<compile_context>
chip_gen: v6e
topology: v6e:2x2x1
jax: 0.10.0
libtpu: 0.0.40
codegen_flags: <defaults>
</compile_context>

<pallas_src>
import functools

import jax
import jax.numpy as jnp
from jax.experimental import pallas as pl
from jax.experimental.pallas import tpu as pltpu

C = 64                     # channels (in == out)
H = 56                     # spatial H of the input (x dim 2)
W = 56                     # spatial W of the input (x dim 3)
K = 3                      # conv taps (unfold kernel (3, 1))
HW = H * W                 # 3136
SLAB_COLS = (W + 2) * H    # 3248: zero-padded W extent, flattened with H


def _conv_roll_kernel(w2k_ref, slab_ref, coef_ref, out_ref, *, shift):
    """Single-program kernel: 3-tap conv as 3 accumulating MXU dots + rolled combine.

    w2k_ref  : (K, C, C)      f32  w2 transposed to tap-major (w2k[k, i, c] = w2[i, k, c])
    slab_ref : (C, SLAB_COLS) f32  H-rolled, W-zero-padded input, column = w_pad*H + h
    coef_ref : (C, 2)         f32  per-channel w1 coefficients (col 0 -> un-rolled term)
    out_ref  : (C, HW)        f32  output, column = w*H + h
    """
    # im2col-free conv: tap k of the (C,K*C)@(K*C,HW) matmul is a lane-offset view of the
    # slab (offsets 0, H, 2H), so no K*C x HW matrix is ever formed in HBM.
    mh = jnp.dot(w2k_ref[0], slab_ref[:, 0:HW],
                 preferred_element_type=jnp.float32)
    mh = mh + jnp.dot(w2k_ref[1], slab_ref[:, H:H + HW],
                      preferred_element_type=jnp.float32)
    mh = mh + jnp.dot(w2k_ref[2], slab_ref[:, 2 * H:2 * H + HW],
                      preferred_element_type=jnp.float32)
    # The module's circular W-roll of the conv result == roll by shift*H columns in the
    # (w*H + h) layout (two static lane slices + concat; stays in VMEM).
    rolled = jnp.roll(mh, shift * H, axis=1)
    out_ref[...] = coef_ref[:, 0:1] * mh + coef_ref[:, 1:2] * rolled


@functools.partial(jax.jit, static_argnames=("shift",))
def kernel_generated_0_forward(x, w1, w2, *, shift):
    """x: (1,64,56,56) f32, w1: (64,2), w2: (64,3,64), shift in {+1,-1}."""
    # ---- thin layout glue: one fused XLA producer of the ~0.83 MB slab ----
    xc = x[0]                                    # (C, H, W)
    xr = jnp.roll(xc, shift, axis=1)             # fold the output H-roll into the input
    xt = jnp.transpose(xr, (0, 2, 1))            # (C, W, H)
    xp = jnp.pad(xt, ((0, 0), (1, 1), (0, 0)))   # zero pad along W for the 3-tap conv
    slab = xp.reshape(C, SLAB_COLS)              # (C, 3248), column = w_pad*H + h

    w2k = jnp.transpose(w2, (1, 0, 2))           # (K, C_out, C_in)
    coef = w1 if shift == 1 else w1[:, ::-1]     # col 0 scales mh, col 1 the rolled term

    vmem = pl.BlockSpec(memory_space=pltpu.MemorySpace.VMEM)
    out2d = pl.pallas_call(
        functools.partial(_conv_roll_kernel, shift=shift),
        out_shape=jax.ShapeDtypeStruct((C, HW), jnp.float32),
        in_specs=[vmem, vmem, vmem],
        out_specs=vmem,
        cost_estimate=pl.CostEstimate(
            flops=2 * C * K * C * HW,
            transcendentals=0,
            bytes_accessed=4 * (K * C * C + C * SLAB_COLS + 2 * C + C * HW),
        ),
    )(w2k, slab, coef)

    # column index is w*H + h -> (1, C, W, H): the module's output spatial order.
    return out2d.reshape(1, C, W, H)


def _reference(x, w1, w2, shift):
    """Direct jnp translation of the PyTorch forward (for verification)."""
    hp = jax.lax.Precision.HIGHEST
    t3 = jnp.einsum('ikjl->ilkj', x)                       # (1, 56, 64, 56)
    t3 = t3.reshape(1, 1, 56, 3584)
    padded = jnp.pad(t3, ((0, 0), (0, 0), (1, 1), (0, 0)))
    # unfold with kernel (3,1), padding (1,0)
    cols = jnp.stack([padded[:, 0, k:k + 56, :] for k in range(3)], axis=1)   # (1,3,56,3584)
    t3u = cols.reshape(1, 3, 56, 64, 56)
    t4 = jnp.einsum('lknjm, ikj -> linm', t3u, w2, precision=hp)
    t5 = jnp.einsum('kiml, ij -> kimjl', t4, w1, precision=hp)
    t6 = t5.reshape(1, 64, 112, 56)
    t6 = jnp.roll(t6, shift, axis=2)
    t6 = t6.reshape(1, 64, 56, 2, 56)
    t6 = jnp.sum(t6, axis=3)
    return jnp.roll(t6, shift, axis=3)


if __name__ == "__main__":
    key = jax.random.PRNGKey(0)
    kx, k1, k2 = jax.random.split(key, 3)
    # shapes are fixed by the module's hard-coded reshapes / weight shapes
    x = jax.random.normal(kx, (1, C, H, W), jnp.float32)
    w1 = jax.random.normal(k1, (C, 2), jnp.float32)          # weights[0]
    w2 = jax.random.normal(k2, (C, K, C), jnp.float32)       # weights[1]

    # The torch module picks shift_direction = +/-1 randomly at __init__;
    # verify both possible values deterministically.
    for shift in (1, -1):
        y = jax.block_until_ready(kernel_generated_0_forward(x, w1, w2, shift=shift))
        assert y.shape == (1, C, W, H), y.shape
        y_ref = _reference(x, w1, w2, shift)
        err = float(jnp.max(jnp.abs(y - y_ref)))
        # all-f32 MXU path: expected ~1e-4 max abs error; 5e-3 gates bf16 operands (~5e-2)
        # and any roll / tap-indexing bug (O(10)).
        assert err < 5e-3, f"mismatch for shift={shift}: max abs err {err}"
    print("KERNEL_OK")
</pallas_src>

<mosaic_0001>
module attributes {stable_mosaic.version = 11 : i64} {
  func.func @_conv_roll_kernel(%arg0: memref<3x64x64xf32, #tpu.memory_space<vmem>>, %arg1: memref<64x3248xf32, #tpu.memory_space<vmem>>, %arg2: memref<64x2xf32, #tpu.memory_space<vmem>>, %arg3: memref<64x3136xf32, #tpu.memory_space<vmem>>) attributes {dimension_semantics = [], scalar_prefetch = 0 : i64, scratch_operands = 0 : i64, tpu.core_type = #tpu.core_type<tc>} {
    %c0 = arith.constant 0 : index
    %c0_0 = arith.constant 0 : index
    %c0_1 = arith.constant 0 : index
    %0 = vector.load %arg0[%c0, %c0_0, %c0_1] : memref<3x64x64xf32, #tpu.memory_space<vmem>>, vector<1x64x64xf32>
    %1 = vector.shape_cast %0 : vector<1x64x64xf32> to vector<64x64xf32>
    %c0_2 = arith.constant 0 : index
    %c0_3 = arith.constant 0 : index
    %2 = vector.load %arg1[%c0_2, %c0_3] : memref<64x3248xf32, #tpu.memory_space<vmem>>, vector<64x3136xf32>
    %cst = arith.constant dense<0.000000e+00> : vector<64x3136xf32>
    %3 = tpu.matmul %1, %2, %cst {dimension_numbers = #tpu.dot_dimension_numbers<[1], [0], [0], [1], [0, 0, 1, 1], [], []>} : vector<64x64xf32>, vector<64x3136xf32>, vector<64x3136xf32> -> vector<64x3136xf32>
    %c1 = arith.constant 1 : index
    %c0_4 = arith.constant 0 : index
    %c0_5 = arith.constant 0 : index
    %4 = vector.load %arg0[%c1, %c0_4, %c0_5] : memref<3x64x64xf32, #tpu.memory_space<vmem>>, vector<1x64x64xf32>
    %5 = vector.shape_cast %4 : vector<1x64x64xf32> to vector<64x64xf32>
    %c0_6 = arith.constant 0 : index
    %c56 = arith.constant 56 : index
    %6 = vector.load %arg1[%c0_6, %c56] : memref<64x3248xf32, #tpu.memory_space<vmem>>, vector<64x3136xf32>
    %cst_7 = arith.constant dense<0.000000e+00> : vector<64x3136xf32>
    %7 = tpu.matmul %5, %6, %cst_7 {dimension_numbers = #tpu.dot_dimension_numbers<[1], [0], [0], [1], [0, 0, 1, 1], [], []>} : vector<64x64xf32>, vector<64x3136xf32>, vector<64x3136xf32> -> vector<64x3136xf32>
    %8 = arith.addf %3, %7 : vector<64x3136xf32>
    %c2 = arith.constant 2 : index
    %c0_8 = arith.constant 0 : index
    %c0_9 = arith.constant 0 : index
    %9 = vector.load %arg0[%c2, %c0_8, %c0_9] : memref<3x64x64xf32, #tpu.memory_space<vmem>>, vector<1x64x64xf32>
    %10 = vector.shape_cast %9 : vector<1x64x64xf32> to vector<64x64xf32>
    %c0_10 = arith.constant 0 : index
    %c112 = arith.constant 112 : index
    %11 = vector.load %arg1[%c0_10, %c112] : memref<64x3248xf32, #tpu.memory_space<vmem>>, vector<64x3136xf32>
    %cst_11 = arith.constant dense<0.000000e+00> : vector<64x3136xf32>
    %12 = tpu.matmul %10, %11, %cst_11 {dimension_numbers = #tpu.dot_dimension_numbers<[1], [0], [0], [1], [0, 0, 1, 1], [], []>} : vector<64x64xf32>, vector<64x3136xf32>, vector<64x3136xf32> -> vector<64x3136xf32>
    %13 = arith.addf %8, %12 : vector<64x3136xf32>
    %14 = vector.extract_strided_slice %13 {offsets = [0, 3080], sizes = [64, 56], strides = [1, 1]} : vector<64x3136xf32> to vector<64x56xf32>
    %15 = vector.extract_strided_slice %13 {offsets = [0, 0], sizes = [64, 3080], strides = [1, 1]} : vector<64x3136xf32> to vector<64x3080xf32>
    %16 = tpu.concatenate %14, %15 in 1 : vector<64x56xf32>, vector<64x3080xf32> -> vector<64x3136xf32>
    %c0_12 = arith.constant 0 : index
    %c0_13 = arith.constant 0 : index
    %17 = vector.load %arg2[%c0_12, %c0_13] : memref<64x2xf32, #tpu.memory_space<vmem>>, vector<64x1xf32>
    %18 = vector.broadcast %17 : vector<64x1xf32> to vector<64x3136xf32>
    %19 = arith.mulf %18, %13 : vector<64x3136xf32>
    %c0_14 = arith.constant 0 : index
    %c1_15 = arith.constant 1 : index
    %20 = vector.load %arg2[%c0_14, %c1_15] : memref<64x2xf32, #tpu.memory_space<vmem>>, vector<64x1xf32>
    %21 = vector.broadcast %20 : vector<64x1xf32> to vector<64x3136xf32>
    %22 = arith.mulf %21, %16 : vector<64x3136xf32>
    %23 = arith.addf %19, %22 : vector<64x3136xf32>
    %c0_16 = arith.constant 0 : index
    %c0_17 = arith.constant 0 : index
    %24 = vector.load %arg3[%c0_16, %c0_17] : memref<64x3136xf32, #tpu.memory_space<vmem>>, vector<64x3136xf32>
    tpu.vector_store %arg3[%c0_16, %c0_17], %23 {strides = array<i32>} : memref<64x3136xf32, #tpu.memory_space<vmem>>, vector<64x3136xf32>,
    return
  }
}

</mosaic_0001>

<llo_original>
// kernel: kernel_generated_0_forward.1
$region0: #{kernel_generated_0_forward.1}
  #allocation0 [shape = 'u32[]', space=smem, size = 0x4, offset = 0x4, fixed_abs, tag = 'smem constant byte address 0x4 - core index']
  #allocation1 [shape = 'u32[144,128]{1,0:T(1,128)}', space=vmem, size = 0x12000, scoped, tag = 'internal scratch']
  %s0 = inlined_call_operand.vmem [shape: f32[3,64,64], index: 0, kind: input, shape index: {}]
  %s1 = inlined_call_operand.vmem [shape: f32[64,3248], index: 1, kind: input, shape index: {}]
  %s2 = inlined_call_operand.vmem [shape: f32[64,2], index: 2, kind: input, shape index: {}]
  %s3 = inlined_call_operand.vmem [shape: f32[64,3136], index: 3, kind: output, shape index: {}]
  %s4 = sld [smem:[#allocation0]]
  $region22: #{kernel_generated_0_forward.1} parent=0
    _
  %s6 = ssub.s32 1, %s4
  %s7 = scalar_select 0, %s6, %s4
  // Predicated region
  $region2: #{kernel_generated_0_forward.1} parent=0 // pred_check
    _
  $region3: #{kernel_generated_0_forward.1} parent=0 // pred_check_branch
    %9 = sbr.rel (0) target = $region5
  $region4: #{kernel_generated_0_forward.1} parent=0 // pred_region
    _
  $region5: #{kernel_generated_0_forward.1} parent=0 // pred_fallthru
    _
  // Predicated region
  $region6: #{kernel_generated_0_forward.1} parent=0 // pred_check
    _
  $region7: #{kernel_generated_0_forward.1} parent=0 // pred_check_branch
    %11 = sbr.rel (0) target = $region9
  $region8: #{kernel_generated_0_forward.1} parent=0 // pred_region
    _
  $region9: #{kernel_generated_0_forward.1} parent=0 // pred_fallthru
    _
  // Predicated region
  $region10: #{kernel_generated_0_forward.1} parent=0 // pred_check
    _
  $region11: #{kernel_generated_0_forward.1} parent=0 // pred_check_branch
    %13 = sbr.rel (0) target = $region13
  $region12: #{kernel_generated_0_forward.1} parent=0 // pred_region
    _
  $region13: #{kernel_generated_0_forward.1} parent=0 // pred_fallthru
    _
  %v14 = vld [vmem:[%s0] sm:$0xff]
  %v15 = vld [vmem:[%s0 + $0x8] sm:$0xff]
  %v16 = vld [vmem:[%s0 + $0x10] sm:$0xff]
  %v17 = vld [vmem:[%s0 + $0x18] sm:$0xff]
  %v18 = vld [vmem:[%s0 + $0x20] sm:$0xff]
  %v19 = vld [vmem:[%s0 + $0x28] sm:$0xff]
  %v20 = vld [vmem:[%s0 + $0x30] sm:$0xff]
  %v21 = vld [vmem:[%s0 + $0x38] sm:$0xff]
  %v22 = vld [vmem:[%s1] sm:$0xff]
  %v23 = vld [vmem:[%s1 + $0x8] sm:$0xff]
  %v24 = vld [vmem:[%s1 + $0x10] sm:$0xff]
  %v25 = vld [vmem:[%s1 + $0x18] sm:$0xff]
  %v26 = vld [vmem:[%s1 + $0x20] sm:$0xff]
  %v27 = vld [vmem:[%s1 + $0x28] sm:$0xff]
  %v28 = vld [vmem:[%s1 + $0x30] sm:$0xff]
  %v29 = vld [vmem:[%s1 + $0x38] sm:$0xff]
  %v30 = vld [vmem:[%s1 + $0x40] sm:$0xff]
  %v31 = vld [vmem:[%s1 + $0x48] sm:$0xff]
  %v32 = vld [vmem:[%s1 + $0x50] sm:$0xff]
  %v33 = vld [vmem:[%s1 + $0x58] sm:$0xff]
  %v34 = vld [vmem:[%s1 + $0x60] sm:$0xff]
  %v35 = vld [vmem:[%s1 + $0x68] sm:$0xff]
  %v36 = vld [vmem:[%s1 + $0x70] sm:$0xff]
  %v37 = vld [vmem:[%s1 + $0x78] sm:$0xff]
  %v38 = vld [vmem:[%s1 + $0x80] sm:$0xff]
  %v39 = vld [vmem:[%s1 + $0x88] sm:$0xff]
  %v40 = vld [vmem:[%s1 + $0x90] sm:$0xff]
  %v41 = vld [vmem:[%s1 + $0x98] sm:$0xff]
  %v42 = vld [vmem:[%s1 + $0xa0] sm:$0xff]
  %v43 = vld [vmem:[%s1 + $0xa8] sm:$0xff]
  %v44 = vld [vmem:[%s1 + $0xb0] sm:$0xff]
  %v45 = vld [vmem:[%s1 + $0xb8] sm:$0xff]
  %v46 = vld [vmem:[%s1 + $0xc0] sm:$0xff]
  %v47 = vld [vmem:[%s1 + $0xd0] sm:$0xff]
  %v48 = vld [vmem:[%s1 + $0xd8] sm:$0xff]
  %v49 = vld [vmem:[%s1 + $0xe0] sm:$0xff]
  %v50 = vld [vmem:[%s1 + $0xe8] sm:$0xff]
  %v51 = vld [vmem:[%s1 + $0xf0] sm:$0xff]
  %v52 = vld [vmem:[%s1 + $0xf8] sm:$0xff]
  %v53 = vld [vmem:[%s1 + $0x100] sm:$0xff]
  %v54 = vld [vmem:[%s1 + $0x108] sm:$0xff]
  %v55 = vld [vmem:[%s1 + $0x110] sm:$0xff]
  %v56 = vld [vmem:[%s1 + $0x118] sm:$0xff]
  %v57 = vld [vmem:[%s1 + $0x120] sm:$0xff]
  %v58 = vld [vmem:[%s1 + $0x128] sm:$0xff]
  %v59 = vld [vmem:[%s1 + $0x130] sm:$0xff]
  %v60 = vld [vmem:[%s1 + $0x138] sm:$0xff]
  %v61 = vld [vmem:[%s1 + $0x140] sm:$0xff]
  %v62 = vld [vmem:[%s1 + $0x148] sm:$0xff]
  %v63 = vld [vmem:[%s1 + $0x150] sm:$0xff]
  %v64 = vld [vmem:[%s1 + $0x158] sm:$0xff]
  %v65 = vld [vmem:[%s1 + $0x160] sm:$0xff]
  %v66 = vld [vmem:[%s1 + $0x168] sm:$0xff]
  %v67 = vld [vmem:[%s1 + $0x170] sm:$0xff]
  %v68 = vld [vmem:[%s1 + $0x178] sm:$0xff]
  %v69 = vld [vmem:[%s1 + $0x180] sm:$0xff]
  %v70 = vld [vmem:[%s1 + $0x188] sm:$0xff]
  %v71 = vld [vmem:[%s1 + $0x190] sm:$0xff]
  %v72 = vld [vmem:[%s1 + $0x1a0] sm:$0xff]
  %v73 = vld [vmem:[%s1 + $0x1a8] sm:$0xff]
  %v74 = vld [vmem:[%s1 + $0x1b0] sm:$0xff]
  %v75 = vld [vmem:[%s1 + $0x1b8] sm:$0xff]
  %v76 = vld [vmem:[%s1 + $0x1c0] sm:$0xff]
  %v77 = vld [vmem:[%s1 + $0x1c8] sm:$0xff]
  %v78 = vld [vmem:[%s1 + $0x1d0] sm:$0xff]
  %v79 = vld [vmem:[%s1 + $0x1d8] sm:$0xff]
  %v80 = vld [vmem:[%s1 + $0x1e0] sm:$0xff]
  %v81 = vld [vmem:[%s1 + $0x1e8] sm:$0xff]
  %v82 = vld [vmem:[%s1 + $0x1f0] sm:$0xff]
  %v83 = vld [vmem:[%s1 + $0x1f8] sm:$0xff]
  %v84 = vld [vmem:[%s1 + $0x200] sm:$0xff]
  %v85 = vld [vmem:[%s1 + $0x208] sm:$0xff]
  %v86 = vld [vmem:[%s1 + $0x210] sm:$0xff]
  %v87 = vld [vmem:[%s1 + $0x218] sm:$0xff]
  %v88 = vld [vmem:[%s1 + $0x220] sm:$0xff]
  %v89 = vld [vmem:[%s1 + $0x228] sm:$0xff]
  %v90 = vld [vmem:[%s1 + $0x230] sm:$0xff]
  %v91 = vld [vmem:[%s1 + $0x238] sm:$0xff]
  %v92 = vld [vmem:[%s1 + $0x240] sm:$0xff]
  %v93 = vld [vmem:[%s1 + $0x248] sm:$0xff]
  %v94 = vld [vmem:[%s1 + $0x250] sm:$0xff]
  %v95 = vld [vmem:[%s1 + $0x258] sm:$0xff]
  %v96 = vld [vmem:[%s1 + $0x260] sm:$0xff]
  %v97 = vld [vmem:[%s1 + $0x270] sm:$0xff]
  %v98 = vld [vmem:[%s1 + $0x278] sm:$0xff]
  %v99 = vld [vmem:[%s1 + $0x280] sm:$0xff]
  %v100 = vld [vmem:[%s1 + $0x288] sm:$0xff]
  %v101 = vld [vmem:[%s1 + $0x290] sm:$0xff]
  %v102 = vld [vmem:[%s1 + $0x298] sm:$0xff]
  %v103 = vld [vmem:[%s1 + $0x2a0] sm:$0xff]
  %v104 = vld [vmem:[%s1 + $0x2a8] sm:$0xff]
  %v105 = vld [vmem:[%s1 + $0x2b0] sm:$0xff]
  %v106 = vld [vmem:[%s1 + $0x2b8] sm:$0xff]
  %v107 = vld [vmem:[%s1 + $0x2c0] sm:$0xff]
  %v108 = vld [vmem:[%s1 + $0x2c8] sm:$0xff]
  %v109 = vld [vmem:[%s1 + $0x2d0] sm:$0xff]
  %v110 = vld [vmem:[%s1 + $0x2d8] sm:$0xff]
  %v111 = vld [vmem:[%s1 + $0x2e0] sm:$0xff]
  %v112 = vld [vmem:[%s1 + $0x2e8] sm:$0xff]
  %v113 = vld [vmem:[%s1 + $0x2f0] sm:$0xff]
  %v114 = vld [vmem:[%s1 + $0x2f8] sm:$0xff]
  %v115 = vld [vmem:[%s1 + $0x300] sm:$0xff]
  %v116 = vld [vmem:[%s1 + $0x308] sm:$0xff]
  %v117 = vld [vmem:[%s1 + $0x310] sm:$0xff]
  %v118 = vld [vmem:[%s1 + $0x318] sm:$0xff]
  %v119 = vld [vmem:[%s1 + $0x320] sm:$0xff]
  %v120 = vld [vmem:[%s1 + $0x328] sm:$0xff]
  %v121 = vld [vmem:[%s1 + $0x330] sm:$0xff]
  %v122 = vld [vmem:[%s1 + $0x340] sm:$0xff]
  %v123 = vld [vmem:[%s1 + $0x348] sm:$0xff]
  %v124 = vld [vmem:[%s1 + $0x350] sm:$0xff]
  %v125 = vld [vmem:[%s1 + $0x358] sm:$0xff]
  %v126 = vld [vmem:[%s1 + $0x360] sm:$0xff]
  %v127 = vld [vmem:[%s1 + $0x368] sm:$0xff]
  %v128 = vld [vmem:[%s1 + $0x370] sm:$0xff]
  %v129 = vld [vmem:[%s1 + $0x378] sm:$0xff]
  %v130 = vld [vmem:[%s1 + $0x380] sm:$0xff]
  %v131 = vld [vmem:[%s1 + $0x388] sm:$0xff]
  %v132 = vld [vmem:[%s1 + $0x390] sm:$0xff]
  %v133 = vld [vmem:[%s1 + $0x398] sm:$0xff]
  %v134 = vld [vmem:[%s1 + $0x3a0] sm:$0xff]
  %v135 = vld [vmem:[%s1 + $0x3a8] sm:$0xff]
  %v136 = vld [vmem:[%s1 + $0x3b0] sm:$0xff]
  %v137 = vld [vmem:[%s1 + $0x3b8] sm:$0xff]
  %v138 = vld [vmem:[%s1 + $0x3c0] sm:$0xff]
  %v139 = vld [vmem:[%s1 + $0x3c8] sm:$0xff]
  %v140 = vld [vmem:[%s1 + $0x3d0] sm:$0xff]
  %v141 = vld [vmem:[%s1 + $0x3d8] sm:$0xff]
  %v142 = vld [vmem:[%s1 + $0x3e0] sm:$0xff]
  %v143 = vld [vmem:[%s1 + $0x3e8] sm:$0xff]
  %v144 = vld [vmem:[%s1 + $0x3f0] sm:$0xff]
  %v145 = vld [vmem:[%s1 + $0x3f8] sm:$0xff]
  %v146 = vld [vmem:[%s1 + $0x400] sm:$0xff]
  %v147 = vld [vmem:[%s1 + $0x410] sm:$0xff]
  %v148 = vld [vmem:[%s1 + $0x418] sm:$0xff]
  %v149 = vld [vmem:[%s1 + $0x420] sm:$0xff]
  %v150 = vld [vmem:[%s1 + $0x428] sm:$0xff]
  %v151 = vld [vmem:[%s1 + $0x430] sm:$0xff]
  %v152 = vld [vmem:[%s1 + $0x438] sm:$0xff]
  %v153 = vld [vmem:[%s1 + $0x440] sm:$0xff]
  %v154 = vld [vmem:[%s1 + $0x448] sm:$0xff]
  %v155 = vld [vmem:[%s1 + $0x450] sm:$0xff]
  %v156 = vld [vmem:[%s1 + $0x458] sm:$0xff]
  %v157 = vld [vmem:[%s1 + $0x460] sm:$0xff]
  %v158 = vld [vmem:[%s1 + $0x468] sm:$0xff]
  %v159 = vld [vmem:[%s1 + $0x470] sm:$0xff]
  %v160 = vld [vmem:[%s1 + $0x478] sm:$0xff]
  %v161 = vld [vmem:[%s1 + $0x480] sm:$0xff]
  %v162 = vld [vmem:[%s1 + $0x488] sm:$0xff]
  %v163 = vld [vmem:[%s1 + $0x490] sm:$0xff]
  %v164 = vld [vmem:[%s1 + $0x498] sm:$0xff]
  %v165 = vld [vmem:[%s1 + $0x4a0] sm:$0xff]
  %v166 = vld [vmem:[%s1 + $0x4a8] sm:$0xff]
  %v167 = vld [vmem:[%s1 + $0x4b0] sm:$0xff]
  %v168 = vld [vmem:[%s1 + $0x4b8] sm:$0xff]
  %v169 = vld [vmem:[%s1 + $0x4c0] sm:$0xff]
  %v170 = vld [vmem:[%s1 + $0x4c8] sm:$0xff]
  %v171 = vld [vmem:[%s1 + $0x4d0] sm:$0xff]
  %v172 = vld [vmem:[%s1 + $0x4e0] sm:$0xff]
  %v173 = vld [vmem:[%s1 + $0x4e8] sm:$0xff]
  %v174 = vld [vmem:[%s1 + $0x4f0] sm:$0xff]
  %v175 = vld [vmem:[%s1 + $0x4f8] sm:$0xff]
  %v176 = vld [vmem:[%s1 + $0x500] sm:$0xff]
  %v177 = vld [vmem:[%s1 + $0x508] sm:$0xff]
  %v178 = vld [vmem:[%s1 + $0x510] sm:$0xff]
  %v179 = vld [vmem:[%s1 + $0x518] sm:$0xff]
  %v180 = vld [vmem:[%s1 + $0x520] sm:$0xff]
  %v181 = vld [vmem:[%s1 + $0x528] sm:$0xff]
  %v182 = vld [vmem:[%s1 + $0x530] sm:$0xff]
  %v183 = vld [vmem:[%s1 + $0x538] sm:$0xff]
  %v184 = vld [vmem:[%s1 + $0x540] sm:$0xff]
  %v185 = vld [vmem:[%s1 + $0x548] sm:$0xff]
  %v186 = vld [vmem:[%s1 + $0x550] sm:$0xff]
  %v187 = vld [vmem:[%s1 + $0x558] sm:$0xff]
  %v188 = vld [vmem:[%s1 + $0x560] sm:$0xff]
  %v189 = vld [vmem:[%s1 + $0x568] sm:$0xff]
  %v190 = vld [vmem:[%s1 + $0x570] sm:$0xff]
  %v191 = vld [vmem:[%s1 + $0x578] sm:$0xff]
  %v192 = vld [vmem:[%s1 + $0x580] sm:$0xff]
  %v193 = vld [vmem:[%s1 + $0x588] sm:$0xff]
  %v194 = vld [vmem:[%s1 + $0x590] sm:$0xff]
  %v195 = vld [vmem:[%s1 + $0x598] sm:$0xff]
  %v196 = vld [vmem:[%s1 + $0x5a0] sm:$0xff]
  %v197 = vld [vmem:[%s1 + $0x5b0] sm:$0xff]
  %v198 = vld [vmem:[%s1 + $0x5b8] sm:$0xff]
  %v199 = vld [vmem:[%s1 + $0x5c0] sm:$0xff]
  %v200 = vld [vmem:[%s1 + $0x5c8] sm:$0xff]
  %v201 = vld [vmem:[%s1 + $0x5d0] sm:$0xff]
  %v202 = vld [vmem:[%s1 + $0x5d8] sm:$0xff]
  %v203 = vld [vmem:[%s1 + $0x5e0] sm:$0xff]
  %v204 = vld [vmem:[%s1 + $0x5e8] sm:$0xff]
  %v205 = vld [vmem:[%s1 + $0x5f0] sm:$0xff]
  %v206 = vld [vmem:[%s1 + $0x5f8] sm:$0xff]
  %v207 = vld [vmem:[%s1 + $0x600] sm:$0xff]
  %v208 = vld [vmem:[%s1 + $0x608] sm:$0xff]
  %v209 = vld [vmem:[%s1 + $0x610] sm:$0xff]
  %v210 = vld [vmem:[%s1 + $0x618] sm:$0xff]
  %v211 = vld [vmem:[%s1 + $0x620] sm:$0xff]
  %v212 = vld [vmem:[%s1 + $0x628] sm:$0xff]
  %v213 = vld [vmem:[%s1 + $0x630] sm:$0xff]
  %v214 = vld [vmem:[%s1 + $0x638] sm:$0xff]
  %v215 = vld [vmem:[%s1 + $0x640] sm:$0xff]
  %v216 = vld [vmem:[%s1 + $0x648] sm:$0xff]
  %v217 = vld [vmem:[%s1 + $0x650] sm:$0xff]
  %v218 = vld [vmem:[%s1 + $0x658] sm:$0xff]
  %v219 = vld [vmem:[%s1 + $0x660] sm:$0xff]
  %v220 = vld [vmem:[%s1 + $0x668] sm:$0xff]
  %v221 = vld [vmem:[%s1 + $0x670] sm:$0xff]
  %s222 = scalar_lea.vmem %s0, 64
  %v223 = vld [vmem:[%s222] sm:$0xff]
  %v224 = vld [vmem:[%s222 + $0x8] sm:$0xff]
  %v225 = vld [vmem:[%s222 + $0x10] sm:$0xff]
  %v226 = vld [vmem:[%s222 + $0x18] sm:$0xff]
  %v227 = vld [vmem:[%s222 + $0x20] sm:$0xff]
  %v228 = vld [vmem:[%s222 + $0x28] sm:$0xff]
  %v229 = vld [vmem:[%s222 + $0x30] sm:$0xff]
  %v230 = vld [vmem:[%s222 + $0x38] sm:$0xff]
  %431 = vrot.lane.b32.xlu0 %v22, 72
  %v432 = vpop.permute.xlu0 %431
  %433 = vrot.lane.b32.xlu0 %v23, 72
  %v434 = vpop.permute.xlu0 %433
  %435 = vrot.lane.b32.xlu0 %v24, 72
  %v436 = vpop.permute.xlu0 %435
  %437 = vrot.lane.b32.xlu0 %v25, 72
  %v438 = vpop.permute.xlu0 %437
  %439 = vrot.lane.b32.xlu0 %v26, 72
  %v440 = vpop.permute.xlu0 %439
  %441 = vrot.lane.b32.xlu0 %v27, 72
  %v442 = vpop.permute.xlu0 %441
  %443 = vrot.lane.b32.xlu0 %v28, 72
  %v444 = vpop.permute.xlu0 %443
  %445 = vrot.lane.b32.xlu0 %v29, 72
  %v446 = vpop.permute.xlu0 %445
  %447 = vrot.lane.b32.xlu0 %v30, 72
  %v448 = vpop.permute.xlu0 %447
  %449 = vrot.lane.b32.xlu0 %v31, 72
  %v450 = vpop.permute.xlu0 %449
  %451 = vrot.lane.b32.xlu0 %v32, 72
  %v452 = vpop.permute.xlu0 %451
  %453 = vrot.lane.b32.xlu0 %v33, 72
  %v454 = vpop.permute.xlu0 %453
  %455 = vrot.lane.b32.xlu0 %v34, 72
  %v456 = vpop.permute.xlu0 %455
  %457 = vrot.lane.b32.xlu0 %v35, 72
  %v458 = vpop.permute.xlu0 %457
  %459 = vrot.lane.b32.xlu0 %v36, 72
  %v460 = vpop.permute.xlu0 %459
  %461 = vrot.lane.b32.xlu0 %v37, 72
  %v462 = vpop.permute.xlu0 %461
  %463 = vrot.lane.b32.xlu0 %v38, 72
  %v464 = vpop.permute.xlu0 %463
  %465 = vrot.lane.b32.xlu0 %v39, 72
  %v466 = vpop.permute.xlu0 %465
  %467 = vrot.lane.b32.xlu0 %v40, 72
  %v468 = vpop.permute.xlu0 %467
  %469 = vrot.lane.b32.xlu0 %v41, 72
  %v470 = vpop.permute.xlu0 %469
  %471 = vrot.lane.b32.xlu0 %v42, 72
  %v472 = vpop.permute.xlu0 %471
  %473 = vrot.lane.b32.xlu0 %v43, 72
  %v474 = vpop.permute.xlu0 %473
  %475 = vrot.lane.b32.xlu0 %v44, 72
  %v476 = vpop.permute.xlu0 %475
  %477 = vrot.lane.b32.xlu0 %v45, 72
  %v478 = vpop.permute.xlu0 %477
  %479 = vrot.lane.b32.xlu0 %v46, 72
  %v480 = vpop.permute.xlu0 %479
  %481 = vrot.lane.b32.xlu0 %v47, 72
  %v482 = vpop.permute.xlu0 %481
  %483 = vrot.lane.b32.xlu0 %v48, 72
  %v484 = vpop.permute.xlu0 %483
  %485 = vrot.lane.b32.xlu0 %v49, 72
  %v486 = vpop.permute.xlu0 %485
  %487 = vrot.lane.b32.xlu0 %v50, 72
  %v488 = vpop.permute.xlu0 %487
  %489 = vrot.lane.b32.xlu0 %v51, 72
  %v490 = vpop.permute.xlu0 %489
  %491 = vrot.lane.b32.xlu0 %v52, 72
  %v492 = vpop.permute.xlu0 %491
  %493 = vrot.lane.b32.xlu0 %v53, 72
  %v494 = vpop.permute.xlu0 %493
  %495 = vrot.lane.b32.xlu0 %v54, 72
  %v496 = vpop.permute.xlu0 %495
  %497 = vrot.lane.b32.xlu0 %v55, 72
  %v498 = vpop.permute.xlu0 %497
  %499 = vrot.lane.b32.xlu0 %v56, 72
  %v500 = vpop.permute.xlu0 %499
  %501 = vrot.lane.b32.xlu0 %v57, 72
  %v502 = vpop.permute.xlu0 %501
  %503 = vrot.lane.b32.xlu0 %v58, 72
  %v504 = vpop.permute.xlu0 %503
  %505 = vrot.lane.b32.xlu0 %v59, 72
  %v506 = vpop.permute.xlu0 %505
  %507 = vrot.lane.b32.xlu0 %v60, 72
  %v508 = vpop.permute.xlu0 %507
  %509 = vrot.lane.b32.xlu0 %v61, 72
  %v510 = vpop.permute.xlu0 %509
  %511 = vrot.lane.b32.xlu0 %v62, 72
  %v512 = vpop.permute.xlu0 %511
  %513 = vrot.lane.b32.xlu0 %v63, 72
  %v514 = vpop.permute.xlu0 %513
  %515 = vrot.lane.b32.xlu0 %v64, 72
  %v516 = vpop.permute.xlu0 %515
  %517 = vrot.lane.b32.xlu0 %v65, 72
  %v518 = vpop.permute.xlu0 %517
  %519 = vrot.lane.b32.xlu0 %v66, 72
  %v520 = vpop.permute.xlu0 %519
  %521 = vrot.lane.b32.xlu0 %v67, 72
  %v522 = vpop.permute.xlu0 %521
  %523 = vrot.lane.b32.xlu0 %v68, 72
  %v524 = vpop.permute.xlu0 %523
  %525 = vrot.lane.b32.xlu0 %v69, 72
  %v526 = vpop.permute.xlu0 %525
  %527 = vrot.lane.b32.xlu0 %v70, 72
  %v528 = vpop.permute.xlu0 %527
  %529 = vrot.lane.b32.xlu0 %v71, 72
  %v530 = vpop.permute.xlu0 %529
  %531 = vrot.lane.b32.xlu0 %v72, 72
  %v532 = vpop.permute.xlu0 %531
  %533 = vrot.lane.b32.xlu0 %v73, 72
  %v534 = vpop.permute.xlu0 %533
  %535 = vrot.lane.b32.xlu0 %v74, 72
  %v536 = vpop.permute.xlu0 %535
  %537 = vrot.lane.b32.xlu0 %v75, 72
  %v538 = vpop.permute.xlu0 %537
  %539 = vrot.lane.b32.xlu0 %v76, 72
  %v540 = vpop.permute.xlu0 %539
  %541 = vrot.lane.b32.xlu0 %v77, 72
  %v542 = vpop.permute.xlu0 %541
  %543 = vrot.lane.b32.xlu0 %v78, 72
  %v544 = vpop.permute.xlu0 %543
  %545 = vrot.lane.b32.xlu0 %v79, 72
  %v546 = vpop.permute.xlu0 %545
  %547 = vrot.lane.b32.xlu0 %v80, 72
  %v548 = vpop.permute.xlu0 %547
  %549 = vrot.lane.b32.xlu0 %v81, 72
  %v550 = vpop.permute.xlu0 %549
  %551 = vrot.lane.b32.xlu0 %v82, 72
  %v552 = vpop.permute.xlu0 %551
  %553 = vrot.lane.b32.xlu0 %v83, 72
  %v554 = vpop.permute.xlu0 %553
  %555 = vrot.lane.b32.xlu0 %v84, 72
  %v556 = vpop.permute.xlu0 %555
  %557 = vrot.lane.b32.xlu0 %v85, 72
  %v558 = vpop.permute.xlu0 %557
  %559 = vrot.lane.b32.xlu0 %v86, 72
  %v560 = vpop.permute.xlu0 %559
  %561 = vrot.lane.b32.xlu0 %v87, 72
  %v562 = vpop.permute.xlu0 %561
  %563 = vrot.lane.b32.xlu0 %v88, 72
  %v564 = vpop.permute.xlu0 %563
  %565 = vrot.lane.b32.xlu0 %v89, 72
  %v566 = vpop.permute.xlu0 %565
  %567 = vrot.lane.b32.xlu0 %v90, 72
  %v568 = vpop.permute.xlu0 %567
  %569 = vrot.lane.b32.xlu0 %v91, 72
  %v570 = vpop.permute.xlu0 %569
  %571 = vrot.lane.b32.xlu0 %v92, 72
  %v572 = vpop.permute.xlu0 %571
  %573 = vrot.lane.b32.xlu0 %v93, 72
  %v574 = vpop.permute.xlu0 %573
  %575 = vrot.lane.b32.xlu0 %v94, 72
  %v576 = vpop.permute.xlu0 %575
  %577 = vrot.lane.b32.xlu0 %v95, 72
  %v578 = vpop.permute.xlu0 %577
  %579 = vrot.lane.b32.xlu0 %v96, 72
  %v580 = vpop.permute.xlu0 %579
  %581 = vrot.lane.b32.xlu0 %v97, 72
  %v582 = vpop.permute.xlu0 %581
  %583 = vrot.lane.b32.xlu0 %v98, 72
  %v584 = vpop.permute.xlu0 %583
  %585 = vrot.lane.b32.xlu0 %v99, 72
  %v586 = vpop.permute.xlu0 %585
  %587 = vrot.lane.b32.xlu0 %v100, 72
  %v588 = vpop.permute.xlu0 %587
  %589 = vrot.lane.b32.xlu0 %v101, 72
  %v590 = vpop.permute.xlu0 %589
  %591 = vrot.lane.b32.xlu0 %v102, 72
  %v592 = vpop.permute.xlu0 %591
  %593 = vrot.lane.b32.xlu0 %v103, 72
  %v594 = vpop.permute.xlu0 %593
  %595 = vrot.lane.b32.xlu0 %v104, 72
  %v596 = vpop.permute.xlu0 %595
  %597 = vrot.lane.b32.xlu0 %v105, 72
  %v598 = vpop.permute.xlu0 %597
  %599 = vrot.lane.b32.xlu0 %v106, 72
  %v600 = vpop.permute.xlu0 %599
  %601 = vrot.lane.b32.xlu0 %v107, 72
  %v602 = vpop.permute.xlu0 %601
  %603 = vrot.lane.b32.xlu0 %v108, 72
  %v604 = vpop.permute.xlu0 %603
  %605 = vrot.lane.b32.xlu0 %v109, 72
  %v606 = vpop.permute.xlu0 %605
  %607 = vrot.lane.b32.xlu0 %v110, 72
  %v608 = vpop.permute.xlu0 %607
  %609 = vrot.lane.b32.xlu0 %v111, 72
  %v610 = vpop.permute.xlu0 %609
  %611 = vrot.lane.b32.xlu0 %v112, 72
  %v612 = vpop.permute.xlu0 %611
  %613 = vrot.lane.b32.xlu0 %v113, 72
  %v614 = vpop.permute.xlu0 %613
  %615 = vrot.lane.b32.xlu0 %v114, 72
  %v616 = vpop.permute.xlu0 %615
  %617 = vrot.lane.b32.xlu0 %v115, 72
  %v618 = vpop.permute.xlu0 %617
  %619 = vrot.lane.b32.xlu0 %v116, 72
  %v620 = vpop.permute.xlu0 %619
  %621 = vrot.lane.b32.xlu0 %v117, 72
  %v622 = vpop.permute.xlu0 %621
  %623 = vrot.lane.b32.xlu0 %v118, 72
  %v624 = vpop.permute.xlu0 %623
  %625 = vrot.lane.b32.xlu0 %v119, 72
  %v626 = vpop.permute.xlu0 %625
  %627 = vrot.lane.b32.xlu0 %v120, 72
  %v628 = vpop.permute.xlu0 %627
  %629 = vrot.lane.b32.xlu0 %v121, 72
  %v630 = vpop.permute.xlu0 %629
  %631 = vrot.lane.b32.xlu0 %v122, 72
  %v632 = vpop.permute.xlu0 %631
  %633 = vrot.lane.b32.xlu0 %v123, 72
  %v634 = vpop.permute.xlu0 %633
  %635 = vrot.lane.b32.xlu0 %v124, 72
  %v636 = vpop.permute.xlu0 %635
  %637 = vrot.lane.b32.xlu0 %v125, 72
  %v638 = vpop.permute.xlu0 %637
  %639 = vrot.lane.b32.xlu0 %v126, 72
  %v640 = vpop.permute.xlu0 %639
  %641 = vrot.lane.b32.xlu0 %v127, 72
  %v642 = vpop.permute.xlu0 %641
  %643 = vrot.lane.b32.xlu0 %v128, 72
  %v644 = vpop.permute.xlu0 %643
  %645 = vrot.lane.b32.xlu0 %v129, 72
  %v646 = vpop.permute.xlu0 %645
  %647 = vrot.lane.b32.xlu0 %v130, 72
  %v648 = vpop.permute.xlu0 %647
  %649 = vrot.lane.b32.xlu0 %v131, 72
  %v650 = vpop.permute.xlu0 %649
  %651 = vrot.lane.b32.xlu0 %v132, 72
  %v652 = vpop.permute.xlu0 %651
  %653 = vrot.lane.b32.xlu0 %v133, 72
  %v654 = vpop.permute.xlu0 %653
  %655 = vrot.lane.b32.xlu0 %v134, 72
  %v656 = vpop.permute.xlu0 %655
  %657 = vrot.lane.b32.xlu0 %v135, 72
  %v658 = vpop.permute.xlu0 %657
  %659 = vrot.lane.b32.xlu0 %v136, 72
  %v660 = vpop.permute.xlu0 %659
  %661 = vrot.lane.b32.xlu0 %v137, 72
  %v662 = vpop.permute.xlu0 %661
  %663 = vrot.lane.b32.xlu0 %v138, 72
  %v664 = vpop.permute.xlu0 %663
  %665 = vrot.lane.b32.xlu0 %v139, 72
  %v666 = vpop.permute.xlu0 %665
  %667 = vrot.lane.b32.xlu0 %v140, 72
  %v668 = vpop.permute.xlu0 %667
  %669 = vrot.lane.b32.xlu0 %v141, 72
  %v670 = vpop.permute.xlu0 %669
  %671 = vrot.lane.b32.xlu0 %v142, 72
  %v672 = vpop.permute.xlu0 %671
  %673 = vrot.lane.b32.xlu0 %v143, 72
  %v674 = vpop.permute.xlu0 %673
  %675 = vrot.lane.b32.xlu0 %v144, 72
  %v676 = vpop.permute.xlu0 %675
  %677 = vrot.lane.b32.xlu0 %v145, 72
  %v678 = vpop.permute.xlu0 %677
  %679 = vrot.lane.b32.xlu0 %v146, 72
  %v680 = vpop.permute.xlu0 %679
  %681 = vrot.lane.b32.xlu0 %v147, 72
  %v682 = vpop.permute.xlu0 %681
  %683 = vrot.lane.b32.xlu0 %v148, 72
  %v684 = vpop.permute.xlu0 %683
  %685 = vrot.lane.b32.xlu0 %v149, 72
  %v686 = vpop.permute.xlu0 %685
  %687 = vrot.lane.b32.xlu0 %v150, 72
  %v688 = vpop.permute.xlu0 %687
  %689 = vrot.lane.b32.xlu0 %v151, 72
  %v690 = vpop.permute.xlu0 %689
  %691 = vrot.lane.b32.xlu0 %v152, 72
  %v692 = vpop.permute.xlu0 %691
  %693 = vrot.lane.b32.xlu0 %v153, 72
  %v694 = vpop.permute.xlu0 %693
  %695 = vrot.lane.b32.xlu0 %v154, 72
  %v696 = vpop.permute.xlu0 %695
  %697 = vrot.lane.b32.xlu0 %v155, 72
  %v698 = vpop.permute.xlu0 %697
  %699 = vrot.lane.b32.xlu0 %v156, 72
  %v700 = vpop.permute.xlu0 %699
  %701 = vrot.lane.b32.xlu0 %v157, 72
  %v702 = vpop.permute.xlu0 %701
  %703 = vrot.lane.b32.xlu0 %v158, 72
  %v704 = vpop.permute.xlu0 %703
  %705 = vrot.lane.b32.xlu0 %v159, 72
  %v706 = vpop.permute.xlu0 %705
  %707 = vrot.lane.b32.xlu0 %v160, 72
  %v708 = vpop.permute.xlu0 %707
  %709 = vrot.lane.b32.xlu0 %v161, 72
  %v710 = vpop.permute.xlu0 %709
  %711 = vrot.lane.b32.xlu0 %v162, 72
  %v712 = vpop.permute.xlu0 %711
  %713 = vrot.lane.b32.xlu0 %v163, 72
  %v714 = vpop.permute.xlu0 %713
  %715 = vrot.lane.b32.xlu0 %v164, 72
  %v716 = vpop.permute.xlu0 %715
  %717 = vrot.lane.b32.xlu0 %v165, 72
  %v718 = vpop.permute.xlu0 %717
  %719 = vrot.lane.b32.xlu0 %v166, 72
  %v720 = vpop.permute.xlu0 %719
  %721 = vrot.lane.b32.xlu0 %v167, 72
  %v722 = vpop.permute.xlu0 %721
  %723 = vrot.lane.b32.xlu0 %v168, 72
  %v724 = vpop.permute.xlu0 %723
  %725 = vrot.lane.b32.xlu0 %v169, 72
  %v726 = vpop.permute.xlu0 %725
  %727 = vrot.lane.b32.xlu0 %v170, 72
  %v728 = vpop.permute.xlu0 %727
  %729 = vrot.lane.b32.xlu0 %v171, 72
  %v730 = vpop.permute.xlu0 %729
  %731 = vrot.lane.b32.xlu0 %v172, 72
  %v732 = vpop.permute.xlu0 %731
  %733 = vrot.lane.b32.xlu0 %v173, 72
  %v734 = vpop.permute.xlu0 %733
  %735 = vrot.lane.b32.xlu0 %v174, 72
  %v736 = vpop.permute.xlu0 %735
  %737 = vrot.lane.b32.xlu0 %v175, 72
  %v738 = vpop.permute.xlu0 %737
  %739 = vrot.lane.b32.xlu0 %v176, 72
  %v740 = vpop.permute.xlu0 %739
  %741 = vrot.lane.b32.xlu0 %v177, 72
  %v742 = vpop.permute.xlu0 %741
  %743 = vrot.lane.b32.xlu0 %v178, 72
  %v744 = vpop.permute.xlu0 %743
  %745 = vrot.lane.b32.xlu0 %v179, 72
  %v746 = vpop.permute.xlu0 %745
  %747 = vrot.lane.b32.xlu0 %v180, 72
  %v748 = vpop.permute.xlu0 %747
  %749 = vrot.lane.b32.xlu0 %v181, 72
  %v750 = vpop.permute.xlu0 %749
  %751 = vrot.lane.b32.xlu0 %v182, 72
  %v752 = vpop.permute.xlu0 %751
  %753 = vrot.lane.b32.xlu0 %v183, 72
  %v754 = vpop.permute.xlu0 %753
  %755 = vrot.lane.b32.xlu0 %v184, 72
  %v756 = vpop.permute.xlu0 %755
  %757 = vrot.lane.b32.xlu0 %v185, 72
  %v758 = vpop.permute.xlu0 %757
  %759 = vrot.lane.b32.xlu0 %v186, 72
  %v760 = vpop.permute.xlu0 %759
  %761 = vrot.lane.b32.xlu0 %v187, 72
  %v762 = vpop.permute.xlu0 %761
  %763 = vrot.lane.b32.xlu0 %v188, 72
  %v764 = vpop.permute.xlu0 %763
  %765 = vrot.lane.b32.xlu0 %v189, 72
  %v766 = vpop.permute.xlu0 %765
  %767 = vrot.lane.b32.xlu0 %v190, 72
  %v768 = vpop.permute.xlu0 %767
  %769 = vrot.lane.b32.xlu0 %v191, 72
  %v770 = vpop.permute.xlu0 %769
  %771 = vrot.lane.b32.xlu0 %v192, 72
  %v772 = vpop.permute.xlu0 %771
  %773 = vrot.lane.b32.xlu0 %v193, 72
  %v774 = vpop.permute.xlu0 %773
  %775 = vrot.lane.b32.xlu0 %v194, 72
  %v776 = vpop.permute.xlu0 %775
  %777 = vrot.lane.b32.xlu0 %v195, 72
  %v778 = vpop.permute.xlu0 %777
  %779 = vrot.lane.b32.xlu0 %v196, 72
  %v780 = vpop.permute.xlu0 %779
  %781 = vrot.lane.b32.xlu0 %v197, 72
  %v782 = vpop.permute.xlu0 %781
  %783 = vrot.lane.b32.xlu0 %v198, 72
  %v784 = vpop.permute.xlu0 %783
  %785 = vrot.lane.b32.xlu0 %v199, 72
  %v786 = vpop.permute.xlu0 %785
  %787 = vrot.lane.b32.xlu0 %v200, 72
  %v788 = vpop.permute.xlu0 %787
  %789 = vrot.lane.b32.xlu0 %v201, 72
  %v790 = vpop.permute.xlu0 %789
  %791 = vrot.lane.b32.xlu0 %v202, 72
  %v792 = vpop.permute.xlu0 %791
  %793 = vrot.lane.b32.xlu0 %v203, 72
  %v794 = vpop.permute.xlu0 %793
  %795 = vrot.lane.b32.xlu0 %v204, 72
  %v796 = vpop.permute.xlu0 %795
  %797 = vrot.lane.b32.xlu0 %v205, 72
  %v798 = vpop.permute.xlu0 %797
  %799 = vrot.lane.b32.xlu0 %v206, 72
  %v800 = vpop.permute.xlu0 %799
  %801 = vrot.lane.b32.xlu0 %v207, 72
  %v802 = vpop.permute.xlu0 %801
  %803 = vrot.lane.b32.xlu0 %v208, 72
  %v804 = vpop.permute.xlu0 %803
  %805 = vrot.lane.b32.xlu0 %v209, 72
  %v806 = vpop.permute.xlu0 %805
  %807 = vrot.lane.b32.xlu0 %v210, 72
  %v808 = vpop.permute.xlu0 %807
  %809 = vrot.lane.b32.xlu0 %v211, 72
  %v810 = vpop.permute.xlu0 %809
  %811 = vrot.lane.b32.xlu0 %v212, 72
  %v812 = vpop.permute.xlu0 %811
  %813 = vrot.lane.b32.xlu0 %v213, 72
  %v814 = vpop.permute.xlu0 %813
  %815 = vrot.lane.b32.xlu0 %v214, 72
  %v816 = vpop.permute.xlu0 %815
  %817 = vrot.lane.b32.xlu0 %v215, 72
  %v818 = vpop.permute.xlu0 %817
  %819 = vrot.lane.b32.xlu0 %v216, 72
  %v820 = vpop.permute.xlu0 %819
  %821 = vrot.lane.b32.xlu0 %v217, 72
  %v822 = vpop.permute.xlu0 %821
  %823 = vrot.lane.b32.xlu0 %v218, 72
  %v824 = vpop.permute.xlu0 %823
  %825 = vrot.lane.b32.xlu0 %v219, 72
  %v826 = vpop.permute.xlu0 %825
  %827 = vrot.lane.b32.xlu0 %v220, 72
  %v828 = vpop.permute.xlu0 %827
  %829 = vrot.lane.b32.xlu0 %v221, 72
  %v830 = vpop.permute.xlu0 %829
  %vm831 = vcmask 588800
  %v832 = vsel %vm831, %v432, %v434
  %v833 = vsel %vm831, %v434, %v436
  %v834 = vsel %vm831, %v436, %v438
  %v835 = vsel %vm831, %v438, %v440
  %v836 = vsel %vm831, %v440, %v442
  %v837 = vsel %vm831, %v442, %v444
  %v838 = vsel %vm831, %v444, %v446
  %v839 = vsel %vm831, %v446, %v448
  %v840 = vsel %vm831, %v448, %v450
  %v841 = vsel %vm831, %v450, %v452
  %v842 = vsel %vm831, %v452, %v454
  %v843 = vsel %vm831, %v454, %v456
  %v844 = vsel %vm831, %v456, %v458
  %v845 = vsel %vm831, %v458, %v460
  %v846 = vsel %vm831, %v460, %v462
  %v847 = vsel %vm831, %v462, %v464
  %v848 = vsel %vm831, %v464, %v466
  %v849 = vsel %vm831, %v466, %v468
  %v850 = vsel %vm831, %v468, %v470
  %v851 = vsel %vm831, %v470, %v472
  %v852 = vsel %vm831, %v472, %v474
  %v853 = vsel %vm831, %v474, %v476
  %v854 = vsel %vm831, %v476, %v478
  %v855 = vsel %vm831, %v478, %v480
  %v856 = vsel %vm831, %v482, %v484
  %v857 = vsel %vm831, %v484, %v486
  %v858 = vsel %vm831, %v486, %v488
  %v859 = vsel %vm831, %v488, %v490
  %v860 = vsel %vm831, %v490, %v492
  %v861 = vsel %vm831, %v492, %v494
  %v862 = vsel %vm831, %v494, %v496
  %v863 = vsel %vm831, %v496, %v498
  %v864 = vsel %vm831, %v498, %v500
  %v865 = vsel %vm831, %v500, %v502
  %v866 = vsel %vm831, %v502, %v504
  %v867 = vsel %vm831, %v504, %v506
  %v868 = vsel %vm831, %v506, %v508
  %v869 = vsel %vm831, %v508, %v510
  %v870 = vsel %vm831, %v510, %v512
  %v871 = vsel %vm831, %v512, %v514
  %v872 = vsel %vm831, %v514, %v516
  %v873 = vsel %vm831, %v516, %v518
  %v874 = vsel %vm831, %v518, %v520
  %v875 = vsel %vm831, %v520, %v522
  %v876 = vsel %vm831, %v522, %v524
  %v877 = vsel %vm831, %v524, %v526
  %v878 = vsel %vm831, %v526, %v528
  %v879 = vsel %vm831, %v528, %v530
  %v880 = vsel %vm831, %v532, %v534
  %v881 = vsel %vm831, %v534, %v536
  %v882 = vsel %vm831, %v536, %v538
  %v883 = vsel %vm831, %v538, %v540
  %v884 = vsel %vm831, %v540, %v542
  %v885 = vsel %vm831, %v542, %v544
  %v886 = vsel %vm831, %v544, %v546
  %v887 = vsel %vm831, %v546, %v548
  %v888 = vsel %vm831, %v548, %v550
  %v889 = vsel %vm831, %v550, %v552
  %v890 = vsel %vm831, %v552, %v554
  %v891 = vsel %vm831, %v554, %v556
  %v892 = vsel %vm831, %v556, %v558
  %v893 = vsel %vm831, %v558, %v560
  %v894 = vsel %vm831, %v560, %v562
  %v895 = vsel %vm831, %v562, %v564
  %v896 = vsel %vm831, %v564, %v566
  %v897 = vsel %vm831, %v566, %v568
  %v898 = vsel %vm831, %v568, %v570
  %v899 = vsel %vm831, %v570, %v572
  %v900 = vsel %vm831, %v572, %v574
  %v901 = vsel %vm831, %v574, %v576
  %v902 = vsel %vm831, %v576, %v578
  %v903 = vsel %vm831, %v578, %v580
  %v904 = vsel %vm831, %v582, %v584
  %v905 = vsel %vm831, %v584, %v586
  %v906 = vsel %vm831, %v586, %v588
  %v907 = vsel %vm831, %v588, %v590
  %v908 = vsel %vm831, %v590, %v592
  %v909 = vsel %vm831, %v592, %v594
  %v910 = vsel %vm831, %v594, %v596
  %v911 = vsel %vm831, %v596, %v598
  %v912 = vsel %vm831, %v598, %v600
  %v913 = vsel %vm831, %v600, %v602
  %v914 = vsel %vm831, %v602, %v604
  %v915 = vsel %vm831, %v604, %v606
  %v916 = vsel %vm831, %v606, %v608
  %v917 = vsel %vm831, %v608, %v610
  %v918 = vsel %vm831, %v610, %v612
  %v919 = vsel %vm831, %v612, %v614
  %v920 = vsel %vm831, %v614, %v616
  %v921 = vsel %vm831, %v616, %v618
  %v922 = vsel %vm831, %v618, %v620
  %v923 = vsel %vm831, %v620, %v622
  %v924 = vsel %vm831, %v622, %v624
  %v925 = vsel %vm831, %v624, %v626
  %v926 = vsel %vm831, %v626, %v628
  %v927 = vsel %vm831, %v628, %v630
  %v928 = vsel %vm831, %v632, %v634
  %v929 = vsel %vm831, %v634, %v636
  %v930 = vsel %vm831, %v636, %v638
  %v931 = vsel %vm831, %v638, %v640
  %v932 = vsel %vm831, %v640, %v642
  %v933 = vsel %vm831, %v642, %v644
  %v934 = vsel %vm831, %v644, %v646
  %v935 = vsel %vm831, %v646, %v648
  %v936 = vsel %vm831, %v648, %v650
  %v937 = vsel %vm831, %v650, %v652
  %v938 = vsel %vm831, %v652, %v654
  %v939 = vsel %vm831, %v654, %v656
  %v940 = vsel %vm831, %v656, %v658
  %v941 = vsel %vm831, %v658, %v660
  %v942 = vsel %vm831, %v660, %v662
  %v943 = vsel %vm831, %v662, %v664
  %v944 = vsel %vm831, %v664, %v666
  %v945 = vsel %vm831, %v666, %v668
  %v946 = vsel %vm831, %v668, %v670
  %v947 = vsel %vm831, %v670, %v672
  %v948 = vsel %vm831, %v672, %v674
  %v949 = vsel %vm831, %v674, %v676
  %v950 = vsel %vm831, %v676, %v678
  %v951 = vsel %vm831, %v678, %v680
  %v952 = vsel %vm831, %v682, %v684
  %v953 = vsel %vm831, %v684, %v686
  %v954 = vsel %vm831, %v686, %v688
  %v955 = vsel %vm831, %v688, %v690
  %v956 = vsel %vm831, %v690, %v692
  %v957 = vsel %vm831, %v692, %v694
  %v958 = vsel %vm831, %v694, %v696
  %v959 = vsel %vm831, %v696, %v698
  %v960 = vsel %vm831, %v698, %v700
  %v961 = vsel %vm831, %v700, %v702
  %v962 = vsel %vm831, %v702, %v704
  %v963 = vsel %vm831, %v704, %v706
  %v964 = vsel %vm831, %v706, %v708
  %v965 = vsel %vm831, %v708, %v710
  %v966 = vsel %vm831, %v710, %v712
  %v967 = vsel %vm831, %v712, %v714
  %v968 = vsel %vm831, %v714, %v716
  %v969 = vsel %vm831, %v716, %v718
  %v970 = vsel %vm831, %v718, %v720
  %v971 = vsel %vm831, %v720, %v722
  %v972 = vsel %vm831, %v722, %v724
  %v973 = vsel %vm831, %v724, %v726
  %v974 = vsel %vm831, %v726, %v728
  %v975 = vsel %vm831, %v728, %v730
  %v976 = vsel %vm831, %v732, %v734
  %v977 = vsel %vm831, %v734, %v736
  %v978 = vsel %vm831, %v736, %v738
  %v979 = vsel %vm831, %v738, %v740
  %v980 = vsel %vm831, %v740, %v742
  %v981 = vsel %vm831, %v742, %v744
  %v982 = vsel %vm831, %v744, %v746
  %v983 = vsel %vm831, %v746, %v748
  %v984 = vsel %vm831, %v748, %v750
  %v985 = vsel %vm831, %v750, %v752
  %v986 = vsel %vm831, %v752, %v754
  %v987 = vsel %vm831, %v754, %v756
  %v988 = vsel %vm831, %v756, %v758
  %v989 = vsel %vm831, %v758, %v760
  %v990 = vsel %vm831, %v760, %v762
  %v991 = vsel %vm831, %v762, %v764
  %v992 = vsel %vm831, %v764, %v766
  %v993 = vsel %vm831, %v766, %v768
  %v994 = vsel %vm831, %v768, %v770
  %v995 = vsel %vm831, %v770, %v772
  %v996 = vsel %vm831, %v772, %v774
  %v997 = vsel %vm831, %v774, %v776
  %v998 = vsel %vm831, %v776, %v778
  %v999 = vsel %vm831, %v778, %v780
  %v1000 = vsel %vm831, %v782, %v784
  %v1001 = vsel %vm831, %v784, %v786
  %v1002 = vsel %vm831, %v786, %v788
  %v1003 = vsel %vm831, %v788, %v790
  %v1004 = vsel %vm831, %v790, %v792
  %v1005 = vsel %vm831, %v792, %v794
  %v1006 = vsel %vm831, %v794, %v796
  %v1007 = vsel %vm831, %v796, %v798
  %v1008 = vsel %vm831, %v798, %v800
  %v1009 = vsel %vm831, %v800, %v802
  %v1010 = vsel %vm831, %v802, %v804
  %v1011 = vsel %vm831, %v804, %v806
  %v1012 = vsel %vm831, %v806, %v808
  %v1013 = vsel %vm831, %v808, %v810
  %v1014 = vsel %vm831, %v810, %v812
  %v1015 = vsel %vm831, %v812, %v814
  %v1016 = vsel %vm831, %v814, %v816
  %v1017 = vsel %vm831, %v816, %v818
  %v1018 = vsel %vm831, %v818, %v820
  %v1019 = vsel %vm831, %v820, %v822
  %v1020 = vsel %vm831, %v822, %v824
  %v1021 = vsel %vm831, %v824, %v826
  %v1022 = vsel %vm831, %v826, %v828
  %v1023 = vsel %vm831, %v828, %v830
  %vm1224 = vcmask 523264
  %v1226 = vsel %vm1224, %v223, 0
  %v1229 = vsel %vm1224, %v224, 0
  %v1232 = vsel %vm1224, %v225, 0
  %v1235 = vsel %vm1224, %v226, 0
  %v1238 = vsel %vm1224, %v227, 0
  %v1241 = vsel %vm1224, %v228, 0
  %v1244 = vsel %vm1224, %v229, 0
  %v1247 = vsel %vm1224, %v230, 0
  %1249 = vmatprep.subr.mxu0 0.0
  %1250 = vmatpush1.msra.mxu0 0.0
  %1251 = vmatprep.subr.mxu0 0.0
  %1252 = vmatpush1.msra.mxu0 0.0
  %1253 = vmatprep.subr.mxu0 0.0
  %1254 = vmatpush1.msra.mxu0 0.0
  %1255 = vmatprep.subr.mxu0 0.0
  %1256 = vmatpush1.msra.mxu0 0.0
  %1257 = vmatprep.subr.mxu0 0.0
  %1258 = vmatpush1.msra.mxu0 0.0
  %1259 = vmatprep.subr.mxu0 0.0
  %1260 = vmatpush1.msra.mxu0 0.0
  %1261 = vmatprep.subr.mxu0 0.0
  %1262 = vmatpush1.msra.mxu0 0.0
  %1263 = vmatprep.subr.mxu0 0.0
  %1264 = vmatpush1.msra.mxu0 0.0
  %1265 = vmatprep.subr.mxu0 %v1001
  %1266 = vmatpush1.msra.mxu0 %v1000
  %1267 = vmatprep.subr.mxu0 %v977
  %1268 = vmatpush1.msra.mxu0 %v976
  %1269 = vmatprep.subr.mxu0 %v953
  %1270 = vmatpush1.msra.mxu0 %v952
  %1271 = vmatprep.subr.mxu0 %v929
  %1272 = vmatpush1.msra.mxu0 %v928
  %1273 = vmatprep.subr.mxu0 %v905
  %1274 = vmatpush1.msra.mxu0 %v904
  %1275 = vmatprep.subr.mxu0 %v881
  %1276 = vmatpush1.msra.mxu0 %v880
  %1277 = vmatprep.subr.mxu0 %v857
  %1278 = vmatpush1.msra.mxu0 %v856
  %1279 = vmatprep.subr.mxu0 %v833
  %1280 = vmatpush1.msra.mxu0 %v832
  %1281 = vmatprep.subr.mxu0 0.0
  %1282 = vmatpush2.msra.mxu0 0.0
  %1283 = vmatprep.subr.mxu0 0.0
  %1284 = vmatpush2.msra.mxu0 0.0
  %1285 = vmatprep.subr.mxu0 0.0
  %1286 = vmatpush2.msra.mxu0 0.0
  %1287 = vmatprep.subr.mxu0 0.0
  %1288 = vmatpush2.msra.mxu0 0.0
  %1289 = vmatprep.subr.mxu0 0.0
  %1290 = vmatpush2.msra.mxu0 0.0
  %1291 = vmatprep.subr.mxu0 0.0
  %1292 = vmatpush2.msra.mxu0 0.0
  %1293 = vmatprep.subr.mxu0 0.0
  %1294 = vmatpush2.msra.mxu0 0.0
  %1295 = vmatprep.subr.mxu0 0.0
  %1296 = vmatpush2.msra.mxu0 0.0
  %1297 = vmatprep.subr.mxu0 0.0
  %1298 = vmatpush2.msra.mxu0 0.0
  %1299 = vmatprep.subr.mxu0 0.0
  %1300 = vmatpush2.msra.mxu0 0.0
  %1301 = vmatprep.subr.mxu0 0.0
  %1302 = vmatpush2.msra.mxu0 0.0
  %1303 = vmatprep.subr.mxu0 0.0
  %1304 = vmatpush2.msra.mxu0 0.0
  %1305 = vmatprep.subr.mxu0 0.0
  %1306 = vmatpush2.msra.mxu0 0.0
  %1307 = vmatprep.subr.mxu0 0.0
  %1308 = vmatpush2.msra.mxu0 0.0
  %1309 = vmatprep.subr.mxu0 0.0
  %1310 = vmatpush2.msra.mxu0 0.0
  %1311 = vmatprep.subr.mxu0 0.0
  %1312 = vmatpush2.msra.mxu0 0.0
  %1313 = vmatprep.mubr.f32.mxu0 0.0
  %1314 = vmatmul.mubr.f32.gmra.mxu0 %v1226
  %v1315 = vpop.f32.mrf.mxu0
  %v1316 = vadd.f32 0.0, %v1315
  %v1317 = vpop.f32.mrf.mxu0
  %v1318 = vadd.f32 0.0, %v1317
  %1319 = vmatprep.mubr.f32.mxu0 0.0
  %1320 = vmatmul.mubr.f32.gmra.mxu0 %v1229
  %v1321 = vpop.f32.mrf.mxu0
  %v1322 = vadd.f32 0.0, %v1321
  %v1323 = vpop.f32.mrf.mxu0
  %v1324 = vadd.f32 0.0, %v1323
  %1325 = vmatprep.mubr.f32.mxu0 0.0
  %1326 = vmatmul.mubr.f32.gmra.mxu0 %v1232
  %v1327 = vpop.f32.mrf.mxu0
  %v1328 = vadd.f32 0.0, %v1327
  %v1329 = vpop.f32.mrf.mxu0
  %v1330 = vadd.f32 0.0, %v1329
  %1331 = vmatprep.mubr.f32.mxu0 0.0
  %1332 = vmatmul.mubr.f32.gmra.mxu0 %v1235
  %v1333 = vpop.f32.mrf.mxu0
  %v1334 = vadd.f32 0.0, %v1333
  %v1335 = vpop.f32.mrf.mxu0
  %v1336 = vadd.f32 0.0, %v1335
  %1337 = vmatprep.mubr.f32.mxu0 0.0
  %1338 = vmatmul.mubr.f32.gmra.mxu0 %v1238
  %v1339 = vpop.f32.mrf.mxu0
  %v1340 = vadd.f32 0.0, %v1339
  %v1341 = vpop.f32.mrf.mxu0
  %v1342 = vadd.f32 0.0, %v1341
  %1343 = vmatprep.mubr.f32.mxu0 0.0
  %1344 = vmatmul.mubr.f32.gmra.mxu0 %v1241
  %v1345 = vpop.f32.mrf.mxu0
  %v1346 = vadd.f32 0.0, %v1345
  %v1347 = vpop.f32.mrf.mxu0
  %v1348 = vadd.f32 0.0, %v1347
  %1349 = vmatprep.mubr.f32.mxu0 0.0
  %1350 = vmatmul.mubr.f32.gmra.mxu0 %v1244
  %v1351 = vpop.f32.mrf.mxu0
  %v1352 = vadd.f32 0.0, %v1351
  %v1353 = vpop.f32.mrf.mxu0
  %v1354 = vadd.f32 0.0, %v1353
  %1355 = vmatprep.mubr.f32.mxu0 0.0
  %1356 = vmatmul.mubr.f32.gmra.mxu0 %v1247
  %v1357 = vpop.f32.mrf.mxu0
  %v1358 = vadd.f32 0.0, %v1357
  %v1359 = vpop.f32.mrf.mxu0
  %v1360 = vadd.f32 0.0, %v1359
  %1361 = vdwg.mxu0
  %1362 = vmatprep.subr.mxu0 0.0
  %1363 = vmatpush1.msra.mxu0 0.0
  %1364 = vmatprep.subr.mxu0 0.0
  %1365 = vmatpush1.msra.mxu0 0.0
  %1366 = vmatprep.subr.mxu0 0.0
  %1367 = vmatpush1.msra.mxu0 0.0
  %1368 = vmatprep.subr.mxu0 0.0
  %1369 = vmatpush1.msra.mxu0 0.0
  %1370 = vmatprep.subr.mxu0 0.0
  %1371 = vmatpush1.msra.mxu0 0.0
  %1372 = vmatprep.subr.mxu0 0.0
  %1373 = vmatpush1.msra.mxu0 0.0
  %1374 = vmatprep.subr.mxu0 0.0
  %1375 = vmatpush1.msra.mxu0 0.0
  %1376 = vmatprep.subr.mxu0 0.0
  %1377 = vmatpush1.msra.mxu0 0.0
  %1378 = vmatprep.subr.mxu0 %v1003
  %1379 = vmatpush1.msra.mxu0 %v1002
  %1380 = vmatprep.subr.mxu0 %v979
  %1381 = vmatpush1.msra.mxu0 %v978
  %1382 = vmatprep.subr.mxu0 %v955
  %1383 = vmatpush1.msra.mxu0 %v954
  %1384 = vmatprep.subr.mxu0 %v931
  %1385 = vmatpush1.msra.mxu0 %v930
  %1386 = vmatprep.subr.mxu0 %v907
  %1387 = vmatpush1.msra.mxu0 %v906
  %1388 = vmatprep.subr.mxu0 %v883
  %1389 = vmatpush1.msra.mxu0 %v882
  %1390 = vmatprep.subr.mxu0 %v859
  %1391 = vmatpush1.msra.mxu0 %v858
  %1392 = vmatprep.subr.mxu0 %v835
  %1393 = vmatpush1.msra.mxu0 %v834
  %1394 = vmatprep.subr.mxu0 0.0
  %1395 = vmatpush2.msra.mxu0 0.0
  %1396 = vmatprep.subr.mxu0 0.0
  %1397 = vmatpush2.msra.mxu0 0.0
  %1398 = vmatprep.subr.mxu0 0.0
  %1399 = vmatpush2.msra.mxu0 0.0
  %1400 = vmatprep.subr.mxu0 0.0
  %1401 = vmatpush2.msra.mxu0 0.0
  %1402 = vmatprep.subr.mxu0 0.0
  %1403 = vmatpush2.msra.mxu0 0.0
  %1404 = vmatprep.subr.mxu0 0.0
  %1405 = vmatpush2.msra.mxu0 0.0
  %1406 = vmatprep.subr.mxu0 0.0
  %1407 = vmatpush2.msra.mxu0 0.0
  %1408 = vmatprep.subr.mxu0 0.0
  %1409 = vmatpush2.msra.mxu0 0.0
  %1410 = vmatprep.subr.mxu0 0.0
  %1411 = vmatpush2.msra.mxu0 0.0
  %1412 = vmatprep.subr.mxu0 0.0
  %1413 = vmatpush2.msra.mxu0 0.0
  %1414 = vmatprep.subr.mxu0 0.0
  %1415 = vmatpush2.msra.mxu0 0.0
  %1416 = vmatprep.subr.mxu0 0.0
  %1417 = vmatpush2.msra.mxu0 0.0
  %1418 = vmatprep.subr.mxu0 0.0
  %1419 = vmatpush2.msra.mxu0 0.0
  %1420 = vmatprep.subr.mxu0 0.0
  %1421 = vmatpush2.msra.mxu0 0.0
  %1422 = vmatprep.subr.mxu0 0.0
  %1423 = vmatpush2.msra.mxu0 0.0
  %1424 = vmatprep.subr.mxu0 0.0
  %1425 = vmatpush2.msra.mxu0 0.0
  %1426 = vmatprep.mubr.f32.mxu0 0.0
  %1427 = vmatmul.mubr.f32.gmra.mxu0 %v1226
  %v1428 = vpop.f32.mrf.mxu0
  %v1429 = vadd.f32 0.0, %v1428
  %v1430 = vpop.f32.mrf.mxu0
  %v1431 = vadd.f32 0.0, %v1430
  %1432 = vmatprep.mubr.f32.mxu0 0.0
  %1433 = vmatmul.mubr.f32.gmra.mxu0 %v1229
  %v1434 = vpop.f32.mrf.mxu0
  %v1435 = vadd.f32 0.0, %v1434
  %v1436 = vpop.f32.mrf.mxu0
  %v1437 = vadd.f32 0.0, %v1436
  %1438 = vmatprep.mubr.f32.mxu0 0.0
  %1439 = vmatmul.mubr.f32.gmra.mxu0 %v1232
  %v1440 = vpop.f32.mrf.mxu0
  %v1441 = vadd.f32 0.0, %v1440
  %v1442 = vpop.f32.mrf.mxu0
  %v1443 = vadd.f32 0.0, %v1442
  %1444 = vmatprep.mubr.f32.mxu0 0.0
  %1445 = vmatmul.mubr.f32.gmra.mxu0 %v1235
  %v1446 = vpop.f32.mrf.mxu0
  %v1447 = vadd.f32 0.0, %v1446
  %v1448 = vpop.f32.mrf.mxu0
  %v1449 = vadd.f32 0.0, %v1448
  %1450 = vmatprep.mubr.f32.mxu0 0.0
  %1451 = vmatmul.mubr.f32.gmra.mxu0 %v1238
  %v1452 = vpop.f32.mrf.mxu0
  %v1453 = vadd.f32 0.0, %v1452
  %v1454 = vpop.f32.mrf.mxu0
  %v1455 = vadd.f32 0.0, %v1454
  %1456 = vmatprep.mubr.f32.mxu0 0.0
  %1457 = vmatmul.mubr.f32.gmra.mxu0 %v1241
  %v1458 = vpop.f32.mrf.mxu0
  %v1459 = vadd.f32 0.0, %v1458
  %v1460 = vpop.f32.mrf.mxu0
  %v1461 = vadd.f32 0.0, %v1460
  %1462 = vmatprep.mubr.f32.mxu0 0.0
  %1463 = vmatmul.mubr.f32.gmra.mxu0 %v1244
  %v1464 = vpop.f32.mrf.mxu0
  %v1465 = vadd.f32 0.0, %v1464
  %v1466 = vpop.f32.mrf.mxu0
  %v1467 = vadd.f32 0.0, %v1466
  %1468 = vmatprep.mubr.f32.mxu0 0.0
  %1469 = vmatmul.mubr.f32.gmra.mxu0 %v1247
  %v1470 = vpop.f32.mrf.mxu0
  %v1471 = vadd.f32 0.0, %v1470
  %v1472 = vpop.f32.mrf.mxu0
  %v1473 = vadd.f32 0.0, %v1472
  %1474 = vdwg.mxu0
  %1475 = vmatprep.subr.mxu0 0.0
  %1476 = vmatpush1.msra.mxu0 0.0
  %1477 = vmatprep.subr.mxu0 0.0
  %1478 = vmatpush1.msra.mxu0 0.0
  %1479 = vmatprep.subr.mxu0 0.0
  %1480 = vmatpush1.msra.mxu0 0.0
  %1481 = vmatprep.subr.mxu0 0.0
  %1482 = vmatpush1.msra.mxu0 0.0
  %1483 = vmatprep.subr.mxu0 0.0
  %1484 = vmatpush1.msra.mxu0 0.0
  %1485 = vmatprep.subr.mxu0 0.0
  %1486 = vmatpush1.msra.mxu0 0.0
  %1487 = vmatprep.subr.mxu0 0.0
  %1488 = vmatpush1.msra.mxu0 0.0
  %1489 = vmatprep.subr.mxu0 0.0
  %1490 = vmatpush1.msra.mxu0 0.0
  %1491 = vmatprep.subr.mxu0 %v1005
  %1492 = vmatpush1.msra.mxu0 %v1004
  %1493 = vmatprep.subr.mxu0 %v981
  %1494 = vmatpush1.msra.mxu0 %v980
  %1495 = vmatprep.subr.mxu0 %v957
  %1496 = vmatpush1.msra.mxu0 %v956
  %1497 = vmatprep.subr.mxu0 %v933
  %1498 = vmatpush1.msra.mxu0 %v932
  %1499 = vmatprep.subr.mxu0 %v909
  %1500 = vmatpush1.msra.mxu0 %v908
  %1501 = vmatprep.subr.mxu0 %v885
  %1502 = vmatpush1.msra.mxu0 %v884
  %1503 = vmatprep.subr.mxu0 %v861
  %1504 = vmatpush1.msra.mxu0 %v860
  %1505 = vmatprep.subr.mxu0 %v837
  %1506 = vmatpush1.msra.mxu0 %v836
  %1507 = vmatprep.subr.mxu0 0.0
  %1508 = vmatpush2.msra.mxu0 0.0
  %1509 = vmatprep.subr.mxu0 0.0
  %1510 = vmatpush2.msra.mxu0 0.0
  %1511 = vmatprep.subr.mxu0 0.0
  %1512 = vmatpush2.msra.mxu0 0.0
  %1513 = vmatprep.subr.mxu0 0.0
  %1514 = vmatpush2.msra.mxu0 0.0
  %1515 = vmatprep.subr.mxu0 0.0
  %1516 = vmatpush2.msra.mxu0 0.0
  %1517 = vmatprep.subr.mxu0 0.0
  %1518 = vmatpush2.msra.mxu0 0.0
  %1519 = vmatprep.subr.mxu0 0.0
  %1520 = vmatpush2.msra.mxu0 0.0
  %1521 = vmatprep.subr.mxu0 0.0
  %1522 = vmatpush2.msra.mxu0 0.0
  %1523 = vmatprep.subr.mxu0 0.0
  %1524 = vmatpush2.msra.mxu0 0.0
  %1525 = vmatprep.subr.mxu0 0.0
  %1526 = vmatpush2.msra.mxu0 0.0
  %1527 = vmatprep.subr.mxu0 0.0
  %1528 = vmatpush2.msra.mxu0 0.0
  %1529 = vmatprep.subr.mxu0 0.0
  %1530 = vmatpush2.msra.mxu0 0.0
  %1531 = vmatprep.subr.mxu0 0.0
  %1532 = vmatpush2.msra.mxu0 0.0
  %1533 = vmatprep.subr.mxu0 0.0
  %1534 = vmatpush2.msra.mxu0 0.0
  %1535 = vmatprep.subr.mxu0 0.0
  %1536 = vmatpush2.msra.mxu0 0.0
  %1537 = vmatprep.subr.mxu0 0.0
  %1538 = vmatpush2.msra.mxu0 0.0
  %1539 = vmatprep.mubr.f32.mxu0 0.0
  %1540 = vmatmul.mubr.f32.gmra.mxu0 %v1226
  %v1541 = vpop.f32.mrf.mxu0
  %v1542 = vadd.f32 0.0, %v1541
  %v1543 = vpop.f32.mrf.mxu0
  %v1544 = vadd.f32 0.0, %v1543
  %1545 = vmatprep.mubr.f32.mxu0 0.0
  %1546 = vmatmul.mubr.f32.gmra.mxu0 %v1229
  %v1547 = vpop.f32.mrf.mxu0
  %v1548 = vadd.f32 0.0, %v1547
  %v1549 = vpop.f32.mrf.mxu0
  %v1550 = vadd.f32 0.0, %v1549
  %1551 = vmatprep.mubr.f32.mxu0 0.0
  %1552 = vmatmul.mubr.f32.gmra.mxu0 %v1232
  %v1553 = vpop.f32.mrf.mxu0
  %v1554 = vadd.f32 0.0, %v1553
  %v1555 = vpop.f32.mrf.mxu0
  %v1556 = vadd.f32 0.0, %v1555
  %1557 = vmatprep.mubr.f32.mxu0 0.0
  %1558 = vmatmul.mubr.f32.gmra.mxu0 %v1235
  %v1559 = vpop.f32.mrf.mxu0
  %v1560 = vadd.f32 0.0, %v1559
  %v1561 = vpop.f32.mrf.mxu0
  %v1562 = vadd.f32 0.0, %v1561
  %1563 = vmatprep.mubr.f32.mxu0 0.0
  %1564 = vmatmul.mubr.f32.gmra.mxu0 %v1238
  %v1565 = vpop.f32.mrf.mxu0
  %v1566 = vadd.f32 0.0, %v1565
  %v1567 = vpop.f32.mrf.mxu0
  %v1568 = vadd.f32 0.0, %v1567
  %1569 = vmatprep.mubr.f32.mxu0 0.0
  %1570 = vmatmul.mubr.f32.gmra.mxu0 %v1241
  %v1571 = vpop.f32.mrf.mxu0
  %v1572 = vadd.f32 0.0, %v1571
  %v1573 = vpop.f32.mrf.mxu0
  %v1574 = vadd.f32 0.0, %v1573
  %1575 = vmatprep.mubr.f32.mxu0 0.0
  %1576 = vmatmul.mubr.f32.gmra.mxu0 %v1244
  %v1577 = vpop.f32.mrf.mxu0
  %v1578 = vadd.f32 0.0, %v1577
  %v1579 = vpop.f32.mrf.mxu0
  %v1580 = vadd.f32 0.0, %v1579
  %1581 = vmatprep.mubr.f32.mxu0 0.0
  %1582 = vmatmul.mubr.f32.gmra.mxu0 %v1247
  %v1583 = vpop.f32.mrf.mxu0
  %v1584 = vadd.f32 0.0, %v1583
  %v1585 = vpop.f32.mrf.mxu0
  %v1586 = vadd.f32 0.0, %v1585
  %1587 = vdwg.mxu0
  %1588 = vmatprep.subr.mxu0 0.0
  %1589 = vmatpush1.msra.mxu0 0.0
  %1590 = vmatprep.subr.mxu0 0.0
  %1591 = vmatpush1.msra.mxu0 0.0
  %1592 = vmatprep.subr.mxu0 0.0
  %1593 = vmatpush1.msra.mxu0 0.0
  %1594 = vmatprep.subr.mxu0 0.0
  %1595 = vmatpush1.msra.mxu0 0.0
  %1596 = vmatprep.subr.mxu0 0.0
  %1597 = vmatpush1.msra.mxu0 0.0
  %1598 = vmatprep.subr.mxu0 0.0
  %1599 = vmatpush1.msra.mxu0 0.0
  %1600 = vmatprep.subr.mxu0 0.0
  %1601 = vmatpush1.msra.mxu0 0.0
  %1602 = vmatprep.subr.mxu0 0.0
  %1603 = vmatpush1.msra.mxu0 0.0
  %1604 = vmatprep.subr.mxu0 %v1007
  %1605 = vmatpush1.msra.mxu0 %v1006
  %1606 = vmatprep.subr.mxu0 %v983
  %1607 = vmatpush1.msra.mxu0 %v982
  %1608 = vmatprep.subr.mxu0 %v959
  %1609 = vmatpush1.msra.mxu0 %v958
  %1610 = vmatprep.subr.mxu0 %v935
  %1611 = vmatpush1.msra.mxu0 %v934
  %1612 = vmatprep.subr.mxu0 %v911
  %1613 = vmatpush1.msra.mxu0 %v910
  %1614 = vmatprep.subr.mxu0 %v887
  %1615 = vmatpush1.msra.mxu0 %v886
  %1616 = vmatprep.subr.mxu0 %v863
  %1617 = vmatpush1.msra.mxu0 %v862
  %1618 = vmatprep.subr.mxu0 %v839
  %1619 = vmatpush1.msra.mxu0 %v838
  %1620 = vmatprep.subr.mxu0 0.0
  %1621 = vmatpush2.msra.mxu0 0.0
  %1622 = vmatprep.subr.mxu0 0.0
  %1623 = vmatpush2.msra.mxu0 0.0
  %1624 = vmatprep.subr.mxu0 0.0
  %1625 = vmatpush2.msra.mxu0 0.0
  %1626 = vmatprep.subr.mxu0 0.0
  %1627 = vmatpush2.msra.mxu0 0.0
  %1628 = vmatprep.subr.mxu0 0.0
  %1629 = vmatpush2.msra.mxu0 0.0
  %1630 = vmatprep.subr.mxu0 0.0
  %1631 = vmatpush2.msra.mxu0 0.0
  %1632 = vmatprep.subr.mxu0 0.0
  %1633 = vmatpush2.msra.mxu0 0.0
  %1634 = vmatprep.subr.mxu0 0.0
  %1635 = vmatpush2.msra.mxu0 0.0
  %1636 = vmatprep.subr.mxu0 0.0
  %1637 = vmatpush2.msra.mxu0 0.0
  %1638 = vmatprep.subr.mxu0 0.0
  %1639 = vmatpush2.msra.mxu0 0.0
  %1640 = vmatprep.subr.mxu0 0.0
  %1641 = vmatpush2.msra.mxu0 0.0
  %1642 = vmatprep.subr.mxu0 0.0
  %1643 = vmatpush2.msra.mxu0 0.0
  %1644 = vmatprep.subr.mxu0 0.0
  %1645 = vmatpush2.msra.mxu0 0.0
  %1646 = vmatprep.subr.mxu0 0.0
  %1647 = vmatpush2.msra.mxu0 0.0
  %1648 = vmatprep.subr.mxu0 0.0
  %1649 = vmatpush2.msra.mxu0 0.0
  %1650 = vmatprep.subr.mxu0 0.0
  %1651 = vmatpush2.msra.mxu0 0.0
  %1652 = vmatprep.mubr.f32.mxu0 0.0
  %1653 = vmatmul.mubr.f32.gmra.mxu0 %v1226
  %v1654 = vpop.f32.mrf.mxu0
  %v1655 = vadd.f32 0.0, %v1654
  %v1656 = vpop.f32.mrf.mxu0
  %v1657 = vadd.f32 0.0, %v1656
  %1658 = vmatprep.mubr.f32.mxu0 0.0
  %1659 = vmatmul.mubr.f32.gmra.mxu0 %v1229
  %v1660 = vpop.f32.mrf.mxu0
  %v1661 = vadd.f32 0.0, %v1660
  %v1662 = vpop.f32.mrf.mxu0
  %v1663 = vadd.f32 0.0, %v1662
  %1664 = vmatprep.mubr.f32.mxu0 0.0
  %1665 = vmatmul.mubr.f32.gmra.mxu0 %v1232
  %v1666 = vpop.f32.mrf.mxu0
  %v1667 = vadd.f32 0.0, %v1666
  %v1668 = vpop.f32.mrf.mxu0
  %v1669 = vadd.f32 0.0, %v1668
  %1670 = vmatprep.mubr.f32.mxu0 0.0
  %1671 = vmatmul.mubr.f32.gmra.mxu0 %v1235
  %v1672 = vpop.f32.mrf.mxu0
  %v1673 = vadd.f32 0.0, %v1672
  %v1674 = vpop.f32.mrf.mxu0
  %v1675 = vadd.f32 0.0, %v1674
  %1676 = vmatprep.mubr.f32.mxu0 0.0
  %1677 = vmatmul.mubr.f32.gmra.mxu0 %v1238
  %v1678 = vpop.f32.mrf.mxu0
  %v1679 = vadd.f32 0.0, %v1678
  %v1680 = vpop.f32.mrf.mxu0
  %v1681 = vadd.f32 0.0, %v1680
  %1682 = vmatprep.mubr.f32.mxu0 0.0
  %1683 = vmatmul.mubr.f32.gmra.mxu0 %v1241
  %v1684 = vpop.f32.mrf.mxu0
  %v1685 = vadd.f32 0.0, %v1684
  %v1686 = vpop.f32.mrf.mxu0
  %v1687 = vadd.f32 0.0, %v1686
  %1688 = vmatprep.mubr.f32.mxu0 0.0
  %1689 = vmatmul.mubr.f32.gmra.mxu0 %v1244
  %v1690 = vpop.f32.mrf.mxu0
  %v1691 = vadd.f32 0.0, %v1690
  %v1692 = vpop.f32.mrf.mxu0
  %v1693 = vadd.f32 0.0, %v1692
  %1694 = vmatprep.mubr.f32.mxu0 0.0
  %1695 = vmatmul.mubr.f32.gmra.mxu0 %v1247
  %v1696 = vpop.f32.mrf.mxu0
  %v1697 = vadd.f32 0.0, %v1696
  %v1698 = vpop.f32.mrf.mxu0
  %v1699 = vadd.f32 0.0, %v1698
  %1700 = vdwg.mxu0
  %1701 = vmatprep.subr.mxu0 0.0
  %1702 = vmatpush1.msra.mxu0 0.0
  %1703 = vmatprep.subr.mxu0 0.0
  %1704 = vmatpush1.msra.mxu0 0.0
  %1705 = vmatprep.subr.mxu0 0.0
  %1706 = vmatpush1.msra.mxu0 0.0
  %1707 = vmatprep.subr.mxu0 0.0
  %1708 = vmatpush1.msra.mxu0 0.0
  %1709 = vmatprep.subr.mxu0 0.0
  %1710 = vmatpush1.msra.mxu0 0.0
  %1711 = vmatprep.subr.mxu0 0.0
  %1712 = vmatpush1.msra.mxu0 0.0
  %1713 = vmatprep.subr.mxu0 0.0
  %1714 = vmatpush1.msra.mxu0 0.0
  %1715 = vmatprep.subr.mxu0 0.0
  %1716 = vmatpush1.msra.mxu0 0.0
  %1717 = vmatprep.subr.mxu0 %v1009
  %1718 = vmatpush1.msra.mxu0 %v1008
  %1719 = vmatprep.subr.mxu0 %v985
  %1720 = vmatpush1.msra.mxu0 %v984
  %1721 = vmatprep.subr.mxu0 %v961
  %1722 = vmatpush1.msra.mxu0 %v960
  %1723 = vmatprep.subr.mxu0 %v937
  %1724 = vmatpush1.msra.mxu0 %v936
  %1725 = vmatprep.subr.mxu0 %v913
  %1726 = vmatpush1.msra.mxu0 %v912
  %1727 = vmatprep.subr.mxu0 %v889
  %1728 = vmatpush1.msra.mxu0 %v888
  %1729 = vmatprep.subr.mxu0 %v865
  %1730 = vmatpush1.msra.mxu0 %v864
  %1731 = vmatprep.subr.mxu0 %v841
  %1732 = vmatpush1.msra.mxu0 %v840
  %1733 = vmatprep.subr.mxu0 0.0
  %1734 = vmatpush2.msra.mxu0 0.0
  %1735 = vmatprep.subr.mxu0 0.0
  %1736 = vmatpush2.msra.mxu0 0.0
  %1737 = vmatprep.subr.mxu0 0.0
  %1738 = vmatpush2.msra.mxu0 0.0
  %1739 = vmatprep.subr.mxu0 0.0
  %1740 = vmatpush2.msra.mxu0 0.0
  %1741 = vmatprep.subr.mxu0 0.0
  %1742 = vmatpush2.msra.mxu0 0.0
  %1743 = vmatprep.subr.mxu0 0.0
  %1744 = vmatpush2.msra.mxu0 0.0
  %1745 = vmatprep.subr.mxu0 0.0
  %1746 = vmatpush2.msra.mxu0 0.0
  %1747 = vmatprep.subr.mxu0 0.0
  %1748 = vmatpush2.msra.mxu0 0.0
  %1749 = vmatprep.subr.mxu0 0.0
  %1750 = vmatpush2.msra.mxu0 0.0
  %1751 = vmatprep.subr.mxu0 0.0
  %1752 = vmatpush2.msra.mxu0 0.0
  %1753 = vmatprep.subr.mxu0 0.0
  %1754 = vmatpush2.msra.mxu0 0.0
  %1755 = vmatprep.subr.mxu0 0.0
  %1756 = vmatpush2.msra.mxu0 0.0
  %1757 = vmatprep.subr.mxu0 0.0
  %1758 = vmatpush2.msra.mxu0 0.0
  %1759 = vmatprep.subr.mxu0 0.0
  %1760 = vmatpush2.msra.mxu0 0.0
  %1761 = vmatprep.subr.mxu0 0.0
  %1762 = vmatpush2.msra.mxu0 0.0
  %1763 = vmatprep.subr.mxu0 0.0
  %1764 = vmatpush2.msra.mxu0 0.0
  %1765 = vmatprep.mubr.f32.mxu0 0.0
  %1766 = vmatmul.mubr.f32.gmra.mxu0 %v1226
  %v1767 = vpop.f32.mrf.mxu0
  %v1768 = vadd.f32 0.0, %v1767
  %v1769 = vpop.f32.mrf.mxu0
  %v1770 = vadd.f32 0.0, %v1769
  %1771 = vmatprep.mubr.f32.mxu0 0.0
  %1772 = vmatmul.mubr.f32.gmra.mxu0 %v1229
  %v1773 = vpop.f32.mrf.mxu0
  %v1774 = vadd.f32 0.0, %v1773
  %v1775 = vpop.f32.mrf.mxu0
  %v1776 = vadd.f32 0.0, %v1775
  %1777 = vmatprep.mubr.f32.mxu0 0.0
  %1778 = vmatmul.mubr.f32.gmra.mxu0 %v1232
  %v1779 = vpop.f32.mrf.mxu0
  %v1780 = vadd.f32 0.0, %v1779
  %v1781 = vpop.f32.mrf.mxu0
  %v1782 = vadd.f32 0.0, %v1781
  %1783 = vmatprep.mubr.f32.mxu0 0.0
  %1784 = vmatmul.mubr.f32.gmra.mxu0 %v1235
  %v1785 = vpop.f32.mrf.mxu0
  %v1786 = vadd.f32 0.0, %v1785
  %v1787 = vpop.f32.mrf.mxu0
  %v1788 = vadd.f32 0.0, %v1787
  %1789 = vmatprep.mubr.f32.mxu0 0.0
  %1790 = vmatmul.mubr.f32.gmra.mxu0 %v1238
  %v1791 = vpop.f32.mrf.mxu0
  %v1792 = vadd.f32 0.0, %v1791
  %v1793 = vpop.f32.mrf.mxu0
  %v1794 = vadd.f32 0.0, %v1793
  %1795 = vmatprep.mubr.f32.mxu0 0.0
  %1796 = vmatmul.mubr.f32.gmra.mxu0 %v1241
  %v1797 = vpop.f32.mrf.mxu0
  %v1798 = vadd.f32 0.0, %v1797
  %v1799 = vpop.f32.mrf.mxu0
  %v1800 = vadd.f32 0.0, %v1799
  %1801 = vmatprep.mubr.f32.mxu0 0.0
  %1802 = vmatmul.mubr.f32.gmra.mxu0 %v1244
  %v1803 = vpop.f32.mrf.mxu0
  %v1804 = vadd.f32 0.0, %v1803
  %v1805 = vpop.f32.mrf.mxu0
  %v1806 = vadd.f32 0.0, %v1805
  %1807 = vmatprep.mubr.f32.mxu0 0.0
  %1808 = vmatmul.mubr.f32.gmra.mxu0 %v1247
  %v1809 = vpop.f32.mrf.mxu0
  %v1810 = vadd.f32 0.0, %v1809
  %v1811 = vpop.f32.mrf.mxu0
  %v1812 = vadd.f32 0.0, %v1811
  %1813 = vdwg.mxu0
  %1814 = vmatprep.subr.mxu0 0.0
  %1815 = vmatpush1.msra.mxu0 0.0
  %1816 = vmatprep.subr.mxu0 0.0
  %1817 = vmatpush1.msra.mxu0 0.0
  %1818 = vmatprep.subr.mxu0 0.0
  %1819 = vmatpush1.msra.mxu0 0.0
  %1820 = vmatprep.subr.mxu0 0.0
  %1821 = vmatpush1.msra.mxu0 0.0
  %1822 = vmatprep.subr.mxu0 0.0
  %1823 = vmatpush1.msra.mxu0 0.0
  %1824 = vmatprep.subr.mxu0 0.0
  %1825 = vmatpush1.msra.mxu0 0.0
  %1826 = vmatprep.subr.mxu0 0.0
  %1827 = vmatpush1.msra.mxu0 0.0
  %1828 = vmatprep.subr.mxu0 0.0
  %1829 = vmatpush1.msra.mxu0 0.0
  %1830 = vmatprep.subr.mxu0 %v1011
  %1831 = vmatpush1.msra.mxu0 %v1010
  %1832 = vmatprep.subr.mxu0 %v987
  %1833 = vmatpush1.msra.mxu0 %v986
  %1834 = vmatprep.subr.mxu0 %v963
  %1835 = vmatpush1.msra.mxu0 %v962
  %1836 = vmatprep.subr.mxu0 %v939
  %1837 = vmatpush1.msra.mxu0 %v938
  %1838 = vmatprep.subr.mxu0 %v915
  %1839 = vmatpush1.msra.mxu0 %v914
  %1840 = vmatprep.subr.mxu0 %v891
  %1841 = vmatpush1.msra.mxu0 %v890
  %1842 = vmatprep.subr.mxu0 %v867
  %1843 = vmatpush1.msra.mxu0 %v866
  %1844 = vmatprep.subr.mxu0 %v843
  %1845 = vmatpush1.msra.mxu0 %v842
  %1846 = vmatprep.subr.mxu0 0.0
  %1847 = vmatpush2.msra.mxu0 0.0
  %1848 = vmatprep.subr.mxu0 0.0
  %1849 = vmatpush2.msra.mxu0 0.0
  %1850 = vmatprep.subr.mxu0 0.0
  %1851 = vmatpush2.msra.mxu0 0.0
  %1852 = vmatprep.subr.mxu0 0.0
  %1853 = vmatpush2.msra.mxu0 0.0
  %1854 = vmatprep.subr.mxu0 0.0
  %1855 = vmatpush2.msra.mxu0 0.0
  %1856 = vmatprep.subr.mxu0 0.0
  %1857 = vmatpush2.msra.mxu0 0.0
  %1858 = vmatprep.subr.mxu0 0.0
  %1859 = vmatpush2.msra.mxu0 0.0
  %1860 = vmatprep.subr.mxu0 0.0
  %1861 = vmatpush2.msra.mxu0 0.0
  %1862 = vmatprep.subr.mxu0 0.0
  %1863 = vmatpush2.msra.mxu0 0.0
  %1864 = vmatprep.subr.mxu0 0.0
  %1865 = vmatpush2.msra.mxu0 0.0
  %1866 = vmatprep.subr.mxu0 0.0
  %1867 = vmatpush2.msra.mxu0 0.0
  %1868 = vmatprep.subr.mxu0 0.0
  %1869 = vmatpush2.msra.mxu0 0.0
  %1870 = vmatprep.subr.mxu0 0.0
  %1871 = vmatpush2.msra.mxu0 0.0
  %1872 = vmatprep.subr.mxu0 0.0
  %1873 = vmatpush2.msra.mxu0 0.0
  %1874 = vmatprep.subr.mxu0 0.0
  %1875 = vmatpush2.msra.mxu0 0.0
  %1876 = vmatprep.subr.mxu0 0.0
  %1877 = vmatpush2.msra.mxu0 0.0
  %1878 = vmatprep.mubr.f32.mxu0 0.0
  %1879 = vmatmul.mubr.f32.gmra.mxu0 %v1226
  %v1880 = vpop.f32.mrf.mxu0
  %v1881 = vadd.f32 0.0, %v1880
  %v1882 = vpop.f32.mrf.mxu0
  %v1883 = vadd.f32 0.0, %v1882
  %1884 = vmatprep.mubr.f32.mxu0 0.0
  %1885 = vmatmul.mubr.f32.gmra.mxu0 %v1229
  %v1886 = vpop.f32.mrf.mxu0
  %v1887 = vadd.f32 0.0, %v1886
  %v1888 = vpop.f32.mrf.mxu0
  %v1889 = vadd.f32 0.0, %v1888
  %1890 = vmatprep.mubr.f32.mxu0 0.0
  %1891 = vmatmul.mubr.f32.gmra.mxu0 %v1232
  %v1892 = vpop.f32.mrf.mxu0
  %v1893 = vadd.f32 0.0, %v1892
  %v1894 = vpop.f32.mrf.mxu0
  %v1895 = vadd.f32 0.0, %v1894
  %1896 = vmatprep.mubr.f32.mxu0 0.0
  %1897 = vmatmul.mubr.f32.gmra.mxu0 %v1235
  %v1898 = vpop.f32.mrf.mxu0
  %v1899 = vadd.f32 0.0, %v1898
  %v1900 = vpop.f32.mrf.mxu0
  %v1901 = vadd.f32 0.0, %v1900
  %1902 = vmatprep.mubr.f32.mxu0 0.0
  %1903 = vmatmul.mubr.f32.gmra.mxu0 %v1238
  %v1904 = vpop.f32.mrf.mxu0
  %v1905 = vadd.f32 0.0, %v1904
  %v1906 = vpop.f32.mrf.mxu0
  %v1907 = vadd.f32 0.0, %v1906
  %1908 = vmatprep.mubr.f32.mxu0 0.0
  %1909 = vmatmul.mubr.f32.gmra.mxu0 %v1241
  %v1910 = vpop.f32.mrf.mxu0
  %v1911 = vadd.f32 0.0, %v1910
  %v1912 = vpop.f32.mrf.mxu0
  %v1913 = vadd.f32 0.0, %v1912
  %1914 = vmatprep.mubr.f32.mxu0 0.0
  %1915 = vmatmul.mubr.f32.gmra.mxu0 %v1244
  %v1916 = vpop.f32.mrf.mxu0
  %v1917 = vadd.f32 0.0, %v1916
  %v1918 = vpop.f32.mrf.mxu0
  %v1919 = vadd.f32 0.0, %v1918
  %1920 = vmatprep.mubr.f32.mxu0 0.0
  %1921 = vmatmul.mubr.f32.gmra.mxu0 %v1247
  %v1922 = vpop.f32.mrf.mxu0
  %v1923 = vadd.f32 0.0, %v1922
  %v1924 = vpop.f32.mrf.mxu0
  %v1925 = vadd.f32 0.0, %v1924
  %1926 = vdwg.mxu0
  %1927 = vmatprep.subr.mxu0 0.0
  %1928 = vmatpush1.msra.mxu0 0.0
  %1929 = vmatprep.subr.mxu0 0.0
  %1930 = vmatpush1.msra.mxu0 0.0
  %1931 = vmatprep.subr.mxu0 0.0
  %1932 = vmatpush1.msra.mxu0 0.0
  %1933 = vmatprep.subr.mxu0 0.0
  %1934 = vmatpush1.msra.mxu0 0.0
  %1935 = vmatprep.subr.mxu0 0.0
  %1936 = vmatpush1.msra.mxu0 0.0
  %1937 = vmatprep.subr.mxu0 0.0
  %1938 = vmatpush1.msra.mxu0 0.0
  %1939 = vmatprep.subr.mxu0 0.0
  %1940 = vmatpush1.msra.mxu0 0.0
  %1941 = vmatprep.subr.mxu0 0.0
  %1942 = vmatpush1.msra.mxu0 0.0
  %1943 = vmatprep.subr.mxu0 %v1013
  %1944 = vmatpush1.msra.mxu0 %v1012
  %1945 = vmatprep.subr.mxu0 %v989
  %1946 = vmatpush1.msra.mxu0 %v988
  %1947 = vmatprep.subr.mxu0 %v965
  %1948 = vmatpush1.msra.mxu0 %v964
  %1949 = vmatprep.subr.mxu0 %v941
  %1950 = vmatpush1.msra.mxu0 %v940
  %1951 = vmatprep.subr.mxu0 %v917
  %1952 = vmatpush1.msra.mxu0 %v916
  %1953 = vmatprep.subr.mxu0 %v893
  %1954 = vmatpush1.msra.mxu0 %v892
  %1955 = vmatprep.subr.mxu0 %v869
  %1956 = vmatpush1.msra.mxu0 %v868
  %1957 = vmatprep.subr.mxu0 %v845
  %1958 = vmatpush1.msra.mxu0 %v844
  %1959 = vmatprep.subr.mxu0 0.0
  %1960 = vmatpush2.msra.mxu0 0.0
  %1961 = vmatprep.subr.mxu0 0.0
  %1962 = vmatpush2.msra.mxu0 0.0
  %1963 = vmatprep.subr.mxu0 0.0
  %1964 = vmatpush2.msra.mxu0 0.0
  %1965 = vmatprep.subr.mxu0 0.0
  %1966 = vmatpush2.msra.mxu0 0.0
  %1967 = vmatprep.subr.mxu0 0.0
  %1968 = vmatpush2.msra.mxu0 0.0
  %1969 = vmatprep.subr.mxu0 0.0
  %1970 = vmatpush2.msra.mxu0 0.0
  %1971 = vmatprep.subr.mxu0 0.0
  %1972 = vmatpush2.msra.mxu0 0.0
  %1973 = vmatprep.subr.mxu0 0.0
  %1974 = vmatpush2.msra.mxu0 0.0
  %1975 = vmatprep.subr.mxu0 0.0
  %1976 = vmatpush2.msra.mxu0 0.0
  %1977 = vmatprep.subr.mxu0 0.0
  %1978 = vmatpush2.msra.mxu0 0.0
  %1979 = vmatprep.subr.mxu0 0.0
  %1980 = vmatpush2.msra.mxu0 0.0
  %1981 = vmatprep.subr.mxu0 0.0
  %1982 = vmatpush2.msra.mxu0 0.0
  %1983 = vmatprep.subr.mxu0 0.0
  %1984 = vmatpush2.msra.mxu0 0.0
  %1985 = vmatprep.subr.mxu0 0.0
  %1986 = vmatpush2.msra.mxu0 0.0
  %1987 = vmatprep.subr.mxu0 0.0
  %1988 = vmatpush2.msra.mxu0 0.0
  %1989 = vmatprep.subr.mxu0 0.0
  %1990 = vmatpush2.msra.mxu0 0.0
  %1991 = vmatprep.mubr.f32.mxu0 0.0
  %1992 = vmatmul.mubr.f32.gmra.mxu0 %v1226
  %v1993 = vpop.f32.mrf.mxu0
  %v1994 = vadd.f32 0.0, %v1993
  %v1995 = vpop.f32.mrf.mxu0
  %v1996 = vadd.f32 0.0, %v1995
  %1997 = vmatprep.mubr.f32.mxu0 0.0
  %1998 = vmatmul.mubr.f32.gmra.mxu0 %v1229
  %v1999 = vpop.f32.mrf.mxu0
  %v2000 = vadd.f32 0.0, %v1999
  %v2001 = vpop.f32.mrf.mxu0
  %v2002 = vadd.f32 0.0, %v2001
  %2003 = vmatprep.mubr.f32.mxu0 0.0
  %2004 = vmatmul.mubr.f32.gmra.mxu0 %v1232
  %v2005 = vpop.f32.mrf.mxu0
  %v2006 = vadd.f32 0.0, %v2005
  %v2007 = vpop.f32.mrf.mxu0
  %v2008 = vadd.f32 0.0, %v2007
  %2009 = vmatprep.mubr.f32.mxu0 0.0
  %2010 = vmatmul.mubr.f32.gmra.mxu0 %v1235
  %v2011 = vpop.f32.mrf.mxu0
  %v2012 = vadd.f32 0.0, %v2011
  %v2013 = vpop.f32.mrf.mxu0
  %v2014 = vadd.f32 0.0, %v2013
  %2015 = vmatprep.mubr.f32.mxu0 0.0
  %2016 = vmatmul.mubr.f32.gmra.mxu0 %v1238
  %v2017 = vpop.f32.mrf.mxu0
  %v2018 = vadd.f32 0.0, %v2017
  %v2019 = vpop.f32.mrf.mxu0
  %v2020 = vadd.f32 0.0, %v2019
  %2021 = vmatprep.mubr.f32.mxu0 0.0
  %2022 = vmatmul.mubr.f32.gmra.mxu0 %v1241
  %v2023 = vpop.f32.mrf.mxu0
  %v2024 = vadd.f32 0.0, %v2023
  %v2025 = vpop.f32.mrf.mxu0
  %v2026 = vadd.f32 0.0, %v2025
  %2027 = vmatprep.mubr.f32.mxu0 0.0
  %2028 = vmatmul.mubr.f32.gmra.mxu0 %v1244
  %v2029 = vpop.f32.mrf.mxu0
  %v2030 = vadd.f32 0.0, %v2029
  %v2031 = vpop.f32.mrf.mxu0
  %v2032 = vadd.f32 0.0, %v2031
  %2033 = vmatprep.mubr.f32.mxu0 0.0
  %2034 = vmatmul.mubr.f32.gmra.mxu0 %v1247
  %v2035 = vpop.f32.mrf.mxu0
  %v2036 = vadd.f32 0.0, %v2035
  %v2037 = vpop.f32.mrf.mxu0
  %v2038 = vadd.f32 0.0, %v2037
  %2039 = vdwg.mxu0
  %2040 = vmatprep.subr.mxu0 0.0
  %2041 = vmatpush1.msra.mxu0 0.0
  %2042 = vmatprep.subr.mxu0 0.0
  %2043 = vmatpush1.msra.mxu0 0.0
  %2044 = vmatprep.subr.mxu0 0.0
  %2045 = vmatpush1.msra.mxu0 0.0
  %2046 = vmatprep.subr.mxu0 0.0
  %2047 = vmatpush1.msra.mxu0 0.0
  %2048 = vmatprep.subr.mxu0 0.0
  %2049 = vmatpush1.msra.mxu0 0.0
  %2050 = vmatprep.subr.mxu0 0.0
  %2051 = vmatpush1.msra.mxu0 0.0
  %2052 = vmatprep.subr.mxu0 0.0
  %2053 = vmatpush1.msra.mxu0 0.0
  %2054 = vmatprep.subr.mxu0 0.0
  %2055 = vmatpush1.msra.mxu0 0.0
  %2056 = vmatprep.subr.mxu0 %v1015
  %2057 = vmatpush1.msra.mxu0 %v1014
  %2058 = vmatprep.subr.mxu0 %v991
  %2059 = vmatpush1.msra.mxu0 %v990
  %2060 = vmatprep.subr.mxu0 %v967
  %2061 = vmatpush1.msra.mxu0 %v966
  %2062 = vmatprep.subr.mxu0 %v943
  %2063 = vmatpush1.msra.mxu0 %v942
  %2064 = vmatprep.subr.mxu0 %v919
  %2065 = vmatpush1.msra.mxu0 %v918
  %2066 = vmatprep.subr.mxu0 %v895
  %2067 = vmatpush1.msra.mxu0 %v894
  %2068 = vmatprep.subr.mxu0 %v871
  %2069 = vmatpush1.msra.mxu0 %v870
  %2070 = vmatprep.subr.mxu0 %v847
  %2071 = vmatpush1.msra.mxu0 %v846
  %2072 = vmatprep.subr.mxu0 0.0
  %2073 = vmatpush2.msra.mxu0 0.0
  %2074 = vmatprep.subr.mxu0 0.0
  %2075 = vmatpush2.msra.mxu0 0.0
  %2076 = vmatprep.subr.mxu0 0.0
  %2077 = vmatpush2.msra.mxu0 0.0
  %2078 = vmatprep.subr.mxu0 0.0
  %2079 = vmatpush2.msra.mxu0 0.0
  %2080 = vmatprep.subr.mxu0 0.0
  %2081 = vmatpush2.msra.mxu0 0.0
  %2082 = vmatprep.subr.mxu0 0.0
  %2083 = vmatpush2.msra.mxu0 0.0
  %2084 = vmatprep.subr.mxu0 0.0
  %2085 = vmatpush2.msra.mxu0 0.0
  %2086 = vmatprep.subr.mxu0 0.0
  %2087 = vmatpush2.msra.mxu0 0.0
  %2088 = vmatprep.subr.mxu0 0.0
  %2089 = vmatpush2.msra.mxu0 0.0
  %2090 = vmatprep.subr.mxu0 0.0
  %2091 = vmatpush2.msra.mxu0 0.0
  %2092 = vmatprep.subr.mxu0 0.0
  %2093 = vmatpush2.msra.mxu0 0.0
  %2094 = vmatprep.subr.mxu0 0.0
  %2095 = vmatpush2.msra.mxu0 0.0
  %2096 = vmatprep.subr.mxu0 0.0
  %2097 = vmatpush2.msra.mxu0 0.0
  %2098 = vmatprep.subr.mxu0 0.0
  %2099 = vmatpush2.msra.mxu0 0.0
  %2100 = vmatprep.subr.mxu0 0.0
  %2101 = vmatpush2.msra.mxu0 0.0
  %2102 = vmatprep.subr.mxu0 0.0
  %2103 = vmatpush2.msra.mxu0 0.0
  %2104 = vmatprep.mubr.f32.mxu0 0.0
  %2105 = vmatmul.mubr.f32.gmra.mxu0 %v1226
  %v2106 = vpop.f32.mrf.mxu0
  %v2107 = vadd.f32 0.0, %v2106
  %v2108 = vpop.f32.mrf.mxu0
  %v2109 = vadd.f32 0.0, %v2108
  %2110 = vmatprep.mubr.f32.mxu0 0.0
  %2111 = vmatmul.mubr.f32.gmra.mxu0 %v1229
  %v2112 = vpop.f32.mrf.mxu0
  %v2113 = vadd.f32 0.0, %v2112
  %v2114 = vpop.f32.mrf.mxu0
  %v2115 = vadd.f32 0.0, %v2114
  %2116 = vmatprep.mubr.f32.mxu0 0.0
  %2117 = vmatmul.mubr.f32.gmra.mxu0 %v1232
  %v2118 = vpop.f32.mrf.mxu0
  %v2119 = vadd.f32 0.0, %v2118
  %v2120 = vpop.f32.mrf.mxu0
  %v2121 = vadd.f32 0.0, %v2120
  %2122 = vmatprep.mubr.f32.mxu0 0.0
  %2123 = vmatmul.mubr.f32.gmra.mxu0 %v1235
  %v2124 = vpop.f32.mrf.mxu0
  %v2125 = vadd.f32 0.0, %v2124
  %v2126 = vpop.f32.mrf.mxu0
  %v2127 = vadd.f32 0.0, %v2126
  %2128 = vmatprep.mubr.f32.mxu0 0.0
  %2129 = vmatmul.mubr.f32.gmra.mxu0 %v1238
  %v2130 = vpop.f32.mrf.mxu0
  %v2131 = vadd.f32 0.0, %v2130
  %v2132 = vpop.f32.mrf.mxu0
  %v2133 = vadd.f32 0.0, %v2132
  %2134 = vmatprep.mubr.f32.mxu0 0.0
  %2135 = vmatmul.mubr.f32.gmra.mxu0 %v1241
  %v2136 = vpop.f32.mrf.mxu0
  %v2137 = vadd.f32 0.0, %v2136
  %v2138 = vpop.f32.mrf.mxu0
  %v2139 = vadd.f32 0.0, %v2138
  %2140 = vmatprep.mubr.f32.mxu0 0.0
  %2141 = vmatmul.mubr.f32.gmra.mxu0 %v1244
  %v2142 = vpop.f32.mrf.mxu0
  %v2143 = vadd.f32 0.0, %v2142
  %v2144 = vpop.f32.mrf.mxu0
  %v2145 = vadd.f32 0.0, %v2144
  %2146 = vmatprep.mubr.f32.mxu0 0.0
  %2147 = vmatmul.mubr.f32.gmra.mxu0 %v1247
  %v2148 = vpop.f32.mrf.mxu0
  %v2149 = vadd.f32 0.0, %v2148
  %v2150 = vpop.f32.mrf.mxu0
  %v2151 = vadd.f32 0.0, %v2150
  %2152 = vdwg.mxu0
  %2153 = vmatprep.subr.mxu0 0.0
  %2154 = vmatpush1.msra.mxu0 0.0
  %2155 = vmatprep.subr.mxu0 0.0
  %2156 = vmatpush1.msra.mxu0 0.0
  %2157 = vmatprep.subr.mxu0 0.0
  %2158 = vmatpush1.msra.mxu0 0.0
  %2159 = vmatprep.subr.mxu0 0.0
  %2160 = vmatpush1.msra.mxu0 0.0
  %2161 = vmatprep.subr.mxu0 0.0
  %2162 = vmatpush1.msra.mxu0 0.0
  %2163 = vmatprep.subr.mxu0 0.0
  %2164 = vmatpush1.msra.mxu0 0.0
  %2165 = vmatprep.subr.mxu0 0.0
  %2166 = vmatpush1.msra.mxu0 0.0
  %2167 = vmatprep.subr.mxu0 0.0
  %2168 = vmatpush1.msra.mxu0 0.0
  %2169 = vmatprep.subr.mxu0 %v1017
  %2170 = vmatpush1.msra.mxu0 %v1016
  %2171 = vmatprep.subr.mxu0 %v993
  %2172 = vmatpush1.msra.mxu0 %v992
  %2173 = vmatprep.subr.mxu0 %v969
  %2174 = vmatpush1.msra.mxu0 %v968
  %2175 = vmatprep.subr.mxu0 %v945
  %2176 = vmatpush1.msra.mxu0 %v944
  %2177 = vmatprep.subr.mxu0 %v921
  %2178 = vmatpush1.msra.mxu0 %v920
  %2179 = vmatprep.subr.mxu0 %v897
  %2180 = vmatpush1.msra.mxu0 %v896
  %2181 = vmatprep.subr.mxu0 %v873
  %2182 = vmatpush1.msra.mxu0 %v872
  %2183 = vmatprep.subr.mxu0 %v849
  %2184 = vmatpush1.msra.mxu0 %v848
  %2185 = vmatprep.subr.mxu0 0.0
  %2186 = vmatpush2.msra.mxu0 0.0
  %2187 = vmatprep.subr.mxu0 0.0
  %2188 = vmatpush2.msra.mxu0 0.0
  %2189 = vmatprep.subr.mxu0 0.0
  %2190 = vmatpush2.msra.mxu0 0.0
  %2191 = vmatprep.subr.mxu0 0.0
  %2192 = vmatpush2.msra.mxu0 0.0
  %2193 = vmatprep.subr.mxu0 0.0
  %2194 = vmatpush2.msra.mxu0 0.0
  %2195 = vmatprep.subr.mxu0 0.0
  %2196 = vmatpush2.msra.mxu0 0.0
  %2197 = vmatprep.subr.mxu0 0.0
  %2198 = vmatpush2.msra.mxu0 0.0
  %2199 = vmatprep.subr.mxu0 0.0
  %2200 = vmatpush2.msra.mxu0 0.0
  %2201 = vmatprep.subr.mxu0 0.0
  %2202 = vmatpush2.msra.mxu0 0.0
  %2203 = vmatprep.subr.mxu0 0.0
  %2204 = vmatpush2.msra.mxu0 0.0
  %2205 = vmatprep.subr.mxu0 0.0
  %2206 = vmatpush2.msra.mxu0 0.0
  %2207 = vmatprep.subr.mxu0 0.0
  %2208 = vmatpush2.msra.mxu0 0.0
  %2209 = vmatprep.subr.mxu0 0.0
  %2210 = vmatpush2.msra.mxu0 0.0
  %2211 = vmatprep.subr.mxu0 0.0
  %2212 = vmatpush2.msra.mxu0 0.0
  %2213 = vmatprep.subr.mxu0 0.0
  %2214 = vmatpush2.msra.mxu0 0.0
  %2215 = vmatprep.subr.mxu0 0.0
  %2216 = vmatpush2.msra.mxu0 0.0
  %2217 = vmatprep.mubr.f32.mxu0 0.0
  %2218 = vmatmul.mubr.f32.gmra.mxu0 %v1226
  %v2219 = vpop.f32.mrf.mxu0
  %v2220 = vadd.f32 0.0, %v2219
  %v2221 = vpop.f32.mrf.mxu0
  %v2222 = vadd.f32 0.0, %v2221
  %2223 = vmatprep.mubr.f32.mxu0 0.0
  %2224 = vmatmul.mubr.f32.gmra.mxu0 %v1229
  %v2225 = vpop.f32.mrf.mxu0
  %v2226 = vadd.f32 0.0, %v2225
  %v2227 = vpop.f32.mrf.mxu0
  %v2228 = vadd.f32 0.0, %v2227
  %2229 = vmatprep.mubr.f32.mxu0 0.0
  %2230 = vmatmul.mubr.f32.gmra.mxu0 %v1232
  %v2231 = vpop.f32.mrf.mxu0
  %v2232 = vadd.f32 0.0, %v2231
  %v2233 = vpop.f32.mrf.mxu0
  %v2234 = vadd.f32 0.0, %v2233
  %2235 = vmatprep.mubr.f32.mxu0 0.0
  %2236 = vmatmul.mubr.f32.gmra.mxu0 %v1235
  %v2237 = vpop.f32.mrf.mxu0
  %v2238 = vadd.f32 0.0, %v2237
  %v2239 = vpop.f32.mrf.mxu0
  %v2240 = vadd.f32 0.0, %v2239
  %2241 = vmatprep.mubr.f32.mxu0 0.0
  %2242 = vmatmul.mubr.f32.gmra.mxu0 %v1238
  %v2243 = vpop.f32.mrf.mxu0
  %v2244 = vadd.f32 0.0, %v2243
  %v2245 = vpop.f32.mrf.mxu0
  %v2246 = vadd.f32 0.0, %v2245
  %2247 = vmatprep.mubr.f32.mxu0 0.0
  %2248 = vmatmul.mubr.f32.gmra.mxu0 %v1241
  %v2249 = vpop.f32.mrf.mxu0
  %v2250 = vadd.f32 0.0, %v2249
  %v2251 = vpop.f32.mrf.mxu0
  %v2252 = vadd.f32 0.0, %v2251
  %2253 = vmatprep.mubr.f32.mxu0 0.0
  %2254 = vmatmul.mubr.f32.gmra.mxu0 %v1244
  %v2255 = vpop.f32.mrf.mxu0
  %v2256 = vadd.f32 0.0, %v2255
  %v2257 = vpop.f32.mrf.mxu0
  %v2258 = vadd.f32 0.0, %v2257
  %2259 = vmatprep.mubr.f32.mxu0 0.0
  %2260 = vmatmul.mubr.f32.gmra.mxu0 %v1247
  %v2261 = vpop.f32.mrf.mxu0
  %v2262 = vadd.f32 0.0, %v2261
  %v2263 = vpop.f32.mrf.mxu0
  %v2264 = vadd.f32 0.0, %v2263
  %2265 = vdwg.mxu0
  %2266 = vmatprep.subr.mxu0 0.0
  %2267 = vmatpush1.msra.mxu0 0.0
  %2268 = vmatprep.subr.mxu0 0.0
  %2269 = vmatpush1.msra.mxu0 0.0
  %2270 = vmatprep.subr.mxu0 0.0
  %2271 = vmatpush1.msra.mxu0 0.0
  %2272 = vmatprep.subr.mxu0 0.0
  %2273 = vmatpush1.msra.mxu0 0.0
  %2274 = vmatprep.subr.mxu0 0.0
  %2275 = vmatpush1.msra.mxu0 0.0
  %2276 = vmatprep.subr.mxu0 0.0
  %2277 = vmatpush1.msra.mxu0 0.0
  %2278 = vmatprep.subr.mxu0 0.0
  %2279 = vmatpush1.msra.mxu0 0.0
  %2280 = vmatprep.subr.mxu0 0.0
  %2281 = vmatpush1.msra.mxu0 0.0
  %2282 = vmatprep.subr.mxu0 %v1019
  %2283 = vmatpush1.msra.mxu0 %v1018
  %2284 = vmatprep.subr.mxu0 %v995
  %2285 = vmatpush1.msra.mxu0 %v994
  %2286 = vmatprep.subr.mxu0 %v971
  %2287 = vmatpush1.msra.mxu0 %v970
  %2288 = vmatprep.subr.mxu0 %v947
  %2289 = vmatpush1.msra.mxu0 %v946
  %2290 = vmatprep.subr.mxu0 %v923
  %2291 = vmatpush1.msra.mxu0 %v922
  %2292 = vmatprep.subr.mxu0 %v899
  %2293 = vmatpush1.msra.mxu0 %v898
  %2294 = vmatprep.subr.mxu0 %v875
  %2295 = vmatpush1.msra.mxu0 %v874
  %2296 = vmatprep.subr.mxu0 %v851
  %2297 = vmatpush1.msra.mxu0 %v850
  %2298 = vmatprep.subr.mxu0 0.0
  %2299 = vmatpush2.msra.mxu0 0.0
  %2300 = vmatprep.subr.mxu0 0.0
  %2301 = vmatpush2.msra.mxu0 0.0
  %2302 = vmatprep.subr.mxu0 0.0
  %2303 = vmatpush2.msra.mxu0 0.0
  %2304 = vmatprep.subr.mxu0 0.0
  %2305 = vmatpush2.msra.mxu0 0.0
  %2306 = vmatprep.subr.mxu0 0.0
  %2307 = vmatpush2.msra.mxu0 0.0
  %2308 = vmatprep.subr.mxu0 0.0
  %2309 = vmatpush2.msra.mxu0 0.0
  %2310 = vmatprep.subr.mxu0 0.0
  %2311 = vmatpush2.msra.mxu0 0.0
  %2312 = vmatprep.subr.mxu0 0.0
  %2313 = vmatpush2.msra.mxu0 0.0
  %2314 = vmatprep.subr.mxu0 0.0
  %2315 = vmatpush2.msra.mxu0 0.0
  %2316 = vmatprep.subr.mxu0 0.0
  %2317 = vmatpush2.msra.mxu0 0.0
  %2318 = vmatprep.subr.mxu0 0.0
  %2319 = vmatpush2.msra.mxu0 0.0
  %2320 = vmatprep.subr.mxu0 0.0
  %2321 = vmatpush2.msra.mxu0 0.0
  %2322 = vmatprep.subr.mxu0 0.0
  %2323 = vmatpush2.msra.mxu0 0.0
  %2324 = vmatprep.subr.mxu0 0.0
  %2325 = vmatpush2.msra.mxu0 0.0
  %2326 = vmatprep.subr.mxu0 0.0
  %2327 = vmatpush2.msra.mxu0 0.0
  %2328 = vmatprep.subr.mxu0 0.0
  %2329 = vmatpush2.msra.mxu0 0.0
  %2330 = vmatprep.mubr.f32.mxu0 0.0
  %2331 = vmatmul.mubr.f32.gmra.mxu0 %v1226
  %v2332 = vpop.f32.mrf.mxu0
  %v2333 = vadd.f32 0.0, %v2332
  %v2334 = vpop.f32.mrf.mxu0
  %v2335 = vadd.f32 0.0, %v2334
  %2336 = vmatprep.mubr.f32.mxu0 0.0
  %2337 = vmatmul.mubr.f32.gmra.mxu0 %v1229
  %v2338 = vpop.f32.mrf.mxu0
  %v2339 = vadd.f32 0.0, %v2338
  %v2340 = vpop.f32.mrf.mxu0
  %v2341 = vadd.f32 0.0, %v2340
  %2342 = vmatprep.mubr.f32.mxu0 0.0
  %2343 = vmatmul.mubr.f32.gmra.mxu0 %v1232
  %v2344 = vpop.f32.mrf.mxu0
  %v2345 = vadd.f32 0.0, %v2344
  %v2346 = vpop.f32.mrf.mxu0
  %v2347 = vadd.f32 0.0, %v2346
  %2348 = vmatprep.mubr.f32.mxu0 0.0
  %2349 = vmatmul.mubr.f32.gmra.mxu0 %v1235
  %v2350 = vpop.f32.mrf.mxu0
  %v2351 = vadd.f32 0.0, %v2350
  %v2352 = vpop.f32.mrf.mxu0
  %v2353 = vadd.f32 0.0, %v2352
  %2354 = vmatprep.mubr.f32.mxu0 0.0
  %2355 = vmatmul.mubr.f32.gmra.mxu0 %v1238
  %v2356 = vpop.f32.mrf.mxu0
  %v2357 = vadd.f32 0.0, %v2356
  %v2358 = vpop.f32.mrf.mxu0
  %v2359 = vadd.f32 0.0, %v2358
  %2360 = vmatprep.mubr.f32.mxu0 0.0
  %2361 = vmatmul.mubr.f32.gmra.mxu0 %v1241
  %v2362 = vpop.f32.mrf.mxu0
  %v2363 = vadd.f32 0.0, %v2362
  %v2364 = vpop.f32.mrf.mxu0
  %v2365 = vadd.f32 0.0, %v2364
  %2366 = vmatprep.mubr.f32.mxu0 0.0
  %2367 = vmatmul.mubr.f32.gmra.mxu0 %v1244
  %v2368 = vpop.f32.mrf.mxu0
  %v2369 = vadd.f32 0.0, %v2368
  %v2370 = vpop.f32.mrf.mxu0
  %v2371 = vadd.f32 0.0, %v2370
  %2372 = vmatprep.mubr.f32.mxu0 0.0
  %2373 = vmatmul.mubr.f32.gmra.mxu0 %v1247
  %v2374 = vpop.f32.mrf.mxu0
  %v2375 = vadd.f32 0.0, %v2374
  %v2376 = vpop.f32.mrf.mxu0
  %v2377 = vadd.f32 0.0, %v2376
  %2378 = vdwg.mxu0
  %2379 = vmatprep.subr.mxu0 0.0
  %2380 = vmatpush1.msra.mxu0 0.0
  %2381 = vmatprep.subr.mxu0 0.0
  %2382 = vmatpush1.msra.mxu0 0.0
  %2383 = vmatprep.subr.mxu0 0.0
  %2384 = vmatpush1.msra.mxu0 0.0
  %2385 = vmatprep.subr.mxu0 0.0
  %2386 = vmatpush1.msra.mxu0 0.0
  %2387 = vmatprep.subr.mxu0 0.0
  %2388 = vmatpush1.msra.mxu0 0.0
  %2389 = vmatprep.subr.mxu0 0.0
  %2390 = vmatpush1.msra.mxu0 0.0
  %2391 = vmatprep.subr.mxu0 0.0
  %2392 = vmatpush1.msra.mxu0 0.0
  %2393 = vmatprep.subr.mxu0 0.0
  %2394 = vmatpush1.msra.mxu0 0.0
  %2395 = vmatprep.subr.mxu0 %v1021
  %2396 = vmatpush1.msra.mxu0 %v1020
  %2397 = vmatprep.subr.mxu0 %v997
  %2398 = vmatpush1.msra.mxu0 %v996
  %2399 = vmatprep.subr.mxu0 %v973
  %2400 = vmatpush1.msra.mxu0 %v972
  %2401 = vmatprep.subr.mxu0 %v949
  %2402 = vmatpush1.msra.mxu0 %v948
  %2403 = vmatprep.subr.mxu0 %v925
  %2404 = vmatpush1.msra.mxu0 %v924
  %2405 = vmatprep.subr.mxu0 %v901
  %2406 = vmatpush1.msra.mxu0 %v900
  %2407 = vmatprep.subr.mxu0 %v877
  %2408 = vmatpush1.msra.mxu0 %v876
  %2409 = vmatprep.subr.mxu0 %v853
  %2410 = vmatpush1.msra.mxu0 %v852
  %2411 = vmatprep.subr.mxu0 0.0
  %2412 = vmatpush2.msra.mxu0 0.0
  %2413 = vmatprep.subr.mxu0 0.0
  %2414 = vmatpush2.msra.mxu0 0.0
  %2415 = vmatprep.subr.mxu0 0.0
  %2416 = vmatpush2.msra.mxu0 0.0
  %2417 = vmatprep.subr.mxu0 0.0
  %2418 = vmatpush2.msra.mxu0 0.0
  %2419 = vmatprep.subr.mxu0 0.0
  %2420 = vmatpush2.msra.mxu0 0.0
  %2421 = vmatprep.subr.mxu0 0.0
  %2422 = vmatpush2.msra.mxu0 0.0
  %2423 = vmatprep.subr.mxu0 0.0
  %2424 = vmatpush2.msra.mxu0 0.0
  %2425 = vmatprep.subr.mxu0 0.0
  %2426 = vmatpush2.msra.mxu0 0.0
  %2427 = vmatprep.subr.mxu0 0.0
  %2428 = vmatpush2.msra.mxu0 0.0
  %2429 = vmatprep.subr.mxu0 0.0
  %2430 = vmatpush2.msra.mxu0 0.0
  %2431 = vmatprep.subr.mxu0 0.0
  %2432 = vmatpush2.msra.mxu0 0.0
  %2433 = vmatprep.subr.mxu0 0.0
  %2434 = vmatpush2.msra.mxu0 0.0
  %2435 = vmatprep.subr.mxu0 0.0
  %2436 = vmatpush2.msra.mxu0 0.0
  %2437 = vmatprep.subr.mxu0 0.0
  %2438 = vmatpush2.msra.mxu0 0.0
  %2439 = vmatprep.subr.mxu0 0.0
  %2440 = vmatpush2.msra.mxu0 0.0
  %2441 = vmatprep.subr.mxu0 0.0
  %2442 = vmatpush2.msra.mxu0 0.0
  %2443 = vmatprep.mubr.f32.mxu0 0.0
  %2444 = vmatmul.mubr.f32.gmra.mxu0 %v1226
  %v2445 = vpop.f32.mrf.mxu0
  %v2446 = vadd.f32 0.0, %v2445
  %v2447 = vpop.f32.mrf.mxu0
  %v2448 = vadd.f32 0.0, %v2447
  %2449 = vmatprep.mubr.f32.mxu0 0.0
  %2450 = vmatmul.mubr.f32.gmra.mxu0 %v1229
  %v2451 = vpop.f32.mrf.mxu0
  %v2452 = vadd.f32 0.0, %v2451
  %v2453 = vpop.f32.mrf.mxu0
  %v2454 = vadd.f32 0.0, %v2453
  %2455 = vmatprep.mubr.f32.mxu0 0.0
  %2456 = vmatmul.mubr.f32.gmra.mxu0 %v1232
  %v2457 = vpop.f32.mrf.mxu0
  %v2458 = vadd.f32 0.0, %v2457
  %v2459 = vpop.f32.mrf.mxu0
  %v2460 = vadd.f32 0.0, %v2459
  %2461 = vmatprep.mubr.f32.mxu0 0.0
  %2462 = vmatmul.mubr.f32.gmra.mxu0 %v1235
  %v2463 = vpop.f32.mrf.mxu0
  %v2464 = vadd.f32 0.0, %v2463
  %v2465 = vpop.f32.mrf.mxu0
  %v2466 = vadd.f32 0.0, %v2465
  %2467 = vmatprep.mubr.f32.mxu0 0.0
  %2468 = vmatmul.mubr.f32.gmra.mxu0 %v1238
  %v2469 = vpop.f32.mrf.mxu0
  %v2470 = vadd.f32 0.0, %v2469
  %v2471 = vpop.f32.mrf.mxu0
  %v2472 = vadd.f32 0.0, %v2471
  %2473 = vmatprep.mubr.f32.mxu0 0.0
  %2474 = vmatmul.mubr.f32.gmra.mxu0 %v1241
  %v2475 = vpop.f32.mrf.mxu0
  %v2476 = vadd.f32 0.0, %v2475
  %v2477 = vpop.f32.mrf.mxu0
  %v2478 = vadd.f32 0.0, %v2477
  %2479 = vmatprep.mubr.f32.mxu0 0.0
  %2480 = vmatmul.mubr.f32.gmra.mxu0 %v1244
  %v2481 = vpop.f32.mrf.mxu0
  %v2482 = vadd.f32 0.0, %v2481
  %v2483 = vpop.f32.mrf.mxu0
  %v2484 = vadd.f32 0.0, %v2483
  %2485 = vmatprep.mubr.f32.mxu0 0.0
  %2486 = vmatmul.mubr.f32.gmra.mxu0 %v1247
  %v2487 = vpop.f32.mrf.mxu0
  %v2488 = vadd.f32 0.0, %v2487
  %v2489 = vpop.f32.mrf.mxu0
  %v2490 = vadd.f32 0.0, %v2489
  %2491 = vdwg.mxu0
  %2492 = vmatprep.subr.mxu0 0.0
  %2493 = vmatpush1.msra.mxu0 0.0
  %2494 = vmatprep.subr.mxu0 0.0
  %2495 = vmatpush1.msra.mxu0 0.0
  %2496 = vmatprep.subr.mxu0 0.0
  %2497 = vmatpush1.msra.mxu0 0.0
  %2498 = vmatprep.subr.mxu0 0.0
  %2499 = vmatpush1.msra.mxu0 0.0
  %2500 = vmatprep.subr.mxu0 0.0
  %2501 = vmatpush1.msra.mxu0 0.0
  %2502 = vmatprep.subr.mxu0 0.0
  %2503 = vmatpush1.msra.mxu0 0.0
  %2504 = vmatprep.subr.mxu0 0.0
  %2505 = vmatpush1.msra.mxu0 0.0
  %2506 = vmatprep.subr.mxu0 0.0
  %2507 = vmatpush1.msra.mxu0 0.0
  %2508 = vmatprep.subr.mxu0 %v1023
  %2509 = vmatpush1.msra.mxu0 %v1022
  %2510 = vmatprep.subr.mxu0 %v999
  %2511 = vmatpush1.msra.mxu0 %v998
  %2512 = vmatprep.subr.mxu0 %v975
  %2513 = vmatpush1.msra.mxu0 %v974
  %2514 = vmatprep.subr.mxu0 %v951
  %2515 = vmatpush1.msra.mxu0 %v950
  %2516 = vmatprep.subr.mxu0 %v927
  %2517 = vmatpush1.msra.mxu0 %v926
  %2518 = vmatprep.subr.mxu0 %v903
  %2519 = vmatpush1.msra.mxu0 %v902
  %2520 = vmatprep.subr.mxu0 %v879
  %2521 = vmatpush1.msra.mxu0 %v878
  %2522 = vmatprep.subr.mxu0 %v855
  %2523 = vmatpush1.msra.mxu0 %v854
  %2524 = vmatprep.subr.mxu0 0.0
  %2525 = vmatpush2.msra.mxu0 0.0
  %2526 = vmatprep.subr.mxu0 0.0
  %2527 = vmatpush2.msra.mxu0 0.0
  %2528 = vmatprep.subr.mxu0 0.0
  %2529 = vmatpush2.msra.mxu0 0.0
  %2530 = vmatprep.subr.mxu0 0.0
  %2531 = vmatpush2.msra.mxu0 0.0
  %2532 = vmatprep.subr.mxu0 0.0
  %2533 = vmatpush2.msra.mxu0 0.0
  %2534 = vmatprep.subr.mxu0 0.0
  %2535 = vmatpush2.msra.mxu0 0.0
  %2536 = vmatprep.subr.mxu0 0.0
  %2537 = vmatpush2.msra.mxu0 0.0
  %2538 = vmatprep.subr.mxu0 0.0
  %2539 = vmatpush2.msra.mxu0 0.0
  %2540 = vmatprep.subr.mxu0 0.0
  %2541 = vmatpush2.msra.mxu0 0.0
  %2542 = vmatprep.subr.mxu0 0.0
  %2543 = vmatpush2.msra.mxu0 0.0
  %2544 = vmatprep.subr.mxu0 0.0
  %2545 = vmatpush2.msra.mxu0 0.0
  %2546 = vmatprep.subr.mxu0 0.0
  %2547 = vmatpush2.msra.mxu0 0.0
  %2548 = vmatprep.subr.mxu0 0.0
  %2549 = vmatpush2.msra.mxu0 0.0
  %2550 = vmatprep.subr.mxu0 0.0
  %2551 = vmatpush2.msra.mxu0 0.0
  %2552 = vmatprep.subr.mxu0 0.0
  %2553 = vmatpush2.msra.mxu0 0.0
  %2554 = vmatprep.subr.mxu0 0.0
  %2555 = vmatpush2.msra.mxu0 0.0
  %2556 = vmatprep.mubr.f32.mxu0 0.0
  %2557 = vmatmul.mubr.f32.gmra.mxu0 %v1226
  %v2558 = vpop.f32.mrf.mxu0
  %v2559 = vadd.f32 0.0, %v2558
  %v2560 = vpop.f32.mrf.mxu0
  %v2561 = vadd.f32 0.0, %v2560
  %2562 = vmatprep.mubr.f32.mxu0 0.0
  %2563 = vmatmul.mubr.f32.gmra.mxu0 %v1229
  %v2564 = vpop.f32.mrf.mxu0
  %v2565 = vadd.f32 0.0, %v2564
  %v2566 = vpop.f32.mrf.mxu0
  %v2567 = vadd.f32 0.0, %v2566
  %2568 = vmatprep.mubr.f32.mxu0 0.0
  %2569 = vmatmul.mubr.f32.gmra.mxu0 %v1232
  %v2570 = vpop.f32.mrf.mxu0
  %v2571 = vadd.f32 0.0, %v2570
  %v2572 = vpop.f32.mrf.mxu0
  %v2573 = vadd.f32 0.0, %v2572
  %2574 = vmatprep.mubr.f32.mxu0 0.0
  %2575 = vmatmul.mubr.f32.gmra.mxu0 %v1235
  %v2576 = vpop.f32.mrf.mxu0
  %v2577 = vadd.f32 0.0, %v2576
  %v2578 = vpop.f32.mrf.mxu0
  %v2579 = vadd.f32 0.0, %v2578
  %2580 = vmatprep.mubr.f32.mxu0 0.0
  %2581 = vmatmul.mubr.f32.gmra.mxu0 %v1238
  %v2582 = vpop.f32.mrf.mxu0
  %v2583 = vadd.f32 0.0, %v2582
  %v2584 = vpop.f32.mrf.mxu0
  %v2585 = vadd.f32 0.0, %v2584
  %2586 = vmatprep.mubr.f32.mxu0 0.0
  %2587 = vmatmul.mubr.f32.gmra.mxu0 %v1241
  %v2588 = vpop.f32.mrf.mxu0
  %v2589 = vadd.f32 0.0, %v2588
  %v2590 = vpop.f32.mrf.mxu0
  %v2591 = vadd.f32 0.0, %v2590
  %2592 = vmatprep.mubr.f32.mxu0 0.0
  %2593 = vmatmul.mubr.f32.gmra.mxu0 %v1244
  %v2594 = vpop.f32.mrf.mxu0
  %v2595 = vadd.f32 0.0, %v2594
  %v2596 = vpop.f32.mrf.mxu0
  %v2597 = vadd.f32 0.0, %v2596
  %2598 = vmatprep.mubr.f32.mxu0 0.0
  %2599 = vmatmul.mubr.f32.gmra.mxu0 %v1247
  %v2600 = vpop.f32.mrf.mxu0
  %v2601 = vadd.f32 0.0, %v2600
  %v2602 = vpop.f32.mrf.mxu0
  %v2603 = vadd.f32 0.0, %v2602
  %2604 = vdwg.mxu0
  %2605 = vmatprep.subr.mxu0 0.0
  %2606 = vmatpush1.msra.mxu0 0.0
  %2607 = vmatprep.subr.mxu0 0.0
  %2608 = vmatpush1.msra.mxu0 0.0
  %2609 = vmatprep.subr.mxu0 0.0
  %2610 = vmatpush1.msra.mxu0 0.0
  %2611 = vmatprep.subr.mxu0 0.0
  %2612 = vmatpush1.msra.mxu0 0.0
  %2613 = vmatprep.subr.mxu0 0.0
  %2614 = vmatpush1.msra.mxu0 0.0
  %2615 = vmatprep.subr.mxu0 0.0
  %2616 = vmatpush1.msra.mxu0 0.0
  %2617 = vmatprep.subr.mxu0 0.0
  %2618 = vmatpush1.msra.mxu0 0.0
  %2619 = vmatprep.subr.mxu0 0.0
  %2620 = vmatpush1.msra.mxu0 0.0
  %2621 = vmatprep.subr.mxu0 0.0
  %2622 = vmatpush1.msra.mxu0 %v830
  %2623 = vmatprep.subr.mxu0 0.0
  %2624 = vmatpush1.msra.mxu0 %v780
  %2625 = vmatprep.subr.mxu0 0.0
  %2626 = vmatpush1.msra.mxu0 %v730
  %2627 = vmatprep.subr.mxu0 0.0
  %2628 = vmatpush1.msra.mxu0 %v680
  %2629 = vmatprep.subr.mxu0 0.0
  %2630 = vmatpush1.msra.mxu0 %v630
  %2631 = vmatprep.subr.mxu0 0.0
  %2632 = vmatpush1.msra.mxu0 %v580
  %2633 = vmatprep.subr.mxu0 0.0
  %2634 = vmatpush1.msra.mxu0 %v530
  %2635 = vmatprep.subr.mxu0 0.0
  %2636 = vmatpush1.msra.mxu0 %v480
  %2637 = vmatprep.subr.mxu0 0.0
  %2638 = vmatpush2.msra.mxu0 0.0
  %2639 = vmatprep.subr.mxu0 0.0
  %2640 = vmatpush2.msra.mxu0 0.0
  %2641 = vmatprep.subr.mxu0 0.0
  %2642 = vmatpush2.msra.mxu0 0.0
  %2643 = vmatprep.subr.mxu0 0.0
  %2644 = vmatpush2.msra.mxu0 0.0
  %2645 = vmatprep.subr.mxu0 0.0
  %2646 = vmatpush2.msra.mxu0 0.0
  %2647 = vmatprep.subr.mxu0 0.0
  %2648 = vmatpush2.msra.mxu0 0.0
  %2649 = vmatprep.subr.mxu0 0.0
  %2650 = vmatpush2.msra.mxu0 0.0
  %2651 = vmatprep.subr.mxu0 0.0
  %2652 = vmatpush2.msra.mxu0 0.0
  %2653 = vmatprep.subr.mxu0 0.0
  %2654 = vmatpush2.msra.mxu0 0.0
  %2655 = vmatprep.subr.mxu0 0.0
  %2656 = vmatpush2.msra.mxu0 0.0
  %2657 = vmatprep.subr.mxu0 0.0
  %2658 = vmatpush2.msra.mxu0 0.0
  %2659 = vmatprep.subr.mxu0 0.0
  %2660 = vmatpush2.msra.mxu0 0.0
  %2661 = vmatprep.subr.mxu0 0.0
  %2662 = vmatpush2.msra.mxu0 0.0
  %2663 = vmatprep.subr.mxu0 0.0
  %2664 = vmatpush2.msra.mxu0 0.0
  %2665 = vmatprep.subr.mxu0 0.0
  %2666 = vmatpush2.msra.mxu0 0.0
  %2667 = vmatprep.subr.mxu0 0.0
  %2668 = vmatpush2.msra.mxu0 0.0
  %2669 = vmatprep.mubr.f32.mxu0 0.0
  %2670 = vmatmul.mubr.f32.gmra.mxu0 %v1226
  %v2671 = vpop.f32.mrf.mxu0
  %v2672 = vadd.f32 0.0, %v2671
  %v2673 = vpop.f32.mrf.mxu0
  %2674 = vmatprep.mubr.f32.mxu0 0.0
  %2675 = vmatmul.mubr.f32.gmra.mxu0 %v1229
  %v2676 = vpop.f32.mrf.mxu0
  %v2677 = vadd.f32 0.0, %v2676
  %v2678 = vpop.f32.mrf.mxu0
  %2679 = vmatprep.mubr.f32.mxu0 0.0
  %2680 = vmatmul.mubr.f32.gmra.mxu0 %v1232
  %v2681 = vpop.f32.mrf.mxu0
  %v2682 = vadd.f32 0.0, %v2681
  %v2683 = vpop.f32.mrf.mxu0
  %2684 = vmatprep.mubr.f32.mxu0 0.0
  %2685 = vmatmul.mubr.f32.gmra.mxu0 %v1235
  %v2686 = vpop.f32.mrf.mxu0
  %v2687 = vadd.f32 0.0, %v2686
  %v2688 = vpop.f32.mrf.mxu0
  %2689 = vmatprep.mubr.f32.mxu0 0.0
  %2690 = vmatmul.mubr.f32.gmra.mxu0 %v1238
  %v2691 = vpop.f32.mrf.mxu0
  %v2692 = vadd.f32 0.0, %v2691
  %v2693 = vpop.f32.mrf.mxu0
  %2694 = vmatprep.mubr.f32.mxu0 0.0
  %2695 = vmatmul.mubr.f32.gmra.mxu0 %v1241
  %v2696 = vpop.f32.mrf.mxu0
  %v2697 = vadd.f32 0.0, %v2696
  %v2698 = vpop.f32.mrf.mxu0
  %2699 = vmatprep.mubr.f32.mxu0 0.0
  %2700 = vmatmul.mubr.f32.gmra.mxu0 %v1244
  %v2701 = vpop.f32.mrf.mxu0
  %v2702 = vadd.f32 0.0, %v2701
  %v2703 = vpop.f32.mrf.mxu0
  %2704 = vmatprep.mubr.f32.mxu0 0.0
  %2705 = vmatmul.mubr.f32.gmra.mxu0 %v1247
  %v2706 = vpop.f32.mrf.mxu0
  %v2707 = vadd.f32 0.0, %v2706
  %v2708 = vpop.f32.mrf.mxu0
  %2709 = vdwg.mxu0
  %v2711 = vsel %vm1224, %v14, 0
  %v2714 = vsel %vm1224, %v15, 0
  %v2717 = vsel %vm1224, %v16, 0
  %v2720 = vsel %vm1224, %v17, 0
  %v2723 = vsel %vm1224, %v18, 0
  %v2726 = vsel %vm1224, %v19, 0
  %v2729 = vsel %vm1224, %v20, 0
  %v2732 = vsel %vm1224, %v21, 0
  %2734 = vmatprep.subr.mxu0 0.0
  %2735 = vmatpush1.msra.mxu0 0.0
  %2736 = vmatprep.subr.mxu0 0.0
  %2737 = vmatpush1.msra.mxu0 0.0
  %2738 = vmatprep.subr.mxu0 0.0
  %2739 = vmatpush1.msra.mxu0 0.0
  %2740 = vmatprep.subr.mxu0 0.0
  %2741 = vmatpush1.msra.mxu0 0.0
  %2742 = vmatprep.subr.mxu0 0.0
  %2743 = vmatpush1.msra.mxu0 0.0
  %2744 = vmatprep.subr.mxu0 0.0
  %2745 = vmatpush1.msra.mxu0 0.0
  %2746 = vmatprep.subr.mxu0 0.0
  %2747 = vmatpush1.msra.mxu0 0.0
  %2748 = vmatprep.subr.mxu0 0.0
  %2749 = vmatpush1.msra.mxu0 0.0
  %2750 = vmatprep.subr.mxu0 %v198
  %2751 = vmatpush1.msra.mxu0 %v197
  %2752 = vmatprep.subr.mxu0 %v173
  %2753 = vmatpush1.msra.mxu0 %v172
  %2754 = vmatprep.subr.mxu0 %v148
  %2755 = vmatpush1.msra.mxu0 %v147
  %2756 = vmatprep.subr.mxu0 %v123
  %2757 = vmatpush1.msra.mxu0 %v122
  %2758 = vmatprep.subr.mxu0 %v98
  %2759 = vmatpush1.msra.mxu0 %v97
  %2760 = vmatprep.subr.mxu0 %v73
  %2761 = vmatpush1.msra.mxu0 %v72
  %2762 = vmatprep.subr.mxu0 %v48
  %2763 = vmatpush1.msra.mxu0 %v47
  %2764 = vmatprep.subr.mxu0 %v23
  %2765 = vmatpush1.msra.mxu0 %v22
  %2766 = vmatprep.subr.mxu0 0.0
  %2767 = vmatpush2.msra.mxu0 0.0
  %2768 = vmatprep.subr.mxu0 0.0
  %2769 = vmatpush2.msra.mxu0 0.0
  %2770 = vmatprep.subr.mxu0 0.0
  %2771 = vmatpush2.msra.mxu0 0.0
  %2772 = vmatprep.subr.mxu0 0.0
  %2773 = vmatpush2.msra.mxu0 0.0
  %2774 = vmatprep.subr.mxu0 0.0
  %2775 = vmatpush2.msra.mxu0 0.0
  %2776 = vmatprep.subr.mxu0 0.0
  %2777 = vmatpush2.msra.mxu0 0.0
  %2778 = vmatprep.subr.mxu0 0.0
  %2779 = vmatpush2.msra.mxu0 0.0
  %2780 = vmatprep.subr.mxu0 0.0
  %2781 = vmatpush2.msra.mxu0 0.0
  %2782 = vmatprep.subr.mxu0 0.0
  %2783 = vmatpush2.msra.mxu0 0.0
  %2784 = vmatprep.subr.mxu0 0.0
  %2785 = vmatpush2.msra.mxu0 0.0
  %2786 = vmatprep.subr.mxu0 0.0
  %2787 = vmatpush2.msra.mxu0 0.0
  %2788 = vmatprep.subr.mxu0 0.0
  %2789 = vmatpush2.msra.mxu0 0.0
  %2790 = vmatprep.subr.mxu0 0.0
  %2791 = vmatpush2.msra.mxu0 0.0
  %2792 = vmatprep.subr.mxu0 0.0
  %2793 = vmatpush2.msra.mxu0 0.0
  %2794 = vmatprep.subr.mxu0 0.0
  %2795 = vmatpush2.msra.mxu0 0.0
  %2796 = vmatprep.subr.mxu0 0.0
  %2797 = vmatpush2.msra.mxu0 0.0
  %2798 = vmatprep.mubr.f32.mxu0 0.0
  %2799 = vmatmul.mubr.f32.gmra.mxu0 %v2711
  %v2800 = vpop.f32.mrf.mxu0
  %v2801 = vadd.f32 %v1316, %v2800
  %v2802 = vpop.f32.mrf.mxu0
  %v2803 = vadd.f32 %v1318, %v2802
  %2804 = vmatprep.mubr.f32.mxu0 0.0
  %2805 = vmatmul.mubr.f32.gmra.mxu0 %v2714
  %v2806 = vpop.f32.mrf.mxu0
  %v2807 = vadd.f32 %v1322, %v2806
  %v2808 = vpop.f32.mrf.mxu0
  %v2809 = vadd.f32 %v1324, %v2808
  %2810 = vmatprep.mubr.f32.mxu0 0.0
  %2811 = vmatmul.mubr.f32.gmra.mxu0 %v2717
  %v2812 = vpop.f32.mrf.mxu0
  %v2813 = vadd.f32 %v1328, %v2812
  %v2814 = vpop.f32.mrf.mxu0
  %v2815 = vadd.f32 %v1330, %v2814
  %2816 = vmatprep.mubr.f32.mxu0 0.0
  %2817 = vmatmul.mubr.f32.gmra.mxu0 %v2720
  %v2818 = vpop.f32.mrf.mxu0
  %v2819 = vadd.f32 %v1334, %v2818
  %v2820 = vpop.f32.mrf.mxu0
  %v2821 = vadd.f32 %v1336, %v2820
  %2822 = vmatprep.mubr.f32.mxu0 0.0
  %2823 = vmatmul.mubr.f32.gmra.mxu0 %v2723
  %v2824 = vpop.f32.mrf.mxu0
  %v2825 = vadd.f32 %v1340, %v2824
  %v2826 = vpop.f32.mrf.mxu0
  %v2827 = vadd.f32 %v1342, %v2826
  %2828 = vmatprep.mubr.f32.mxu0 0.0
  %2829 = vmatmul.mubr.f32.gmra.mxu0 %v2726
  %v2830 = vpop.f32.mrf.mxu0
  %v2831 = vadd.f32 %v1346, %v2830
  %v2832 = vpop.f32.mrf.mxu0
  %v2833 = vadd.f32 %v1348, %v2832
  %2834 = vmatprep.mubr.f32.mxu0 0.0
  %2835 = vmatmul.mubr.f32.gmra.mxu0 %v2729
  %v2836 = vpop.f32.mrf.mxu0
  %v2837 = vadd.f32 %v1352, %v2836
  %v2838 = vpop.f32.mrf.mxu0
  %v2839 = vadd.f32 %v1354, %v2838
  %2840 = vmatprep.mubr.f32.mxu0 0.0
  %2841 = vmatmul.mubr.f32.gmra.mxu0 %v2732
  %v2842 = vpop.f32.mrf.mxu0
  %v2843 = vadd.f32 %v1358, %v2842
  %v2844 = vpop.f32.mrf.mxu0
  %v2845 = vadd.f32 %v1360, %v2844
  %2846 = vdwg.mxu0
  %2847 = vmatprep.subr.mxu0 0.0
  %2848 = vmatpush1.msra.mxu0 0.0
  %2849 = vmatprep.subr.mxu0 0.0
  %2850 = vmatpush1.msra.mxu0 0.0
  %2851 = vmatprep.subr.mxu0 0.0
  %2852 = vmatpush1.msra.mxu0 0.0
  %2853 = vmatprep.subr.mxu0 0.0
  %2854 = vmatpush1.msra.mxu0 0.0
  %2855 = vmatprep.subr.mxu0 0.0
  %2856 = vmatpush1.msra.mxu0 0.0
  %2857 = vmatprep.subr.mxu0 0.0
  %2858 = vmatpush1.msra.mxu0 0.0
  %2859 = vmatprep.subr.mxu0 0.0
  %2860 = vmatpush1.msra.mxu0 0.0
  %2861 = vmatprep.subr.mxu0 0.0
  %2862 = vmatpush1.msra.mxu0 0.0
  %2863 = vmatprep.subr.mxu0 %v200
  %2864 = vmatpush1.msra.mxu0 %v199
  %2865 = vmatprep.subr.mxu0 %v175
  %2866 = vmatpush1.msra.mxu0 %v174
  %2867 = vmatprep.subr.mxu0 %v150
  %2868 = vmatpush1.msra.mxu0 %v149
  %2869 = vmatprep.subr.mxu0 %v125
  %2870 = vmatpush1.msra.mxu0 %v124
  %2871 = vmatprep.subr.mxu0 %v100
  %2872 = vmatpush1.msra.mxu0 %v99
  %2873 = vmatprep.subr.mxu0 %v75
  %2874 = vmatpush1.msra.mxu0 %v74
  %2875 = vmatprep.subr.mxu0 %v50
  %2876 = vmatpush1.msra.mxu0 %v49
  %2877 = vmatprep.subr.mxu0 %v25
  %2878 = vmatpush1.msra.mxu0 %v24
  %2879 = vmatprep.subr.mxu0 0.0
  %2880 = vmatpush2.msra.mxu0 0.0
  %2881 = vmatprep.subr.mxu0 0.0
  %2882 = vmatpush2.msra.mxu0 0.0
  %2883 = vmatprep.subr.mxu0 0.0
  %2884 = vmatpush2.msra.mxu0 0.0
  %2885 = vmatprep.subr.mxu0 0.0
  %2886 = vmatpush2.msra.mxu0 0.0
  %2887 = vmatprep.subr.mxu0 0.0
  %2888 = vmatpush2.msra.mxu0 0.0
  %2889 = vmatprep.subr.mxu0 0.0
  %2890 = vmatpush2.msra.mxu0 0.0
  %2891 = vmatprep.subr.mxu0 0.0
  %2892 = vmatpush2.msra.mxu0 0.0
  %2893 = vmatprep.subr.mxu0 0.0
  %2894 = vmatpush2.msra.mxu0 0.0
  %2895 = vmatprep.subr.mxu0 0.0
  %2896 = vmatpush2.msra.mxu0 0.0
  %2897 = vmatprep.subr.mxu0 0.0
  %2898 = vmatpush2.msra.mxu0 0.0
  %2899 = vmatprep.subr.mxu0 0.0
  %2900 = vmatpush2.msra.mxu0 0.0
  %2901 = vmatprep.subr.mxu0 0.0
  %2902 = vmatpush2.msra.mxu0 0.0
  %2903 = vmatprep.subr.mxu0 0.0
  %2904 = vmatpush2.msra.mxu0 0.0
  %2905 = vmatprep.subr.mxu0 0.0
  %2906 = vmatpush2.msra.mxu0 0.0
  %2907 = vmatprep.subr.mxu0 0.0
  %2908 = vmatpush2.msra.mxu0 0.0
  %2909 = vmatprep.subr.mxu0 0.0
  %2910 = vmatpush2.msra.mxu0 0.0
  %2911 = vmatprep.mubr.f32.mxu0 0.0
  %2912 = vmatmul.mubr.f32.gmra.mxu0 %v2711
  %v2913 = vpop.f32.mrf.mxu0
  %v2914 = vadd.f32 %v1429, %v2913
  %v2915 = vpop.f32.mrf.mxu0
  %v2916 = vadd.f32 %v1431, %v2915
  %2917 = vmatprep.mubr.f32.mxu0 0.0
  %2918 = vmatmul.mubr.f32.gmra.mxu0 %v2714
  %v2919 = vpop.f32.mrf.mxu0
  %v2920 = vadd.f32 %v1435, %v2919
  %v2921 = vpop.f32.mrf.mxu0
  %v2922 = vadd.f32 %v1437, %v2921
  %2923 = vmatprep.mubr.f32.mxu0 0.0
  %2924 = vmatmul.mubr.f32.gmra.mxu0 %v2717
  %v2925 = vpop.f32.mrf.mxu0
  %v2926 = vadd.f32 %v1441, %v2925
  %v2927 = vpop.f32.mrf.mxu0
  %v2928 = vadd.f32 %v1443, %v2927
  %2929 = vmatprep.mubr.f32.mxu0 0.0
  %2930 = vmatmul.mubr.f32.gmra.mxu0 %v2720
  %v2931 = vpop.f32.mrf.mxu0
  %v2932 = vadd.f32 %v1447, %v2931
  %v2933 = vpop.f32.mrf.mxu0
  %v2934 = vadd.f32 %v1449, %v2933
  %2935 = vmatprep.mubr.f32.mxu0 0.0
  %2936 = vmatmul.mubr.f32.gmra.mxu0 %v2723
  %v2937 = vpop.f32.mrf.mxu0
  %v2938 = vadd.f32 %v1453, %v2937
  %v2939 = vpop.f32.mrf.mxu0
  %v2940 = vadd.f32 %v1455, %v2939
  %2941 = vmatprep.mubr.f32.mxu0 0.0
  %2942 = vmatmul.mubr.f32.gmra.mxu0 %v2726
  %v2943 = vpop.f32.mrf.mxu0
  %v2944 = vadd.f32 %v1459, %v2943
  %v2945 = vpop.f32.mrf.mxu0
  %v2946 = vadd.f32 %v1461, %v2945
  %2947 = vmatprep.mubr.f32.mxu0 0.0
  %2948 = vmatmul.mubr.f32.gmra.mxu0 %v2729
  %v2949 = vpop.f32.mrf.mxu0
  %v2950 = vadd.f32 %v1465, %v2949
  %v2951 = vpop.f32.mrf.mxu0
  %v2952 = vadd.f32 %v1467, %v2951
  %2953 = vmatprep.mubr.f32.mxu0 0.0
  %2954 = vmatmul.mubr.f32.gmra.mxu0 %v2732
  %v2955 = vpop.f32.mrf.mxu0
  %v2956 = vadd.f32 %v1471, %v2955
  %v2957 = vpop.f32.mrf.mxu0
  %v2958 = vadd.f32 %v1473, %v2957
  %2959 = vdwg.mxu0
  %2960 = vmatprep.subr.mxu0 0.0
  %2961 = vmatpush1.msra.mxu0 0.0
  %2962 = vmatprep.subr.mxu0 0.0
  %2963 = vmatpush1.msra.mxu0 0.0
  %2964 = vmatprep.subr.mxu0 0.0
  %2965 = vmatpush1.msra.mxu0 0.0
  %2966 = vmatprep.subr.mxu0 0.0
  %2967 = vmatpush1.msra.mxu0 0.0
  %2968 = vmatprep.subr.mxu0 0.0
  %2969 = vmatpush1.msra.mxu0 0.0
  %2970 = vmatprep.subr.mxu0 0.0
  %2971 = vmatpush1.msra.mxu0 0.0
  %2972 = vmatprep.subr.mxu0 0.0
  %2973 = vmatpush1.msra.mxu0 0.0
  %2974 = vmatprep.subr.mxu0 0.0
  %2975 = vmatpush1.msra.mxu0 0.0
  %2976 = vmatprep.subr.mxu0 %v202
  %2977 = vmatpush1.msra.mxu0 %v201
  %2978 = vmatprep.subr.mxu0 %v177
  %2979 = vmatpush1.msra.mxu0 %v176
  %2980 = vmatprep.subr.mxu0 %v152
  %2981 = vmatpush1.msra.mxu0 %v151
  %2982 = vmatprep.subr.mxu0 %v127
  %2983 = vmatpush1.msra.mxu0 %v126
  %2984 = vmatprep.subr.mxu0 %v102
  %2985 = vmatpush1.msra.mxu0 %v101
  %2986 = vmatprep.subr.mxu0 %v77
  %2987 = vmatpush1.msra.mxu0 %v76
  %2988 = vmatprep.subr.mxu0 %v52
  %2989 = vmatpush1.msra.mxu0 %v51
  %2990 = vmatprep.subr.mxu0 %v27
  %2991 = vmatpush1.msra.mxu0 %v26
  %2992 = vmatprep.subr.mxu0 0.0
  %2993 = vmatpush2.msra.mxu0 0.0
  %2994 = vmatprep.subr.mxu0 0.0
  %2995 = vmatpush2.msra.mxu0 0.0
  %2996 = vmatprep.subr.mxu0 0.0
  %2997 = vmatpush2.msra.mxu0 0.0
  %2998 = vmatprep.subr.mxu0 0.0
  %2999 = vmatpush2.msra.mxu0 0.0
  %3000 = vmatprep.subr.mxu0 0.0
  %3001 = vmatpush2.msra.mxu0 0.0
  %3002 = vmatprep.subr.mxu0 0.0
  %3003 = vmatpush2.msra.mxu0 0.0
  %3004 = vmatprep.subr.mxu0 0.0
  %3005 = vmatpush2.msra.mxu0 0.0
  %3006 = vmatprep.subr.mxu0 0.0
  %3007 = vmatpush2.msra.mxu0 0.0
  %3008 = vmatprep.subr.mxu0 0.0
  %3009 = vmatpush2.msra.mxu0 0.0
  %3010 = vmatprep.subr.mxu0 0.0
  %3011 = vmatpush2.msra.mxu0 0.0
  %3012 = vmatprep.subr.mxu0 0.0
  %3013 = vmatpush2.msra.mxu0 0.0
  %3014 = vmatprep.subr.mxu0 0.0
  %3015 = vmatpush2.msra.mxu0 0.0
  %3016 = vmatprep.subr.mxu0 0.0
  %3017 = vmatpush2.msra.mxu0 0.0
  %3018 = vmatprep.subr.mxu0 0.0
  %3019 = vmatpush2.msra.mxu0 0.0
  %3020 = vmatprep.subr.mxu0 0.0
  %3021 = vmatpush2.msra.mxu0 0.0
  %3022 = vmatprep.subr.mxu0 0.0
  %3023 = vmatpush2.msra.mxu0 0.0
  %3024 = vmatprep.mubr.f32.mxu0 0.0
  %3025 = vmatmul.mubr.f32.gmra.mxu0 %v2711
  %v3026 = vpop.f32.mrf.mxu0
  %v3027 = vadd.f32 %v1542, %v3026
  %v3028 = vpop.f32.mrf.mxu0
  %v3029 = vadd.f32 %v1544, %v3028
  %3030 = vmatprep.mubr.f32.mxu0 0.0
  %3031 = vmatmul.mubr.f32.gmra.mxu0 %v2714
  %v3032 = vpop.f32.mrf.mxu0
  %v3033 = vadd.f32 %v1548, %v3032
  %v3034 = vpop.f32.mrf.mxu0
  %v3035 = vadd.f32 %v1550, %v3034
  %3036 = vmatprep.mubr.f32.mxu0 0.0
  %3037 = vmatmul.mubr.f32.gmra.mxu0 %v2717
  %v3038 = vpop.f32.mrf.mxu0
  %v3039 = vadd.f32 %v1554, %v3038
  %v3040 = vpop.f32.mrf.mxu0
  %v3041 = vadd.f32 %v1556, %v3040
  %3042 = vmatprep.mubr.f32.mxu0 0.0
  %3043 = vmatmul.mubr.f32.gmra.mxu0 %v2720
  %v3044 = vpop.f32.mrf.mxu0
  %v3045 = vadd.f32 %v1560, %v3044
  %v3046 = vpop.f32.mrf.mxu0
  %v3047 = vadd.f32 %v1562, %v3046
  %3048 = vmatprep.mubr.f32.mxu0 0.0
  %3049 = vmatmul.mubr.f32.gmra.mxu0 %v2723
  %v3050 = vpop.f32.mrf.mxu0
  %v3051 = vadd.f32 %v1566, %v3050
  %v3052 = vpop.f32.mrf.mxu0
  %v3053 = vadd.f32 %v1568, %v3052
  %3054 = vmatprep.mubr.f32.mxu0 0.0
  %3055 = vmatmul.mubr.f32.gmra.mxu0 %v2726
  %v3056 = vpop.f32.mrf.mxu0
  %v3057 = vadd.f32 %v1572, %v3056
  %v3058 = vpop.f32.mrf.mxu0
  %v3059 = vadd.f32 %v1574, %v3058
  %3060 = vmatprep.mubr.f32.mxu0 0.0
  %3061 = vmatmul.mubr.f32.gmra.mxu0 %v2729
  %v3062 = vpop.f32.mrf.mxu0
  %v3063 = vadd.f32 %v1578, %v3062
  %v3064 = vpop.f32.mrf.mxu0
  %v3065 = vadd.f32 %v1580, %v3064
  %3066 = vmatprep.mubr.f32.mxu0 0.0
  %3067 = vmatmul.mubr.f32.gmra.mxu0 %v2732
  %v3068 = vpop.f32.mrf.mxu0
  %v3069 = vadd.f32 %v1584, %v3068
  %v3070 = vpop.f32.mrf.mxu0
  %v3071 = vadd.f32 %v1586, %v3070
  %3072 = vdwg.mxu0
  %3073 = vmatprep.subr.mxu0 0.0
  %3074 = vmatpush1.msra.mxu0 0.0
  %3075 = vmatprep.subr.mxu0 0.0
  %3076 = vmatpush1.msra.mxu0 0.0
  %3077 = vmatprep.subr.mxu0 0.0
  %3078 = vmatpush1.msra.mxu0 0.0
  %3079 = vmatprep.subr.mxu0 0.0
  %3080 = vmatpush1.msra.mxu0 0.0
  %3081 = vmatprep.subr.mxu0 0.0
  %3082 = vmatpush1.msra.mxu0 0.0
  %3083 = vmatprep.subr.mxu0 0.0
  %3084 = vmatpush1.msra.mxu0 0.0
  %3085 = vmatprep.subr.mxu0 0.0
  %3086 = vmatpush1.msra.mxu0 0.0
  %3087 = vmatprep.subr.mxu0 0.0
  %3088 = vmatpush1.msra.mxu0 0.0
  %3089 = vmatprep.subr.mxu0 %v204
  %3090 = vmatpush1.msra.mxu0 %v203
  %3091 = vmatprep.subr.mxu0 %v179
  %3092 = vmatpush1.msra.mxu0 %v178
  %3093 = vmatprep.subr.mxu0 %v154
  %3094 = vmatpush1.msra.mxu0 %v153
  %3095 = vmatprep.subr.mxu0 %v129
  %3096 = vmatpush1.msra.mxu0 %v128
  %3097 = vmatprep.subr.mxu0 %v104
  %3098 = vmatpush1.msra.mxu0 %v103
  %3099 = vmatprep.subr.mxu0 %v79
  %3100 = vmatpush1.msra.mxu0 %v78
  %3101 = vmatprep.subr.mxu0 %v54
  %3102 = vmatpush1.msra.mxu0 %v53
  %3103 = vmatprep.subr.mxu0 %v29
  %3104 = vmatpush1.msra.mxu0 %v28
  %3105 = vmatprep.subr.mxu0 0.0
  %3106 = vmatpush2.msra.mxu0 0.0
  %3107 = vmatprep.subr.mxu0 0.0
  %3108 = vmatpush2.msra.mxu0 0.0
  %3109 = vmatprep.subr.mxu0 0.0
  %3110 = vmatpush2.msra.mxu0 0.0
  %3111 = vmatprep.subr.mxu0 0.0
  %3112 = vmatpush2.msra.mxu0 0.0
  %3113 = vmatprep.subr.mxu0 0.0
  %3114 = vmatpush2.msra.mxu0 0.0
  %3115 = vmatprep.subr.mxu0 0.0
  %3116 = vmatpush2.msra.mxu0 0.0
  %3117 = vmatprep.subr.mxu0 0.0
  %3118 = vmatpush2.msra.mxu0 0.0
  %3119 = vmatprep.subr.mxu0 0.0
  %3120 = vmatpush2.msra.mxu0 0.0
  %3121 = vmatprep.subr.mxu0 0.0
  %3122 = vmatpush2.msra.mxu0 0.0
  %3123 = vmatprep.subr.mxu0 0.0
  %3124 = vmatpush2.msra.mxu0 0.0
  %3125 = vmatprep.subr.mxu0 0.0
  %3126 = vmatpush2.msra.mxu0 0.0
  %3127 = vmatprep.subr.mxu0 0.0
  %3128 = vmatpush2.msra.mxu0 0.0
  %3129 = vmatprep.subr.mxu0 0.0
  %3130 = vmatpush2.msra.mxu0 0.0
  %3131 = vmatprep.subr.mxu0 0.0
  %3132 = vmatpush2.msra.mxu0 0.0
  %3133 = vmatprep.subr.mxu0 0.0
  %3134 = vmatpush2.msra.mxu0 0.0
  %3135 = vmatprep.subr.mxu0 0.0
  %3136 = vmatpush2.msra.mxu0 0.0
  %3137 = vmatprep.mubr.f32.mxu0 0.0
  %3138 = vmatmul.mubr.f32.gmra.mxu0 %v2711
  %v3139 = vpop.f32.mrf.mxu0
  %v3140 = vadd.f32 %v1655, %v3139
  %v3141 = vpop.f32.mrf.mxu0
  %v3142 = vadd.f32 %v1657, %v3141
  %3143 = vmatprep.mubr.f32.mxu0 0.0
  %3144 = vmatmul.mubr.f32.gmra.mxu0 %v2714
  %v3145 = vpop.f32.mrf.mxu0
  %v3146 = vadd.f32 %v1661, %v3145
  %v3147 = vpop.f32.mrf.mxu0
  %v3148 = vadd.f32 %v1663, %v3147
  %3149 = vmatprep.mubr.f32.mxu0 0.0
  %3150 = vmatmul.mubr.f32.gmra.mxu0 %v2717
  %v3151 = vpop.f32.mrf.mxu0
  %v3152 = vadd.f32 %v1667, %v3151
  %v3153 = vpop.f32.mrf.mxu0
  %v3154 = vadd.f32 %v1669, %v3153
  %3155 = vmatprep.mubr.f32.mxu0 0.0
  %3156 = vmatmul.mubr.f32.gmra.mxu0 %v2720
  %v3157 = vpop.f32.mrf.mxu0
  %v3158 = vadd.f32 %v1673, %v3157
  %v3159 = vpop.f32.mrf.mxu0
  %v3160 = vadd.f32 %v1675, %v3159
  %3161 = vmatprep.mubr.f32.mxu0 0.0
  %3162 = vmatmul.mubr.f32.gmra.mxu0 %v2723
  %v3163 = vpop.f32.mrf.mxu0
  %v3164 = vadd.f32 %v1679, %v3163
  %v3165 = vpop.f32.mrf.mxu0
  %v3166 = vadd.f32 %v1681, %v3165
  %3167 = vmatprep.mubr.f32.mxu0 0.0
  %3168 = vmatmul.mubr.f32.gmra.mxu0 %v2726
  %v3169 = vpop.f32.mrf.mxu0
  %v3170 = vadd.f32 %v1685, %v3169
  %v3171 = vpop.f32.mrf.mxu0
  %v3172 = vadd.f32 %v1687, %v3171
  %3173 = vmatprep.mubr.f32.mxu0 0.0
  %3174 = vmatmul.mubr.f32.gmra.mxu0 %v2729
  %v3175 = vpop.f32.mrf.mxu0
  %v3176 = vadd.f32 %v1691, %v3175
  %v3177 = vpop.f32.mrf.mxu0
  %v3178 = vadd.f32 %v1693, %v3177
  %3179 = vmatprep.mubr.f32.mxu0 0.0
  %3180 = vmatmul.mubr.f32.gmra.mxu0 %v2732
  %v3181 = vpop.f32.mrf.mxu0
  %v3182 = vadd.f32 %v1697, %v3181
  %v3183 = vpop.f32.mrf.mxu0
  %v3184 = vadd.f32 %v1699, %v3183
  %3185 = vdwg.mxu0
  %3186 = vmatprep.subr.mxu0 0.0
  %3187 = vmatpush1.msra.mxu0 0.0
  %3188 = vmatprep.subr.mxu0 0.0
  %3189 = vmatpush1.msra.mxu0 0.0
  %3190 = vmatprep.subr.mxu0 0.0
  %3191 = vmatpush1.msra.mxu0 0.0
  %3192 = vmatprep.subr.mxu0 0.0
  %3193 = vmatpush1.msra.mxu0 0.0
  %3194 = vmatprep.subr.mxu0 0.0
  %3195 = vmatpush1.msra.mxu0 0.0
  %3196 = vmatprep.subr.mxu0 0.0
  %3197 = vmatpush1.msra.mxu0 0.0
  %3198 = vmatprep.subr.mxu0 0.0
  %3199 = vmatpush1.msra.mxu0 0.0
  %3200 = vmatprep.subr.mxu0 0.0
  %3201 = vmatpush1.msra.mxu0 0.0
  %3202 = vmatprep.subr.mxu0 %v206
  %3203 = vmatpush1.msra.mxu0 %v205
  %3204 = vmatprep.subr.mxu0 %v181
  %3205 = vmatpush1.msra.mxu0 %v180
  %3206 = vmatprep.subr.mxu0 %v156
  %3207 = vmatpush1.msra.mxu0 %v155
  %3208 = vmatprep.subr.mxu0 %v131
  %3209 = vmatpush1.msra.mxu0 %v130
  %3210 = vmatprep.subr.mxu0 %v106
  %3211 = vmatpush1.msra.mxu0 %v105
  %3212 = vmatprep.subr.mxu0 %v81
  %3213 = vmatpush1.msra.mxu0 %v80
  %3214 = vmatprep.subr.mxu0 %v56
  %3215 = vmatpush1.msra.mxu0 %v55
  %3216 = vmatprep.subr.mxu0 %v31
  %3217 = vmatpush1.msra.mxu0 %v30
  %3218 = vmatprep.subr.mxu0 0.0
  %3219 = vmatpush2.msra.mxu0 0.0
  %3220 = vmatprep.subr.mxu0 0.0
  %3221 = vmatpush2.msra.mxu0 0.0
  %3222 = vmatprep.subr.mxu0 0.0
  %3223 = vmatpush2.msra.mxu0 0.0
  %3224 = vmatprep.subr.mxu0 0.0
  %3225 = vmatpush2.msra.mxu0 0.0
  %3226 = vmatprep.subr.mxu0 0.0
  %3227 = vmatpush2.msra.mxu0 0.0
  %3228 = vmatprep.subr.mxu0 0.0
  %3229 = vmatpush2.msra.mxu0 0.0
  %3230 = vmatprep.subr.mxu0 0.0
  %3231 = vmatpush2.msra.mxu0 0.0
  %3232 = vmatprep.subr.mxu0 0.0
  %3233 = vmatpush2.msra.mxu0 0.0
  %3234 = vmatprep.subr.mxu0 0.0
  %3235 = vmatpush2.msra.mxu0 0.0
  %3236 = vmatprep.subr.mxu0 0.0
  %3237 = vmatpush2.msra.mxu0 0.0
  %3238 = vmatprep.subr.mxu0 0.0
  %3239 = vmatpush2.msra.mxu0 0.0
  %3240 = vmatprep.subr.mxu0 0.0
  %3241 = vmatpush2.msra.mxu0 0.0
  %3242 = vmatprep.subr.mxu0 0.0
  %3243 = vmatpush2.msra.mxu0 0.0
  %3244 = vmatprep.subr.mxu0 0.0
  %3245 = vmatpush2.msra.mxu0 0.0
  %3246 = vmatprep.subr.mxu0 0.0
  %3247 = vmatpush2.msra.mxu0 0.0
  %3248 = vmatprep.subr.mxu0 0.0
  %3249 = vmatpush2.msra.mxu0 0.0
  %3250 = vmatprep.mubr.f32.mxu0 0.0
  %3251 = vmatmul.mubr.f32.gmra.mxu0 %v2711
  %v3252 = vpop.f32.mrf.mxu0
  %v3253 = vadd.f32 %v1768, %v3252
  %v3254 = vpop.f32.mrf.mxu0
  %v3255 = vadd.f32 %v1770, %v3254
  %3256 = vmatprep.mubr.f32.mxu0 0.0
  %3257 = vmatmul.mubr.f32.gmra.mxu0 %v2714
  %v3258 = vpop.f32.mrf.mxu0
  %v3259 = vadd.f32 %v1774, %v3258
  %v3260 = vpop.f32.mrf.mxu0
  %v3261 = vadd.f32 %v1776, %v3260
  %3262 = vmatprep.mubr.f32.mxu0 0.0
  %3263 = vmatmul.mubr.f32.gmra.mxu0 %v2717
  %v3264 = vpop.f32.mrf.mxu0
  %v3265 = vadd.f32 %v1780, %v3264
  %v3266 = vpop.f32.mrf.mxu0
  %v3267 = vadd.f32 %v1782, %v3266
  %3268 = vmatprep.mubr.f32.mxu0 0.0
  %3269 = vmatmul.mubr.f32.gmra.mxu0 %v2720
  %v3270 = vpop.f32.mrf.mxu0
  %v3271 = vadd.f32 %v1786, %v3270
  %v3272 = vpop.f32.mrf.mxu0
  %v3273 = vadd.f32 %v1788, %v3272
  %3274 = vmatprep.mubr.f32.mxu0 0.0
  %3275 = vmatmul.mubr.f32.gmra.mxu0 %v2723
  %v3276 = vpop.f32.mrf.mxu0
  %v3277 = vadd.f32 %v1792, %v3276
  %v3278 = vpop.f32.mrf.mxu0
  %v3279 = vadd.f32 %v1794, %v3278
  %3280 = vmatprep.mubr.f32.mxu0 0.0
  %3281 = vmatmul.mubr.f32.gmra.mxu0 %v2726
  %v3282 = vpop.f32.mrf.mxu0
  %v3283 = vadd.f32 %v1798, %v3282
  %v3284 = vpop.f32.mrf.mxu0
  %v3285 = vadd.f32 %v1800, %v3284
  %3286 = vmatprep.mubr.f32.mxu0 0.0
  %3287 = vmatmul.mubr.f32.gmra.mxu0 %v2729
  %v3288 = vpop.f32.mrf.mxu0
  %v3289 = vadd.f32 %v1804, %v3288
  %v3290 = vpop.f32.mrf.mxu0
  %v3291 = vadd.f32 %v1806, %v3290
  %3292 = vmatprep.mubr.f32.mxu0 0.0
  %3293 = vmatmul.mubr.f32.gmra.mxu0 %v2732
  %v3294 = vpop.f32.mrf.mxu0
  %v3295 = vadd.f32 %v1810, %v3294
  %v3296 = vpop.f32.mrf.mxu0
  %v3297 = vadd.f32 %v1812, %v3296
  %3298 = vdwg.mxu0
  %3299 = vmatprep.subr.mxu0 0.0
  %3300 = vmatpush1.msra.mxu0 0.0
  %3301 = vmatprep.subr.mxu0 0.0
  %3302 = vmatpush1.msra.mxu0 0.0
  %3303 = vmatprep.subr.mxu0 0.0
  %3304 = vmatpush1.msra.mxu0 0.0
  %3305 = vmatprep.subr.mxu0 0.0
  %3306 = vmatpush1.msra.mxu0 0.0
  %3307 = vmatprep.subr.mxu0 0.0
  %3308 = vmatpush1.msra.mxu0 0.0
  %3309 = vmatprep.subr.mxu0 0.0
  %3310 = vmatpush1.msra.mxu0 0.0
  %3311 = vmatprep.subr.mxu0 0.0
  %3312 = vmatpush1.msra.mxu0 0.0
  %3313 = vmatprep.subr.mxu0 0.0
  %3314 = vmatpush1.msra.mxu0 0.0
  %3315 = vmatprep.subr.mxu0 %v208
  %3316 = vmatpush1.msra.mxu0 %v207
  %3317 = vmatprep.subr.mxu0 %v183
  %3318 = vmatpush1.msra.mxu0 %v182
  %3319 = vmatprep.subr.mxu0 %v158
  %3320 = vmatpush1.msra.mxu0 %v157
  %3321 = vmatprep.subr.mxu0 %v133
  %3322 = vmatpush1.msra.mxu0 %v132
  %3323 = vmatprep.subr.mxu0 %v108
  %3324 = vmatpush1.msra.mxu0 %v107
  %3325 = vmatprep.subr.mxu0 %v83
  %3326 = vmatpush1.msra.mxu0 %v82
  %3327 = vmatprep.subr.mxu0 %v58
  %3328 = vmatpush1.msra.mxu0 %v57
  %3329 = vmatprep.subr.mxu0 %v33
  %3330 = vmatpush1.msra.mxu0 %v32
  %3331 = vmatprep.subr.mxu0 0.0
  %3332 = vmatpush2.msra.mxu0 0.0
  %3333 = vmatprep.subr.mxu0 0.0
  %3334 = vmatpush2.msra.mxu0 0.0
  %3335 = vmatprep.subr.mxu0 0.0
  %3336 = vmatpush2.msra.mxu0 0.0
  %3337 = vmatprep.subr.mxu0 0.0
  %3338 = vmatpush2.msra.mxu0 0.0
  %3339 = vmatprep.subr.mxu0 0.0
  %3340 = vmatpush2.msra.mxu0 0.0
  %3341 = vmatprep.subr.mxu0 0.0
  %3342 = vmatpush2.msra.mxu0 0.0
  %3343 = vmatprep.subr.mxu0 0.0
  %3344 = vmatpush2.msra.mxu0 0.0
  %3345 = vmatprep.subr.mxu0 0.0
  %3346 = vmatpush2.msra.mxu0 0.0
  %3347 = vmatprep.subr.mxu0 0.0
  %3348 = vmatpush2.msra.mxu0 0.0
  %3349 = vmatprep.subr.mxu0 0.0
  %3350 = vmatpush2.msra.mxu0 0.0
  %3351 = vmatprep.subr.mxu0 0.0
  %3352 = vmatpush2.msra.mxu0 0.0
  %3353 = vmatprep.subr.mxu0 0.0
  %3354 = vmatpush2.msra.mxu0 0.0
  %3355 = vmatprep.subr.mxu0 0.0
  %3356 = vmatpush2.msra.mxu0 0.0
  %3357 = vmatprep.subr.mxu0 0.0
  %3358 = vmatpush2.msra.mxu0 0.0
  %3359 = vmatprep.subr.mxu0 0.0
  %3360 = vmatpush2.msra.mxu0 0.0
  %3361 = vmatprep.subr.mxu0 0.0
  %3362 = vmatpush2.msra.mxu0 0.0
  %3363 = vmatprep.mubr.f32.mxu0 0.0
  %3364 = vmatmul.mubr.f32.gmra.mxu0 %v2711
  %v3365 = vpop.f32.mrf.mxu0
  %v3366 = vadd.f32 %v1881, %v3365
  %v3367 = vpop.f32.mrf.mxu0
  %v3368 = vadd.f32 %v1883, %v3367
  %3369 = vmatprep.mubr.f32.mxu0 0.0
  %3370 = vmatmul.mubr.f32.gmra.mxu0 %v2714
  %v3371 = vpop.f32.mrf.mxu0
  %v3372 = vadd.f32 %v1887, %v3371
  %v3373 = vpop.f32.mrf.mxu0
  %v3374 = vadd.f32 %v1889, %v3373
  %3375 = vmatprep.mubr.f32.mxu0 0.0
  %3376 = vmatmul.mubr.f32.gmra.mxu0 %v2717
  %v3377 = vpop.f32.mrf.mxu0
  %v3378 = vadd.f32 %v1893, %v3377
  %v3379 = vpop.f32.mrf.mxu0
  %v3380 = vadd.f32 %v1895, %v3379
  %3381 = vmatprep.mubr.f32.mxu0 0.0
  %3382 = vmatmul.mubr.f32.gmra.mxu0 %v2720
  %v3383 = vpop.f32.mrf.mxu0
  %v3384 = vadd.f32 %v1899, %v3383
  %v3385 = vpop.f32.mrf.mxu0
  %v3386 = vadd.f32 %v1901, %v3385
  %3387 = vmatprep.mubr.f32.mxu0 0.0
  %3388 = vmatmul.mubr.f32.gmra.mxu0 %v2723
  %v3389 = vpop.f32.mrf.mxu0
  %v3390 = vadd.f32 %v1905, %v3389
  %v3391 = vpop.f32.mrf.mxu0
  %v3392 = vadd.f32 %v1907, %v3391
  %3393 = vmatprep.mubr.f32.mxu0 0.0
  %3394 = vmatmul.mubr.f32.gmra.mxu0 %v2726
  %v3395 = vpop.f32.mrf.mxu0
  %v3396 = vadd.f32 %v1911, %v3395
  %v3397 = vpop.f32.mrf.mxu0
  %v3398 = vadd.f32 %v1913, %v3397
  %3399 = vmatprep.mubr.f32.mxu0 0.0
  %3400 = vmatmul.mubr.f32.gmra.mxu0 %v2729
  %v3401 = vpop.f32.mrf.mxu0
  %v3402 = vadd.f32 %v1917, %v3401
  %v3403 = vpop.f32.mrf.mxu0
  %v3404 = vadd.f32 %v1919, %v3403
  %3405 = vmatprep.mubr.f32.mxu0 0.0
  %3406 = vmatmul.mubr.f32.gmra.mxu0 %v2732
  %v3407 = vpop.f32.mrf.mxu0
  %v3408 = vadd.f32 %v1923, %v3407
  %v3409 = vpop.f32.mrf.mxu0
  %v3410 = vadd.f32 %v1925, %v3409
  %3411 = vdwg.mxu0
  %3412 = vmatprep.subr.mxu0 0.0
  %3413 = vmatpush1.msra.mxu0 0.0
  %3414 = vmatprep.subr.mxu0 0.0
  %3415 = vmatpush1.msra.mxu0 0.0
  %3416 = vmatprep.subr.mxu0 0.0
  %3417 = vmatpush1.msra.mxu0 0.0
  %3418 = vmatprep.subr.mxu0 0.0
  %3419 = vmatpush1.msra.mxu0 0.0
  %3420 = vmatprep.subr.mxu0 0.0
  %3421 = vmatpush1.msra.mxu0 0.0
  %3422 = vmatprep.subr.mxu0 0.0
  %3423 = vmatpush1.msra.mxu0 0.0
  %3424 = vmatprep.subr.mxu0 0.0
  %3425 = vmatpush1.msra.mxu0 0.0
  %3426 = vmatprep.subr.mxu0 0.0
  %3427 = vmatpush1.msra.mxu0 0.0
  %3428 = vmatprep.subr.mxu0 %v210
  %3429 = vmatpush1.msra.mxu0 %v209
  %3430 = vmatprep.subr.mxu0 %v185
  %3431 = vmatpush1.msra.mxu0 %v184
  %3432 = vmatprep.subr.mxu0 %v160
  %3433 = vmatpush1.msra.mxu0 %v159
  %3434 = vmatprep.subr.mxu0 %v135
  %3435 = vmatpush1.msra.mxu0 %v134
  %3436 = vmatprep.subr.mxu0 %v110
  %3437 = vmatpush1.msra.mxu0 %v109
  %3438 = vmatprep.subr.mxu0 %v85
  %3439 = vmatpush1.msra.mxu0 %v84
  %3440 = vmatprep.subr.mxu0 %v60
  %3441 = vmatpush1.msra.mxu0 %v59
  %3442 = vmatprep.subr.mxu0 %v35
  %3443 = vmatpush1.msra.mxu0 %v34
  %3444 = vmatprep.subr.mxu0 0.0
  %3445 = vmatpush2.msra.mxu0 0.0
  %3446 = vmatprep.subr.mxu0 0.0
  %3447 = vmatpush2.msra.mxu0 0.0
  %3448 = vmatprep.subr.mxu0 0.0
  %3449 = vmatpush2.msra.mxu0 0.0
  %3450 = vmatprep.subr.mxu0 0.0
  %3451 = vmatpush2.msra.mxu0 0.0
  %3452 = vmatprep.subr.mxu0 0.0
  %3453 = vmatpush2.msra.mxu0 0.0
  %3454 = vmatprep.subr.mxu0 0.0
  %3455 = vmatpush2.msra.mxu0 0.0
  %3456 = vmatprep.subr.mxu0 0.0
  %3457 = vmatpush2.msra.mxu0 0.0
  %3458 = vmatprep.subr.mxu0 0.0
  %3459 = vmatpush2.msra.mxu0 0.0
  %3460 = vmatprep.subr.mxu0 0.0
  %3461 = vmatpush2.msra.mxu0 0.0
  %3462 = vmatprep.subr.mxu0 0.0
  %3463 = vmatpush2.msra.mxu0 0.0
  %3464 = vmatprep.subr.mxu0 0.0
  %3465 = vmatpush2.msra.mxu0 0.0
  %3466 = vmatprep.subr.mxu0 0.0
  %3467 = vmatpush2.msra.mxu0 0.0
  %3468 = vmatprep.subr.mxu0 0.0
  %3469 = vmatpush2.msra.mxu0 0.0
  %3470 = vmatprep.subr.mxu0 0.0
  %3471 = vmatpush2.msra.mxu0 0.0
  %3472 = vmatprep.subr.mxu0 0.0
  %3473 = vmatpush2.msra.mxu0 0.0
  %3474 = vmatprep.subr.mxu0 0.0
  %3475 = vmatpush2.msra.mxu0 0.0
  %3476 = vmatprep.mubr.f32.mxu0 0.0
  %3477 = vmatmul.mubr.f32.gmra.mxu0 %v2711
  %v3478 = vpop.f32.mrf.mxu0
  %v3479 = vadd.f32 %v1994, %v3478
  %v3480 = vpop.f32.mrf.mxu0
  %v3481 = vadd.f32 %v1996, %v3480
  %3482 = vmatprep.mubr.f32.mxu0 0.0
  %3483 = vmatmul.mubr.f32.gmra.mxu0 %v2714
  %v3484 = vpop.f32.mrf.mxu0
  %v3485 = vadd.f32 %v2000, %v3484
  %v3486 = vpop.f32.mrf.mxu0
  %v3487 = vadd.f32 %v2002, %v3486
  %3488 = vmatprep.mubr.f32.mxu0 0.0
  %3489 = vmatmul.mubr.f32.gmra.mxu0 %v2717
  %v3490 = vpop.f32.mrf.mxu0
  %v3491 = vadd.f32 %v2006, %v3490
  %v3492 = vpop.f32.mrf.mxu0
  %v3493 = vadd.f32 %v2008, %v3492
  %3494 = vmatprep.mubr.f32.mxu0 0.0
  %3495 = vmatmul.mubr.f32.gmra.mxu0 %v2720
  %v3496 = vpop.f32.mrf.mxu0
  %v3497 = vadd.f32 %v2012, %v3496
  %v3498 = vpop.f32.mrf.mxu0
  %v3499 = vadd.f32 %v2014, %v3498
  %3500 = vmatprep.mubr.f32.mxu0 0.0
  %3501 = vmatmul.mubr.f32.gmra.mxu0 %v2723
  %v3502 = vpop.f32.mrf.mxu0
  %v3503 = vadd.f32 %v2018, %v3502
  %v3504 = vpop.f32.mrf.mxu0
  %v3505 = vadd.f32 %v2020, %v3504
  %3506 = vmatprep.mubr.f32.mxu0 0.0
  %3507 = vmatmul.mubr.f32.gmra.mxu0 %v2726
  %v3508 = vpop.f32.mrf.mxu0
  %v3509 = vadd.f32 %v2024, %v3508
  %v3510 = vpop.f32.mrf.mxu0
  %v3511 = vadd.f32 %v2026, %v3510
  %3512 = vmatprep.mubr.f32.mxu0 0.0
  %3513 = vmatmul.mubr.f32.gmra.mxu0 %v2729
  %v3514 = vpop.f32.mrf.mxu0
  %v3515 = vadd.f32 %v2030, %v3514
  %v3516 = vpop.f32.mrf.mxu0
  %v3517 = vadd.f32 %v2032, %v3516
  %3518 = vmatprep.mubr.f32.mxu0 0.0
  %3519 = vmatmul.mubr.f32.gmra.mxu0 %v2732
  %v3520 = vpop.f32.mrf.mxu0
  %v3521 = vadd.f32 %v2036, %v3520
  %v3522 = vpop.f32.mrf.mxu0
  %v3523 = vadd.f32 %v2038, %v3522
  %3524 = vdwg.mxu0
  %3525 = vmatprep.subr.mxu0 0.0
  %3526 = vmatpush1.msra.mxu0 0.0
  %3527 = vmatprep.subr.mxu0 0.0
  %3528 = vmatpush1.msra.mxu0 0.0
  %3529 = vmatprep.subr.mxu0 0.0
  %3530 = vmatpush1.msra.mxu0 0.0
  %3531 = vmatprep.subr.mxu0 0.0
  %3532 = vmatpush1.msra.mxu0 0.0
  %3533 = vmatprep.subr.mxu0 0.0
  %3534 = vmatpush1.msra.mxu0 0.0
  %3535 = vmatprep.subr.mxu0 0.0
  %3536 = vmatpush1.msra.mxu0 0.0
  %3537 = vmatprep.subr.mxu0 0.0
  %3538 = vmatpush1.msra.mxu0 0.0
  %3539 = vmatprep.subr.mxu0 0.0
  %3540 = vmatpush1.msra.mxu0 0.0
  %3541 = vmatprep.subr.mxu0 %v212
  %3542 = vmatpush1.msra.mxu0 %v211
  %3543 = vmatprep.subr.mxu0 %v187
  %3544 = vmatpush1.msra.mxu0 %v186
  %3545 = vmatprep.subr.mxu0 %v162
  %3546 = vmatpush1.msra.mxu0 %v161
  %3547 = vmatprep.subr.mxu0 %v137
  %3548 = vmatpush1.msra.mxu0 %v136
  %3549 = vmatprep.subr.mxu0 %v112
  %3550 = vmatpush1.msra.mxu0 %v111
  %3551 = vmatprep.subr.mxu0 %v87
  %3552 = vmatpush1.msra.mxu0 %v86
  %3553 = vmatprep.subr.mxu0 %v62
  %3554 = vmatpush1.msra.mxu0 %v61
  %3555 = vmatprep.subr.mxu0 %v37
  %3556 = vmatpush1.msra.mxu0 %v36
  %3557 = vmatprep.subr.mxu0 0.0
  %3558 = vmatpush2.msra.mxu0 0.0
  %3559 = vmatprep.subr.mxu0 0.0
  %3560 = vmatpush2.msra.mxu0 0.0
  %3561 = vmatprep.subr.mxu0 0.0
  %3562 = vmatpush2.msra.mxu0 0.0
  %3563 = vmatprep.subr.mxu0 0.0
  %3564 = vmatpush2.msra.mxu0 0.0
  %3565 = vmatprep.subr.mxu0 0.0
  %3566 = vmatpush2.msra.mxu0 0.0
  %3567 = vmatprep.subr.mxu0 0.0
  %3568 = vmatpush2.msra.mxu0 0.0
  %3569 = vmatprep.subr.mxu0 0.0
  %3570 = vmatpush2.msra.mxu0 0.0
  %3571 = vmatprep.subr.mxu0 0.0
  %3572 = vmatpush2.msra.mxu0 0.0
  %3573 = vmatprep.subr.mxu0 0.0
  %3574 = vmatpush2.msra.mxu0 0.0
  %3575 = vmatprep.subr.mxu0 0.0
  %3576 = vmatpush2.msra.mxu0 0.0
  %3577 = vmatprep.subr.mxu0 0.0
  %3578 = vmatpush2.msra.mxu0 0.0
  %3579 = vmatprep.subr.mxu0 0.0
  %3580 = vmatpush2.msra.mxu0 0.0
  %3581 = vmatprep.subr.mxu0 0.0
  %3582 = vmatpush2.msra.mxu0 0.0
  %3583 = vmatprep.subr.mxu0 0.0
  %3584 = vmatpush2.msra.mxu0 0.0
  %3585 = vmatprep.subr.mxu0 0.0
  %3586 = vmatpush2.msra.mxu0 0.0
  %3587 = vmatprep.subr.mxu0 0.0
  %3588 = vmatpush2.msra.mxu0 0.0
  %3589 = vmatprep.mubr.f32.mxu0 0.0
  %3590 = vmatmul.mubr.f32.gmra.mxu0 %v2711
  %v3591 = vpop.f32.mrf.mxu0
  %v3592 = vadd.f32 %v2107, %v3591
  %v3593 = vpop.f32.mrf.mxu0
  %v3594 = vadd.f32 %v2109, %v3593
  %3595 = vmatprep.mubr.f32.mxu0 0.0
  %3596 = vmatmul.mubr.f32.gmra.mxu0 %v2714
  %v3597 = vpop.f32.mrf.mxu0
  %v3598 = vadd.f32 %v2113, %v3597
  %v3599 = vpop.f32.mrf.mxu0
  %v3600 = vadd.f32 %v2115, %v3599
  %3601 = vmatprep.mubr.f32.mxu0 0.0
  %3602 = vmatmul.mubr.f32.gmra.mxu0 %v2717
  %v3603 = vpop.f32.mrf.mxu0
  %v3604 = vadd.f32 %v2119, %v3603
  %v3605 = vpop.f32.mrf.mxu0
  %v3606 = vadd.f32 %v2121, %v3605
  %3607 = vmatprep.mubr.f32.mxu0 0.0
  %3608 = vmatmul.mubr.f32.gmra.mxu0 %v2720
  %v3609 = vpop.f32.mrf.mxu0
  %v3610 = vadd.f32 %v2125, %v3609
  %v3611 = vpop.f32.mrf.mxu0
  %v3612 = vadd.f32 %v2127, %v3611
  %3613 = vmatprep.mubr.f32.mxu0 0.0
  %3614 = vmatmul.mubr.f32.gmra.mxu0 %v2723
  %v3615 = vpop.f32.mrf.mxu0
  %v3616 = vadd.f32 %v2131, %v3615
  %v3617 = vpop.f32.mrf.mxu0
  %v3618 = vadd.f32 %v2133, %v3617
  %3619 = vmatprep.mubr.f32.mxu0 0.0
  %3620 = vmatmul.mubr.f32.gmra.mxu0 %v2726
  %v3621 = vpop.f32.mrf.mxu0
  %v3622 = vadd.f32 %v2137, %v3621
  %v3623 = vpop.f32.mrf.mxu0
  %v3624 = vadd.f32 %v2139, %v3623
  %3625 = vmatprep.mubr.f32.mxu0 0.0
  %3626 = vmatmul.mubr.f32.gmra.mxu0 %v2729
  %v3627 = vpop.f32.mrf.mxu0
  %v3628 = vadd.f32 %v2143, %v3627
  %v3629 = vpop.f32.mrf.mxu0
  %v3630 = vadd.f32 %v2145, %v3629
  %3631 = vmatprep.mubr.f32.mxu0 0.0
  %3632 = vmatmul.mubr.f32.gmra.mxu0 %v2732
  %v3633 = vpop.f32.mrf.mxu0
  %v3634 = vadd.f32 %v2149, %v3633
  %v3635 = vpop.f32.mrf.mxu0
  %v3636 = vadd.f32 %v2151, %v3635
  %3637 = vdwg.mxu0
  %3638 = vmatprep.subr.mxu0 0.0
  %3639 = vmatpush1.msra.mxu0 0.0
  %3640 = vmatprep.subr.mxu0 0.0
  %3641 = vmatpush1.msra.mxu0 0.0
  %3642 = vmatprep.subr.mxu0 0.0
  %3643 = vmatpush1.msra.mxu0 0.0
  %3644 = vmatprep.subr.mxu0 0.0
  %3645 = vmatpush1.msra.mxu0 0.0
  %3646 = vmatprep.subr.mxu0 0.0
  %3647 = vmatpush1.msra.mxu0 0.0
  %3648 = vmatprep.subr.mxu0 0.0
  %3649 = vmatpush1.msra.mxu0 0.0
  %3650 = vmatprep.subr.mxu0 0.0
  %3651 = vmatpush1.msra.mxu0 0.0
  %3652 = vmatprep.subr.mxu0 0.0
  %3653 = vmatpush1.msra.mxu0 0.0
  %3654 = vmatprep.subr.mxu0 %v214
  %3655 = vmatpush1.msra.mxu0 %v213
  %3656 = vmatprep.subr.mxu0 %v189
  %3657 = vmatpush1.msra.mxu0 %v188
  %3658 = vmatprep.subr.mxu0 %v164
  %3659 = vmatpush1.msra.mxu0 %v163
  %3660 = vmatprep.subr.mxu0 %v139
  %3661 = vmatpush1.msra.mxu0 %v138
  %3662 = vmatprep.subr.mxu0 %v114
  %3663 = vmatpush1.msra.mxu0 %v113
  %3664 = vmatprep.subr.mxu0 %v89
  %3665 = vmatpush1.msra.mxu0 %v88
  %3666 = vmatprep.subr.mxu0 %v64
  %3667 = vmatpush1.msra.mxu0 %v63
  %3668 = vmatprep.subr.mxu0 %v39
  %3669 = vmatpush1.msra.mxu0 %v38
  %3670 = vmatprep.subr.mxu0 0.0
  %3671 = vmatpush2.msra.mxu0 0.0
  %3672 = vmatprep.subr.mxu0 0.0
  %3673 = vmatpush2.msra.mxu0 0.0
  %3674 = vmatprep.subr.mxu0 0.0
  %3675 = vmatpush2.msra.mxu0 0.0
  %3676 = vmatprep.subr.mxu0 0.0
  %3677 = vmatpush2.msra.mxu0 0.0
  %3678 = vmatprep.subr.mxu0 0.0
  %3679 = vmatpush2.msra.mxu0 0.0
  %3680 = vmatprep.subr.mxu0 0.0
  %3681 = vmatpush2.msra.mxu0 0.0
  %3682 = vmatprep.subr.mxu0 0.0
  %3683 = vmatpush2.msra.mxu0 0.0
  %3684 = vmatprep.subr.mxu0 0.0
  %3685 = vmatpush2.msra.mxu0 0.0
  %3686 = vmatprep.subr.mxu0 0.0
  %3687 = vmatpush2.msra.mxu0 0.0
  %3688 = vmatprep.subr.mxu0 0.0
  %3689 = vmatpush2.msra.mxu0 0.0
  %3690 = vmatprep.subr.mxu0 0.0
  %3691 = vmatpush2.msra.mxu0 0.0
  %3692 = vmatprep.subr.mxu0 0.0
  %3693 = vmatpush2.msra.mxu0 0.0
  %3694 = vmatprep.subr.mxu0 0.0
  %3695 = vmatpush2.msra.mxu0 0.0
  %3696 = vmatprep.subr.mxu0 0.0
  %3697 = vmatpush2.msra.mxu0 0.0
  %3698 = vmatprep.subr.mxu0 0.0
  %3699 = vmatpush2.msra.mxu0 0.0
  %3700 = vmatprep.subr.mxu0 0.0
  %3701 = vmatpush2.msra.mxu0 0.0
  %3702 = vmatprep.mubr.f32.mxu0 0.0
  %3703 = vmatmul.mubr.f32.gmra.mxu0 %v2711
  %v3704 = vpop.f32.mrf.mxu0
  %v3705 = vadd.f32 %v2220, %v3704
  %v3706 = vpop.f32.mrf.mxu0
  %v3707 = vadd.f32 %v2222, %v3706
  %3708 = vmatprep.mubr.f32.mxu0 0.0
  %3709 = vmatmul.mubr.f32.gmra.mxu0 %v2714
  %v3710 = vpop.f32.mrf.mxu0
  %v3711 = vadd.f32 %v2226, %v3710
  %v3712 = vpop.f32.mrf.mxu0
  %v3713 = vadd.f32 %v2228, %v3712
  %3714 = vmatprep.mubr.f32.mxu0 0.0
  %3715 = vmatmul.mubr.f32.gmra.mxu0 %v2717
  %v3716 = vpop.f32.mrf.mxu0
  %v3717 = vadd.f32 %v2232, %v3716
  %v3718 = vpop.f32.mrf.mxu0
  %v3719 = vadd.f32 %v2234, %v3718
  %3720 = vmatprep.mubr.f32.mxu0 0.0
  %3721 = vmatmul.mubr.f32.gmra.mxu0 %v2720
  %v3722 = vpop.f32.mrf.mxu0
  %v3723 = vadd.f32 %v2238, %v3722
  %v3724 = vpop.f32.mrf.mxu0
  %v3725 = vadd.f32 %v2240, %v3724
  %3726 = vmatprep.mubr.f32.mxu0 0.0
  %3727 = vmatmul.mubr.f32.gmra.mxu0 %v2723
  %v3728 = vpop.f32.mrf.mxu0
  %v3729 = vadd.f32 %v2244, %v3728
  %v3730 = vpop.f32.mrf.mxu0
  %v3731 = vadd.f32 %v2246, %v3730
  %3732 = vmatprep.mubr.f32.mxu0 0.0
  %3733 = vmatmul.mubr.f32.gmra.mxu0 %v2726
  %v3734 = vpop.f32.mrf.mxu0
  %v3735 = vadd.f32 %v2250, %v3734
  %v3736 = vpop.f32.mrf.mxu0
  %v3737 = vadd.f32 %v2252, %v3736
  %3738 = vmatprep.mubr.f32.mxu0 0.0
  %3739 = vmatmul.mubr.f32.gmra.mxu0 %v2729
  %v3740 = vpop.f32.mrf.mxu0
  %v3741 = vadd.f32 %v2256, %v3740
  %v3742 = vpop.f32.mrf.mxu0
  %v3743 = vadd.f32 %v2258, %v3742
  %3744 = vmatprep.mubr.f32.mxu0 0.0
  %3745 = vmatmul.mubr.f32.gmra.mxu0 %v2732
  %v3746 = vpop.f32.mrf.mxu0
  %v3747 = vadd.f32 %v2262, %v3746
  %v3748 = vpop.f32.mrf.mxu0
  %v3749 = vadd.f32 %v2264, %v3748
  %3750 = vdwg.mxu0
  %3751 = vmatprep.subr.mxu0 0.0
  %3752 = vmatpush1.msra.mxu0 0.0
  %3753 = vmatprep.subr.mxu0 0.0
  %3754 = vmatpush1.msra.mxu0 0.0
  %3755 = vmatprep.subr.mxu0 0.0
  %3756 = vmatpush1.msra.mxu0 0.0
  %3757 = vmatprep.subr.mxu0 0.0
  %3758 = vmatpush1.msra.mxu0 0.0
  %3759 = vmatprep.subr.mxu0 0.0
  %3760 = vmatpush1.msra.mxu0 0.0
  %3761 = vmatprep.subr.mxu0 0.0
  %3762 = vmatpush1.msra.mxu0 0.0
  %3763 = vmatprep.subr.mxu0 0.0
  %3764 = vmatpush1.msra.mxu0 0.0
  %3765 = vmatprep.subr.mxu0 0.0
  %3766 = vmatpush1.msra.mxu0 0.0
  %3767 = vmatprep.subr.mxu0 %v216
  %3768 = vmatpush1.msra.mxu0 %v215
  %3769 = vmatprep.subr.mxu0 %v191
  %3770 = vmatpush1.msra.mxu0 %v190
  %3771 = vmatprep.subr.mxu0 %v166
  %3772 = vmatpush1.msra.mxu0 %v165
  %3773 = vmatprep.subr.mxu0 %v141
  %3774 = vmatpush1.msra.mxu0 %v140
  %3775 = vmatprep.subr.mxu0 %v116
  %3776 = vmatpush1.msra.mxu0 %v115
  %3777 = vmatprep.subr.mxu0 %v91
  %3778 = vmatpush1.msra.mxu0 %v90
  %3779 = vmatprep.subr.mxu0 %v66
  %3780 = vmatpush1.msra.mxu0 %v65
  %3781 = vmatprep.subr.mxu0 %v41
  %3782 = vmatpush1.msra.mxu0 %v40
  %3783 = vmatprep.subr.mxu0 0.0
  %3784 = vmatpush2.msra.mxu0 0.0
  %3785 = vmatprep.subr.mxu0 0.0
  %3786 = vmatpush2.msra.mxu0 0.0
  %3787 = vmatprep.subr.mxu0 0.0
  %3788 = vmatpush2.msra.mxu0 0.0
  %3789 = vmatprep.subr.mxu0 0.0
  %3790 = vmatpush2.msra.mxu0 0.0
  %3791 = vmatprep.subr.mxu0 0.0
  %3792 = vmatpush2.msra.mxu0 0.0
  %3793 = vmatprep.subr.mxu0 0.0
  %3794 = vmatpush2.msra.mxu0 0.0
  %3795 = vmatprep.subr.mxu0 0.0
  %3796 = vmatpush2.msra.mxu0 0.0
  %3797 = vmatprep.subr.mxu0 0.0
  %3798 = vmatpush2.msra.mxu0 0.0
  %3799 = vmatprep.subr.mxu0 0.0
  %3800 = vmatpush2.msra.mxu0 0.0
  %3801 = vmatprep.subr.mxu0 0.0
  %3802 = vmatpush2.msra.mxu0 0.0
  %3803 = vmatprep.subr.mxu0 0.0
  %3804 = vmatpush2.msra.mxu0 0.0
  %3805 = vmatprep.subr.mxu0 0.0
  %3806 = vmatpush2.msra.mxu0 0.0
  %3807 = vmatprep.subr.mxu0 0.0
  %3808 = vmatpush2.msra.mxu0 0.0
  %3809 = vmatprep.subr.mxu0 0.0
  %3810 = vmatpush2.msra.mxu0 0.0
  %3811 = vmatprep.subr.mxu0 0.0
  %3812 = vmatpush2.msra.mxu0 0.0
  %3813 = vmatprep.subr.mxu0 0.0
  %3814 = vmatpush2.msra.mxu0 0.0
  %3815 = vmatprep.mubr.f32.mxu0 0.0
  %3816 = vmatmul.mubr.f32.gmra.mxu0 %v2711
  %v3817 = vpop.f32.mrf.mxu0
  %v3818 = vadd.f32 %v2333, %v3817
  %v3819 = vpop.f32.mrf.mxu0
  %v3820 = vadd.f32 %v2335, %v3819
  %3821 = vmatprep.mubr.f32.mxu0 0.0
  %3822 = vmatmul.mubr.f32.gmra.mxu0 %v2714
  %v3823 = vpop.f32.mrf.mxu0
  %v3824 = vadd.f32 %v2339, %v3823
  %v3825 = vpop.f32.mrf.mxu0
  %v3826 = vadd.f32 %v2341, %v3825
  %3827 = vmatprep.mubr.f32.mxu0 0.0
  %3828 = vmatmul.mubr.f32.gmra.mxu0 %v2717
  %v3829 = vpop.f32.mrf.mxu0
  %v3830 = vadd.f32 %v2345, %v3829
  %v3831 = vpop.f32.mrf.mxu0
  %v3832 = vadd.f32 %v2347, %v3831
  %3833 = vmatprep.mubr.f32.mxu0 0.0
  %3834 = vmatmul.mubr.f32.gmra.mxu0 %v2720
  %v3835 = vpop.f32.mrf.mxu0
  %v3836 = vadd.f32 %v2351, %v3835
  %v3837 = vpop.f32.mrf.mxu0
  %v3838 = vadd.f32 %v2353, %v3837
  %3839 = vmatprep.mubr.f32.mxu0 0.0
  %3840 = vmatmul.mubr.f32.gmra.mxu0 %v2723
  %v3841 = vpop.f32.mrf.mxu0
  %v3842 = vadd.f32 %v2357, %v3841
  %v3843 = vpop.f32.mrf.mxu0
  %v3844 = vadd.f32 %v2359, %v3843
  %3845 = vmatprep.mubr.f32.mxu0 0.0
  %3846 = vmatmul.mubr.f32.gmra.mxu0 %v2726
  %v3847 = vpop.f32.mrf.mxu0
  %v3848 = vadd.f32 %v2363, %v3847
  %v3849 = vpop.f32.mrf.mxu0
  %v3850 = vadd.f32 %v2365, %v3849
  %3851 = vmatprep.mubr.f32.mxu0 0.0
  %3852 = vmatmul.mubr.f32.gmra.mxu0 %v2729
  %v3853 = vpop.f32.mrf.mxu0
  %v3854 = vadd.f32 %v2369, %v3853
  %v3855 = vpop.f32.mrf.mxu0
  %v3856 = vadd.f32 %v2371, %v3855
  %3857 = vmatprep.mubr.f32.mxu0 0.0
  %3858 = vmatmul.mubr.f32.gmra.mxu0 %v2732
  %v3859 = vpop.f32.mrf.mxu0
  %v3860 = vadd.f32 %v2375, %v3859
  %v3861 = vpop.f32.mrf.mxu0
  %v3862 = vadd.f32 %v2377, %v3861
  %3863 = vdwg.mxu0
  %3864 = vmatprep.subr.mxu0 0.0
  %3865 = vmatpush1.msra.mxu0 0.0
  %3866 = vmatprep.subr.mxu0 0.0
  %3867 = vmatpush1.msra.mxu0 0.0
  %3868 = vmatprep.subr.mxu0 0.0
  %3869 = vmatpush1.msra.mxu0 0.0
  %3870 = vmatprep.subr.mxu0 0.0
  %3871 = vmatpush1.msra.mxu0 0.0
  %3872 = vmatprep.subr.mxu0 0.0
  %3873 = vmatpush1.msra.mxu0 0.0
  %3874 = vmatprep.subr.mxu0 0.0
  %3875 = vmatpush1.msra.mxu0 0.0
  %3876 = vmatprep.subr.mxu0 0.0
  %3877 = vmatpush1.msra.mxu0 0.0
  %3878 = vmatprep.subr.mxu0 0.0
  %3879 = vmatpush1.msra.mxu0 0.0
  %3880 = vmatprep.subr.mxu0 %v218
  %3881 = vmatpush1.msra.mxu0 %v217
  %3882 = vmatprep.subr.mxu0 %v193
  %3883 = vmatpush1.msra.mxu0 %v192
  %3884 = vmatprep.subr.mxu0 %v168
  %3885 = vmatpush1.msra.mxu0 %v167
  %3886 = vmatprep.subr.mxu0 %v143
  %3887 = vmatpush1.msra.mxu0 %v142
  %3888 = vmatprep.subr.mxu0 %v118
  %3889 = vmatpush1.msra.mxu0 %v117
  %3890 = vmatprep.subr.mxu0 %v93
  %3891 = vmatpush1.msra.mxu0 %v92
  %3892 = vmatprep.subr.mxu0 %v68
  %3893 = vmatpush1.msra.mxu0 %v67
  %3894 = vmatprep.subr.mxu0 %v43
  %3895 = vmatpush1.msra.mxu0 %v42
  %3896 = vmatprep.subr.mxu0 0.0
  %3897 = vmatpush2.msra.mxu0 0.0
  %3898 = vmatprep.subr.mxu0 0.0
  %3899 = vmatpush2.msra.mxu0 0.0
  %3900 = vmatprep.subr.mxu0 0.0
  %3901 = vmatpush2.msra.mxu0 0.0
  %3902 = vmatprep.subr.mxu0 0.0
  %3903 = vmatpush2.msra.mxu0 0.0
  %3904 = vmatprep.subr.mxu0 0.0
  %3905 = vmatpush2.msra.mxu0 0.0
  %3906 = vmatprep.subr.mxu0 0.0
  %3907 = vmatpush2.msra.mxu0 0.0
  %3908 = vmatprep.subr.mxu0 0.0
  %3909 = vmatpush2.msra.mxu0 0.0
  %3910 = vmatprep.subr.mxu0 0.0
  %3911 = vmatpush2.msra.mxu0 0.0
  %3912 = vmatprep.subr.mxu0 0.0
  %3913 = vmatpush2.msra.mxu0 0.0
  %3914 = vmatprep.subr.mxu0 0.0
  %3915 = vmatpush2.msra.mxu0 0.0
  %3916 = vmatprep.subr.mxu0 0.0
  %3917 = vmatpush2.msra.mxu0 0.0
  %3918 = vmatprep.subr.mxu0 0.0
  %3919 = vmatpush2.msra.mxu0 0.0
  %3920 = vmatprep.subr.mxu0 0.0
  %3921 = vmatpush2.msra.mxu0 0.0
  %3922 = vmatprep.subr.mxu0 0.0
  %3923 = vmatpush2.msra.mxu0 0.0
  %3924 = vmatprep.subr.mxu0 0.0
  %3925 = vmatpush2.msra.mxu0 0.0
  %3926 = vmatprep.subr.mxu0 0.0
  %3927 = vmatpush2.msra.mxu0 0.0
  %3928 = vmatprep.mubr.f32.mxu0 0.0
  %3929 = vmatmul.mubr.f32.gmra.mxu0 %v2711
  %v3930 = vpop.f32.mrf.mxu0
  %v3931 = vadd.f32 %v2446, %v3930
  %v3932 = vpop.f32.mrf.mxu0
  %v3933 = vadd.f32 %v2448, %v3932
  %3934 = vmatprep.mubr.f32.mxu0 0.0
  %3935 = vmatmul.mubr.f32.gmra.mxu0 %v2714
  %v3936 = vpop.f32.mrf.mxu0
  %v3937 = vadd.f32 %v2452, %v3936
  %v3938 = vpop.f32.mrf.mxu0
  %v3939 = vadd.f32 %v2454, %v3938
  %3940 = vmatprep.mubr.f32.mxu0 0.0
  %3941 = vmatmul.mubr.f32.gmra.mxu0 %v2717
  %v3942 = vpop.f32.mrf.mxu0
  %v3943 = vadd.f32 %v2458, %v3942
  %v3944 = vpop.f32.mrf.mxu0
  %v3945 = vadd.f32 %v2460, %v3944
  %3946 = vmatprep.mubr.f32.mxu0 0.0
  %3947 = vmatmul.mubr.f32.gmra.mxu0 %v2720
  %v3948 = vpop.f32.mrf.mxu0
  %v3949 = vadd.f32 %v2464, %v3948
  %v3950 = vpop.f32.mrf.mxu0
  %v3951 = vadd.f32 %v2466, %v3950
  %3952 = vmatprep.mubr.f32.mxu0 0.0
  %3953 = vmatmul.mubr.f32.gmra.mxu0 %v2723
  %v3954 = vpop.f32.mrf.mxu0
  %v3955 = vadd.f32 %v2470, %v3954
  %v3956 = vpop.f32.mrf.mxu0
  %v3957 = vadd.f32 %v2472, %v3956
  %3958 = vmatprep.mubr.f32.mxu0 0.0
  %3959 = vmatmul.mubr.f32.gmra.mxu0 %v2726
  %v3960 = vpop.f32.mrf.mxu0
  %v3961 = vadd.f32 %v2476, %v3960
  %v3962 = vpop.f32.mrf.mxu0
  %v3963 = vadd.f32 %v2478, %v3962
  %3964 = vmatprep.mubr.f32.mxu0 0.0
  %3965 = vmatmul.mubr.f32.gmra.mxu0 %v2729
  %v3966 = vpop.f32.mrf.mxu0
  %v3967 = vadd.f32 %v2482, %v3966
  %v3968 = vpop.f32.mrf.mxu0
  %v3969 = vadd.f32 %v2484, %v3968
  %3970 = vmatprep.mubr.f32.mxu0 0.0
  %3971 = vmatmul.mubr.f32.gmra.mxu0 %v2732
  %v3972 = vpop.f32.mrf.mxu0
  %v3973 = vadd.f32 %v2488, %v3972
  %v3974 = vpop.f32.mrf.mxu0
  %v3975 = vadd.f32 %v2490, %v3974
  %3976 = vdwg.mxu0
  %3977 = vmatprep.subr.mxu0 0.0
  %3978 = vmatpush1.msra.mxu0 0.0
  %3979 = vmatprep.subr.mxu0 0.0
  %3980 = vmatpush1.msra.mxu0 0.0
  %3981 = vmatprep.subr.mxu0 0.0
  %3982 = vmatpush1.msra.mxu0 0.0
  %3983 = vmatprep.subr.mxu0 0.0
  %3984 = vmatpush1.msra.mxu0 0.0
  %3985 = vmatprep.subr.mxu0 0.0
  %3986 = vmatpush1.msra.mxu0 0.0
  %3987 = vmatprep.subr.mxu0 0.0
  %3988 = vmatpush1.msra.mxu0 0.0
  %3989 = vmatprep.subr.mxu0 0.0
  %3990 = vmatpush1.msra.mxu0 0.0
  %3991 = vmatprep.subr.mxu0 0.0
  %3992 = vmatpush1.msra.mxu0 0.0
  %3993 = vmatprep.subr.mxu0 %v220
  %3994 = vmatpush1.msra.mxu0 %v219
  %3995 = vmatprep.subr.mxu0 %v195
  %3996 = vmatpush1.msra.mxu0 %v194
  %3997 = vmatprep.subr.mxu0 %v170
  %3998 = vmatpush1.msra.mxu0 %v169
  %3999 = vmatprep.subr.mxu0 %v145
  %4000 = vmatpush1.msra.mxu0 %v144
  %4001 = vmatprep.subr.mxu0 %v120
  %4002 = vmatpush1.msra.mxu0 %v119
  %4003 = vmatprep.subr.mxu0 %v95
  %4004 = vmatpush1.msra.mxu0 %v94
  %4005 = vmatprep.subr.mxu0 %v70
  %4006 = vmatpush1.msra.mxu0 %v69
  %4007 = vmatprep.subr.mxu0 %v45
  %4008 = vmatpush1.msra.mxu0 %v44
  %4009 = vmatprep.subr.mxu0 0.0
  %4010 = vmatpush2.msra.mxu0 0.0
  %4011 = vmatprep.subr.mxu0 0.0
  %4012 = vmatpush2.msra.mxu0 0.0
  %4013 = vmatprep.subr.mxu0 0.0
  %4014 = vmatpush2.msra.mxu0 0.0
  %4015 = vmatprep.subr.mxu0 0.0
  %4016 = vmatpush2.msra.mxu0 0.0
  %4017 = vmatprep.subr.mxu0 0.0
  %4018 = vmatpush2.msra.mxu0 0.0
  %4019 = vmatprep.subr.mxu0 0.0
  %4020 = vmatpush2.msra.mxu0 0.0
  %4021 = vmatprep.subr.mxu0 0.0
  %4022 = vmatpush2.msra.mxu0 0.0
  %4023 = vmatprep.subr.mxu0 0.0
  %4024 = vmatpush2.msra.mxu0 0.0
  %4025 = vmatprep.subr.mxu0 0.0
  %4026 = vmatpush2.msra.mxu0 0.0
  %4027 = vmatprep.subr.mxu0 0.0
  %4028 = vmatpush2.msra.mxu0 0.0
  %4029 = vmatprep.subr.mxu0 0.0
  %4030 = vmatpush2.msra.mxu0 0.0
  %4031 = vmatprep.subr.mxu0 0.0
  %4032 = vmatpush2.msra.mxu0 0.0
  %4033 = vmatprep.subr.mxu0 0.0
  %4034 = vmatpush2.msra.mxu0 0.0
  %4035 = vmatprep.subr.mxu0 0.0
  %4036 = vmatpush2.msra.mxu0 0.0
  %4037 = vmatprep.subr.mxu0 0.0
  %4038 = vmatpush2.msra.mxu0 0.0
  %4039 = vmatprep.subr.mxu0 0.0
  %4040 = vmatpush2.msra.mxu0 0.0
  %4041 = vmatprep.mubr.f32.mxu0 0.0
  %4042 = vmatmul.mubr.f32.gmra.mxu0 %v2711
  %v4043 = vpop.f32.mrf.mxu0
  %v4044 = vadd.f32 %v2559, %v4043
  %v4045 = vpop.f32.mrf.mxu0
  %v4046 = vadd.f32 %v2561, %v4045
  %4047 = vmatprep.mubr.f32.mxu0 0.0
  %4048 = vmatmul.mubr.f32.gmra.mxu0 %v2714
  %v4049 = vpop.f32.mrf.mxu0
  %v4050 = vadd.f32 %v2565, %v4049
  %v4051 = vpop.f32.mrf.mxu0
  %v4052 = vadd.f32 %v2567, %v4051
  %4053 = vmatprep.mubr.f32.mxu0 0.0
  %4054 = vmatmul.mubr.f32.gmra.mxu0 %v2717
  %v4055 = vpop.f32.mrf.mxu0
  %v4056 = vadd.f32 %v2571, %v4055
  %v4057 = vpop.f32.mrf.mxu0
  %v4058 = vadd.f32 %v2573, %v4057
  %4059 = vmatprep.mubr.f32.mxu0 0.0
  %4060 = vmatmul.mubr.f32.gmra.mxu0 %v2720
  %v4061 = vpop.f32.mrf.mxu0
  %v4062 = vadd.f32 %v2577, %v4061
  %v4063 = vpop.f32.mrf.mxu0
  %v4064 = vadd.f32 %v2579, %v4063
  %4065 = vmatprep.mubr.f32.mxu0 0.0
  %4066 = vmatmul.mubr.f32.gmra.mxu0 %v2723
  %v4067 = vpop.f32.mrf.mxu0
  %v4068 = vadd.f32 %v2583, %v4067
  %v4069 = vpop.f32.mrf.mxu0
  %v4070 = vadd.f32 %v2585, %v4069
  %4071 = vmatprep.mubr.f32.mxu0 0.0
  %4072 = vmatmul.mubr.f32.gmra.mxu0 %v2726
  %v4073 = vpop.f32.mrf.mxu0
  %v4074 = vadd.f32 %v2589, %v4073
  %v4075 = vpop.f32.mrf.mxu0
  %v4076 = vadd.f32 %v2591, %v4075
  %4077 = vmatprep.mubr.f32.mxu0 0.0
  %4078 = vmatmul.mubr.f32.gmra.mxu0 %v2729
  %v4079 = vpop.f32.mrf.mxu0
  %v4080 = vadd.f32 %v2595, %v4079
  %v4081 = vpop.f32.mrf.mxu0
  %v4082 = vadd.f32 %v2597, %v4081
  %4083 = vmatprep.mubr.f32.mxu0 0.0
  %4084 = vmatmul.mubr.f32.gmra.mxu0 %v2732
  %v4085 = vpop.f32.mrf.mxu0
  %v4086 = vadd.f32 %v2601, %v4085
  %v4087 = vpop.f32.mrf.mxu0
  %v4088 = vadd.f32 %v2603, %v4087
  %4089 = vdwg.mxu0
  %4090 = vmatprep.subr.mxu0 0.0
  %4091 = vmatpush1.msra.mxu0 0.0
  %4092 = vmatprep.subr.mxu0 0.0
  %4093 = vmatpush1.msra.mxu0 0.0
  %4094 = vmatprep.subr.mxu0 0.0
  %4095 = vmatpush1.msra.mxu0 0.0
  %4096 = vmatprep.subr.mxu0 0.0
  %4097 = vmatpush1.msra.mxu0 0.0
  %4098 = vmatprep.subr.mxu0 0.0
  %4099 = vmatpush1.msra.mxu0 0.0
  %4100 = vmatprep.subr.mxu0 0.0
  %4101 = vmatpush1.msra.mxu0 0.0
  %4102 = vmatprep.subr.mxu0 0.0
  %4103 = vmatpush1.msra.mxu0 0.0
  %4104 = vmatprep.subr.mxu0 0.0
  %4105 = vmatpush1.msra.mxu0 0.0
  %4106 = vmatprep.subr.mxu0 0.0
  %4107 = vmatpush1.msra.mxu0 %v221
  %4108 = vmatprep.subr.mxu0 0.0
  %4109 = vmatpush1.msra.mxu0 %v196
  %4110 = vmatprep.subr.mxu0 0.0
  %4111 = vmatpush1.msra.mxu0 %v171
  %4112 = vmatprep.subr.mxu0 0.0
  %4113 = vmatpush1.msra.mxu0 %v146
  %4114 = vmatprep.subr.mxu0 0.0
  %4115 = vmatpush1.msra.mxu0 %v121
  %4116 = vmatprep.subr.mxu0 0.0
  %4117 = vmatpush1.msra.mxu0 %v96
  %4118 = vmatprep.subr.mxu0 0.0
  %4119 = vmatpush1.msra.mxu0 %v71
  %4120 = vmatprep.subr.mxu0 0.0
  %4121 = vmatpush1.msra.mxu0 %v46
  %4122 = vmatprep.subr.mxu0 0.0
  %4123 = vmatpush2.msra.mxu0 0.0
  %4124 = vmatprep.subr.mxu0 0.0
  %4125 = vmatpush2.msra.mxu0 0.0
  %4126 = vmatprep.subr.mxu0 0.0
  %4127 = vmatpush2.msra.mxu0 0.0
  %4128 = vmatprep.subr.mxu0 0.0
  %4129 = vmatpush2.msra.mxu0 0.0
  %4130 = vmatprep.subr.mxu0 0.0
  %4131 = vmatpush2.msra.mxu0 0.0
  %4132 = vmatprep.subr.mxu0 0.0
  %4133 = vmatpush2.msra.mxu0 0.0
  %4134 = vmatprep.subr.mxu0 0.0
  %4135 = vmatpush2.msra.mxu0 0.0
  %4136 = vmatprep.subr.mxu0 0.0
  %4137 = vmatpush2.msra.mxu0 0.0
  %4138 = vmatprep.subr.mxu0 0.0
  %4139 = vmatpush2.msra.mxu0 0.0
  %4140 = vmatprep.subr.mxu0 0.0
  %4141 = vmatpush2.msra.mxu0 0.0
  %4142 = vmatprep.subr.mxu0 0.0
  %4143 = vmatpush2.msra.mxu0 0.0
  %4144 = vmatprep.subr.mxu0 0.0
  %4145 = vmatpush2.msra.mxu0 0.0
  %4146 = vmatprep.subr.mxu0 0.0
  %4147 = vmatpush2.msra.mxu0 0.0
  %4148 = vmatprep.subr.mxu0 0.0
  %4149 = vmatpush2.msra.mxu0 0.0
  %4150 = vmatprep.subr.mxu0 0.0
  %4151 = vmatpush2.msra.mxu0 0.0
  %4152 = vmatprep.subr.mxu0 0.0
  %4153 = vmatpush2.msra.mxu0 0.0
  %4154 = vmatprep.mubr.f32.mxu0 0.0
  %4155 = vmatmul.mubr.f32.gmra.mxu0 %v2711
  %v4156 = vpop.f32.mrf.mxu0
  %v4157 = vadd.f32 %v2672, %v4156
  %v4158 = vpop.f32.mrf.mxu0
  %4159 = vmatprep.mubr.f32.mxu0 0.0
  %4160 = vmatmul.mubr.f32.gmra.mxu0 %v2714
  %v4161 = vpop.f32.mrf.mxu0
  %v4162 = vadd.f32 %v2677, %v4161
  %v4163 = vpop.f32.mrf.mxu0
  %4164 = vmatprep.mubr.f32.mxu0 0.0
  %4165 = vmatmul.mubr.f32.gmra.mxu0 %v2717
  %v4166 = vpop.f32.mrf.mxu0
  %v4167 = vadd.f32 %v2682, %v4166
  %v4168 = vpop.f32.mrf.mxu0
  %4169 = vmatprep.mubr.f32.mxu0 0.0
  %4170 = vmatmul.mubr.f32.gmra.mxu0 %v2720
  %v4171 = vpop.f32.mrf.mxu0
  %v4172 = vadd.f32 %v2687, %v4171
  %v4173 = vpop.f32.mrf.mxu0
  %4174 = vmatprep.mubr.f32.mxu0 0.0
  %4175 = vmatmul.mubr.f32.gmra.mxu0 %v2723
  %v4176 = vpop.f32.mrf.mxu0
  %v4177 = vadd.f32 %v2692, %v4176
  %v4178 = vpop.f32.mrf.mxu0
  %4179 = vmatprep.mubr.f32.mxu0 0.0
  %4180 = vmatmul.mubr.f32.gmra.mxu0 %v2726
  %v4181 = vpop.f32.mrf.mxu0
  %v4182 = vadd.f32 %v2697, %v4181
  %v4183 = vpop.f32.mrf.mxu0
  %4184 = vmatprep.mubr.f32.mxu0 0.0
  %4185 = vmatmul.mubr.f32.gmra.mxu0 %v2729
  %v4186 = vpop.f32.mrf.mxu0
  %v4187 = vadd.f32 %v2702, %v4186
  %v4188 = vpop.f32.mrf.mxu0
  %4189 = vmatprep.mubr.f32.mxu0 0.0
  %4190 = vmatmul.mubr.f32.gmra.mxu0 %v2732
  %v4191 = vpop.f32.mrf.mxu0
  %v4192 = vadd.f32 %v2707, %v4191
  %v4193 = vpop.f32.mrf.mxu0
  %4194 = vdwg.mxu0
  %s4195 = scalar_lea.vmem %s0, 128
  %v4196 = vld [vmem:[%s4195] sm:$0xff]
  %v4197 = vld [vmem:[%s4195 + $0x8] sm:$0xff]
  %v4198 = vld [vmem:[%s4195 + $0x10] sm:$0xff]
  %v4199 = vld [vmem:[%s4195 + $0x18] sm:$0xff]
  %v4200 = vld [vmem:[%s4195 + $0x20] sm:$0xff]
  %v4201 = vld [vmem:[%s4195 + $0x28] sm:$0xff]
  %v4202 = vld [vmem:[%s4195 + $0x30] sm:$0xff]
  %v4203 = vld [vmem:[%s4195 + $0x38] sm:$0xff]
  %v4204 = vld [vmem:[%s1] sm:$0xff]
  %v4205 = vld [vmem:[%s1 + $0x8] sm:$0xff]
  %v4206 = vld [vmem:[%s1 + $0x10] sm:$0xff]
  %v4207 = vld [vmem:[%s1 + $0x18] sm:$0xff]
  %v4208 = vld [vmem:[%s1 + $0x20] sm:$0xff]
  %v4209 = vld [vmem:[%s1 + $0x28] sm:$0xff]
  %v4210 = vld [vmem:[%s1 + $0x30] sm:$0xff]
  %v4211 = vld [vmem:[%s1 + $0x38] sm:$0xff]
  %v4212 = vld [vmem:[%s1 + $0x40] sm:$0xff]
  %v4213 = vld [vmem:[%s1 + $0x48] sm:$0xff]
  %v4214 = vld [vmem:[%s1 + $0x50] sm:$0xff]
  %v4215 = vld [vmem:[%s1 + $0x58] sm:$0xff]
  %v4216 = vld [vmem:[%s1 + $0x60] sm:$0xff]
  %v4217 = vld [vmem:[%s1 + $0x68] sm:$0xff]
  %v4218 = vld [vmem:[%s1 + $0x70] sm:$0xff]
  %v4219 = vld [vmem:[%s1 + $0x78] sm:$0xff]
  %v4220 = vld [vmem:[%s1 + $0x80] sm:$0xff]
  %v4221 = vld [vmem:[%s1 + $0x88] sm:$0xff]
  %v4222 = vld [vmem:[%s1 + $0x90] sm:$0xff]
  %v4223 = vld [vmem:[%s1 + $0x98] sm:$0xff]
  %v4224 = vld [vmem:[%s1 + $0xa0] sm:$0xff]
  %v4225 = vld [vmem:[%s1 + $0xa8] sm:$0xff]
  %v4226 = vld [vmem:[%s1 + $0xb0] sm:$0xff]
  %v4227 = vld [vmem:[%s1 + $0xb8] sm:$0xff]
  %v4228 = vld [vmem:[%s1 + $0xc0] sm:$0xff]
  %v4229 = vld [vmem:[%s1 + $0xc8] sm:$0xff]
  %v4230 = vld [vmem:[%s1 + $0xd0] sm:$0xff]
  %v4231 = vld [vmem:[%s1 + $0xd8] sm:$0xff]
  %v4232 = vld [vmem:[%s1 + $0xe0] sm:$0xff]
  %v4233 = vld [vmem:[%s1 + $0xe8] sm:$0xff]
  %v4234 = vld [vmem:[%s1 + $0xf0] sm:$0xff]
  %v4235 = vld [vmem:[%s1 + $0xf8] sm:$0xff]
  %v4236 = vld [vmem:[%s1 + $0x100] sm:$0xff]
  %v4237 = vld [vmem:[%s1 + $0x108] sm:$0xff]
  %v4238 = vld [vmem:[%s1 + $0x110] sm:$0xff]
  %v4239 = vld [vmem:[%s1 + $0x118] sm:$0xff]
  %v4240 = vld [vmem:[%s1 + $0x120] sm:$0xff]
  %v4241 = vld [vmem:[%s1 + $0x128] sm:$0xff]
  %v4242 = vld [vmem:[%s1 + $0x130] sm:$0xff]
  %v4243 = vld [vmem:[%s1 + $0x138] sm:$0xff]
  %v4244 = vld [vmem:[%s1 + $0x140] sm:$0xff]
  %v4245 = vld [vmem:[%s1 + $0x148] sm:$0xff]
  %v4246 = vld [vmem:[%s1 + $0x150] sm:$0xff]
  %v4247 = vld [vmem:[%s1 + $0x158] sm:$0xff]
  %v4248 = vld [vmem:[%s1 + $0x160] sm:$0xff]
  %v4249 = vld [vmem:[%s1 + $0x168] sm:$0xff]
  %v4250 = vld [vmem:[%s1 + $0x170] sm:$0xff]
  %v4251 = vld [vmem:[%s1 + $0x178] sm:$0xff]
  %v4252 = vld [vmem:[%s1 + $0x180] sm:$0xff]
  %v4253 = vld [vmem:[%s1 + $0x188] sm:$0xff]
  %v4254 = vld [vmem:[%s1 + $0x190] sm:$0xff]
  %v4255 = vld [vmem:[%s1 + $0x198] sm:$0xff]
  %v4256 = vld [vmem:[%s1 + $0x1a0] sm:$0xff]
  %v4257 = vld [vmem:[%s1 + $0x1a8] sm:$0xff]
  %v4258 = vld [vmem:[%s1 + $0x1b0] sm:$0xff]
  %v4259 = vld [vmem:[%s1 + $0x1b8] sm:$0xff]
  %v4260 = vld [vmem:[%s1 + $0x1c0] sm:$0xff]
  %v4261 = vld [vmem:[%s1 + $0x1c8] sm:$0xff]
  %v4262 = vld [vmem:[%s1 + $0x1d0] sm:$0xff]
  %v4263 = vld [vmem:[%s1 + $0x1d8] sm:$0xff]
  %v4264 = vld [vmem:[%s1 + $0x1e0] sm:$0xff]
  %v4265 = vld [vmem:[%s1 + $0x1e8] sm:$0xff]
  %v4266 = vld [vmem:[%s1 + $0x1f0] sm:$0xff]
  %v4267 = vld [vmem:[%s1 + $0x1f8] sm:$0xff]
  %v4268 = vld [vmem:[%s1 + $0x200] sm:$0xff]
  %v4269 = vld [vmem:[%s1 + $0x208] sm:$0xff]
  %v4270 = vld [vmem:[%s1 + $0x210] sm:$0xff]
  %v4271 = vld [vmem:[%s1 + $0x218] sm:$0xff]
  %v4272 = vld [vmem:[%s1 + $0x220] sm:$0xff]
  %v4273 = vld [vmem:[%s1 + $0x228] sm:$0xff]
  %v4274 = vld [vmem:[%s1 + $0x230] sm:$0xff]
  %v4275 = vld [vmem:[%s1 + $0x238] sm:$0xff]
  %v4276 = vld [vmem:[%s1 + $0x240] sm:$0xff]
  %v4277 = vld [vmem:[%s1 + $0x248] sm:$0xff]
  %v4278 = vld [vmem:[%s1 + $0x250] sm:$0xff]
  %v4279 = vld [vmem:[%s1 + $0x258] sm:$0xff]
  %v4280 = vld [vmem:[%s1 + $0x260] sm:$0xff]
  %v4281 = vld [vmem:[%s1 + $0x268] sm:$0xff]
  %v4282 = vld [vmem:[%s1 + $0x270] sm:$0xff]
  %v4283 = vld [vmem:[%s1 + $0x278] sm:$0xff]
  %v4284 = vld [vmem:[%s1 + $0x280] sm:$0xff]
  %v4285 = vld [vmem:[%s1 + $0x288] sm:$0xff]
  %v4286 = vld [vmem:[%s1 + $0x290] sm:$0xff]
  %v4287 = vld [vmem:[%s1 + $0x298] sm:$0xff]
  %v4288 = vld [vmem:[%s1 + $0x2a0] sm:$0xff]
  %v4289 = vld [vmem:[%s1 + $0x2a8] sm:$0xff]
  %v4290 = vld [vmem:[%s1 + $0x2b0] sm:$0xff]
  %v4291 = vld [vmem:[%s1 + $0x2b8] sm:$0xff]
  %v4292 = vld [vmem:[%s1 + $0x2c0] sm:$0xff]
  %v4293 = vld [vmem:[%s1 + $0x2c8] sm:$0xff]
  %v4294 = vld [vmem:[%s1 + $0x2d0] sm:$0xff]
  %v4295 = vld [vmem:[%s1 + $0x2d8] sm:$0xff]
  %v4296 = vld [vmem:[%s1 + $0x2e0] sm:$0xff]
  %v4297 = vld [vmem:[%s1 + $0x2e8] sm:$0xff]
  %v4298 = vld [vmem:[%s1 + $0x2f0] sm:$0xff]
  %v4299 = vld [vmem:[%s1 + $0x2f8] sm:$0xff]
  %v4300 = vld [vmem:[%s1 + $0x300] sm:$0xff]
  %v4301 = vld [vmem:[%s1 + $0x308] sm:$0xff]
  %v4302 = vld [vmem:[%s1 + $0x310] sm:$0xff]
  %v4303 = vld [vmem:[%s1 + $0x318] sm:$0xff]
  %v4304 = vld [vmem:[%s1 + $0x320] sm:$0xff]
  %v4305 = vld [vmem:[%s1 + $0x328] sm:$0xff]
  %v4306 = vld [vmem:[%s1 + $0x330] sm:$0xff]
  %v4307 = vld [vmem:[%s1 + $0x338] sm:$0xff]
  %v4308 = vld [vmem:[%s1 + $0x340] sm:$0xff]
  %v4309 = vld [vmem:[%s1 + $0x348] sm:$0xff]
  %v4310 = vld [vmem:[%s1 + $0x350] sm:$0xff]
  %v4311 = vld [vmem:[%s1 + $0x358] sm:$0xff]
  %v4312 = vld [vmem:[%s1 + $0x360] sm:$0xff]
  %v4313 = vld [vmem:[%s1 + $0x368] sm:$0xff]
  %v4314 = vld [vmem:[%s1 + $0x370] sm:$0xff]
  %v4315 = vld [vmem:[%s1 + $0x378] sm:$0xff]
  %v4316 = vld [vmem:[%s1 + $0x380] sm:$0xff]
  %v4317 = vld [vmem:[%s1 + $0x388] sm:$0xff]
  %v4318 = vld [vmem:[%s1 + $0x390] sm:$0xff]
  %v4319 = vld [vmem:[%s1 + $0x398] sm:$0xff]
  %v4320 = vld [vmem:[%s1 + $0x3a0] sm:$0xff]
  %v4321 = vld [vmem:[%s1 + $0x3a8] sm:$0xff]
  %v4322 = vld [vmem:[%s1 + $0x3b0] sm:$0xff]
  %v4323 = vld [vmem:[%s1 + $0x3b8] sm:$0xff]
  %v4324 = vld [vmem:[%s1 + $0x3c0] sm:$0xff]
  %v4325 = vld [vmem:[%s1 + $0x3c8] sm:$0xff]
  %v4326 = vld [vmem:[%s1 + $0x3d0] sm:$0xff]
  %v4327 = vld [vmem:[%s1 + $0x3d8] sm:$0xff]
  %v4328 = vld [vmem:[%s1 + $0x3e0] sm:$0xff]
  %v4329 = vld [vmem:[%s1 + $0x3e8] sm:$0xff]
  %v4330 = vld [vmem:[%s1 + $0x3f0] sm:$0xff]
  %v4331 = vld [vmem:[%s1 + $0x3f8] sm:$0xff]
  %v4332 = vld [vmem:[%s1 + $0x400] sm:$0xff]
  %v4333 = vld [vmem:[%s1 + $0x408] sm:$0xff]
  %v4334 = vld [vmem:[%s1 + $0x410] sm:$0xff]
  %v4335 = vld [vmem:[%s1 + $0x418] sm:$0xff]
  %v4336 = vld [vmem:[%s1 + $0x420] sm:$0xff]
  %v4337 = vld [vmem:[%s1 + $0x428] sm:$0xff]
  %v4338 = vld [vmem:[%s1 + $0x430] sm:$0xff]
  %v4339 = vld [vmem:[%s1 + $0x438] sm:$0xff]
  %v4340 = vld [vmem:[%s1 + $0x440] sm:$0xff]
  %v4341 = vld [vmem:[%s1 + $0x448] sm:$0xff]
  %v4342 = vld [vmem:[%s1 + $0x450] sm:$0xff]
  %v4343 = vld [vmem:[%s1 + $0x458] sm:$0xff]
  %v4344 = vld [vmem:[%s1 + $0x460] sm:$0xff]
  %v4345 = vld [vmem:[%s1 + $0x468] sm:$0xff]
  %v4346 = vld [vmem:[%s1 + $0x470] sm:$0xff]
  %v4347 = vld [vmem:[%s1 + $0x478] sm:$0xff]
  %v4348 = vld [vmem:[%s1 + $0x480] sm:$0xff]
  %v4349 = vld [vmem:[%s1 + $0x488] sm:$0xff]
  %v4350 = vld [vmem:[%s1 + $0x490] sm:$0xff]
  %v4351 = vld [vmem:[%s1 + $0x498] sm:$0xff]
  %v4352 = vld [vmem:[%s1 + $0x4a0] sm:$0xff]
  %v4353 = vld [vmem:[%s1 + $0x4a8] sm:$0xff]
  %v4354 = vld [vmem:[%s1 + $0x4b0] sm:$0xff]
  %v4355 = vld [vmem:[%s1 + $0x4b8] sm:$0xff]
  %v4356 = vld [vmem:[%s1 + $0x4c0] sm:$0xff]
  %v4357 = vld [vmem:[%s1 + $0x4c8] sm:$0xff]
  %v4358 = vld [vmem:[%s1 + $0x4d0] sm:$0xff]
  %v4359 = vld [vmem:[%s1 + $0x4d8] sm:$0xff]
  %v4360 = vld [vmem:[%s1 + $0x4e0] sm:$0xff]
  %v4361 = vld [vmem:[%s1 + $0x4e8] sm:$0xff]
  %v4362 = vld [vmem:[%s1 + $0x4f0] sm:$0xff]
  %v4363 = vld [vmem:[%s1 + $0x4f8] sm:$0xff]
  %v4364 = vld [vmem:[%s1 + $0x500] sm:$0xff]
  %v4365 = vld [vmem:[%s1 + $0x508] sm:$0xff]
  %v4366 = vld [vmem:[%s1 + $0x510] sm:$0xff]
  %v4367 = vld [vmem:[%s1 + $0x518] sm:$0xff]
  %v4368 = vld [vmem:[%s1 + $0x520] sm:$0xff]
  %v4369 = vld [vmem:[%s1 + $0x528] sm:$0xff]
  %v4370 = vld [vmem:[%s1 + $0x530] sm:$0xff]
  %v4371 = vld [vmem:[%s1 + $0x538] sm:$0xff]
  %v4372 = vld [vmem:[%s1 + $0x540] sm:$0xff]
  %v4373 = vld [vmem:[%s1 + $0x548] sm:$0xff]
  %v4374 = vld [vmem:[%s1 + $0x550] sm:$0xff]
  %v4375 = vld [vmem:[%s1 + $0x558] sm:$0xff]
  %v4376 = vld [vmem:[%s1 + $0x560] sm:$0xff]
  %v4377 = vld [vmem:[%s1 + $0x568] sm:$0xff]
  %v4378 = vld [vmem:[%s1 + $0x570] sm:$0xff]
  %v4379 = vld [vmem:[%s1 + $0x578] sm:$0xff]
  %v4380 = vld [vmem:[%s1 + $0x580] sm:$0xff]
  %v4381 = vld [vmem:[%s1 + $0x588] sm:$0xff]
  %v4382 = vld [vmem:[%s1 + $0x590] sm:$0xff]
  %v4383 = vld [vmem:[%s1 + $0x598] sm:$0xff]
  %v4384 = vld [vmem:[%s1 + $0x5a0] sm:$0xff]
  %v4385 = vld [vmem:[%s1 + $0x5a8] sm:$0xff]
  %v4386 = vld [vmem:[%s1 + $0x5b0] sm:$0xff]
  %v4387 = vld [vmem:[%s1 + $0x5b8] sm:$0xff]
  %v4388 = vld [vmem:[%s1 + $0x5c0] sm:$0xff]
  %v4389 = vld [vmem:[%s1 + $0x5c8] sm:$0xff]
  %v4390 = vld [vmem:[%s1 + $0x5d0] sm:$0xff]
  %v4391 = vld [vmem:[%s1 + $0x5d8] sm:$0xff]
  %v4392 = vld [vmem:[%s1 + $0x5e0] sm:$0xff]
  %v4393 = vld [vmem:[%s1 + $0x5e8] sm:$0xff]
  %v4394 = vld [vmem:[%s1 + $0x5f0] sm:$0xff]
  %v4395 = vld [vmem:[%s1 + $0x5f8] sm:$0xff]
  %v4396 = vld [vmem:[%s1 + $0x600] sm:$0xff]
  %v4397 = vld [vmem:[%s1 + $0x608] sm:$0xff]
  %v4398 = vld [vmem:[%s1 + $0x610] sm:$0xff]
  %v4399 = vld [vmem:[%s1 + $0x618] sm:$0xff]
  %v4400 = vld [vmem:[%s1 + $0x620] sm:$0xff]
  %v4401 = vld [vmem:[%s1 + $0x628] sm:$0xff]
  %v4402 = vld [vmem:[%s1 + $0x630] sm:$0xff]
  %v4403 = vld [vmem:[%s1 + $0x638] sm:$0xff]
  %v4404 = vld [vmem:[%s1 + $0x640] sm:$0xff]
  %v4405 = vld [vmem:[%s1 + $0x648] sm:$0xff]
  %v4406 = vld [vmem:[%s1 + $0x650] sm:$0xff]
  %v4407 = vld [vmem:[%s1 + $0x658] sm:$0xff]
  %v4408 = vld [vmem:[%s1 + $0x660] sm:$0xff]
  %v4409 = vld [vmem:[%s1 + $0x668] sm:$0xff]
  %v4410 = vld [vmem:[%s1 + $0x670] sm:$0xff]
  %v4411 = vld [vmem:[%s1 + $0x678] sm:$0xff]
  %4620 = vrot.lane.b32.xlu0 %v4204, 16
  %v4621 = vpop.permute.xlu0 %4620
  %4622 = vrot.lane.b32.xlu0 %v4205, 16
  %v4623 = vpop.permute.xlu0 %4622
  %4624 = vrot.lane.b32.xlu0 %v4206, 16
  %v4625 = vpop.permute.xlu0 %4624
  %4626 = vrot.lane.b32.xlu0 %v4207, 16
  %v4627 = vpop.permute.xlu0 %4626
  %4628 = vrot.lane.b32.xlu0 %v4208, 16
  %v4629 = vpop.permute.xlu0 %4628
  %4630 = vrot.lane.b32.xlu0 %v4209, 16
  %v4631 = vpop.permute.xlu0 %4630
  %4632 = vrot.lane.b32.xlu0 %v4210, 16
  %v4633 = vpop.permute.xlu0 %4632
  %4634 = vrot.lane.b32.xlu0 %v4211, 16
  %v4635 = vpop.permute.xlu0 %4634
  %4636 = vrot.lane.b32.xlu0 %v4212, 16
  %v4637 = vpop.permute.xlu0 %4636
  %4638 = vrot.lane.b32.xlu0 %v4213, 16
  %v4639 = vpop.permute.xlu0 %4638
  %4640 = vrot.lane.b32.xlu0 %v4214, 16
  %v4641 = vpop.permute.xlu0 %4640
  %4642 = vrot.lane.b32.xlu0 %v4215, 16
  %v4643 = vpop.permute.xlu0 %4642
  %4644 = vrot.lane.b32.xlu0 %v4216, 16
  %v4645 = vpop.permute.xlu0 %4644
  %4646 = vrot.lane.b32.xlu0 %v4217, 16
  %v4647 = vpop.permute.xlu0 %4646
  %4648 = vrot.lane.b32.xlu0 %v4218, 16
  %v4649 = vpop.permute.xlu0 %4648
  %4650 = vrot.lane.b32.xlu0 %v4219, 16
  %v4651 = vpop.permute.xlu0 %4650
  %4652 = vrot.lane.b32.xlu0 %v4220, 16
  %v4653 = vpop.permute.xlu0 %4652
  %4654 = vrot.lane.b32.xlu0 %v4221, 16
  %v4655 = vpop.permute.xlu0 %4654
  %4656 = vrot.lane.b32.xlu0 %v4222, 16
  %v4657 = vpop.permute.xlu0 %4656
  %4658 = vrot.lane.b32.xlu0 %v4223, 16
  %v4659 = vpop.permute.xlu0 %4658
  %4660 = vrot.lane.b32.xlu0 %v4224, 16
  %v4661 = vpop.permute.xlu0 %4660
  %4662 = vrot.lane.b32.xlu0 %v4225, 16
  %v4663 = vpop.permute.xlu0 %4662
  %4664 = vrot.lane.b32.xlu0 %v4226, 16
  %v4665 = vpop.permute.xlu0 %4664
  %4666 = vrot.lane.b32.xlu0 %v4227, 16
  %v4667 = vpop.permute.xlu0 %4666
  %4668 = vrot.lane.b32.xlu0 %v4228, 16
  %v4669 = vpop.permute.xlu0 %4668
  %4670 = vrot.lane.b32.xlu0 %v4229, 16
  %v4671 = vpop.permute.xlu0 %4670
  %4672 = vrot.lane.b32.xlu0 %v4230, 16
  %v4673 = vpop.permute.xlu0 %4672
  %4674 = vrot.lane.b32.xlu0 %v4231, 16
  %v4675 = vpop.permute.xlu0 %4674
  %4676 = vrot.lane.b32.xlu0 %v4232, 16
  %v4677 = vpop.permute.xlu0 %4676
  %4678 = vrot.lane.b32.xlu0 %v4233, 16
  %v4679 = vpop.permute.xlu0 %4678
  %4680 = vrot.lane.b32.xlu0 %v4234, 16
  %v4681 = vpop.permute.xlu0 %4680
  %4682 = vrot.lane.b32.xlu0 %v4235, 16
  %v4683 = vpop.permute.xlu0 %4682
  %4684 = vrot.lane.b32.xlu0 %v4236, 16
  %v4685 = vpop.permute.xlu0 %4684
  %4686 = vrot.lane.b32.xlu0 %v4237, 16
  %v4687 = vpop.permute.xlu0 %4686
  %4688 = vrot.lane.b32.xlu0 %v4238, 16
  %v4689 = vpop.permute.xlu0 %4688
  %4690 = vrot.lane.b32.xlu0 %v4239, 16
  %v4691 = vpop.permute.xlu0 %4690
  %4692 = vrot.lane.b32.xlu0 %v4240, 16
  %v4693 = vpop.permute.xlu0 %4692
  %4694 = vrot.lane.b32.xlu0 %v4241, 16
  %v4695 = vpop.permute.xlu0 %4694
  %4696 = vrot.lane.b32.xlu0 %v4242, 16
  %v4697 = vpop.permute.xlu0 %4696
  %4698 = vrot.lane.b32.xlu0 %v4243, 16
  %v4699 = vpop.permute.xlu0 %4698
  %4700 = vrot.lane.b32.xlu0 %v4244, 16
  %v4701 = vpop.permute.xlu0 %4700
  %4702 = vrot.lane.b32.xlu0 %v4245, 16
  %v4703 = vpop.permute.xlu0 %4702
  %4704 = vrot.lane.b32.xlu0 %v4246, 16
  %v4705 = vpop.permute.xlu0 %4704
  %4706 = vrot.lane.b32.xlu0 %v4247, 16
  %v4707 = vpop.permute.xlu0 %4706
  %4708 = vrot.lane.b32.xlu0 %v4248, 16
  %v4709 = vpop.permute.xlu0 %4708
  %4710 = vrot.lane.b32.xlu0 %v4249, 16
  %v4711 = vpop.permute.xlu0 %4710
  %4712 = vrot.lane.b32.xlu0 %v4250, 16
  %v4713 = vpop.permute.xlu0 %4712
  %4714 = vrot.lane.b32.xlu0 %v4251, 16
  %v4715 = vpop.permute.xlu0 %4714
  %4716 = vrot.lane.b32.xlu0 %v4252, 16
  %v4717 = vpop.permute.xlu0 %4716
  %4718 = vrot.lane.b32.xlu0 %v4253, 16
  %v4719 = vpop.permute.xlu0 %4718
  %4720 = vrot.lane.b32.xlu0 %v4254, 16
  %v4721 = vpop.permute.xlu0 %4720
  %4722 = vrot.lane.b32.xlu0 %v4255, 16
  %v4723 = vpop.permute.xlu0 %4722
  %4724 = vrot.lane.b32.xlu0 %v4256, 16
  %v4725 = vpop.permute.xlu0 %4724
  %4726 = vrot.lane.b32.xlu0 %v4257, 16
  %v4727 = vpop.permute.xlu0 %4726
  %4728 = vrot.lane.b32.xlu0 %v4258, 16
  %v4729 = vpop.permute.xlu0 %4728
  %4730 = vrot.lane.b32.xlu0 %v4259, 16
  %v4731 = vpop.permute.xlu0 %4730
  %4732 = vrot.lane.b32.xlu0 %v4260, 16
  %v4733 = vpop.permute.xlu0 %4732
  %4734 = vrot.lane.b32.xlu0 %v4261, 16
  %v4735 = vpop.permute.xlu0 %4734
  %4736 = vrot.lane.b32.xlu0 %v4262, 16
  %v4737 = vpop.permute.xlu0 %4736
  %4738 = vrot.lane.b32.xlu0 %v4263, 16
  %v4739 = vpop.permute.xlu0 %4738
  %4740 = vrot.lane.b32.xlu0 %v4264, 16
  %v4741 = vpop.permute.xlu0 %4740
  %4742 = vrot.lane.b32.xlu0 %v4265, 16
  %v4743 = vpop.permute.xlu0 %4742
  %4744 = vrot.lane.b32.xlu0 %v4266, 16
  %v4745 = vpop.permute.xlu0 %4744
  %4746 = vrot.lane.b32.xlu0 %v4267, 16
  %v4747 = vpop.permute.xlu0 %4746
  %4748 = vrot.lane.b32.xlu0 %v4268, 16
  %v4749 = vpop.permute.xlu0 %4748
  %4750 = vrot.lane.b32.xlu0 %v4269, 16
  %v4751 = vpop.permute.xlu0 %4750
  %4752 = vrot.lane.b32.xlu0 %v4270, 16
  %v4753 = vpop.permute.xlu0 %4752
  %4754 = vrot.lane.b32.xlu0 %v4271, 16
  %v4755 = vpop.permute.xlu0 %4754
  %4756 = vrot.lane.b32.xlu0 %v4272, 16
  %v4757 = vpop.permute.xlu0 %4756
  %4758 = vrot.lane.b32.xlu0 %v4273, 16
  %v4759 = vpop.permute.xlu0 %4758
  %4760 = vrot.lane.b32.xlu0 %v4274, 16
  %v4761 = vpop.permute.xlu0 %4760
  %4762 = vrot.lane.b32.xlu0 %v4275, 16
  %v4763 = vpop.permute.xlu0 %4762
  %4764 = vrot.lane.b32.xlu0 %v4276, 16
  %v4765 = vpop.permute.xlu0 %4764
  %4766 = vrot.lane.b32.xlu0 %v4277, 16
  %v4767 = vpop.permute.xlu0 %4766
  %4768 = vrot.lane.b32.xlu0 %v4278, 16
  %v4769 = vpop.permute.xlu0 %4768
  %4770 = vrot.lane.b32.xlu0 %v4279, 16
  %v4771 = vpop.permute.xlu0 %4770
  %4772 = vrot.lane.b32.xlu0 %v4280, 16
  %v4773 = vpop.permute.xlu0 %4772
  %4774 = vrot.lane.b32.xlu0 %v4281, 16
  %v4775 = vpop.permute.xlu0 %4774
  %4776 = vrot.lane.b32.xlu0 %v4282, 16
  %v4777 = vpop.permute.xlu0 %4776
  %4778 = vrot.lane.b32.xlu0 %v4283, 16
  %v4779 = vpop.permute.xlu0 %4778
  %4780 = vrot.lane.b32.xlu0 %v4284, 16
  %v4781 = vpop.permute.xlu0 %4780
  %4782 = vrot.lane.b32.xlu0 %v4285, 16
  %v4783 = vpop.permute.xlu0 %4782
  %4784 = vrot.lane.b32.xlu0 %v4286, 16
  %v4785 = vpop.permute.xlu0 %4784
  %4786 = vrot.lane.b32.xlu0 %v4287, 16
  %v4787 = vpop.permute.xlu0 %4786
  %4788 = vrot.lane.b32.xlu0 %v4288, 16
  %v4789 = vpop.permute.xlu0 %4788
  %4790 = vrot.lane.b32.xlu0 %v4289, 16
  %v4791 = vpop.permute.xlu0 %4790
  %4792 = vrot.lane.b32.xlu0 %v4290, 16
  %v4793 = vpop.permute.xlu0 %4792
  %4794 = vrot.lane.b32.xlu0 %v4291, 16
  %v4795 = vpop.permute.xlu0 %4794
  %4796 = vrot.lane.b32.xlu0 %v4292, 16
  %v4797 = vpop.permute.xlu0 %4796
  %4798 = vrot.lane.b32.xlu0 %v4293, 16
  %v4799 = vpop.permute.xlu0 %4798
  %4800 = vrot.lane.b32.xlu0 %v4294, 16
  %v4801 = vpop.permute.xlu0 %4800
  %4802 = vrot.lane.b32.xlu0 %v4295, 16
  %v4803 = vpop.permute.xlu0 %4802
  %4804 = vrot.lane.b32.xlu0 %v4296, 16
  %v4805 = vpop.permute.xlu0 %4804
  %4806 = vrot.lane.b32.xlu0 %v4297, 16
  %v4807 = vpop.permute.xlu0 %4806
  %4808 = vrot.lane.b32.xlu0 %v4298, 16
  %v4809 = vpop.permute.xlu0 %4808
  %4810 = vrot.lane.b32.xlu0 %v4299, 16
  %v4811 = vpop.permute.xlu0 %4810
  %4812 = vrot.lane.b32.xlu0 %v4300, 16
  %v4813 = vpop.permute.xlu0 %4812
  %4814 = vrot.lane.b32.xlu0 %v4301, 16
  %v4815 = vpop.permute.xlu0 %4814
  %4816 = vrot.lane.b32.xlu0 %v4302, 16
  %v4817 = vpop.permute.xlu0 %4816
  %4818 = vrot.lane.b32.xlu0 %v4303, 16
  %v4819 = vpop.permute.xlu0 %4818
  %4820 = vrot.lane.b32.xlu0 %v4304, 16
  %v4821 = vpop.permute.xlu0 %4820
  %4822 = vrot.lane.b32.xlu0 %v4305, 16
  %v4823 = vpop.permute.xlu0 %4822
  %4824 = vrot.lane.b32.xlu0 %v4306, 16
  %v4825 = vpop.permute.xlu0 %4824
  %4826 = vrot.lane.b32.xlu0 %v4307, 16
  %v4827 = vpop.permute.xlu0 %4826
  %4828 = vrot.lane.b32.xlu0 %v4308, 16
  %v4829 = vpop.permute.xlu0 %4828
  %4830 = vrot.lane.b32.xlu0 %v4309, 16
  %v4831 = vpop.permute.xlu0 %4830
  %4832 = vrot.lane.b32.xlu0 %v4310, 16
  %v4833 = vpop.permute.xlu0 %4832
  %4834 = vrot.lane.b32.xlu0 %v4311, 16
  %v4835 = vpop.permute.xlu0 %4834
  %4836 = vrot.lane.b32.xlu0 %v4312, 16
  %v4837 = vpop.permute.xlu0 %4836
  %4838 = vrot.lane.b32.xlu0 %v4313, 16
  %v4839 = vpop.permute.xlu0 %4838
  %4840 = vrot.lane.b32.xlu0 %v4314, 16
  %v4841 = vpop.permute.xlu0 %4840
  %4842 = vrot.lane.b32.xlu0 %v4315, 16
  %v4843 = vpop.permute.xlu0 %4842
  %4844 = vrot.lane.b32.xlu0 %v4316, 16
  %v4845 = vpop.permute.xlu0 %4844
  %4846 = vrot.lane.b32.xlu0 %v4317, 16
  %v4847 = vpop.permute.xlu0 %4846
  %4848 = vrot.lane.b32.xlu0 %v4318, 16
  %v4849 = vpop.permute.xlu0 %4848
  %4850 = vrot.lane.b32.xlu0 %v4319, 16
  %v4851 = vpop.permute.xlu0 %4850
  %4852 = vrot.lane.b32.xlu0 %v4320, 16
  %v4853 = vpop.permute.xlu0 %4852
  %4854 = vrot.lane.b32.xlu0 %v4321, 16
  %v4855 = vpop.permute.xlu0 %4854
  %4856 = vrot.lane.b32.xlu0 %v4322, 16
  %v4857 = vpop.permute.xlu0 %4856
  %4858 = vrot.lane.b32.xlu0 %v4323, 16
  %v4859 = vpop.permute.xlu0 %4858
  %4860 = vrot.lane.b32.xlu0 %v4324, 16
  %v4861 = vpop.permute.xlu0 %4860
  %4862 = vrot.lane.b32.xlu0 %v4325, 16
  %v4863 = vpop.permute.xlu0 %4862
  %4864 = vrot.lane.b32.xlu0 %v4326, 16
  %v4865 = vpop.permute.xlu0 %4864
  %4866 = vrot.lane.b32.xlu0 %v4327, 16
  %v4867 = vpop.permute.xlu0 %4866
  %4868 = vrot.lane.b32.xlu0 %v4328, 16
  %v4869 = vpop.permute.xlu0 %4868
  %4870 = vrot.lane.b32.xlu0 %v4329, 16
  %v4871 = vpop.permute.xlu0 %4870
  %4872 = vrot.lane.b32.xlu0 %v4330, 16
  %v4873 = vpop.permute.xlu0 %4872
  %4874 = vrot.lane.b32.xlu0 %v4331, 16
  %v4875 = vpop.permute.xlu0 %4874
  %4876 = vrot.lane.b32.xlu0 %v4332, 16
  %v4877 = vpop.permute.xlu0 %4876
  %4878 = vrot.lane.b32.xlu0 %v4333, 16
  %v4879 = vpop.permute.xlu0 %4878
  %4880 = vrot.lane.b32.xlu0 %v4334, 16
  %v4881 = vpop.permute.xlu0 %4880
  %4882 = vrot.lane.b32.xlu0 %v4335, 16
  %v4883 = vpop.permute.xlu0 %4882
  %4884 = vrot.lane.b32.xlu0 %v4336, 16
  %v4885 = vpop.permute.xlu0 %4884
  %4886 = vrot.lane.b32.xlu0 %v4337, 16
  %v4887 = vpop.permute.xlu0 %4886
  %4888 = vrot.lane.b32.xlu0 %v4338, 16
  %v4889 = vpop.permute.xlu0 %4888
  %4890 = vrot.lane.b32.xlu0 %v4339, 16
  %v4891 = vpop.permute.xlu0 %4890
  %4892 = vrot.lane.b32.xlu0 %v4340, 16
  %v4893 = vpop.permute.xlu0 %4892
  %4894 = vrot.lane.b32.xlu0 %v4341, 16
  %v4895 = vpop.permute.xlu0 %4894
  %4896 = vrot.lane.b32.xlu0 %v4342, 16
  %v4897 = vpop.permute.xlu0 %4896
  %4898 = vrot.lane.b32.xlu0 %v4343, 16
  %v4899 = vpop.permute.xlu0 %4898
  %4900 = vrot.lane.b32.xlu0 %v4344, 16
  %v4901 = vpop.permute.xlu0 %4900
  %4902 = vrot.lane.b32.xlu0 %v4345, 16
  %v4903 = vpop.permute.xlu0 %4902
  %4904 = vrot.lane.b32.xlu0 %v4346, 16
  %v4905 = vpop.permute.xlu0 %4904
  %4906 = vrot.lane.b32.xlu0 %v4347, 16
  %v4907 = vpop.permute.xlu0 %4906
  %4908 = vrot.lane.b32.xlu0 %v4348, 16
  %v4909 = vpop.permute.xlu0 %4908
  %4910 = vrot.lane.b32.xlu0 %v4349, 16
  %v4911 = vpop.permute.xlu0 %4910
  %4912 = vrot.lane.b32.xlu0 %v4350, 16
  %v4913 = vpop.permute.xlu0 %4912
  %4914 = vrot.lane.b32.xlu0 %v4351, 16
  %v4915 = vpop.permute.xlu0 %4914
  %4916 = vrot.lane.b32.xlu0 %v4352, 16
  %v4917 = vpop.permute.xlu0 %4916
  %4918 = vrot.lane.b32.xlu0 %v4353, 16
  %v4919 = vpop.permute.xlu0 %4918
  %4920 = vrot.lane.b32.xlu0 %v4354, 16
  %v4921 = vpop.permute.xlu0 %4920
  %4922 = vrot.lane.b32.xlu0 %v4355, 16
  %v4923 = vpop.permute.xlu0 %4922
  %4924 = vrot.lane.b32.xlu0 %v4356, 16
  %v4925 = vpop.permute.xlu0 %4924
  %4926 = vrot.lane.b32.xlu0 %v4357, 16
  %v4927 = vpop.permute.xlu0 %4926
  %4928 = vrot.lane.b32.xlu0 %v4358, 16
  %v4929 = vpop.permute.xlu0 %4928
  %4930 = vrot.lane.b32.xlu0 %v4359, 16
  %v4931 = vpop.permute.xlu0 %4930
  %4932 = vrot.lane.b32.xlu0 %v4360, 16
  %v4933 = vpop.permute.xlu0 %4932
  %4934 = vrot.lane.b32.xlu0 %v4361, 16
  %v4935 = vpop.permute.xlu0 %4934
  %4936 = vrot.lane.b32.xlu0 %v4362, 16
  %v4937 = vpop.permute.xlu0 %4936
  %4938 = vrot.lane.b32.xlu0 %v4363, 16
  %v4939 = vpop.permute.xlu0 %4938
  %4940 = vrot.lane.b32.xlu0 %v4364, 16
  %v4941 = vpop.permute.xlu0 %4940
  %4942 = vrot.lane.b32.xlu0 %v4365, 16
  %v4943 = vpop.permute.xlu0 %4942
  %4944 = vrot.lane.b32.xlu0 %v4366, 16
  %v4945 = vpop.permute.xlu0 %4944
  %4946 = vrot.lane.b32.xlu0 %v4367, 16
  %v4947 = vpop.permute.xlu0 %4946
  %4948 = vrot.lane.b32.xlu0 %v4368, 16
  %v4949 = vpop.permute.xlu0 %4948
  %4950 = vrot.lane.b32.xlu0 %v4369, 16
  %v4951 = vpop.permute.xlu0 %4950
  %4952 = vrot.lane.b32.xlu0 %v4370, 16
  %v4953 = vpop.permute.xlu0 %4952
  %4954 = vrot.lane.b32.xlu0 %v4371, 16
  %v4955 = vpop.permute.xlu0 %4954
  %4956 = vrot.lane.b32.xlu0 %v4372, 16
  %v4957 = vpop.permute.xlu0 %4956
  %4958 = vrot.lane.b32.xlu0 %v4373, 16
  %v4959 = vpop.permute.xlu0 %4958
  %4960 = vrot.lane.b32.xlu0 %v4374, 16
  %v4961 = vpop.permute.xlu0 %4960
  %4962 = vrot.lane.b32.xlu0 %v4375, 16
  %v4963 = vpop.permute.xlu0 %4962
  %4964 = vrot.lane.b32.xlu0 %v4376, 16
  %v4965 = vpop.permute.xlu0 %4964
  %4966 = vrot.lane.b32.xlu0 %v4377, 16
  %v4967 = vpop.permute.xlu0 %4966
  %4968 = vrot.lane.b32.xlu0 %v4378, 16
  %v4969 = vpop.permute.xlu0 %4968
  %4970 = vrot.lane.b32.xlu0 %v4379, 16
  %v4971 = vpop.permute.xlu0 %4970
  %4972 = vrot.lane.b32.xlu0 %v4380, 16
  %v4973 = vpop.permute.xlu0 %4972
  %4974 = vrot.lane.b32.xlu0 %v4381, 16
  %v4975 = vpop.permute.xlu0 %4974
  %4976 = vrot.lane.b32.xlu0 %v4382, 16
  %v4977 = vpop.permute.xlu0 %4976
  %4978 = vrot.lane.b32.xlu0 %v4383, 16
  %v4979 = vpop.permute.xlu0 %4978
  %4980 = vrot.lane.b32.xlu0 %v4384, 16
  %v4981 = vpop.permute.xlu0 %4980
  %4982 = vrot.lane.b32.xlu0 %v4385, 16
  %v4983 = vpop.permute.xlu0 %4982
  %4984 = vrot.lane.b32.xlu0 %v4386, 16
  %v4985 = vpop.permute.xlu0 %4984
  %4986 = vrot.lane.b32.xlu0 %v4387, 16
  %v4987 = vpop.permute.xlu0 %4986
  %4988 = vrot.lane.b32.xlu0 %v4388, 16
  %v4989 = vpop.permute.xlu0 %4988
  %4990 = vrot.lane.b32.xlu0 %v4389, 16
  %v4991 = vpop.permute.xlu0 %4990
  %4992 = vrot.lane.b32.xlu0 %v4390, 16
  %v4993 = vpop.permute.xlu0 %4992
  %4994 = vrot.lane.b32.xlu0 %v4391, 16
  %v4995 = vpop.permute.xlu0 %4994
  %4996 = vrot.lane.b32.xlu0 %v4392, 16
  %v4997 = vpop.permute.xlu0 %4996
  %4998 = vrot.lane.b32.xlu0 %v4393, 16
  %v4999 = vpop.permute.xlu0 %4998
  %5000 = vrot.lane.b32.xlu0 %v4394, 16
  %v5001 = vpop.permute.xlu0 %5000
  %5002 = vrot.lane.b32.xlu0 %v4395, 16
  %v5003 = vpop.permute.xlu0 %5002
  %5004 = vrot.lane.b32.xlu0 %v4396, 16
  %v5005 = vpop.permute.xlu0 %5004
  %5006 = vrot.lane.b32.xlu0 %v4397, 16
  %v5007 = vpop.permute.xlu0 %5006
  %5008 = vrot.lane.b32.xlu0 %v4398, 16
  %v5009 = vpop.permute.xlu0 %5008
  %5010 = vrot.lane.b32.xlu0 %v4399, 16
  %v5011 = vpop.permute.xlu0 %5010
  %5012 = vrot.lane.b32.xlu0 %v4400, 16
  %v5013 = vpop.permute.xlu0 %5012
  %5014 = vrot.lane.b32.xlu0 %v4401, 16
  %v5015 = vpop.permute.xlu0 %5014
  %5016 = vrot.lane.b32.xlu0 %v4402, 16
  %v5017 = vpop.permute.xlu0 %5016
  %5018 = vrot.lane.b32.xlu0 %v4403, 16
  %v5019 = vpop.permute.xlu0 %5018
  %5020 = vrot.lane.b32.xlu0 %v4404, 16
  %v5021 = vpop.permute.xlu0 %5020
  %5022 = vrot.lane.b32.xlu0 %v4405, 16
  %v5023 = vpop.permute.xlu0 %5022
  %5024 = vrot.lane.b32.xlu0 %v4406, 16
  %v5025 = vpop.permute.xlu0 %5024
  %5026 = vrot.lane.b32.xlu0 %v4407, 16
  %v5027 = vpop.permute.xlu0 %5026
  %5028 = vrot.lane.b32.xlu0 %v4408, 16
  %v5029 = vpop.permute.xlu0 %5028
  %5030 = vrot.lane.b32.xlu0 %v4409, 16
  %v5031 = vpop.permute.xlu0 %5030
  %5032 = vrot.lane.b32.xlu0 %v4410, 16
  %v5033 = vpop.permute.xlu0 %5032
  %5034 = vrot.lane.b32.xlu0 %v4411, 16
  %v5035 = vpop.permute.xlu0 %5034
  %vm5036 = vcmask 130048
  %v5037 = vsel %vm5036, %v4621, %v4623
  %v5038 = vsel %vm5036, %v4623, %v4625
  %v5039 = vsel %vm5036, %v4625, %v4627
  %v5040 = vsel %vm5036, %v4627, %v4629
  %v5041 = vsel %vm5036, %v4629, %v4631
  %v5042 = vsel %vm5036, %v4631, %v4633
  %v5043 = vsel %vm5036, %v4633, %v4635
  %v5044 = vsel %vm5036, %v4635, %v4637
  %v5045 = vsel %vm5036, %v4637, %v4639
  %v5046 = vsel %vm5036, %v4639, %v4641
  %v5047 = vsel %vm5036, %v4641, %v4643
  %v5048 = vsel %vm5036, %v4643, %v4645
  %v5049 = vsel %vm5036, %v4645, %v4647
  %v5050 = vsel %vm5036, %v4647, %v4649
  %v5051 = vsel %vm5036, %v4649, %v4651
  %v5052 = vsel %vm5036, %v4651, %v4653
  %v5053 = vsel %vm5036, %v4653, %v4655
  %v5054 = vsel %vm5036, %v4655, %v4657
  %v5055 = vsel %vm5036, %v4657, %v4659
  %v5056 = vsel %vm5036, %v4659, %v4661
  %v5057 = vsel %vm5036, %v4661, %v4663
  %v5058 = vsel %vm5036, %v4663, %v4665
  %v5059 = vsel %vm5036, %v4665, %v4667
  %v5060 = vsel %vm5036, %v4667, %v4669
  %v5061 = vsel %vm5036, %v4669, %v4671
  %v5062 = vsel %vm5036, %v4673, %v4675
  %v5063 = vsel %vm5036, %v4675, %v4677
  %v5064 = vsel %vm5036, %v4677, %v4679
  %v5065 = vsel %vm5036, %v4679, %v4681
  %v5066 = vsel %vm5036, %v4681, %v4683
  %v5067 = vsel %vm5036, %v4683, %v4685
  %v5068 = vsel %vm5036, %v4685, %v4687
  %v5069 = vsel %vm5036, %v4687, %v4689
  %v5070 = vsel %vm5036, %v4689, %v4691
  %v5071 = vsel %vm5036, %v4691, %v4693
  %v5072 = vsel %vm5036, %v4693, %v4695
  %v5073 = vsel %vm5036, %v4695, %v4697
  %v5074 = vsel %vm5036, %v4697, %v4699
  %v5075 = vsel %vm5036, %v4699, %v4701
  %v5076 = vsel %vm5036, %v4701, %v4703
  %v5077 = vsel %vm5036, %v4703, %v4705
  %v5078 = vsel %vm5036, %v4705, %v4707
  %v5079 = vsel %vm5036, %v4707, %v4709
  %v5080 = vsel %vm5036, %v4709, %v4711
  %v5081 = vsel %vm5036, %v4711, %v4713
  %v5082 = vsel %vm5036, %v4713, %v4715
  %v5083 = vsel %vm5036, %v4715, %v4717
  %v5084 = vsel %vm5036, %v4717, %v4719
  %v5085 = vsel %vm5036, %v4719, %v4721
  %v5086 = vsel %vm5036, %v4721, %v4723
  %v5087 = vsel %vm5036, %v4725, %v4727
  %v5088 = vsel %vm5036, %v4727, %v4729
  %v5089 = vsel %vm5036, %v4729, %v4731
  %v5090 = vsel %vm5036, %v4731, %v4733
  %v5091 = vsel %vm5036, %v4733, %v4735
  %v5092 = vsel %vm5036, %v4735, %v4737
  %v5093 = vsel %vm5036, %v4737, %v4739
  %v5094 = vsel %vm5036, %v4739, %v4741
  %v5095 = vsel %vm5036, %v4741, %v4743
  %v5096 = vsel %vm5036, %v4743, %v4745
  %v5097 = vsel %vm5036, %v4745, %v4747
  %v5098 = vsel %vm5036, %v4747, %v4749
  %v5099 = vsel %vm5036, %v4749, %v4751
  %v5100 = vsel %vm5036, %v4751, %v4753
  %v5101 = vsel %vm5036, %v4753, %v4755
  %v5102 = vsel %vm5036, %v4755, %v4757
  %v5103 = vsel %vm5036, %v4757, %v4759
  %v5104 = vsel %vm5036, %v4759, %v4761
  %v5105 = vsel %vm5036, %v4761, %v4763
  %v5106 = vsel %vm5036, %v4763, %v4765
  %v5107 = vsel %vm5036, %v4765, %v4767
  %v5108 = vsel %vm5036, %v4767, %v4769
  %v5109 = vsel %vm5036, %v4769, %v4771
  %v5110 = vsel %vm5036, %v4771, %v4773
  %v5111 = vsel %vm5036, %v4773, %v4775
  %v5112 = vsel %vm5036, %v4777, %v4779
  %v5113 = vsel %vm5036, %v4779, %v4781
  %v5114 = vsel %vm5036, %v4781, %v4783
  %v5115 = vsel %vm5036, %v4783, %v4785
  %v5116 = vsel %vm5036, %v4785, %v4787
  %v5117 = vsel %vm5036, %v4787, %v4789
  %v5118 = vsel %vm5036, %v4789, %v4791
  %v5119 = vsel %vm5036, %v4791, %v4793
  %v5120 = vsel %vm5036, %v4793, %v4795
  %v5121 = vsel %vm5036, %v4795, %v4797
  %v5122 = vsel %vm5036, %v4797, %v4799
  %v5123 = vsel %vm5036, %v4799, %v4801
  %v5124 = vsel %vm5036, %v4801, %v4803
  %v5125 = vsel %vm5036, %v4803, %v4805
  %v5126 = vsel %vm5036, %v4805, %v4807
  %v5127 = vsel %vm5036, %v4807, %v4809
  %v5128 = vsel %vm5036, %v4809, %v4811
  %v5129 = vsel %vm5036, %v4811, %v4813
  %v5130 = vsel %vm5036, %v4813, %v4815
  %v5131 = vsel %vm5036, %v4815, %v4817
  %v5132 = vsel %vm5036, %v4817, %v4819
  %v5133 = vsel %vm5036, %v4819, %v4821
  %v5134 = vsel %vm5036, %v4821, %v4823
  %v5135 = vsel %vm5036, %v4823, %v4825
  %v5136 = vsel %vm5036, %v4825, %v4827
  %v5137 = vsel %vm5036, %v4829, %v4831
  %v5138 = vsel %vm5036, %v4831, %v4833
  %v5139 = vsel %vm5036, %v4833, %v4835
  %v5140 = vsel %vm5036, %v4835, %v4837
  %v5141 = vsel %vm5036, %v4837, %v4839
  %v5142 = vsel %vm5036, %v4839, %v4841
  %v5143 = vsel %vm5036, %v4841, %v4843
  %v5144 = vsel %vm5036, %v4843, %v4845
  %v5145 = vsel %vm5036, %v4845, %v4847
  %v5146 = vsel %vm5036, %v4847, %v4849
  %v5147 = vsel %vm5036, %v4849, %v4851
  %v5148 = vsel %vm5036, %v4851, %v4853
  %v5149 = vsel %vm5036, %v4853, %v4855
  %v5150 = vsel %vm5036, %v4855, %v4857
  %v5151 = vsel %vm5036, %v4857, %v4859
  %v5152 = vsel %vm5036, %v4859, %v4861
  %v5153 = vsel %vm5036, %v4861, %v4863
  %v5154 = vsel %vm5036, %v4863, %v4865
  %v5155 = vsel %vm5036, %v4865, %v4867
  %v5156 = vsel %vm5036, %v4867, %v4869
  %v5157 = vsel %vm5036, %v4869, %v4871
  %v5158 = vsel %vm5036, %v4871, %v4873
  %v5159 = vsel %vm5036, %v4873, %v4875
  %v5160 = vsel %vm5036, %v4875, %v4877
  %v5161 = vsel %vm5036, %v4877, %v4879
  %v5162 = vsel %vm5036, %v4881, %v4883
  %v5163 = vsel %vm5036, %v4883, %v4885
  %v5164 = vsel %vm5036, %v4885, %v4887
  %v5165 = vsel %vm5036, %v4887, %v4889
  %v5166 = vsel %vm5036, %v4889, %v4891
  %v5167 = vsel %vm5036, %v4891, %v4893
  %v5168 = vsel %vm5036, %v4893, %v4895
  %v5169 = vsel %vm5036, %v4895, %v4897
  %v5170 = vsel %vm5036, %v4897, %v4899
  %v5171 = vsel %vm5036, %v4899, %v4901
  %v5172 = vsel %vm5036, %v4901, %v4903
  %v5173 = vsel %vm5036, %v4903, %v4905
  %v5174 = vsel %vm5036, %v4905, %v4907
  %v5175 = vsel %vm5036, %v4907, %v4909
  %v5176 = vsel %vm5036, %v4909, %v4911
  %v5177 = vsel %vm5036, %v4911, %v4913
  %v5178 = vsel %vm5036, %v4913, %v4915
  %v5179 = vsel %vm5036, %v4915, %v4917
  %v5180 = vsel %vm5036, %v4917, %v4919
  %v5181 = vsel %vm5036, %v4919, %v4921
  %v5182 = vsel %vm5036, %v4921, %v4923
  %v5183 = vsel %vm5036, %v4923, %v4925
  %v5184 = vsel %vm5036, %v4925, %v4927
  %v5185 = vsel %vm5036, %v4927, %v4929
  %v5186 = vsel %vm5036, %v4929, %v4931
  %v5187 = vsel %vm5036, %v4933, %v4935
  %v5188 = vsel %vm5036, %v4935, %v4937
  %v5189 = vsel %vm5036, %v4937, %v4939
  %v5190 = vsel %vm5036, %v4939, %v4941
  %v5191 = vsel %vm5036, %v4941, %v4943
  %v5192 = vsel %vm5036, %v4943, %v4945
  %v5193 = vsel %vm5036, %v4945, %v4947
  %v5194 = vsel %vm5036, %v4947, %v4949
  %v5195 = vsel %vm5036, %v4949, %v4951
  %v5196 = vsel %vm5036, %v4951, %v4953
  %v5197 = vsel %vm5036, %v4953, %v4955
  %v5198 = vsel %vm5036, %v4955, %v4957
  %v5199 = vsel %vm5036, %v4957, %v4959
  %v5200 = vsel %vm5036, %v4959, %v4961
  %v5201 = vsel %vm5036, %v4961, %v4963
  %v5202 = vsel %vm5036, %v4963, %v4965
  %v5203 = vsel %vm5036, %v4965, %v4967
  %v5204 = vsel %vm5036, %v4967, %v4969
  %v5205 = vsel %vm5036, %v4969, %v4971
  %v5206 = vsel %vm5036, %v4971, %v4973
  %v5207 = vsel %vm5036, %v4973, %v4975
  %v5208 = vsel %vm5036, %v4975, %v4977
  %v5209 = vsel %vm5036, %v4977, %v4979
  %v5210 = vsel %vm5036, %v4979, %v4981
  %v5211 = vsel %vm5036, %v4981, %v4983
  %v5212 = vsel %vm5036, %v4985, %v4987
  %v5213 = vsel %vm5036, %v4987, %v4989
  %v5214 = vsel %vm5036, %v4989, %v4991
  %v5215 = vsel %vm5036, %v4991, %v4993
  %v5216 = vsel %vm5036, %v4993, %v4995
  %v5217 = vsel %vm5036, %v4995, %v4997
  %v5218 = vsel %vm5036, %v4997, %v4999
  %v5219 = vsel %vm5036, %v4999, %v5001
  %v5220 = vsel %vm5036, %v5001, %v5003
  %v5221 = vsel %vm5036, %v5003, %v5005
  %v5222 = vsel %vm5036, %v5005, %v5007
  %v5223 = vsel %vm5036, %v5007, %v5009
  %v5224 = vsel %vm5036, %v5009, %v5011
  %v5225 = vsel %vm5036, %v5011, %v5013
  %v5226 = vsel %vm5036, %v5013, %v5015
  %v5227 = vsel %vm5036, %v5015, %v5017
  %v5228 = vsel %vm5036, %v5017, %v5019
  %v5229 = vsel %vm5036, %v5019, %v5021
  %v5230 = vsel %vm5036, %v5021, %v5023
  %v5231 = vsel %vm5036, %v5023, %v5025
  %v5232 = vsel %vm5036, %v5025, %v5027
  %v5233 = vsel %vm5036, %v5027, %v5029
  %v5234 = vsel %vm5036, %v5029, %v5031
  %v5235 = vsel %vm5036, %v5031, %v5033
  %v5236 = vsel %vm5036, %v5033, %v5035
  %v5438 = vsel %vm1224, %v4196, 0
  %v5441 = vsel %vm1224, %v4197, 0
  %v5444 = vsel %vm1224, %v4198, 0
  %v5447 = vsel %vm1224, %v4199, 0
  %v5450 = vsel %vm1224, %v4200, 0
  %v5453 = vsel %vm1224, %v4201, 0
  %v5456 = vsel %vm1224, %v4202, 0
  %v5459 = vsel %vm1224, %v4203, 0
  %5461 = vmatprep.subr.mxu0 0.0
  %5462 = vmatpush1.msra.mxu0 0.0
  %5463 = vmatprep.subr.mxu0 0.0
  %5464 = vmatpush1.msra.mxu0 0.0
  %5465 = vmatprep.subr.mxu0 0.0
  %5466 = vmatpush1.msra.mxu0 0.0
  %5467 = vmatprep.subr.mxu0 0.0
  %5468 = vmatpush1.msra.mxu0 0.0
  %5469 = vmatprep.subr.mxu0 0.0
  %5470 = vmatpush1.msra.mxu0 0.0
  %5471 = vmatprep.subr.mxu0 0.0
  %5472 = vmatpush1.msra.mxu0 0.0
  %5473 = vmatprep.subr.mxu0 0.0
  %5474 = vmatpush1.msra.mxu0 0.0
  %5475 = vmatprep.subr.mxu0 0.0
  %5476 = vmatpush1.msra.mxu0 0.0
  %5477 = vmatprep.subr.mxu0 %v5213
  %5478 = vmatpush1.msra.mxu0 %v5212
  %5479 = vmatprep.subr.mxu0 %v5188
  %5480 = vmatpush1.msra.mxu0 %v5187
  %5481 = vmatprep.subr.mxu0 %v5163
  %5482 = vmatpush1.msra.mxu0 %v5162
  %5483 = vmatprep.subr.mxu0 %v5138
  %5484 = vmatpush1.msra.mxu0 %v5137
  %5485 = vmatprep.subr.mxu0 %v5113
  %5486 = vmatpush1.msra.mxu0 %v5112
  %5487 = vmatprep.subr.mxu0 %v5088
  %5488 = vmatpush1.msra.mxu0 %v5087
  %5489 = vmatprep.subr.mxu0 %v5063
  %5490 = vmatpush1.msra.mxu0 %v5062
  %5491 = vmatprep.subr.mxu0 %v5038
  %5492 = vmatpush1.msra.mxu0 %v5037
  %5493 = vmatprep.subr.mxu0 0.0
  %5494 = vmatpush2.msra.mxu0 0.0
  %5495 = vmatprep.subr.mxu0 0.0
  %5496 = vmatpush2.msra.mxu0 0.0
  %5497 = vmatprep.subr.mxu0 0.0
  %5498 = vmatpush2.msra.mxu0 0.0
  %5499 = vmatprep.subr.mxu0 0.0
  %5500 = vmatpush2.msra.mxu0 0.0
  %5501 = vmatprep.subr.mxu0 0.0
  %5502 = vmatpush2.msra.mxu0 0.0
  %5503 = vmatprep.subr.mxu0 0.0
  %5504 = vmatpush2.msra.mxu0 0.0
  %5505 = vmatprep.subr.mxu0 0.0
  %5506 = vmatpush2.msra.mxu0 0.0
  %5507 = vmatprep.subr.mxu0 0.0
  %5508 = vmatpush2.msra.mxu0 0.0
  %5509 = vmatprep.subr.mxu0 0.0
  %5510 = vmatpush2.msra.mxu0 0.0
  %5511 = vmatprep.subr.mxu0 0.0
  %5512 = vmatpush2.msra.mxu0 0.0
  %5513 = vmatprep.subr.mxu0 0.0
  %5514 = vmatpush2.msra.mxu0 0.0
  %5515 = vmatprep.subr.mxu0 0.0
  %5516 = vmatpush2.msra.mxu0 0.0
  %5517 = vmatprep.subr.mxu0 0.0
  %5518 = vmatpush2.msra.mxu0 0.0
  %5519 = vmatprep.subr.mxu0 0.0
  %5520 = vmatpush2.msra.mxu0 0.0
  %5521 = vmatprep.subr.mxu0 0.0
  %5522 = vmatpush2.msra.mxu0 0.0
  %5523 = vmatprep.subr.mxu0 0.0
  %5524 = vmatpush2.msra.mxu0 0.0
  %5525 = vmatprep.mubr.f32.mxu0 0.0
  %5526 = vmatmul.mubr.f32.gmra.mxu0 %v5438
  %v5527 = vpop.f32.mrf.mxu0
  %v5528 = vadd.f32 0.0, %v5527
  %v5529 = vpop.f32.mrf.mxu0
  %v5530 = vadd.f32 0.0, %v5529
  %5531 = vmatprep.mubr.f32.mxu0 0.0
  %5532 = vmatmul.mubr.f32.gmra.mxu0 %v5441
  %v5533 = vpop.f32.mrf.mxu0
  %v5534 = vadd.f32 0.0, %v5533
  %v5535 = vpop.f32.mrf.mxu0
  %v5536 = vadd.f32 0.0, %v5535
  %5537 = vmatprep.mubr.f32.mxu0 0.0
  %5538 = vmatmul.mubr.f32.gmra.mxu0 %v5444
  %v5539 = vpop.f32.mrf.mxu0
  %v5540 = vadd.f32 0.0, %v5539
  %v5541 = vpop.f32.mrf.mxu0
  %v5542 = vadd.f32 0.0, %v5541
  %5543 = vmatprep.mubr.f32.mxu0 0.0
  %5544 = vmatmul.mubr.f32.gmra.mxu0 %v5447
  %v5545 = vpop.f32.mrf.mxu0
  %v5546 = vadd.f32 0.0, %v5545
  %v5547 = vpop.f32.mrf.mxu0
  %v5548 = vadd.f32 0.0, %v5547
  %5549 = vmatprep.mubr.f32.mxu0 0.0
  %5550 = vmatmul.mubr.f32.gmra.mxu0 %v5450
  %v5551 = vpop.f32.mrf.mxu0
  %v5552 = vadd.f32 0.0, %v5551
  %v5553 = vpop.f32.mrf.mxu0
  %v5554 = vadd.f32 0.0, %v5553
  %5555 = vmatprep.mubr.f32.mxu0 0.0
  %5556 = vmatmul.mubr.f32.gmra.mxu0 %v5453
  %v5557 = vpop.f32.mrf.mxu0
  %v5558 = vadd.f32 0.0, %v5557
  %v5559 = vpop.f32.mrf.mxu0
  %v5560 = vadd.f32 0.0, %v5559
  %5561 = vmatprep.mubr.f32.mxu0 0.0
  %5562 = vmatmul.mubr.f32.gmra.mxu0 %v5456
  %v5563 = vpop.f32.mrf.mxu0
  %v5564 = vadd.f32 0.0, %v5563
  %v5565 = vpop.f32.mrf.mxu0
  %v5566 = vadd.f32 0.0, %v5565
  %5567 = vmatprep.mubr.f32.mxu0 0.0
  %5568 = vmatmul.mubr.f32.gmra.mxu0 %v5459
  %v5569 = vpop.f32.mrf.mxu0
  %v5570 = vadd.f32 0.0, %v5569
  %v5571 = vpop.f32.mrf.mxu0
  %v5572 = vadd.f32 0.0, %v5571
  %5573 = vdwg.mxu0
  %5574 = vmatprep.subr.mxu0 0.0
  %5575 = vmatpush1.msra.mxu0 0.0
  %5576 = vmatprep.subr.mxu0 0.0
  %5577 = vmatpush1.msra.mxu0 0.0
  %5578 = vmatprep.subr.mxu0 0.0
  %5579 = vmatpush1.msra.mxu0 0.0
  %5580 = vmatprep.subr.mxu0 0.0
  %5581 = vmatpush1.msra.mxu0 0.0
  %5582 = vmatprep.subr.mxu0 0.0
  %5583 = vmatpush1.msra.mxu0 0.0
  %5584 = vmatprep.subr.mxu0 0.0
  %5585 = vmatpush1.msra.mxu0 0.0
  %5586 = vmatprep.subr.mxu0 0.0
  %5587 = vmatpush1.msra.mxu0 0.0
  %5588 = vmatprep.subr.mxu0 0.0
  %5589 = vmatpush1.msra.mxu0 0.0
  %5590 = vmatprep.subr.mxu0 %v5215
  %5591 = vmatpush1.msra.mxu0 %v5214
  %5592 = vmatprep.subr.mxu0 %v5190
  %5593 = vmatpush1.msra.mxu0 %v5189
  %5594 = vmatprep.subr.mxu0 %v5165
  %5595 = vmatpush1.msra.mxu0 %v5164
  %5596 = vmatprep.subr.mxu0 %v5140
  %5597 = vmatpush1.msra.mxu0 %v5139
  %5598 = vmatprep.subr.mxu0 %v5115
  %5599 = vmatpush1.msra.mxu0 %v5114
  %5600 = vmatprep.subr.mxu0 %v5090
  %5601 = vmatpush1.msra.mxu0 %v5089
  %5602 = vmatprep.subr.mxu0 %v5065
  %5603 = vmatpush1.msra.mxu0 %v5064
  %5604 = vmatprep.subr.mxu0 %v5040
  %5605 = vmatpush1.msra.mxu0 %v5039
  %5606 = vmatprep.subr.mxu0 0.0
  %5607 = vmatpush2.msra.mxu0 0.0
  %5608 = vmatprep.subr.mxu0 0.0
  %5609 = vmatpush2.msra.mxu0 0.0
  %5610 = vmatprep.subr.mxu0 0.0
  %5611 = vmatpush2.msra.mxu0 0.0
  %5612 = vmatprep.subr.mxu0 0.0
  %5613 = vmatpush2.msra.mxu0 0.0
  %5614 = vmatprep.subr.mxu0 0.0
  %5615 = vmatpush2.msra.mxu0 0.0
  %5616 = vmatprep.subr.mxu0 0.0
  %5617 = vmatpush2.msra.mxu0 0.0
  %5618 = vmatprep.subr.mxu0 0.0
  %5619 = vmatpush2.msra.mxu0 0.0
  %5620 = vmatprep.subr.mxu0 0.0
  %5621 = vmatpush2.msra.mxu0 0.0
  %5622 = vmatprep.subr.mxu0 0.0
  %5623 = vmatpush2.msra.mxu0 0.0
  %5624 = vmatprep.subr.mxu0 0.0
  %5625 = vmatpush2.msra.mxu0 0.0
  %5626 = vmatprep.subr.mxu0 0.0
  %5627 = vmatpush2.msra.mxu0 0.0
  %5628 = vmatprep.subr.mxu0 0.0
  %5629 = vmatpush2.msra.mxu0 0.0
  %5630 = vmatprep.subr.mxu0 0.0
  %5631 = vmatpush2.msra.mxu0 0.0
  %5632 = vmatprep.subr.mxu0 0.0
  %5633 = vmatpush2.msra.mxu0 0.0
  %5634 = vmatprep.subr.mxu0 0.0
  %5635 = vmatpush2.msra.mxu0 0.0
  %5636 = vmatprep.subr.mxu0 0.0
  %5637 = vmatpush2.msra.mxu0 0.0
  %5638 = vmatprep.mubr.f32.mxu0 0.0
  %5639 = vmatmul.mubr.f32.gmra.mxu0 %v5438
  %v5640 = vpop.f32.mrf.mxu0
  %v5641 = vadd.f32 0.0, %v5640
  %v5642 = vpop.f32.mrf.mxu0
  %v5643 = vadd.f32 0.0, %v5642
  %5644 = vmatprep.mubr.f32.mxu0 0.0
  %5645 = vmatmul.mubr.f32.gmra.mxu0 %v5441
  %v5646 = vpop.f32.mrf.mxu0
  %v5647 = vadd.f32 0.0, %v5646
  %v5648 = vpop.f32.mrf.mxu0
  %v5649 = vadd.f32 0.0, %v5648
  %5650 = vmatprep.mubr.f32.mxu0 0.0
  %5651 = vmatmul.mubr.f32.gmra.mxu0 %v5444
  %v5652 = vpop.f32.mrf.mxu0
  %v5653 = vadd.f32 0.0, %v5652
  %v5654 = vpop.f32.mrf.mxu0
  %v5655 = vadd.f32 0.0, %v5654
  %5656 = vmatprep.mubr.f32.mxu0 0.0
  %5657 = vmatmul.mubr.f32.gmra.mxu0 %v5447
  %v5658 = vpop.f32.mrf.mxu0
  %v5659 = vadd.f32 0.0, %v5658
  %v5660 = vpop.f32.mrf.mxu0
  %v5661 = vadd.f32 0.0, %v5660
  %5662 = vmatprep.mubr.f32.mxu0 0.0
  %5663 = vmatmul.mubr.f32.gmra.mxu0 %v5450
  %v5664 = vpop.f32.mrf.mxu0
  %v5665 = vadd.f32 0.0, %v5664
  %v5666 = vpop.f32.mrf.mxu0
  %v5667 = vadd.f32 0.0, %v5666
  %5668 = vmatprep.mubr.f32.mxu0 0.0
  %5669 = vmatmul.mubr.f32.gmra.mxu0 %v5453
  %v5670 = vpop.f32.mrf.mxu0
  %v5671 = vadd.f32 0.0, %v5670
  %v5672 = vpop.f32.mrf.mxu0
  %v5673 = vadd.f32 0.0, %v5672
  %5674 = vmatprep.mubr.f32.mxu0 0.0
  %5675 = vmatmul.mubr.f32.gmra.mxu0 %v5456
  %v5676 = vpop.f32.mrf.mxu0
  %v5677 = vadd.f32 0.0, %v5676
  %v5678 = vpop.f32.mrf.mxu0
  %v5679 = vadd.f32 0.0, %v5678
  %5680 = vmatprep.mubr.f32.mxu0 0.0
  %5681 = vmatmul.mubr.f32.gmra.mxu0 %v5459
  %v5682 = vpop.f32.mrf.mxu0
  %v5683 = vadd.f32 0.0, %v5682
  %v5684 = vpop.f32.mrf.mxu0
  %v5685 = vadd.f32 0.0, %v5684
  %5686 = vdwg.mxu0
  %5687 = vmatprep.subr.mxu0 0.0
  %5688 = vmatpush1.msra.mxu0 0.0
  %5689 = vmatprep.subr.mxu0 0.0
  %5690 = vmatpush1.msra.mxu0 0.0
  %5691 = vmatprep.subr.mxu0 0.0
  %5692 = vmatpush1.msra.mxu0 0.0
  %5693 = vmatprep.subr.mxu0 0.0
  %5694 = vmatpush1.msra.mxu0 0.0
  %5695 = vmatprep.subr.mxu0 0.0
  %5696 = vmatpush1.msra.mxu0 0.0
  %5697 = vmatprep.subr.mxu0 0.0
  %5698 = vmatpush1.msra.mxu0 0.0
  %5699 = vmatprep.subr.mxu0 0.0
  %5700 = vmatpush1.msra.mxu0 0.0
  %5701 = vmatprep.subr.mxu0 0.0
  %5702 = vmatpush1.msra.mxu0 0.0
  %5703 = vmatprep.subr.mxu0 %v5217
  %5704 = vmatpush1.msra.mxu0 %v5216
  %5705 = vmatprep.subr.mxu0 %v5192
  %5706 = vmatpush1.msra.mxu0 %v5191
  %5707 = vmatprep.subr.mxu0 %v5167
  %5708 = vmatpush1.msra.mxu0 %v5166
  %5709 = vmatprep.subr.mxu0 %v5142
  %5710 = vmatpush1.msra.mxu0 %v5141
  %5711 = vmatprep.subr.mxu0 %v5117
  %5712 = vmatpush1.msra.mxu0 %v5116
  %5713 = vmatprep.subr.mxu0 %v5092
  %5714 = vmatpush1.msra.mxu0 %v5091
  %5715 = vmatprep.subr.mxu0 %v5067
  %5716 = vmatpush1.msra.mxu0 %v5066
  %5717 = vmatprep.subr.mxu0 %v5042
  %5718 = vmatpush1.msra.mxu0 %v5041
  %5719 = vmatprep.subr.mxu0 0.0
  %5720 = vmatpush2.msra.mxu0 0.0
  %5721 = vmatprep.subr.mxu0 0.0
  %5722 = vmatpush2.msra.mxu0 0.0
  %5723 = vmatprep.subr.mxu0 0.0
  %5724 = vmatpush2.msra.mxu0 0.0
  %5725 = vmatprep.subr.mxu0 0.0
  %5726 = vmatpush2.msra.mxu0 0.0
  %5727 = vmatprep.subr.mxu0 0.0
  %5728 = vmatpush2.msra.mxu0 0.0
  %5729 = vmatprep.subr.mxu0 0.0
  %5730 = vmatpush2.msra.mxu0 0.0
  %5731 = vmatprep.subr.mxu0 0.0
  %5732 = vmatpush2.msra.mxu0 0.0
  %5733 = vmatprep.subr.mxu0 0.0
  %5734 = vmatpush2.msra.mxu0 0.0
  %5735 = vmatprep.subr.mxu0 0.0
  %5736 = vmatpush2.msra.mxu0 0.0
  %5737 = vmatprep.subr.mxu0 0.0
  %5738 = vmatpush2.msra.mxu0 0.0
  %5739 = vmatprep.subr.mxu0 0.0
  %5740 = vmatpush2.msra.mxu0 0.0
  %5741 = vmatprep.subr.mxu0 0.0
  %5742 = vmatpush2.msra.mxu0 0.0
  %5743 = vmatprep.subr.mxu0 0.0
  %5744 = vmatpush2.msra.mxu0 0.0
  %5745 = vmatprep.subr.mxu0 0.0
  %5746 = vmatpush2.msra.mxu0 0.0
  %5747 = vmatprep.subr.mxu0 0.0
  %5748 = vmatpush2.msra.mxu0 0.0
  %5749 = vmatprep.subr.mxu0 0.0
  %5750 = vmatpush2.msra.mxu0 0.0
  %5751 = vmatprep.mubr.f32.mxu0 0.0
  %5752 = vmatmul.mubr.f32.gmra.mxu0 %v5438
  %v5753 = vpop.f32.mrf.mxu0
  %v5754 = vadd.f32 0.0, %v5753
  %v5755 = vpop.f32.mrf.mxu0
  %v5756 = vadd.f32 0.0, %v5755
  %5757 = vmatprep.mubr.f32.mxu0 0.0
  %5758 = vmatmul.mubr.f32.gmra.mxu0 %v5441
  %v5759 = vpop.f32.mrf.mxu0
  %v5760 = vadd.f32 0.0, %v5759
  %v5761 = vpop.f32.mrf.mxu0
  %v5762 = vadd.f32 0.0, %v5761
  %5763 = vmatprep.mubr.f32.mxu0 0.0
  %5764 = vmatmul.mubr.f32.gmra.mxu0 %v5444
  %v5765 = vpop.f32.mrf.mxu0
  %v5766 = vadd.f32 0.0, %v5765
  %v5767 = vpop.f32.mrf.mxu0
  %v5768 = vadd.f32 0.0, %v5767
  %5769 = vmatprep.mubr.f32.mxu0 0.0
  %5770 = vmatmul.mubr.f32.gmra.mxu0 %v5447
  %v5771 = vpop.f32.mrf.mxu0
  %v5772 = vadd.f32 0.0, %v5771
  %v5773 = vpop.f32.mrf.mxu0
  %v5774 = vadd.f32 0.0, %v5773
  %5775 = vmatprep.mubr.f32.mxu0 0.0
  %5776 = vmatmul.mubr.f32.gmra.mxu0 %v5450
  %v5777 = vpop.f32.mrf.mxu0
  %v5778 = vadd.f32 0.0, %v5777
  %v5779 = vpop.f32.mrf.mxu0
  %v5780 = vadd.f32 0.0, %v5779
  %5781 = vmatprep.mubr.f32.mxu0 0.0
  %5782 = vmatmul.mubr.f32.gmra.mxu0 %v5453
  %v5783 = vpop.f32.mrf.mxu0
  %v5784 = vadd.f32 0.0, %v5783
  %v5785 = vpop.f32.mrf.mxu0
  %v5786 = vadd.f32 0.0, %v5785
  %5787 = vmatprep.mubr.f32.mxu0 0.0
  %5788 = vmatmul.mubr.f32.gmra.mxu0 %v5456
  %v5789 = vpop.f32.mrf.mxu0
  %v5790 = vadd.f32 0.0, %v5789
  %v5791 = vpop.f32.mrf.mxu0
  %v5792 = vadd.f32 0.0, %v5791
  %5793 = vmatprep.mubr.f32.mxu0 0.0
  %5794 = vmatmul.mubr.f32.gmra.mxu0 %v5459
  %v5795 = vpop.f32.mrf.mxu0
  %v5796 = vadd.f32 0.0, %v5795
  %v5797 = vpop.f32.mrf.mxu0
  %v5798 = vadd.f32 0.0, %v5797
  %5799 = vdwg.mxu0
  %5800 = vmatprep.subr.mxu0 0.0
  %5801 = vmatpush1.msra.mxu0 0.0
  %5802 = vmatprep.subr.mxu0 0.0
  %5803 = vmatpush1.msra.mxu0 0.0
  %5804 = vmatprep.subr.mxu0 0.0
  %5805 = vmatpush1.msra.mxu0 0.0
  %5806 = vmatprep.subr.mxu0 0.0
  %5807 = vmatpush1.msra.mxu0 0.0
  %5808 = vmatprep.subr.mxu0 0.0
  %5809 = vmatpush1.msra.mxu0 0.0
  %5810 = vmatprep.subr.mxu0 0.0
  %5811 = vmatpush1.msra.mxu0 0.0
  %5812 = vmatprep.subr.mxu0 0.0
  %5813 = vmatpush1.msra.mxu0 0.0
  %5814 = vmatprep.subr.mxu0 0.0
  %5815 = vmatpush1.msra.mxu0 0.0
  %5816 = vmatprep.subr.mxu0 %v5219
  %5817 = vmatpush1.msra.mxu0 %v5218
  %5818 = vmatprep.subr.mxu0 %v5194
  %5819 = vmatpush1.msra.mxu0 %v5193
  %5820 = vmatprep.subr.mxu0 %v5169
  %5821 = vmatpush1.msra.mxu0 %v5168
  %5822 = vmatprep.subr.mxu0 %v5144
  %5823 = vmatpush1.msra.mxu0 %v5143
  %5824 = vmatprep.subr.mxu0 %v5119
  %5825 = vmatpush1.msra.mxu0 %v5118
  %5826 = vmatprep.subr.mxu0 %v5094
  %5827 = vmatpush1.msra.mxu0 %v5093
  %5828 = vmatprep.subr.mxu0 %v5069
  %5829 = vmatpush1.msra.mxu0 %v5068
  %5830 = vmatprep.subr.mxu0 %v5044
  %5831 = vmatpush1.msra.mxu0 %v5043
  %5832 = vmatprep.subr.mxu0 0.0
  %5833 = vmatpush2.msra.mxu0 0.0
  %5834 = vmatprep.subr.mxu0 0.0
  %5835 = vmatpush2.msra.mxu0 0.0
  %5836 = vmatprep.subr.mxu0 0.0
  %5837 = vmatpush2.msra.mxu0 0.0
  %5838 = vmatprep.subr.mxu0 0.0
  %5839 = vmatpush2.msra.mxu0 0.0
  %5840 = vmatprep.subr.mxu0 0.0
  %5841 = vmatpush2.msra.mxu0 0.0
  %5842 = vmatprep.subr.mxu0 0.0
  %5843 = vmatpush2.msra.mxu0 0.0
  %5844 = vmatprep.subr.mxu0 0.0
  %5845 = vmatpush2.msra.mxu0 0.0
  %5846 = vmatprep.subr.mxu0 0.0
  %5847 = vmatpush2.msra.mxu0 0.0
  %5848 = vmatprep.subr.mxu0 0.0
  %5849 = vmatpush2.msra.mxu0 0.0
  %5850 = vmatprep.subr.mxu0 0.0
  %5851 = vmatpush2.msra.mxu0 0.0
  %5852 = vmatprep.subr.mxu0 0.0
  %5853 = vmatpush2.msra.mxu0 0.0
  %5854 = vmatprep.subr.mxu0 0.0
  %5855 = vmatpush2.msra.mxu0 0.0
  %5856 = vmatprep.subr.mxu0 0.0
  %5857 = vmatpush2.msra.mxu0 0.0
  %5858 = vmatprep.subr.mxu0 0.0
  %5859 = vmatpush2.msra.mxu0 0.0
  %5860 = vmatprep.subr.mxu0 0.0
  %5861 = vmatpush2.msra.mxu0 0.0
  %5862 = vmatprep.subr.mxu0 0.0
  %5863 = vmatpush2.msra.mxu0 0.0
  %5864 = vmatprep.mubr.f32.mxu0 0.0
  %5865 = vmatmul.mubr.f32.gmra.mxu0 %v5438
  %v5866 = vpop.f32.mrf.mxu0
  %v5867 = vadd.f32 0.0, %v5866
  %v5868 = vpop.f32.mrf.mxu0
  %v5869 = vadd.f32 0.0, %v5868
  %5870 = vmatprep.mubr.f32.mxu0 0.0
  %5871 = vmatmul.mubr.f32.gmra.mxu0 %v5441
  %v5872 = vpop.f32.mrf.mxu0
  %v5873 = vadd.f32 0.0, %v5872
  %v5874 = vpop.f32.mrf.mxu0
  %v5875 = vadd.f32 0.0, %v5874
  %5876 = vmatprep.mubr.f32.mxu0 0.0
  %5877 = vmatmul.mubr.f32.gmra.mxu0 %v5444
  %v5878 = vpop.f32.mrf.mxu0
  %v5879 = vadd.f32 0.0, %v5878
  %v5880 = vpop.f32.mrf.mxu0
  %v5881 = vadd.f32 0.0, %v5880
  %5882 = vmatprep.mubr.f32.mxu0 0.0
  %5883 = vmatmul.mubr.f32.gmra.mxu0 %v5447
  %v5884 = vpop.f32.mrf.mxu0
  %v5885 = vadd.f32 0.0, %v5884
  %v5886 = vpop.f32.mrf.mxu0
  %v5887 = vadd.f32 0.0, %v5886
  %5888 = vmatprep.mubr.f32.mxu0 0.0
  %5889 = vmatmul.mubr.f32.gmra.mxu0 %v5450
  %v5890 = vpop.f32.mrf.mxu0
  %v5891 = vadd.f32 0.0, %v5890
  %v5892 = vpop.f32.mrf.mxu0
  %v5893 = vadd.f32 0.0, %v5892
  %5894 = vmatprep.mubr.f32.mxu0 0.0
  %5895 = vmatmul.mubr.f32.gmra.mxu0 %v5453
  %v5896 = vpop.f32.mrf.mxu0
  %v5897 = vadd.f32 0.0, %v5896
  %v5898 = vpop.f32.mrf.mxu0
  %v5899 = vadd.f32 0.0, %v5898
  %5900 = vmatprep.mubr.f32.mxu0 0.0
  %5901 = vmatmul.mubr.f32.gmra.mxu0 %v5456
  %v5902 = vpop.f32.mrf.mxu0
  %v5903 = vadd.f32 0.0, %v5902
  %v5904 = vpop.f32.mrf.mxu0
  %v5905 = vadd.f32 0.0, %v5904
  %5906 = vmatprep.mubr.f32.mxu0 0.0
  %5907 = vmatmul.mubr.f32.gmra.mxu0 %v5459
  %v5908 = vpop.f32.mrf.mxu0
  %v5909 = vadd.f32 0.0, %v5908
  %v5910 = vpop.f32.mrf.mxu0
  %v5911 = vadd.f32 0.0, %v5910
  %5912 = vdwg.mxu0
  %5913 = vmatprep.subr.mxu0 0.0
  %5914 = vmatpush1.msra.mxu0 0.0
  %5915 = vmatprep.subr.mxu0 0.0
  %5916 = vmatpush1.msra.mxu0 0.0
  %5917 = vmatprep.subr.mxu0 0.0
  %5918 = vmatpush1.msra.mxu0 0.0
  %5919 = vmatprep.subr.mxu0 0.0
  %5920 = vmatpush1.msra.mxu0 0.0
  %5921 = vmatprep.subr.mxu0 0.0
  %5922 = vmatpush1.msra.mxu0 0.0
  %5923 = vmatprep.subr.mxu0 0.0
  %5924 = vmatpush1.msra.mxu0 0.0
  %5925 = vmatprep.subr.mxu0 0.0
  %5926 = vmatpush1.msra.mxu0 0.0
  %5927 = vmatprep.subr.mxu0 0.0
  %5928 = vmatpush1.msra.mxu0 0.0
  %5929 = vmatprep.subr.mxu0 %v5221
  %5930 = vmatpush1.msra.mxu0 %v5220
  %5931 = vmatprep.subr.mxu0 %v5196
  %5932 = vmatpush1.msra.mxu0 %v5195
  %5933 = vmatprep.subr.mxu0 %v5171
  %5934 = vmatpush1.msra.mxu0 %v5170
  %5935 = vmatprep.subr.mxu0 %v5146
  %5936 = vmatpush1.msra.mxu0 %v5145
  %5937 = vmatprep.subr.mxu0 %v5121
  %5938 = vmatpush1.msra.mxu0 %v5120
  %5939 = vmatprep.subr.mxu0 %v5096
  %5940 = vmatpush1.msra.mxu0 %v5095
  %5941 = vmatprep.subr.mxu0 %v5071
  %5942 = vmatpush1.msra.mxu0 %v5070
  %5943 = vmatprep.subr.mxu0 %v5046
  %5944 = vmatpush1.msra.mxu0 %v5045
  %5945 = vmatprep.subr.mxu0 0.0
  %5946 = vmatpush2.msra.mxu0 0.0
  %5947 = vmatprep.subr.mxu0 0.0
  %5948 = vmatpush2.msra.mxu0 0.0
  %5949 = vmatprep.subr.mxu0 0.0
  %5950 = vmatpush2.msra.mxu0 0.0
  %5951 = vmatprep.subr.mxu0 0.0
  %5952 = vmatpush2.msra.mxu0 0.0
  %5953 = vmatprep.subr.mxu0 0.0
  %5954 = vmatpush2.msra.mxu0 0.0
  %5955 = vmatprep.subr.mxu0 0.0
  %5956 = vmatpush2.msra.mxu0 0.0
  %5957 = vmatprep.subr.mxu0 0.0
  %5958 = vmatpush2.msra.mxu0 0.0
  %5959 = vmatprep.subr.mxu0 0.0
  %5960 = vmatpush2.msra.mxu0 0.0
  %5961 = vmatprep.subr.mxu0 0.0
  %5962 = vmatpush2.msra.mxu0 0.0
  %5963 = vmatprep.subr.mxu0 0.0
  %5964 = vmatpush2.msra.mxu0 0.0
  %5965 = vmatprep.subr.mxu0 0.0
  %5966 = vmatpush2.msra.mxu0 0.0
  %5967 = vmatprep.subr.mxu0 0.0
  %5968 = vmatpush2.msra.mxu0 0.0
  %5969 = vmatprep.subr.mxu0 0.0
  %5970 = vmatpush2.msra.mxu0 0.0
  %5971 = vmatprep.subr.mxu0 0.0
  %5972 = vmatpush2.msra.mxu0 0.0
  %5973 = vmatprep.subr.mxu0 0.0
  %5974 = vmatpush2.msra.mxu0 0.0
  %5975 = vmatprep.subr.mxu0 0.0
  %5976 = vmatpush2.msra.mxu0 0.0
  %5977 = vmatprep.mubr.f32.mxu0 0.0
  %5978 = vmatmul.mubr.f32.gmra.mxu0 %v5438
  %v5979 = vpop.f32.mrf.mxu0
  %v5980 = vadd.f32 0.0, %v5979
  %v5981 = vpop.f32.mrf.mxu0
  %v5982 = vadd.f32 0.0, %v5981
  %5983 = vmatprep.mubr.f32.mxu0 0.0
  %5984 = vmatmul.mubr.f32.gmra.mxu0 %v5441
  %v5985 = vpop.f32.mrf.mxu0
  %v5986 = vadd.f32 0.0, %v5985
  %v5987 = vpop.f32.mrf.mxu0
  %v5988 = vadd.f32 0.0, %v5987
  %5989 = vmatprep.mubr.f32.mxu0 0.0
  %5990 = vmatmul.mubr.f32.gmra.mxu0 %v5444
  %v5991 = vpop.f32.mrf.mxu0
  %v5992 = vadd.f32 0.0, %v5991
  %v5993 = vpop.f32.mrf.mxu0
  %v5994 = vadd.f32 0.0, %v5993
  %5995 = vmatprep.mubr.f32.mxu0 0.0
  %5996 = vmatmul.mubr.f32.gmra.mxu0 %v5447
  %v5997 = vpop.f32.mrf.mxu0
  %v5998 = vadd.f32 0.0, %v5997
  %v5999 = vpop.f32.mrf.mxu0
  %v6000 = vadd.f32 0.0, %v5999
  %6001 = vmatprep.mubr.f32.mxu0 0.0
  %6002 = vmatmul.mubr.f32.gmra.mxu0 %v5450
  %v6003 = vpop.f32.mrf.mxu0
  %v6004 = vadd.f32 0.0, %v6003
  %v6005 = vpop.f32.mrf.mxu0
  %v6006 = vadd.f32 0.0, %v6005
  %6007 = vmatprep.mubr.f32.mxu0 0.0
  %6008 = vmatmul.mubr.f32.gmra.mxu0 %v5453
  %v6009 = vpop.f32.mrf.mxu0
  %v6010 = vadd.f32 0.0, %v6009
  %v6011 = vpop.f32.mrf.mxu0
  %v6012 = vadd.f32 0.0, %v6011
  %6013 = vmatprep.mubr.f32.mxu0 0.0
  %6014 = vmatmul.mubr.f32.gmra.mxu0 %v5456
  %v6015 = vpop.f32.mrf.mxu0
  %v6016 = vadd.f32 0.0, %v6015
  %v6017 = vpop.f32.mrf.mxu0
  %v6018 = vadd.f32 0.0, %v6017
  %6019 = vmatprep.mubr.f32.mxu0 0.0
  %6020 = vmatmul.mubr.f32.gmra.mxu0 %v5459
  %v6021 = vpop.f32.mrf.mxu0
  %v6022 = vadd.f32 0.0, %v6021
  %v6023 = vpop.f32.mrf.mxu0
  %v6024 = vadd.f32 0.0, %v6023
  %6025 = vdwg.mxu0
  %6026 = vmatprep.subr.mxu0 0.0
  %6027 = vmatpush1.msra.mxu0 0.0
  %6028 = vmatprep.subr.mxu0 0.0
  %6029 = vmatpush1.msra.mxu0 0.0
  %6030 = vmatprep.subr.mxu0 0.0
  %6031 = vmatpush1.msra.mxu0 0.0
  %6032 = vmatprep.subr.mxu0 0.0
  %6033 = vmatpush1.msra.mxu0 0.0
  %6034 = vmatprep.subr.mxu0 0.0
  %6035 = vmatpush1.msra.mxu0 0.0
  %6036 = vmatprep.subr.mxu0 0.0
  %6037 = vmatpush1.msra.mxu0 0.0
  %6038 = vmatprep.subr.mxu0 0.0
  %6039 = vmatpush1.msra.mxu0 0.0
  %6040 = vmatprep.subr.mxu0 0.0
  %6041 = vmatpush1.msra.mxu0 0.0
  %6042 = vmatprep.subr.mxu0 %v5223
  %6043 = vmatpush1.msra.mxu0 %v5222
  %6044 = vmatprep.subr.mxu0 %v5198
  %6045 = vmatpush1.msra.mxu0 %v5197
  %6046 = vmatprep.subr.mxu0 %v5173
  %6047 = vmatpush1.msra.mxu0 %v5172
  %6048 = vmatprep.subr.mxu0 %v5148
  %6049 = vmatpush1.msra.mxu0 %v5147
  %6050 = vmatprep.subr.mxu0 %v5123
  %6051 = vmatpush1.msra.mxu0 %v5122
  %6052 = vmatprep.subr.mxu0 %v5098
  %6053 = vmatpush1.msra.mxu0 %v5097
  %6054 = vmatprep.subr.mxu0 %v5073
  %6055 = vmatpush1.msra.mxu0 %v5072
  %6056 = vmatprep.subr.mxu0 %v5048
  %6057 = vmatpush1.msra.mxu0 %v5047
  %6058 = vmatprep.subr.mxu0 0.0
  %6059 = vmatpush2.msra.mxu0 0.0
  %6060 = vmatprep.subr.mxu0 0.0
  %6061 = vmatpush2.msra.mxu0 0.0
  %6062 = vmatprep.subr.mxu0 0.0
  %6063 = vmatpush2.msra.mxu0 0.0
  %6064 = vmatprep.subr.mxu0 0.0
  %6065 = vmatpush2.msra.mxu0 0.0
  %6066 = vmatprep.subr.mxu0 0.0
  %6067 = vmatpush2.msra.mxu0 0.0
  %6068 = vmatprep.subr.mxu0 0.0
  %6069 = vmatpush2.msra.mxu0 0.0
  %6070 = vmatprep.subr.mxu0 0.0
  %6071 = vmatpush2.msra.mxu0 0.0
  %6072 = vmatprep.subr.mxu0 0.0
  %6073 = vmatpush2.msra.mxu0 0.0
  %6074 = vmatprep.subr.mxu0 0.0
  %6075 = vmatpush2.msra.mxu0 0.0
  %6076 = vmatprep.subr.mxu0 0.0
  %6077 = vmatpush2.msra.mxu0 0.0
  %6078 = vmatprep.subr.mxu0 0.0
  %6079 = vmatpush2.msra.mxu0 0.0
  %6080 = vmatprep.subr.mxu0 0.0
  %6081 = vmatpush2.msra.mxu0 0.0
  %6082 = vmatprep.subr.mxu0 0.0
  %6083 = vmatpush2.msra.mxu0 0.0
  %6084 = vmatprep.subr.mxu0 0.0
  %6085 = vmatpush2.msra.mxu0 0.0
  %6086 = vmatprep.subr.mxu0 0.0
  %6087 = vmatpush2.msra.mxu0 0.0
  %6088 = vmatprep.subr.mxu0 0.0
  %6089 = vmatpush2.msra.mxu0 0.0
  %6090 = vmatprep.mubr.f32.mxu0 0.0
  %6091 = vmatmul.mubr.f32.gmra.mxu0 %v5438
  %v6092 = vpop.f32.mrf.mxu0
  %v6093 = vadd.f32 0.0, %v6092
  %v6094 = vpop.f32.mrf.mxu0
  %v6095 = vadd.f32 0.0, %v6094
  %6096 = vmatprep.mubr.f32.mxu0 0.0
  %6097 = vmatmul.mubr.f32.gmra.mxu0 %v5441
  %v6098 = vpop.f32.mrf.mxu0
  %v6099 = vadd.f32 0.0, %v6098
  %v6100 = vpop.f32.mrf.mxu0
  %v6101 = vadd.f32 0.0, %v6100
  %6102 = vmatprep.mubr.f32.mxu0 0.0
  %6103 = vmatmul.mubr.f32.gmra.mxu0 %v5444
  %v6104 = vpop.f32.mrf.mxu0
  %v6105 = vadd.f32 0.0, %v6104
  %v6106 = vpop.f32.mrf.mxu0
  %v6107 = vadd.f32 0.0, %v6106
  %6108 = vmatprep.mubr.f32.mxu0 0.0
  %6109 = vmatmul.mubr.f32.gmra.mxu0 %v5447
  %v6110 = vpop.f32.mrf.mxu0
  %v6111 = vadd.f32 0.0, %v6110
  %v6112 = vpop.f32.mrf.mxu0
  %v6113 = vadd.f32 0.0, %v6112
  %6114 = vmatprep.mubr.f32.mxu0 0.0
  %6115 = vmatmul.mubr.f32.gmra.mxu0 %v5450
  %v6116 = vpop.f32.mrf.mxu0
  %v6117 = vadd.f32 0.0, %v6116
  %v6118 = vpop.f32.mrf.mxu0
  %v6119 = vadd.f32 0.0, %v6118
  %6120 = vmatprep.mubr.f32.mxu0 0.0
  %6121 = vmatmul.mubr.f32.gmra.mxu0 %v5453
  %v6122 = vpop.f32.mrf.mxu0
  %v6123 = vadd.f32 0.0, %v6122
  %v6124 = vpop.f32.mrf.mxu0
  %v6125 = vadd.f32 0.0, %v6124
  %6126 = vmatprep.mubr.f32.mxu0 0.0
  %6127 = vmatmul.mubr.f32.gmra.mxu0 %v5456
  %v6128 = vpop.f32.mrf.mxu0
  %v6129 = vadd.f32 0.0, %v6128
  %v6130 = vpop.f32.mrf.mxu0
  %v6131 = vadd.f32 0.0, %v6130
  %6132 = vmatprep.mubr.f32.mxu0 0.0
  %6133 = vmatmul.mubr.f32.gmra.mxu0 %v5459
  %v6134 = vpop.f32.mrf.mxu0
  %v6135 = vadd.f32 0.0, %v6134
  %v6136 = vpop.f32.mrf.mxu0
  %v6137 = vadd.f32 0.0, %v6136
  %6138 = vdwg.mxu0
  %6139 = vmatprep.subr.mxu0 0.0
  %6140 = vmatpush1.msra.mxu0 0.0
  %6141 = vmatprep.subr.mxu0 0.0
  %6142 = vmatpush1.msra.mxu0 0.0
  %6143 = vmatprep.subr.mxu0 0.0
  %6144 = vmatpush1.msra.mxu0 0.0
  %6145 = vmatprep.subr.mxu0 0.0
  %6146 = vmatpush1.msra.mxu0 0.0
  %6147 = vmatprep.subr.mxu0 0.0
  %6148 = vmatpush1.msra.mxu0 0.0
  %6149 = vmatprep.subr.mxu0 0.0
  %6150 = vmatpush1.msra.mxu0 0.0
  %6151 = vmatprep.subr.mxu0 0.0
  %6152 = vmatpush1.msra.mxu0 0.0
  %6153 = vmatprep.subr.mxu0 0.0
  %6154 = vmatpush1.msra.mxu0 0.0
  %6155 = vmatprep.subr.mxu0 %v5225
  %6156 = vmatpush1.msra.mxu0 %v5224
  %6157 = vmatprep.subr.mxu0 %v5200
  %6158 = vmatpush1.msra.mxu0 %v5199
  %6159 = vmatprep.subr.mxu0 %v5175
  %6160 = vmatpush1.msra.mxu0 %v5174
  %6161 = vmatprep.subr.mxu0 %v5150
  %6162 = vmatpush1.msra.mxu0 %v5149
  %6163 = vmatprep.subr.mxu0 %v5125
  %6164 = vmatpush1.msra.mxu0 %v5124
  %6165 = vmatprep.subr.mxu0 %v5100
  %6166 = vmatpush1.msra.mxu0 %v5099
  %6167 = vmatprep.subr.mxu0 %v5075
  %6168 = vmatpush1.msra.mxu0 %v5074
  %6169 = vmatprep.subr.mxu0 %v5050
  %6170 = vmatpush1.msra.mxu0 %v5049
  %6171 = vmatprep.subr.mxu0 0.0
  %6172 = vmatpush2.msra.mxu0 0.0
  %6173 = vmatprep.subr.mxu0 0.0
  %6174 = vmatpush2.msra.mxu0 0.0
  %6175 = vmatprep.subr.mxu0 0.0
  %6176 = vmatpush2.msra.mxu0 0.0
  %6177 = vmatprep.subr.mxu0 0.0
  %6178 = vmatpush2.msra.mxu0 0.0
  %6179 = vmatprep.subr.mxu0 0.0
  %6180 = vmatpush2.msra.mxu0 0.0
  %6181 = vmatprep.subr.mxu0 0.0
  %6182 = vmatpush2.msra.mxu0 0.0
  %6183 = vmatprep.subr.mxu0 0.0
  %6184 = vmatpush2.msra.mxu0 0.0
  %6185 = vmatprep.subr.mxu0 0.0
  %6186 = vmatpush2.msra.mxu0 0.0
  %6187 = vmatprep.subr.mxu0 0.0
  %6188 = vmatpush2.msra.mxu0 0.0
  %6189 = vmatprep.subr.mxu0 0.0
  %6190 = vmatpush2.msra.mxu0 0.0
  %6191 = vmatprep.subr.mxu0 0.0
  %6192 = vmatpush2.msra.mxu0 0.0
  %6193 = vmatprep.subr.mxu0 0.0
  %6194 = vmatpush2.msra.mxu0 0.0
  %6195 = vmatprep.subr.mxu0 0.0
  %6196 = vmatpush2.msra.mxu0 0.0
  %6197 = vmatprep.subr.mxu0 0.0
  %6198 = vmatpush2.msra.mxu0 0.0
  %6199 = vmatprep.subr.mxu0 0.0
  %6200 = vmatpush2.msra.mxu0 0.0
  %6201 = vmatprep.subr.mxu0 0.0
  %6202 = vmatpush2.msra.mxu0 0.0
  %6203 = vmatprep.mubr.f32.mxu0 0.0
  %6204 = vmatmul.mubr.f32.gmra.mxu0 %v5438
  %v6205 = vpop.f32.mrf.mxu0
  %v6206 = vadd.f32 0.0, %v6205
  %v6207 = vpop.f32.mrf.mxu0
  %v6208 = vadd.f32 0.0, %v6207
  %6209 = vmatprep.mubr.f32.mxu0 0.0
  %6210 = vmatmul.mubr.f32.gmra.mxu0 %v5441
  %v6211 = vpop.f32.mrf.mxu0
  %v6212 = vadd.f32 0.0, %v6211
  %v6213 = vpop.f32.mrf.mxu0
  %v6214 = vadd.f32 0.0, %v6213
  %6215 = vmatprep.mubr.f32.mxu0 0.0
  %6216 = vmatmul.mubr.f32.gmra.mxu0 %v5444
  %v6217 = vpop.f32.mrf.mxu0
  %v6218 = vadd.f32 0.0, %v6217
  %v6219 = vpop.f32.mrf.mxu0
  %v6220 = vadd.f32 0.0, %v6219
  %6221 = vmatprep.mubr.f32.mxu0 0.0
  %6222 = vmatmul.mubr.f32.gmra.mxu0 %v5447
  %v6223 = vpop.f32.mrf.mxu0
  %v6224 = vadd.f32 0.0, %v6223
  %v6225 = vpop.f32.mrf.mxu0
  %v6226 = vadd.f32 0.0, %v6225
  %6227 = vmatprep.mubr.f32.mxu0 0.0
  %6228 = vmatmul.mubr.f32.gmra.mxu0 %v5450
  %v6229 = vpop.f32.mrf.mxu0
  %v6230 = vadd.f32 0.0, %v6229
  %v6231 = vpop.f32.mrf.mxu0
  %v6232 = vadd.f32 0.0, %v6231
  %6233 = vmatprep.mubr.f32.mxu0 0.0
  %6234 = vmatmul.mubr.f32.gmra.mxu0 %v5453
  %v6235 = vpop.f32.mrf.mxu0
  %v6236 = vadd.f32 0.0, %v6235
  %v6237 = vpop.f32.mrf.mxu0
  %v6238 = vadd.f32 0.0, %v6237
  %6239 = vmatprep.mubr.f32.mxu0 0.0
  %6240 = vmatmul.mubr.f32.gmra.mxu0 %v5456
  %v6241 = vpop.f32.mrf.mxu0
  %v6242 = vadd.f32 0.0, %v6241
  %v6243 = vpop.f32.mrf.mxu0
  %v6244 = vadd.f32 0.0, %v6243
  %6245 = vmatprep.mubr.f32.mxu0 0.0
  %6246 = vmatmul.mubr.f32.gmra.mxu0 %v5459
  %v6247 = vpop.f32.mrf.mxu0
  %v6248 = vadd.f32 0.0, %v6247
  %v6249 = vpop.f32.mrf.mxu0
  %v6250 = vadd.f32 0.0, %v6249
  %6251 = vdwg.mxu0
  %6252 = vmatprep.subr.mxu0 0.0
  %6253 = vmatpush1.msra.mxu0 0.0
  %6254 = vmatprep.subr.mxu0 0.0
  %6255 = vmatpush1.msra.mxu0 0.0
  %6256 = vmatprep.subr.mxu0 0.0
  %6257 = vmatpush1.msra.mxu0 0.0
  %6258 = vmatprep.subr.mxu0 0.0
  %6259 = vmatpush1.msra.mxu0 0.0
  %6260 = vmatprep.subr.mxu0 0.0
  %6261 = vmatpush1.msra.mxu0 0.0
  %6262 = vmatprep.subr.mxu0 0.0
  %6263 = vmatpush1.msra.mxu0 0.0
  %6264 = vmatprep.subr.mxu0 0.0
  %6265 = vmatpush1.msra.mxu0 0.0
  %6266 = vmatprep.subr.mxu0 0.0
  %6267 = vmatpush1.msra.mxu0 0.0
  %6268 = vmatprep.subr.mxu0 %v5227
  %6269 = vmatpush1.msra.mxu0 %v5226
  %6270 = vmatprep.subr.mxu0 %v5202
  %6271 = vmatpush1.msra.mxu0 %v5201
  %6272 = vmatprep.subr.mxu0 %v5177
  %6273 = vmatpush1.msra.mxu0 %v5176
  %6274 = vmatprep.subr.mxu0 %v5152
  %6275 = vmatpush1.msra.mxu0 %v5151
  %6276 = vmatprep.subr.mxu0 %v5127
  %6277 = vmatpush1.msra.mxu0 %v5126
  %6278 = vmatprep.subr.mxu0 %v5102
  %6279 = vmatpush1.msra.mxu0 %v5101
  %6280 = vmatprep.subr.mxu0 %v5077
  %6281 = vmatpush1.msra.mxu0 %v5076
  %6282 = vmatprep.subr.mxu0 %v5052
  %6283 = vmatpush1.msra.mxu0 %v5051
  %6284 = vmatprep.subr.mxu0 0.0
  %6285 = vmatpush2.msra.mxu0 0.0
  %6286 = vmatprep.subr.mxu0 0.0
  %6287 = vmatpush2.msra.mxu0 0.0
  %6288 = vmatprep.subr.mxu0 0.0
  %6289 = vmatpush2.msra.mxu0 0.0
  %6290 = vmatprep.subr.mxu0 0.0
  %6291 = vmatpush2.msra.mxu0 0.0
  %6292 = vmatprep.subr.mxu0 0.0
  %6293 = vmatpush2.msra.mxu0 0.0
  %6294 = vmatprep.subr.mxu0 0.0
  %6295 = vmatpush2.msra.mxu0 0.0
  %6296 = vmatprep.subr.mxu0 0.0
  %6297 = vmatpush2.msra.mxu0 0.0
  %6298 = vmatprep.subr.mxu0 0.0
  %6299 = vmatpush2.msra.mxu0 0.0
  %6300 = vmatprep.subr.mxu0 0.0
  %6301 = vmatpush2.msra.mxu0 0.0
  %6302 = vmatprep.subr.mxu0 0.0
  %6303 = vmatpush2.msra.mxu0 0.0
  %6304 = vmatprep.subr.mxu0 0.0
  %6305 = vmatpush2.msra.mxu0 0.0
  %6306 = vmatprep.subr.mxu0 0.0
  %6307 = vmatpush2.msra.mxu0 0.0
  %6308 = vmatprep.subr.mxu0 0.0
  %6309 = vmatpush2.msra.mxu0 0.0
  %6310 = vmatprep.subr.mxu0 0.0
  %6311 = vmatpush2.msra.mxu0 0.0
  %6312 = vmatprep.subr.mxu0 0.0
  %6313 = vmatpush2.msra.mxu0 0.0
  %6314 = vmatprep.subr.mxu0 0.0
  %6315 = vmatpush2.msra.mxu0 0.0
  %6316 = vmatprep.mubr.f32.mxu0 0.0
  %6317 = vmatmul.mubr.f32.gmra.mxu0 %v5438
  %v6318 = vpop.f32.mrf.mxu0
  %v6319 = vadd.f32 0.0, %v6318
  %v6320 = vpop.f32.mrf.mxu0
  %v6321 = vadd.f32 0.0, %v6320
  %6322 = vmatprep.mubr.f32.mxu0 0.0
  %6323 = vmatmul.mubr.f32.gmra.mxu0 %v5441
  %v6324 = vpop.f32.mrf.mxu0
  %v6325 = vadd.f32 0.0, %v6324
  %v6326 = vpop.f32.mrf.mxu0
  %v6327 = vadd.f32 0.0, %v6326
  %6328 = vmatprep.mubr.f32.mxu0 0.0
  %6329 = vmatmul.mubr.f32.gmra.mxu0 %v5444
  %v6330 = vpop.f32.mrf.mxu0
  %v6331 = vadd.f32 0.0, %v6330
  %v6332 = vpop.f32.mrf.mxu0
  %v6333 = vadd.f32 0.0, %v6332
  %6334 = vmatprep.mubr.f32.mxu0 0.0
  %6335 = vmatmul.mubr.f32.gmra.mxu0 %v5447
  %v6336 = vpop.f32.mrf.mxu0
  %v6337 = vadd.f32 0.0, %v6336
  %v6338 = vpop.f32.mrf.mxu0
  %v6339 = vadd.f32 0.0, %v6338
  %6340 = vmatprep.mubr.f32.mxu0 0.0
  %6341 = vmatmul.mubr.f32.gmra.mxu0 %v5450
  %v6342 = vpop.f32.mrf.mxu0
  %v6343 = vadd.f32 0.0, %v6342
  %v6344 = vpop.f32.mrf.mxu0
  %v6345 = vadd.f32 0.0, %v6344
  %6346 = vmatprep.mubr.f32.mxu0 0.0
  %6347 = vmatmul.mubr.f32.gmra.mxu0 %v5453
  %v6348 = vpop.f32.mrf.mxu0
  %v6349 = vadd.f32 0.0, %v6348
  %v6350 = vpop.f32.mrf.mxu0
  %v6351 = vadd.f32 0.0, %v6350
  %6352 = vmatprep.mubr.f32.mxu0 0.0
  %6353 = vmatmul.mubr.f32.gmra.mxu0 %v5456
  %v6354 = vpop.f32.mrf.mxu0
  %v6355 = vadd.f32 0.0, %v6354
  %v6356 = vpop.f32.mrf.mxu0
  %v6357 = vadd.f32 0.0, %v6356
  %6358 = vmatprep.mubr.f32.mxu0 0.0
  %6359 = vmatmul.mubr.f32.gmra.mxu0 %v5459
  %v6360 = vpop.f32.mrf.mxu0
  %v6361 = vadd.f32 0.0, %v6360
  %v6362 = vpop.f32.mrf.mxu0
  %v6363 = vadd.f32 0.0, %v6362
  %6364 = vdwg.mxu0
  %6365 = vmatprep.subr.mxu0 0.0
  %6366 = vmatpush1.msra.mxu0 0.0
  %6367 = vmatprep.subr.mxu0 0.0
  %6368 = vmatpush1.msra.mxu0 0.0
  %6369 = vmatprep.subr.mxu0 0.0
  %6370 = vmatpush1.msra.mxu0 0.0
  %6371 = vmatprep.subr.mxu0 0.0
  %6372 = vmatpush1.msra.mxu0 0.0
  %6373 = vmatprep.subr.mxu0 0.0
  %6374 = vmatpush1.msra.mxu0 0.0
  %6375 = vmatprep.subr.mxu0 0.0
  %6376 = vmatpush1.msra.mxu0 0.0
  %6377 = vmatprep.subr.mxu0 0.0
  %6378 = vmatpush1.msra.mxu0 0.0
  %6379 = vmatprep.subr.mxu0 0.0
  %6380 = vmatpush1.msra.mxu0 0.0
  %6381 = vmatprep.subr.mxu0 %v5229
  %6382 = vmatpush1.msra.mxu0 %v5228
  %6383 = vmatprep.subr.mxu0 %v5204
  %6384 = vmatpush1.msra.mxu0 %v5203
  %6385 = vmatprep.subr.mxu0 %v5179
  %6386 = vmatpush1.msra.mxu0 %v5178
  %6387 = vmatprep.subr.mxu0 %v5154
  %6388 = vmatpush1.msra.mxu0 %v5153
  %6389 = vmatprep.subr.mxu0 %v5129
  %6390 = vmatpush1.msra.mxu0 %v5128
  %6391 = vmatprep.subr.mxu0 %v5104
  %6392 = vmatpush1.msra.mxu0 %v5103
  %6393 = vmatprep.subr.mxu0 %v5079
  %6394 = vmatpush1.msra.mxu0 %v5078
  %6395 = vmatprep.subr.mxu0 %v5054
  %6396 = vmatpush1.msra.mxu0 %v5053
  %6397 = vmatprep.subr.mxu0 0.0
  %6398 = vmatpush2.msra.mxu0 0.0
  %6399 = vmatprep.subr.mxu0 0.0
  %6400 = vmatpush2.msra.mxu0 0.0
  %6401 = vmatprep.subr.mxu0 0.0
  %6402 = vmatpush2.msra.mxu0 0.0
  %6403 = vmatprep.subr.mxu0 0.0
  %6404 = vmatpush2.msra.mxu0 0.0
  %6405 = vmatprep.subr.mxu0 0.0
  %6406 = vmatpush2.msra.mxu0 0.0
  %6407 = vmatprep.subr.mxu0 0.0
  %6408 = vmatpush2.msra.mxu0 0.0
  %6409 = vmatprep.subr.mxu0 0.0
  %6410 = vmatpush2.msra.mxu0 0.0
  %6411 = vmatprep.subr.mxu0 0.0
  %6412 = vmatpush2.msra.mxu0 0.0
  %6413 = vmatprep.subr.mxu0 0.0
  %6414 = vmatpush2.msra.mxu0 0.0
  %6415 = vmatprep.subr.mxu0 0.0
  %6416 = vmatpush2.msra.mxu0 0.0
  %6417 = vmatprep.subr.mxu0 0.0
  %6418 = vmatpush2.msra.mxu0 0.0
  %6419 = vmatprep.subr.mxu0 0.0
  %6420 = vmatpush2.msra.mxu0 0.0
  %6421 = vmatprep.subr.mxu0 0.0
  %6422 = vmatpush2.msra.mxu0 0.0
  %6423 = vmatprep.subr.mxu0 0.0
  %6424 = vmatpush2.msra.mxu0 0.0
  %6425 = vmatprep.subr.mxu0 0.0
  %6426 = vmatpush2.msra.mxu0 0.0
  %6427 = vmatprep.subr.mxu0 0.0
  %6428 = vmatpush2.msra.mxu0 0.0
  %6429 = vmatprep.mubr.f32.mxu0 0.0
  %6430 = vmatmul.mubr.f32.gmra.mxu0 %v5438
  %v6431 = vpop.f32.mrf.mxu0
  %v6432 = vadd.f32 0.0, %v6431
  %v6433 = vpop.f32.mrf.mxu0
  %v6434 = vadd.f32 0.0, %v6433
  %6435 = vmatprep.mubr.f32.mxu0 0.0
  %6436 = vmatmul.mubr.f32.gmra.mxu0 %v5441
  %v6437 = vpop.f32.mrf.mxu0
  %v6438 = vadd.f32 0.0, %v6437
  %v6439 = vpop.f32.mrf.mxu0
  %v6440 = vadd.f32 0.0, %v6439
  %6441 = vmatprep.mubr.f32.mxu0 0.0
  %6442 = vmatmul.mubr.f32.gmra.mxu0 %v5444
  %v6443 = vpop.f32.mrf.mxu0
  %v6444 = vadd.f32 0.0, %v6443
  %v6445 = vpop.f32.mrf.mxu0
  %v6446 = vadd.f32 0.0, %v6445
  %6447 = vmatprep.mubr.f32.mxu0 0.0
  %6448 = vmatmul.mubr.f32.gmra.mxu0 %v5447
  %v6449 = vpop.f32.mrf.mxu0
  %v6450 = vadd.f32 0.0, %v6449
  %v6451 = vpop.f32.mrf.mxu0
  %v6452 = vadd.f32 0.0, %v6451
  %6453 = vmatprep.mubr.f32.mxu0 0.0
  %6454 = vmatmul.mubr.f32.gmra.mxu0 %v5450
  %v6455 = vpop.f32.mrf.mxu0
  %v6456 = vadd.f32 0.0, %v6455
  %v6457 = vpop.f32.mrf.mxu0
  %v6458 = vadd.f32 0.0, %v6457
  %6459 = vmatprep.mubr.f32.mxu0 0.0
  %6460 = vmatmul.mubr.f32.gmra.mxu0 %v5453
  %v6461 = vpop.f32.mrf.mxu0
  %v6462 = vadd.f32 0.0, %v6461
  %v6463 = vpop.f32.mrf.mxu0
  %v6464 = vadd.f32 0.0, %v6463
  %6465 = vmatprep.mubr.f32.mxu0 0.0
  %6466 = vmatmul.mubr.f32.gmra.mxu0 %v5456
  %v6467 = vpop.f32.mrf.mxu0
  %v6468 = vadd.f32 0.0, %v6467
  %v6469 = vpop.f32.mrf.mxu0
  %v6470 = vadd.f32 0.0, %v6469
  %6471 = vmatprep.mubr.f32.mxu0 0.0
  %6472 = vmatmul.mubr.f32.gmra.mxu0 %v5459
  %v6473 = vpop.f32.mrf.mxu0
  %v6474 = vadd.f32 0.0, %v6473
  %v6475 = vpop.f32.mrf.mxu0
  %v6476 = vadd.f32 0.0, %v6475
  %6477 = vdwg.mxu0
  %6478 = vmatprep.subr.mxu0 0.0
  %6479 = vmatpush1.msra.mxu0 0.0
  %6480 = vmatprep.subr.mxu0 0.0
  %6481 = vmatpush1.msra.mxu0 0.0
  %6482 = vmatprep.subr.mxu0 0.0
  %6483 = vmatpush1.msra.mxu0 0.0
  %6484 = vmatprep.subr.mxu0 0.0
  %6485 = vmatpush1.msra.mxu0 0.0
  %6486 = vmatprep.subr.mxu0 0.0
  %6487 = vmatpush1.msra.mxu0 0.0
  %6488 = vmatprep.subr.mxu0 0.0
  %6489 = vmatpush1.msra.mxu0 0.0
  %6490 = vmatprep.subr.mxu0 0.0
  %6491 = vmatpush1.msra.mxu0 0.0
  %6492 = vmatprep.subr.mxu0 0.0
  %6493 = vmatpush1.msra.mxu0 0.0
  %6494 = vmatprep.subr.mxu0 %v5231
  %6495 = vmatpush1.msra.mxu0 %v5230
  %6496 = vmatprep.subr.mxu0 %v5206
  %6497 = vmatpush1.msra.mxu0 %v5205
  %6498 = vmatprep.subr.mxu0 %v5181
  %6499 = vmatpush1.msra.mxu0 %v5180
  %6500 = vmatprep.subr.mxu0 %v5156
  %6501 = vmatpush1.msra.mxu0 %v5155
  %6502 = vmatprep.subr.mxu0 %v5131
  %6503 = vmatpush1.msra.mxu0 %v5130
  %6504 = vmatprep.subr.mxu0 %v5106
  %6505 = vmatpush1.msra.mxu0 %v5105
  %6506 = vmatprep.subr.mxu0 %v5081
  %6507 = vmatpush1.msra.mxu0 %v5080
  %6508 = vmatprep.subr.mxu0 %v5056
  %6509 = vmatpush1.msra.mxu0 %v5055
  %6510 = vmatprep.subr.mxu0 0.0
  %6511 = vmatpush2.msra.mxu0 0.0
  %6512 = vmatprep.subr.mxu0 0.0
  %6513 = vmatpush2.msra.mxu0 0.0
  %6514 = vmatprep.subr.mxu0 0.0
  %6515 = vmatpush2.msra.mxu0 0.0
  %6516 = vmatprep.subr.mxu0 0.0
  %6517 = vmatpush2.msra.mxu0 0.0
  %6518 = vmatprep.subr.mxu0 0.0
  %6519 = vmatpush2.msra.mxu0 0.0
  %6520 = vmatprep.subr.mxu0 0.0
  %6521 = vmatpush2.msra.mxu0 0.0
  %6522 = vmatprep.subr.mxu0 0.0
  %6523 = vmatpush2.msra.mxu0 0.0
  %6524 = vmatprep.subr.mxu0 0.0
  %6525 = vmatpush2.msra.mxu0 0.0
  %6526 = vmatprep.subr.mxu0 0.0
  %6527 = vmatpush2.msra.mxu0 0.0
  %6528 = vmatprep.subr.mxu0 0.0
  %6529 = vmatpush2.msra.mxu0 0.0
  %6530 = vmatprep.subr.mxu0 0.0
  %6531 = vmatpush2.msra.mxu0 0.0
  %6532 = vmatprep.subr.mxu0 0.0
  %6533 = vmatpush2.msra.mxu0 0.0
  %6534 = vmatprep.subr.mxu0 0.0
  %6535 = vmatpush2.msra.mxu0 0.0
  %6536 = vmatprep.subr.mxu0 0.0
  %6537 = vmatpush2.msra.mxu0 0.0
  %6538 = vmatprep.subr.mxu0 0.0
  %6539 = vmatpush2.msra.mxu0 0.0
  %6540 = vmatprep.subr.mxu0 0.0
  %6541 = vmatpush2.msra.mxu0 0.0
  %6542 = vmatprep.mubr.f32.mxu0 0.0
  %6543 = vmatmul.mubr.f32.gmra.mxu0 %v5438
  %v6544 = vpop.f32.mrf.mxu0
  %v6545 = vadd.f32 0.0, %v6544
  %v6546 = vpop.f32.mrf.mxu0
  %v6547 = vadd.f32 0.0, %v6546
  %6548 = vmatprep.mubr.f32.mxu0 0.0
  %6549 = vmatmul.mubr.f32.gmra.mxu0 %v5441
  %v6550 = vpop.f32.mrf.mxu0
  %v6551 = vadd.f32 0.0, %v6550
  %v6552 = vpop.f32.mrf.mxu0
  %v6553 = vadd.f32 0.0, %v6552
  %6554 = vmatprep.mubr.f32.mxu0 0.0
  %6555 = vmatmul.mubr.f32.gmra.mxu0 %v5444
  %v6556 = vpop.f32.mrf.mxu0
  %v6557 = vadd.f32 0.0, %v6556
  %v6558 = vpop.f32.mrf.mxu0
  %v6559 = vadd.f32 0.0, %v6558
  %6560 = vmatprep.mubr.f32.mxu0 0.0
  %6561 = vmatmul.mubr.f32.gmra.mxu0 %v5447
  %v6562 = vpop.f32.mrf.mxu0
  %v6563 = vadd.f32 0.0, %v6562
  %v6564 = vpop.f32.mrf.mxu0
  %v6565 = vadd.f32 0.0, %v6564
  %6566 = vmatprep.mubr.f32.mxu0 0.0
  %6567 = vmatmul.mubr.f32.gmra.mxu0 %v5450
  %v6568 = vpop.f32.mrf.mxu0
  %v6569 = vadd.f32 0.0, %v6568
  %v6570 = vpop.f32.mrf.mxu0
  %v6571 = vadd.f32 0.0, %v6570
  %6572 = vmatprep.mubr.f32.mxu0 0.0
  %6573 = vmatmul.mubr.f32.gmra.mxu0 %v5453
  %v6574 = vpop.f32.mrf.mxu0
  %v6575 = vadd.f32 0.0, %v6574
  %v6576 = vpop.f32.mrf.mxu0
  %v6577 = vadd.f32 0.0, %v6576
  %6578 = vmatprep.mubr.f32.mxu0 0.0
  %6579 = vmatmul.mubr.f32.gmra.mxu0 %v5456
  %v6580 = vpop.f32.mrf.mxu0
  %v6581 = vadd.f32 0.0, %v6580
  %v6582 = vpop.f32.mrf.mxu0
  %v6583 = vadd.f32 0.0, %v6582
  %6584 = vmatprep.mubr.f32.mxu0 0.0
  %6585 = vmatmul.mubr.f32.gmra.mxu0 %v5459
  %v6586 = vpop.f32.mrf.mxu0
  %v6587 = vadd.f32 0.0, %v6586
  %v6588 = vpop.f32.mrf.mxu0
  %v6589 = vadd.f32 0.0, %v6588
  %6590 = vdwg.mxu0
  %6591 = vmatprep.subr.mxu0 0.0
  %6592 = vmatpush1.msra.mxu0 0.0
  %6593 = vmatprep.subr.mxu0 0.0
  %6594 = vmatpush1.msra.mxu0 0.0
  %6595 = vmatprep.subr.mxu0 0.0
  %6596 = vmatpush1.msra.mxu0 0.0
  %6597 = vmatprep.subr.mxu0 0.0
  %6598 = vmatpush1.msra.mxu0 0.0
  %6599 = vmatprep.subr.mxu0 0.0
  %6600 = vmatpush1.msra.mxu0 0.0
  %6601 = vmatprep.subr.mxu0 0.0
  %6602 = vmatpush1.msra.mxu0 0.0
  %6603 = vmatprep.subr.mxu0 0.0
  %6604 = vmatpush1.msra.mxu0 0.0
  %6605 = vmatprep.subr.mxu0 0.0
  %6606 = vmatpush1.msra.mxu0 0.0
  %6607 = vmatprep.subr.mxu0 %v5233
  %6608 = vmatpush1.msra.mxu0 %v5232
  %6609 = vmatprep.subr.mxu0 %v5208
  %6610 = vmatpush1.msra.mxu0 %v5207
  %6611 = vmatprep.subr.mxu0 %v5183
  %6612 = vmatpush1.msra.mxu0 %v5182
  %6613 = vmatprep.subr.mxu0 %v5158
  %6614 = vmatpush1.msra.mxu0 %v5157
  %6615 = vmatprep.subr.mxu0 %v5133
  %6616 = vmatpush1.msra.mxu0 %v5132
  %6617 = vmatprep.subr.mxu0 %v5108
  %6618 = vmatpush1.msra.mxu0 %v5107
  %6619 = vmatprep.subr.mxu0 %v5083
  %6620 = vmatpush1.msra.mxu0 %v5082
  %6621 = vmatprep.subr.mxu0 %v5058
  %6622 = vmatpush1.msra.mxu0 %v5057
  %6623 = vmatprep.subr.mxu0 0.0
  %6624 = vmatpush2.msra.mxu0 0.0
  %6625 = vmatprep.subr.mxu0 0.0
  %6626 = vmatpush2.msra.mxu0 0.0
  %6627 = vmatprep.subr.mxu0 0.0
  %6628 = vmatpush2.msra.mxu0 0.0
  %6629 = vmatprep.subr.mxu0 0.0
  %6630 = vmatpush2.msra.mxu0 0.0
  %6631 = vmatprep.subr.mxu0 0.0
  %6632 = vmatpush2.msra.mxu0 0.0
  %6633 = vmatprep.subr.mxu0 0.0
  %6634 = vmatpush2.msra.mxu0 0.0
  %6635 = vmatprep.subr.mxu0 0.0
  %6636 = vmatpush2.msra.mxu0 0.0
  %6637 = vmatprep.subr.mxu0 0.0
  %6638 = vmatpush2.msra.mxu0 0.0
  %6639 = vmatprep.subr.mxu0 0.0
  %6640 = vmatpush2.msra.mxu0 0.0
  %6641 = vmatprep.subr.mxu0 0.0
  %6642 = vmatpush2.msra.mxu0 0.0
  %6643 = vmatprep.subr.mxu0 0.0
  %6644 = vmatpush2.msra.mxu0 0.0
  %6645 = vmatprep.subr.mxu0 0.0
  %6646 = vmatpush2.msra.mxu0 0.0
  %6647 = vmatprep.subr.mxu0 0.0
  %6648 = vmatpush2.msra.mxu0 0.0
  %6649 = vmatprep.subr.mxu0 0.0
  %6650 = vmatpush2.msra.mxu0 0.0
  %6651 = vmatprep.subr.mxu0 0.0
  %6652 = vmatpush2.msra.mxu0 0.0
  %6653 = vmatprep.subr.mxu0 0.0
  %6654 = vmatpush2.msra.mxu0 0.0
  %6655 = vmatprep.mubr.f32.mxu0 0.0
  %6656 = vmatmul.mubr.f32.gmra.mxu0 %v5438
  %v6657 = vpop.f32.mrf.mxu0
  %v6658 = vadd.f32 0.0, %v6657
  %v6659 = vpop.f32.mrf.mxu0
  %v6660 = vadd.f32 0.0, %v6659
  %6661 = vmatprep.mubr.f32.mxu0 0.0
  %6662 = vmatmul.mubr.f32.gmra.mxu0 %v5441
  %v6663 = vpop.f32.mrf.mxu0
  %v6664 = vadd.f32 0.0, %v6663
  %v6665 = vpop.f32.mrf.mxu0
  %v6666 = vadd.f32 0.0, %v6665
  %6667 = vmatprep.mubr.f32.mxu0 0.0
  %6668 = vmatmul.mubr.f32.gmra.mxu0 %v5444
  %v6669 = vpop.f32.mrf.mxu0
  %v6670 = vadd.f32 0.0, %v6669
  %v6671 = vpop.f32.mrf.mxu0
  %v6672 = vadd.f32 0.0, %v6671
  %6673 = vmatprep.mubr.f32.mxu0 0.0
  %6674 = vmatmul.mubr.f32.gmra.mxu0 %v5447
  %v6675 = vpop.f32.mrf.mxu0
  %v6676 = vadd.f32 0.0, %v6675
  %v6677 = vpop.f32.mrf.mxu0
  %v6678 = vadd.f32 0.0, %v6677
  %6679 = vmatprep.mubr.f32.mxu0 0.0
  %6680 = vmatmul.mubr.f32.gmra.mxu0 %v5450
  %v6681 = vpop.f32.mrf.mxu0
  %v6682 = vadd.f32 0.0, %v6681
  %v6683 = vpop.f32.mrf.mxu0
  %v6684 = vadd.f32 0.0, %v6683
  %6685 = vmatprep.mubr.f32.mxu0 0.0
  %6686 = vmatmul.mubr.f32.gmra.mxu0 %v5453
  %v6687 = vpop.f32.mrf.mxu0
  %v6688 = vadd.f32 0.0, %v6687
  %v6689 = vpop.f32.mrf.mxu0
  %v6690 = vadd.f32 0.0, %v6689
  %6691 = vmatprep.mubr.f32.mxu0 0.0
  %6692 = vmatmul.mubr.f32.gmra.mxu0 %v5456
  %v6693 = vpop.f32.mrf.mxu0
  %v6694 = vadd.f32 0.0, %v6693
  %v6695 = vpop.f32.mrf.mxu0
  %v6696 = vadd.f32 0.0, %v6695
  %6697 = vmatprep.mubr.f32.mxu0 0.0
  %6698 = vmatmul.mubr.f32.gmra.mxu0 %v5459
  %v6699 = vpop.f32.mrf.mxu0
  %v6700 = vadd.f32 0.0, %v6699
  %v6701 = vpop.f32.mrf.mxu0
  %v6702 = vadd.f32 0.0, %v6701
  %6703 = vdwg.mxu0
  %6704 = vmatprep.subr.mxu0 0.0
  %6705 = vmatpush1.msra.mxu0 0.0
  %6706 = vmatprep.subr.mxu0 0.0
  %6707 = vmatpush1.msra.mxu0 0.0
  %6708 = vmatprep.subr.mxu0 0.0
  %6709 = vmatpush1.msra.mxu0 0.0
  %6710 = vmatprep.subr.mxu0 0.0
  %6711 = vmatpush1.msra.mxu0 0.0
  %6712 = vmatprep.subr.mxu0 0.0
  %6713 = vmatpush1.msra.mxu0 0.0
  %6714 = vmatprep.subr.mxu0 0.0
  %6715 = vmatpush1.msra.mxu0 0.0
  %6716 = vmatprep.subr.mxu0 0.0
  %6717 = vmatpush1.msra.mxu0 0.0
  %6718 = vmatprep.subr.mxu0 0.0
  %6719 = vmatpush1.msra.mxu0 0.0
  %6720 = vmatprep.subr.mxu0 %v5235
  %6721 = vmatpush1.msra.mxu0 %v5234
  %6722 = vmatprep.subr.mxu0 %v5210
  %6723 = vmatpush1.msra.mxu0 %v5209
  %6724 = vmatprep.subr.mxu0 %v5185
  %6725 = vmatpush1.msra.mxu0 %v5184
  %6726 = vmatprep.subr.mxu0 %v5160
  %6727 = vmatpush1.msra.mxu0 %v5159
  %6728 = vmatprep.subr.mxu0 %v5135
  %6729 = vmatpush1.msra.mxu0 %v5134
  %6730 = vmatprep.subr.mxu0 %v5110
  %6731 = vmatpush1.msra.mxu0 %v5109
  %6732 = vmatprep.subr.mxu0 %v5085
  %6733 = vmatpush1.msra.mxu0 %v5084
  %6734 = vmatprep.subr.mxu0 %v5060
  %6735 = vmatpush1.msra.mxu0 %v5059
  %6736 = vmatprep.subr.mxu0 0.0
  %6737 = vmatpush2.msra.mxu0 0.0
  %6738 = vmatprep.subr.mxu0 0.0
  %6739 = vmatpush2.msra.mxu0 0.0
  %6740 = vmatprep.subr.mxu0 0.0
  %6741 = vmatpush2.msra.mxu0 0.0
  %6742 = vmatprep.subr.mxu0 0.0
  %6743 = vmatpush2.msra.mxu0 0.0
  %6744 = vmatprep.subr.mxu0 0.0
  %6745 = vmatpush2.msra.mxu0 0.0
  %6746 = vmatprep.subr.mxu0 0.0
  %6747 = vmatpush2.msra.mxu0 0.0
  %6748 = vmatprep.subr.mxu0 0.0
  %6749 = vmatpush2.msra.mxu0 0.0
  %6750 = vmatprep.subr.mxu0 0.0
  %6751 = vmatpush2.msra.mxu0 0.0
  %6752 = vmatprep.subr.mxu0 0.0
  %6753 = vmatpush2.msra.mxu0 0.0
  %6754 = vmatprep.subr.mxu0 0.0
  %6755 = vmatpush2.msra.mxu0 0.0
  %6756 = vmatprep.subr.mxu0 0.0
  %6757 = vmatpush2.msra.mxu0 0.0
  %6758 = vmatprep.subr.mxu0 0.0
  %6759 = vmatpush2.msra.mxu0 0.0
  %6760 = vmatprep.subr.mxu0 0.0
  %6761 = vmatpush2.msra.mxu0 0.0
  %6762 = vmatprep.subr.mxu0 0.0
  %6763 = vmatpush2.msra.mxu0 0.0
  %6764 = vmatprep.subr.mxu0 0.0
  %6765 = vmatpush2.msra.mxu0 0.0
  %6766 = vmatprep.subr.mxu0 0.0
  %6767 = vmatpush2.msra.mxu0 0.0
  %6768 = vmatprep.mubr.f32.mxu0 0.0
  %6769 = vmatmul.mubr.f32.gmra.mxu0 %v5438
  %v6770 = vpop.f32.mrf.mxu0
  %v6771 = vadd.f32 0.0, %v6770
  %v6772 = vpop.f32.mrf.mxu0
  %v6773 = vadd.f32 0.0, %v6772
  %6774 = vmatprep.mubr.f32.mxu0 0.0
  %6775 = vmatmul.mubr.f32.gmra.mxu0 %v5441
  %v6776 = vpop.f32.mrf.mxu0
  %v6777 = vadd.f32 0.0, %v6776
  %v6778 = vpop.f32.mrf.mxu0
  %v6779 = vadd.f32 0.0, %v6778
  %6780 = vmatprep.mubr.f32.mxu0 0.0
  %6781 = vmatmul.mubr.f32.gmra.mxu0 %v5444
  %v6782 = vpop.f32.mrf.mxu0
  %v6783 = vadd.f32 0.0, %v6782
  %v6784 = vpop.f32.mrf.mxu0
  %v6785 = vadd.f32 0.0, %v6784
  %6786 = vmatprep.mubr.f32.mxu0 0.0
  %6787 = vmatmul.mubr.f32.gmra.mxu0 %v5447
  %v6788 = vpop.f32.mrf.mxu0
  %v6789 = vadd.f32 0.0, %v6788
  %v6790 = vpop.f32.mrf.mxu0
  %v6791 = vadd.f32 0.0, %v6790
  %6792 = vmatprep.mubr.f32.mxu0 0.0
  %6793 = vmatmul.mubr.f32.gmra.mxu0 %v5450
  %v6794 = vpop.f32.mrf.mxu0
  %v6795 = vadd.f32 0.0, %v6794
  %v6796 = vpop.f32.mrf.mxu0
  %v6797 = vadd.f32 0.0, %v6796
  %6798 = vmatprep.mubr.f32.mxu0 0.0
  %6799 = vmatmul.mubr.f32.gmra.mxu0 %v5453
  %v6800 = vpop.f32.mrf.mxu0
  %v6801 = vadd.f32 0.0, %v6800
  %v6802 = vpop.f32.mrf.mxu0
  %v6803 = vadd.f32 0.0, %v6802
  %6804 = vmatprep.mubr.f32.mxu0 0.0
  %6805 = vmatmul.mubr.f32.gmra.mxu0 %v5456
  %v6806 = vpop.f32.mrf.mxu0
  %v6807 = vadd.f32 0.0, %v6806
  %v6808 = vpop.f32.mrf.mxu0
  %v6809 = vadd.f32 0.0, %v6808
  %6810 = vmatprep.mubr.f32.mxu0 0.0
  %6811 = vmatmul.mubr.f32.gmra.mxu0 %v5459
  %v6812 = vpop.f32.mrf.mxu0
  %v6813 = vadd.f32 0.0, %v6812
  %v6814 = vpop.f32.mrf.mxu0
  %v6815 = vadd.f32 0.0, %v6814
  %6816 = vdwg.mxu0
  %6817 = vmatprep.subr.mxu0 0.0
  %6818 = vmatpush1.msra.mxu0 0.0
  %6819 = vmatprep.subr.mxu0 0.0
  %6820 = vmatpush1.msra.mxu0 0.0
  %6821 = vmatprep.subr.mxu0 0.0
  %6822 = vmatpush1.msra.mxu0 0.0
  %6823 = vmatprep.subr.mxu0 0.0
  %6824 = vmatpush1.msra.mxu0 0.0
  %6825 = vmatprep.subr.mxu0 0.0
  %6826 = vmatpush1.msra.mxu0 0.0
  %6827 = vmatprep.subr.mxu0 0.0
  %6828 = vmatpush1.msra.mxu0 0.0
  %6829 = vmatprep.subr.mxu0 0.0
  %6830 = vmatpush1.msra.mxu0 0.0
  %6831 = vmatprep.subr.mxu0 0.0
  %6832 = vmatpush1.msra.mxu0 0.0
  %6833 = vmatprep.subr.mxu0 0.0
  %6834 = vmatpush1.msra.mxu0 %v5236
  %6835 = vmatprep.subr.mxu0 0.0
  %6836 = vmatpush1.msra.mxu0 %v5211
  %6837 = vmatprep.subr.mxu0 0.0
  %6838 = vmatpush1.msra.mxu0 %v5186
  %6839 = vmatprep.subr.mxu0 0.0
  %6840 = vmatpush1.msra.mxu0 %v5161
  %6841 = vmatprep.subr.mxu0 0.0
  %6842 = vmatpush1.msra.mxu0 %v5136
  %6843 = vmatprep.subr.mxu0 0.0
  %6844 = vmatpush1.msra.mxu0 %v5111
  %6845 = vmatprep.subr.mxu0 0.0
  %6846 = vmatpush1.msra.mxu0 %v5086
  %6847 = vmatprep.subr.mxu0 0.0
  %6848 = vmatpush1.msra.mxu0 %v5061
  %6849 = vmatprep.subr.mxu0 0.0
  %6850 = vmatpush2.msra.mxu0 0.0
  %6851 = vmatprep.subr.mxu0 0.0
  %6852 = vmatpush2.msra.mxu0 0.0
  %6853 = vmatprep.subr.mxu0 0.0
  %6854 = vmatpush2.msra.mxu0 0.0
  %6855 = vmatprep.subr.mxu0 0.0
  %6856 = vmatpush2.msra.mxu0 0.0
  %6857 = vmatprep.subr.mxu0 0.0
  %6858 = vmatpush2.msra.mxu0 0.0
  %6859 = vmatprep.subr.mxu0 0.0
  %6860 = vmatpush2.msra.mxu0 0.0
  %6861 = vmatprep.subr.mxu0 0.0
  %6862 = vmatpush2.msra.mxu0 0.0
  %6863 = vmatprep.subr.mxu0 0.0
  %6864 = vmatpush2.msra.mxu0 0.0
  %6865 = vmatprep.subr.mxu0 0.0
  %6866 = vmatpush2.msra.mxu0 0.0
  %6867 = vmatprep.subr.mxu0 0.0
  %6868 = vmatpush2.msra.mxu0 0.0
  %6869 = vmatprep.subr.mxu0 0.0
  %6870 = vmatpush2.msra.mxu0 0.0
  %6871 = vmatprep.subr.mxu0 0.0
  %6872 = vmatpush2.msra.mxu0 0.0
  %6873 = vmatprep.subr.mxu0 0.0
  %6874 = vmatpush2.msra.mxu0 0.0
  %6875 = vmatprep.subr.mxu0 0.0
  %6876 = vmatpush2.msra.mxu0 0.0
  %6877 = vmatprep.subr.mxu0 0.0
  %6878 = vmatpush2.msra.mxu0 0.0
  %6879 = vmatprep.subr.mxu0 0.0
  %6880 = vmatpush2.msra.mxu0 0.0
  %6881 = vmatprep.mubr.f32.mxu0 0.0
  %6882 = vmatmul.mubr.f32.gmra.mxu0 %v5438
  %v6883 = vpop.f32.mrf.mxu0
  %v6884 = vadd.f32 0.0, %v6883
  %v6885 = vpop.f32.mrf.mxu0
  %6886 = vmatprep.mubr.f32.mxu0 0.0
  %6887 = vmatmul.mubr.f32.gmra.mxu0 %v5441
  %v6888 = vpop.f32.mrf.mxu0
  %v6889 = vadd.f32 0.0, %v6888
  %v6890 = vpop.f32.mrf.mxu0
  %6891 = vmatprep.mubr.f32.mxu0 0.0
  %6892 = vmatmul.mubr.f32.gmra.mxu0 %v5444
  %v6893 = vpop.f32.mrf.mxu0
  %v6894 = vadd.f32 0.0, %v6893
  %v6895 = vpop.f32.mrf.mxu0
  %6896 = vmatprep.mubr.f32.mxu0 0.0
  %6897 = vmatmul.mubr.f32.gmra.mxu0 %v5447
  %v6898 = vpop.f32.mrf.mxu0
  %v6899 = vadd.f32 0.0, %v6898
  %v6900 = vpop.f32.mrf.mxu0
  %6901 = vmatprep.mubr.f32.mxu0 0.0
  %6902 = vmatmul.mubr.f32.gmra.mxu0 %v5450
  %v6903 = vpop.f32.mrf.mxu0
  %v6904 = vadd.f32 0.0, %v6903
  %v6905 = vpop.f32.mrf.mxu0
  %6906 = vmatprep.mubr.f32.mxu0 0.0
  %6907 = vmatmul.mubr.f32.gmra.mxu0 %v5453
  %v6908 = vpop.f32.mrf.mxu0
  %v6909 = vadd.f32 0.0, %v6908
  %v6910 = vpop.f32.mrf.mxu0
  %6911 = vmatprep.mubr.f32.mxu0 0.0
  %6912 = vmatmul.mubr.f32.gmra.mxu0 %v5456
  %v6913 = vpop.f32.mrf.mxu0
  %v6914 = vadd.f32 0.0, %v6913
  %v6915 = vpop.f32.mrf.mxu0
  %6916 = vmatprep.mubr.f32.mxu0 0.0
  %6917 = vmatmul.mubr.f32.gmra.mxu0 %v5459
  %v6918 = vpop.f32.mrf.mxu0
  %v6919 = vadd.f32 0.0, %v6918
  %v6920 = vpop.f32.mrf.mxu0
  %6921 = vdwg.mxu0
  %v6922 = vadd.f32 %v2801, %v5528
  %v6923 = vadd.f32 %v2803, %v5530
  %v6924 = vadd.f32 %v2914, %v5641
  %v6925 = vadd.f32 %v2916, %v5643
  %v6926 = vadd.f32 %v3027, %v5754
  %v6927 = vadd.f32 %v3029, %v5756
  %v6928 = vadd.f32 %v3140, %v5867
  %v6929 = vadd.f32 %v3142, %v5869
  %v6930 = vadd.f32 %v3253, %v5980
  %v6931 = vadd.f32 %v3255, %v5982
  %v6932 = vadd.f32 %v3366, %v6093
  %v6933 = vadd.f32 %v3368, %v6095
  %v6934 = vadd.f32 %v3479, %v6206
  %v6935 = vadd.f32 %v3481, %v6208
  %v6936 = vadd.f32 %v3592, %v6319
  %v6937 = vadd.f32 %v3594, %v6321
  %v6938 = vadd.f32 %v3705, %v6432
  %v6939 = vadd.f32 %v3707, %v6434
  %v6940 = vadd.f32 %v3818, %v6545
  %v6941 = vadd.f32 %v3820, %v6547
  %v6942 = vadd.f32 %v3931, %v6658
  %v6943 = vadd.f32 %v3933, %v6660
  %v6944 = vadd.f32 %v4044, %v6771
  %v6945 = vadd.f32 %v4046, %v6773
  %v6946 = vadd.f32 %v4157, %v6884
  %v6947 = vadd.f32 %v2807, %v5534
  %v6948 = vadd.f32 %v2809, %v5536
  %v6949 = vadd.f32 %v2920, %v5647
  %v6950 = vadd.f32 %v2922, %v5649
  %v6951 = vadd.f32 %v3033, %v5760
  %v6952 = vadd.f32 %v3035, %v5762
  %v6953 = vadd.f32 %v3146, %v5873
  %v6954 = vadd.f32 %v3148, %v5875
  %v6955 = vadd.f32 %v3259, %v5986
  %v6956 = vadd.f32 %v3261, %v5988
  %v6957 = vadd.f32 %v3372, %v6099
  %v6958 = vadd.f32 %v3374, %v6101
  %v6959 = vadd.f32 %v3485, %v6212
  %v6960 = vadd.f32 %v3487, %v6214
  %v6961 = vadd.f32 %v3598, %v6325
  %v6962 = vadd.f32 %v3600, %v6327
  %v6963 = vadd.f32 %v3711, %v6438
  %v6964 = vadd.f32 %v3713, %v6440
  %v6965 = vadd.f32 %v3824, %v6551
  %v6966 = vadd.f32 %v3826, %v6553
  %v6967 = vadd.f32 %v3937, %v6664
  %v6968 = vadd.f32 %v3939, %v6666
  %v6969 = vadd.f32 %v4050, %v6777
  %v6970 = vadd.f32 %v4052, %v6779
  %v6971 = vadd.f32 %v4162, %v6889
  %v6972 = vadd.f32 %v2813, %v5540
  %v6973 = vadd.f32 %v2815, %v5542
  %v6974 = vadd.f32 %v2926, %v5653
  %v6975 = vadd.f32 %v2928, %v5655
  %v6976 = vadd.f32 %v3039, %v5766
  %v6977 = vadd.f32 %v3041, %v5768
  %v6978 = vadd.f32 %v3152, %v5879
  %v6979 = vadd.f32 %v3154, %v5881
  %v6980 = vadd.f32 %v3265, %v5992
  %v6981 = vadd.f32 %v3267, %v5994
  %v6982 = vadd.f32 %v3378, %v6105
  %v6983 = vadd.f32 %v3380, %v6107
  %v6984 = vadd.f32 %v3491, %v6218
  %v6985 = vadd.f32 %v3493, %v6220
  %v6986 = vadd.f32 %v3604, %v6331
  %v6987 = vadd.f32 %v3606, %v6333
  %v6988 = vadd.f32 %v3717, %v6444
  %v6989 = vadd.f32 %v3719, %v6446
  %v6990 = vadd.f32 %v3830, %v6557
  %v6991 = vadd.f32 %v3832, %v6559
  %v6992 = vadd.f32 %v3943, %v6670
  %v6993 = vadd.f32 %v3945, %v6672
  %v6994 = vadd.f32 %v4056, %v6783
  %v6995 = vadd.f32 %v4058, %v6785
  %v6996 = vadd.f32 %v4167, %v6894
  %v6997 = vadd.f32 %v2819, %v5546
  %v6998 = vadd.f32 %v2821, %v5548
  %v6999 = vadd.f32 %v2932, %v5659
  %v7000 = vadd.f32 %v2934, %v5661
  %v7001 = vadd.f32 %v3045, %v5772
  %v7002 = vadd.f32 %v3047, %v5774
  %v7003 = vadd.f32 %v3158, %v5885
  %v7004 = vadd.f32 %v3160, %v5887
  %v7005 = vadd.f32 %v3271, %v5998
  %v7006 = vadd.f32 %v3273, %v6000
  %v7007 = vadd.f32 %v3384, %v6111
  %v7008 = vadd.f32 %v3386, %v6113
  %v7009 = vadd.f32 %v3497, %v6224
  %v7010 = vadd.f32 %v3499, %v6226
  %v7011 = vadd.f32 %v3610, %v6337
  %v7012 = vadd.f32 %v3612, %v6339
  %v7013 = vadd.f32 %v3723, %v6450
  %v7014 = vadd.f32 %v3725, %v6452
  %v7015 = vadd.f32 %v3836, %v6563
  %v7016 = vadd.f32 %v3838, %v6565
  %v7017 = vadd.f32 %v3949, %v6676
  %v7018 = vadd.f32 %v3951, %v6678
  %v7019 = vadd.f32 %v4062, %v6789
  %v7020 = vadd.f32 %v4064, %v6791
  %v7021 = vadd.f32 %v4172, %v6899
  %v7022 = vadd.f32 %v2825, %v5552
  %v7023 = vadd.f32 %v2827, %v5554
  %v7024 = vadd.f32 %v2938, %v5665
  %v7025 = vadd.f32 %v2940, %v5667
  %v7026 = vadd.f32 %v3051, %v5778
  %v7027 = vadd.f32 %v3053, %v5780
  %v7028 = vadd.f32 %v3164, %v5891
  %v7029 = vadd.f32 %v3166, %v5893
  %v7030 = vadd.f32 %v3277, %v6004
  %v7031 = vadd.f32 %v3279, %v6006
  %v7032 = vadd.f32 %v3390, %v6117
  %v7033 = vadd.f32 %v3392, %v6119
  %v7034 = vadd.f32 %v3503, %v6230
  %v7035 = vadd.f32 %v3505, %v6232
  %v7036 = vadd.f32 %v3616, %v6343
  %v7037 = vadd.f32 %v3618, %v6345
  %v7038 = vadd.f32 %v3729, %v6456
  %v7039 = vadd.f32 %v3731, %v6458
  %v7040 = vadd.f32 %v3842, %v6569
  %v7041 = vadd.f32 %v3844, %v6571
  %v7042 = vadd.f32 %v3955, %v6682
  %v7043 = vadd.f32 %v3957, %v6684
  %v7044 = vadd.f32 %v4068, %v6795
  %v7045 = vadd.f32 %v4070, %v6797
  %v7046 = vadd.f32 %v4177, %v6904
  %v7047 = vadd.f32 %v2831, %v5558
  %v7048 = vadd.f32 %v2833, %v5560
  %v7049 = vadd.f32 %v2944, %v5671
  %v7050 = vadd.f32 %v2946, %v5673
  %v7051 = vadd.f32 %v3057, %v5784
  %v7052 = vadd.f32 %v3059, %v5786
  %v7053 = vadd.f32 %v3170, %v5897
  %v7054 = vadd.f32 %v3172, %v5899
  %v7055 = vadd.f32 %v3283, %v6010
  %v7056 = vadd.f32 %v3285, %v6012
  %v7057 = vadd.f32 %v3396, %v6123
  %v7058 = vadd.f32 %v3398, %v6125
  %v7059 = vadd.f32 %v3509, %v6236
  %v7060 = vadd.f32 %v3511, %v6238
  %v7061 = vadd.f32 %v3622, %v6349
  %v7062 = vadd.f32 %v3624, %v6351
  %v7063 = vadd.f32 %v3735, %v6462
  %v7064 = vadd.f32 %v3737, %v6464
  %v7065 = vadd.f32 %v3848, %v6575
  %v7066 = vadd.f32 %v3850, %v6577
  %v7067 = vadd.f32 %v3961, %v6688
  %v7068 = vadd.f32 %v3963, %v6690
  %v7069 = vadd.f32 %v4074, %v6801
  %v7070 = vadd.f32 %v4076, %v6803
  %v7071 = vadd.f32 %v4182, %v6909
  %v7072 = vadd.f32 %v2837, %v5564
  %v7073 = vadd.f32 %v2839, %v5566
  %v7074 = vadd.f32 %v2950, %v5677
  %v7075 = vadd.f32 %v2952, %v5679
  %v7076 = vadd.f32 %v3063, %v5790
  %v7077 = vadd.f32 %v3065, %v5792
  %v7078 = vadd.f32 %v3176, %v5903
  %v7079 = vadd.f32 %v3178, %v5905
  %v7080 = vadd.f32 %v3289, %v6016
  %v7081 = vadd.f32 %v3291, %v6018
  %v7082 = vadd.f32 %v3402, %v6129
  %v7083 = vadd.f32 %v3404, %v6131
  %v7084 = vadd.f32 %v3515, %v6242
  %v7085 = vadd.f32 %v3517, %v6244
  %v7086 = vadd.f32 %v3628, %v6355
  %v7087 = vadd.f32 %v3630, %v6357
  %v7088 = vadd.f32 %v3741, %v6468
  %v7089 = vadd.f32 %v3743, %v6470
  %v7090 = vadd.f32 %v3854, %v6581
  %v7091 = vadd.f32 %v3856, %v6583
  %v7092 = vadd.f32 %v3967, %v6694
  %v7093 = vadd.f32 %v3969, %v6696
  %v7094 = vadd.f32 %v4080, %v6807
  %v7095 = vadd.f32 %v4082, %v6809
  %v7096 = vadd.f32 %v4187, %v6914
  %v7097 = vadd.f32 %v2843, %v5570
  %v7098 = vadd.f32 %v2845, %v5572
  %v7099 = vadd.f32 %v2956, %v5683
  %v7100 = vadd.f32 %v2958, %v5685
  %v7101 = vadd.f32 %v3069, %v5796
  %v7102 = vadd.f32 %v3071, %v5798
  %v7103 = vadd.f32 %v3182, %v5909
  %v7104 = vadd.f32 %v3184, %v5911
  %v7105 = vadd.f32 %v3295, %v6022
  %v7106 = vadd.f32 %v3297, %v6024
  %v7107 = vadd.f32 %v3408, %v6135
  %v7108 = vadd.f32 %v3410, %v6137
  %v7109 = vadd.f32 %v3521, %v6248
  %v7110 = vadd.f32 %v3523, %v6250
  %v7111 = vadd.f32 %v3634, %v6361
  %v7112 = vadd.f32 %v3636, %v6363
  %v7113 = vadd.f32 %v3747, %v6474
  %v7114 = vadd.f32 %v3749, %v6476
  %v7115 = vadd.f32 %v3860, %v6587
  %v7116 = vadd.f32 %v3862, %v6589
  %v7117 = vadd.f32 %v3973, %v6700
  %v7118 = vadd.f32 %v3975, %v6702
  %v7119 = vadd.f32 %v4086, %v6813
  %v7120 = vadd.f32 %v4088, %v6815
  %v7121 = vadd.f32 %v4192, %v6919
  %7130 = vrot.lane.b32.xlu0 %v6946, 120
  %v7131 = vpop.permute.xlu0 %7130
  %7132 = vrot.lane.b32.xlu0 %v6971, 120
  %v7133 = vpop.permute.xlu0 %7132
  %7134 = vrot.lane.b32.xlu0 %v6996, 120
  %v7135 = vpop.permute.xlu0 %7134
  %7136 = vrot.lane.b32.xlu0 %v7021, 120
  %v7137 = vpop.permute.xlu0 %7136
  %7138 = vrot.lane.b32.xlu0 %v7046, 120
  %v7139 = vpop.permute.xlu0 %7138
  %7140 = vrot.lane.b32.xlu0 %v7071, 120
  %v7141 = vpop.permute.xlu0 %7140
  %7142 = vrot.lane.b32.xlu0 %v7096, 120
  %v7143 = vpop.permute.xlu0 %7142
  %7144 = vrot.lane.b32.xlu0 %v7121, 120
  %v7145 = vpop.permute.xlu0 %7144
  %7346 = vrot.lane.b32.xlu0 %v6922, 56
  %v7347 = vpop.permute.xlu0 %7346
  %7348 = vrot.lane.b32.xlu0 %v6923, 56
  %v7349 = vpop.permute.xlu0 %7348
  %7350 = vrot.lane.b32.xlu0 %v6924, 56
  %v7351 = vpop.permute.xlu0 %7350
  %7352 = vrot.lane.b32.xlu0 %v6925, 56
  %v7353 = vpop.permute.xlu0 %7352
  %7354 = vrot.lane.b32.xlu0 %v6926, 56
  %v7355 = vpop.permute.xlu0 %7354
  %7356 = vrot.lane.b32.xlu0 %v6927, 56
  %v7357 = vpop.permute.xlu0 %7356
  %7358 = vrot.lane.b32.xlu0 %v6928, 56
  %v7359 = vpop.permute.xlu0 %7358
  %7360 = vrot.lane.b32.xlu0 %v6929, 56
  %v7361 = vpop.permute.xlu0 %7360
  %7362 = vrot.lane.b32.xlu0 %v6930, 56
  %v7363 = vpop.permute.xlu0 %7362
  %7364 = vrot.lane.b32.xlu0 %v6931, 56
  %v7365 = vpop.permute.xlu0 %7364
  %7366 = vrot.lane.b32.xlu0 %v6932, 56
  %v7367 = vpop.permute.xlu0 %7366
  %7368 = vrot.lane.b32.xlu0 %v6933, 56
  %v7369 = vpop.permute.xlu0 %7368
  %7370 = vrot.lane.b32.xlu0 %v6934, 56
  %v7371 = vpop.permute.xlu0 %7370
  %7372 = vrot.lane.b32.xlu0 %v6935, 56
  %v7373 = vpop.permute.xlu0 %7372
  %7374 = vrot.lane.b32.xlu0 %v6936, 56
  %v7375 = vpop.permute.xlu0 %7374
  %7376 = vrot.lane.b32.xlu0 %v6937, 56
  %v7377 = vpop.permute.xlu0 %7376
  %7378 = vrot.lane.b32.xlu0 %v6938, 56
  %v7379 = vpop.permute.xlu0 %7378
  %7380 = vrot.lane.b32.xlu0 %v6939, 56
  %v7381 = vpop.permute.xlu0 %7380
  %7382 = vrot.lane.b32.xlu0 %v6940, 56
  %v7383 = vpop.permute.xlu0 %7382
  %7384 = vrot.lane.b32.xlu0 %v6941, 56
  %v7385 = vpop.permute.xlu0 %7384
  %7386 = vrot.lane.b32.xlu0 %v6942, 56
  %v7387 = vpop.permute.xlu0 %7386
  %7388 = vrot.lane.b32.xlu0 %v6943, 56
  %v7389 = vpop.permute.xlu0 %7388
  %7390 = vrot.lane.b32.xlu0 %v6944, 56
  %v7391 = vpop.permute.xlu0 %7390
  %7392 = vrot.lane.b32.xlu0 %v6945, 56
  %v7393 = vpop.permute.xlu0 %7392
  %7394 = vrot.lane.b32.xlu0 %v6946, 56
  %v7395 = vpop.permute.xlu0 %7394
  %7396 = vrot.lane.b32.xlu0 %v6947, 56
  %v7397 = vpop.permute.xlu0 %7396
  %7398 = vrot.lane.b32.xlu0 %v6948, 56
  %v7399 = vpop.permute.xlu0 %7398
  %7400 = vrot.lane.b32.xlu0 %v6949, 56
  %v7401 = vpop.permute.xlu0 %7400
  %7402 = vrot.lane.b32.xlu0 %v6950, 56
  %v7403 = vpop.permute.xlu0 %7402
  %7404 = vrot.lane.b32.xlu0 %v6951, 56
  %v7405 = vpop.permute.xlu0 %7404
  %7406 = vrot.lane.b32.xlu0 %v6952, 56
  %v7407 = vpop.permute.xlu0 %7406
  %7408 = vrot.lane.b32.xlu0 %v6953, 56
  %v7409 = vpop.permute.xlu0 %7408
  %7410 = vrot.lane.b32.xlu0 %v6954, 56
  %v7411 = vpop.permute.xlu0 %7410
  %7412 = vrot.lane.b32.xlu0 %v6955, 56
  %v7413 = vpop.permute.xlu0 %7412
  %7414 = vrot.lane.b32.xlu0 %v6956, 56
  %v7415 = vpop.permute.xlu0 %7414
  %7416 = vrot.lane.b32.xlu0 %v6957, 56
  %v7417 = vpop.permute.xlu0 %7416
  %7418 = vrot.lane.b32.xlu0 %v6958, 56
  %v7419 = vpop.permute.xlu0 %7418
  %7420 = vrot.lane.b32.xlu0 %v6959, 56
  %v7421 = vpop.permute.xlu0 %7420
  %7422 = vrot.lane.b32.xlu0 %v6960, 56
  %v7423 = vpop.permute.xlu0 %7422
  %7424 = vrot.lane.b32.xlu0 %v6961, 56
  %v7425 = vpop.permute.xlu0 %7424
  %7426 = vrot.lane.b32.xlu0 %v6962, 56
  %v7427 = vpop.permute.xlu0 %7426
  %7428 = vrot.lane.b32.xlu0 %v6963, 56
  %v7429 = vpop.permute.xlu0 %7428
  %7430 = vrot.lane.b32.xlu0 %v6964, 56
  %v7431 = vpop.permute.xlu0 %7430
  %7432 = vrot.lane.b32.xlu0 %v6965, 56
  %v7433 = vpop.permute.xlu0 %7432
  %7434 = vrot.lane.b32.xlu0 %v6966, 56
  %v7435 = vpop.permute.xlu0 %7434
  %7436 = vrot.lane.b32.xlu0 %v6967, 56
  %v7437 = vpop.permute.xlu0 %7436
  %7438 = vrot.lane.b32.xlu0 %v6968, 56
  %v7439 = vpop.permute.xlu0 %7438
  %7440 = vrot.lane.b32.xlu0 %v6969, 56
  %v7441 = vpop.permute.xlu0 %7440
  %7442 = vrot.lane.b32.xlu0 %v6970, 56
  %v7443 = vpop.permute.xlu0 %7442
  %7444 = vrot.lane.b32.xlu0 %v6971, 56
  %v7445 = vpop.permute.xlu0 %7444
  %7446 = vrot.lane.b32.xlu0 %v6972, 56
  %v7447 = vpop.permute.xlu0 %7446
  %7448 = vrot.lane.b32.xlu0 %v6973, 56
  %v7449 = vpop.permute.xlu0 %7448
  %7450 = vrot.lane.b32.xlu0 %v6974, 56
  %v7451 = vpop.permute.xlu0 %7450
  %7452 = vrot.lane.b32.xlu0 %v6975, 56
  %v7453 = vpop.permute.xlu0 %7452
  %7454 = vrot.lane.b32.xlu0 %v6976, 56
  %v7455 = vpop.permute.xlu0 %7454
  %7456 = vrot.lane.b32.xlu0 %v6977, 56
  %v7457 = vpop.permute.xlu0 %7456
  %7458 = vrot.lane.b32.xlu0 %v6978, 56
  %v7459 = vpop.permute.xlu0 %7458
  %7460 = vrot.lane.b32.xlu0 %v6979, 56
  %v7461 = vpop.permute.xlu0 %7460
  %7462 = vrot.lane.b32.xlu0 %v6980, 56
  %v7463 = vpop.permute.xlu0 %7462
  %7464 = vrot.lane.b32.xlu0 %v6981, 56
  %v7465 = vpop.permute.xlu0 %7464
  %7466 = vrot.lane.b32.xlu0 %v6982, 56
  %v7467 = vpop.permute.xlu0 %7466
  %7468 = vrot.lane.b32.xlu0 %v6983, 56
  %v7469 = vpop.permute.xlu0 %7468
  %7470 = vrot.lane.b32.xlu0 %v6984, 56
  %v7471 = vpop.permute.xlu0 %7470
  %7472 = vrot.lane.b32.xlu0 %v6985, 56
  %v7473 = vpop.permute.xlu0 %7472
  %7474 = vrot.lane.b32.xlu0 %v6986, 56
  %v7475 = vpop.permute.xlu0 %7474
  %7476 = vrot.lane.b32.xlu0 %v6987, 56
  %v7477 = vpop.permute.xlu0 %7476
  %7478 = vrot.lane.b32.xlu0 %v6988, 56
  %v7479 = vpop.permute.xlu0 %7478
  %7480 = vrot.lane.b32.xlu0 %v6989, 56
  %v7481 = vpop.permute.xlu0 %7480
  %7482 = vrot.lane.b32.xlu0 %v6990, 56
  %v7483 = vpop.permute.xlu0 %7482
  %7484 = vrot.lane.b32.xlu0 %v6991, 56
  %v7485 = vpop.permute.xlu0 %7484
  %7486 = vrot.lane.b32.xlu0 %v6992, 56
  %v7487 = vpop.permute.xlu0 %7486
  %7488 = vrot.lane.b32.xlu0 %v6993, 56
  %v7489 = vpop.permute.xlu0 %7488
  %7490 = vrot.lane.b32.xlu0 %v6994, 56
  %v7491 = vpop.permute.xlu0 %7490
  %7492 = vrot.lane.b32.xlu0 %v6995, 56
  %v7493 = vpop.permute.xlu0 %7492
  %7494 = vrot.lane.b32.xlu0 %v6996, 56
  %v7495 = vpop.permute.xlu0 %7494
  %7496 = vrot.lane.b32.xlu0 %v6997, 56
  %v7497 = vpop.permute.xlu0 %7496
  %7498 = vrot.lane.b32.xlu0 %v6998, 56
  %v7499 = vpop.permute.xlu0 %7498
  %7500 = vrot.lane.b32.xlu0 %v6999, 56
  %v7501 = vpop.permute.xlu0 %7500
  %7502 = vrot.lane.b32.xlu0 %v7000, 56
  %v7503 = vpop.permute.xlu0 %7502
  %7504 = vrot.lane.b32.xlu0 %v7001, 56
  %v7505 = vpop.permute.xlu0 %7504
  %7506 = vrot.lane.b32.xlu0 %v7002, 56
  %v7507 = vpop.permute.xlu0 %7506
  %7508 = vrot.lane.b32.xlu0 %v7003, 56
  %v7509 = vpop.permute.xlu0 %7508
  %7510 = vrot.lane.b32.xlu0 %v7004, 56
  %v7511 = vpop.permute.xlu0 %7510
  %7512 = vrot.lane.b32.xlu0 %v7005, 56
  %v7513 = vpop.permute.xlu0 %7512
  %7514 = vrot.lane.b32.xlu0 %v7006, 56
  %v7515 = vpop.permute.xlu0 %7514
  %7516 = vrot.lane.b32.xlu0 %v7007, 56
  %v7517 = vpop.permute.xlu0 %7516
  %7518 = vrot.lane.b32.xlu0 %v7008, 56
  %v7519 = vpop.permute.xlu0 %7518
  %7520 = vrot.lane.b32.xlu0 %v7009, 56
  %v7521 = vpop.permute.xlu0 %7520
  %7522 = vrot.lane.b32.xlu0 %v7010, 56
  %v7523 = vpop.permute.xlu0 %7522
  %7524 = vrot.lane.b32.xlu0 %v7011, 56
  %v7525 = vpop.permute.xlu0 %7524
  %7526 = vrot.lane.b32.xlu0 %v7012, 56
  %v7527 = vpop.permute.xlu0 %7526
  %7528 = vrot.lane.b32.xlu0 %v7013, 56
  %v7529 = vpop.permute.xlu0 %7528
  %7530 = vrot.lane.b32.xlu0 %v7014, 56
  %v7531 = vpop.permute.xlu0 %7530
  %7532 = vrot.lane.b32.xlu0 %v7015, 56
  %v7533 = vpop.permute.xlu0 %7532
  %7534 = vrot.lane.b32.xlu0 %v7016, 56
  %v7535 = vpop.permute.xlu0 %7534
  %7536 = vrot.lane.b32.xlu0 %v7017, 56
  %v7537 = vpop.permute.xlu0 %7536
  %7538 = vrot.lane.b32.xlu0 %v7018, 56
  %v7539 = vpop.permute.xlu0 %7538
  %7540 = vrot.lane.b32.xlu0 %v7019, 56
  %v7541 = vpop.permute.xlu0 %7540
  %7542 = vrot.lane.b32.xlu0 %v7020, 56
  %v7543 = vpop.permute.xlu0 %7542
  %7544 = vrot.lane.b32.xlu0 %v7021, 56
  %v7545 = vpop.permute.xlu0 %7544
  %7546 = vrot.lane.b32.xlu0 %v7022, 56
  %v7547 = vpop.permute.xlu0 %7546
  %7548 = vrot.lane.b32.xlu0 %v7023, 56
  %v7549 = vpop.permute.xlu0 %7548
  %7550 = vrot.lane.b32.xlu0 %v7024, 56
  %v7551 = vpop.permute.xlu0 %7550
  %7552 = vrot.lane.b32.xlu0 %v7025, 56
  %v7553 = vpop.permute.xlu0 %7552
  %7554 = vrot.lane.b32.xlu0 %v7026, 56
  %v7555 = vpop.permute.xlu0 %7554
  %7556 = vrot.lane.b32.xlu0 %v7027, 56
  %v7557 = vpop.permute.xlu0 %7556
  %7558 = vrot.lane.b32.xlu0 %v7028, 56
  %v7559 = vpop.permute.xlu0 %7558
  %7560 = vrot.lane.b32.xlu0 %v7029, 56
  %v7561 = vpop.permute.xlu0 %7560
  %7562 = vrot.lane.b32.xlu0 %v7030, 56
  %v7563 = vpop.permute.xlu0 %7562
  %7564 = vrot.lane.b32.xlu0 %v7031, 56
  %v7565 = vpop.permute.xlu0 %7564
  %7566 = vrot.lane.b32.xlu0 %v7032, 56
  %v7567 = vpop.permute.xlu0 %7566
  %7568 = vrot.lane.b32.xlu0 %v7033, 56
  %v7569 = vpop.permute.xlu0 %7568
  %7570 = vrot.lane.b32.xlu0 %v7034, 56
  %v7571 = vpop.permute.xlu0 %7570
  %7572 = vrot.lane.b32.xlu0 %v7035, 56
  %v7573 = vpop.permute.xlu0 %7572
  %7574 = vrot.lane.b32.xlu0 %v7036, 56
  %v7575 = vpop.permute.xlu0 %7574
  %7576 = vrot.lane.b32.xlu0 %v7037, 56
  %v7577 = vpop.permute.xlu0 %7576
  %7578 = vrot.lane.b32.xlu0 %v7038, 56
  %v7579 = vpop.permute.xlu0 %7578
  %7580 = vrot.lane.b32.xlu0 %v7039, 56
  %v7581 = vpop.permute.xlu0 %7580
  %7582 = vrot.lane.b32.xlu0 %v7040, 56
  %v7583 = vpop.permute.xlu0 %7582
  %7584 = vrot.lane.b32.xlu0 %v7041, 56
  %v7585 = vpop.permute.xlu0 %7584
  %7586 = vrot.lane.b32.xlu0 %v7042, 56
  %v7587 = vpop.permute.xlu0 %7586
  %7588 = vrot.lane.b32.xlu0 %v7043, 56
  %v7589 = vpop.permute.xlu0 %7588
  %7590 = vrot.lane.b32.xlu0 %v7044, 56
  %v7591 = vpop.permute.xlu0 %7590
  %7592 = vrot.lane.b32.xlu0 %v7045, 56
  %v7593 = vpop.permute.xlu0 %7592
  %7594 = vrot.lane.b32.xlu0 %v7046, 56
  %v7595 = vpop.permute.xlu0 %7594
  %7596 = vrot.lane.b32.xlu0 %v7047, 56
  %v7597 = vpop.permute.xlu0 %7596
  %7598 = vrot.lane.b32.xlu0 %v7048, 56
  %v7599 = vpop.permute.xlu0 %7598
  %7600 = vrot.lane.b32.xlu0 %v7049, 56
  %v7601 = vpop.permute.xlu0 %7600
  %7602 = vrot.lane.b32.xlu0 %v7050, 56
  %v7603 = vpop.permute.xlu0 %7602
  %7604 = vrot.lane.b32.xlu0 %v7051, 56
  %v7605 = vpop.permute.xlu0 %7604
  %7606 = vrot.lane.b32.xlu0 %v7052, 56
  %v7607 = vpop.permute.xlu0 %7606
  %7608 = vrot.lane.b32.xlu0 %v7053, 56
  %v7609 = vpop.permute.xlu0 %7608
  %7610 = vrot.lane.b32.xlu0 %v7054, 56
  %v7611 = vpop.permute.xlu0 %7610
  %7612 = vrot.lane.b32.xlu0 %v7055, 56
  %v7613 = vpop.permute.xlu0 %7612
  %7614 = vrot.lane.b32.xlu0 %v7056, 56
  %v7615 = vpop.permute.xlu0 %7614
  %7616 = vrot.lane.b32.xlu0 %v7057, 56
  %v7617 = vpop.permute.xlu0 %7616
  %7618 = vrot.lane.b32.xlu0 %v7058, 56
  %v7619 = vpop.permute.xlu0 %7618
  %7620 = vrot.lane.b32.xlu0 %v7059, 56
  %v7621 = vpop.permute.xlu0 %7620
  %7622 = vrot.lane.b32.xlu0 %v7060, 56
  %v7623 = vpop.permute.xlu0 %7622
  %7624 = vrot.lane.b32.xlu0 %v7061, 56
  %v7625 = vpop.permute.xlu0 %7624
  %7626 = vrot.lane.b32.xlu0 %v7062, 56
  %v7627 = vpop.permute.xlu0 %7626
  %7628 = vrot.lane.b32.xlu0 %v7063, 56
  %v7629 = vpop.permute.xlu0 %7628
  %7630 = vrot.lane.b32.xlu0 %v7064, 56
  %v7631 = vpop.permute.xlu0 %7630
  %7632 = vrot.lane.b32.xlu0 %v7065, 56
  %v7633 = vpop.permute.xlu0 %7632
  %7634 = vrot.lane.b32.xlu0 %v7066, 56
  %v7635 = vpop.permute.xlu0 %7634
  %7636 = vrot.lane.b32.xlu0 %v7067, 56
  %v7637 = vpop.permute.xlu0 %7636
  %7638 = vrot.lane.b32.xlu0 %v7068, 56
  %v7639 = vpop.permute.xlu0 %7638
  %7640 = vrot.lane.b32.xlu0 %v7069, 56
  %v7641 = vpop.permute.xlu0 %7640
  %7642 = vrot.lane.b32.xlu0 %v7070, 56
  %v7643 = vpop.permute.xlu0 %7642
  %7644 = vrot.lane.b32.xlu0 %v7071, 56
  %v7645 = vpop.permute.xlu0 %7644
  %7646 = vrot.lane.b32.xlu0 %v7072, 56
  %v7647 = vpop.permute.xlu0 %7646
  %7648 = vrot.lane.b32.xlu0 %v7073, 56
  %v7649 = vpop.permute.xlu0 %7648
  %7650 = vrot.lane.b32.xlu0 %v7074, 56
  %v7651 = vpop.permute.xlu0 %7650
  %7652 = vrot.lane.b32.xlu0 %v7075, 56
  %v7653 = vpop.permute.xlu0 %7652
  %7654 = vrot.lane.b32.xlu0 %v7076, 56
  %v7655 = vpop.permute.xlu0 %7654
  %7656 = vrot.lane.b32.xlu0 %v7077, 56
  %v7657 = vpop.permute.xlu0 %7656
  %7658 = vrot.lane.b32.xlu0 %v7078, 56
  %v7659 = vpop.permute.xlu0 %7658
  %7660 = vrot.lane.b32.xlu0 %v7079, 56
  %v7661 = vpop.permute.xlu0 %7660
  %7662 = vrot.lane.b32.xlu0 %v7080, 56
  %v7663 = vpop.permute.xlu0 %7662
  %7664 = vrot.lane.b32.xlu0 %v7081, 56
  %v7665 = vpop.permute.xlu0 %7664
  %7666 = vrot.lane.b32.xlu0 %v7082, 56
  %v7667 = vpop.permute.xlu0 %7666
  %7668 = vrot.lane.b32.xlu0 %v7083, 56
  %v7669 = vpop.permute.xlu0 %7668
  %7670 = vrot.lane.b32.xlu0 %v7084, 56
  %v7671 = vpop.permute.xlu0 %7670
  %7672 = vrot.lane.b32.xlu0 %v7085, 56
  %v7673 = vpop.permute.xlu0 %7672
  %7674 = vrot.lane.b32.xlu0 %v7086, 56
  %v7675 = vpop.permute.xlu0 %7674
  %7676 = vrot.lane.b32.xlu0 %v7087, 56
  %v7677 = vpop.permute.xlu0 %7676
  %7678 = vrot.lane.b32.xlu0 %v7088, 56
  %v7679 = vpop.permute.xlu0 %7678
  %7680 = vrot.lane.b32.xlu0 %v7089, 56
  %v7681 = vpop.permute.xlu0 %7680
  %7682 = vrot.lane.b32.xlu0 %v7090, 56
  %v7683 = vpop.permute.xlu0 %7682
  %7684 = vrot.lane.b32.xlu0 %v7091, 56
  %v7685 = vpop.permute.xlu0 %7684
  %7686 = vrot.lane.b32.xlu0 %v7092, 56
  %v7687 = vpop.permute.xlu0 %7686
  %7688 = vrot.lane.b32.xlu0 %v7093, 56
  %v7689 = vpop.permute.xlu0 %7688
  %7690 = vrot.lane.b32.xlu0 %v7094, 56
  %v7691 = vpop.permute.xlu0 %7690
  %7692 = vrot.lane.b32.xlu0 %v7095, 56
  %v7693 = vpop.permute.xlu0 %7692
  %7694 = vrot.lane.b32.xlu0 %v7096, 56
  %v7695 = vpop.permute.xlu0 %7694
  %7696 = vrot.lane.b32.xlu0 %v7097, 56
  %v7697 = vpop.permute.xlu0 %7696
  %7698 = vrot.lane.b32.xlu0 %v7098, 56
  %v7699 = vpop.permute.xlu0 %7698
  %7700 = vrot.lane.b32.xlu0 %v7099, 56
  %v7701 = vpop.permute.xlu0 %7700
  %7702 = vrot.lane.b32.xlu0 %v7100, 56
  %v7703 = vpop.permute.xlu0 %7702
  %7704 = vrot.lane.b32.xlu0 %v7101, 56
  %v7705 = vpop.permute.xlu0 %7704
  %7706 = vrot.lane.b32.xlu0 %v7102, 56
  %v7707 = vpop.permute.xlu0 %7706
  %7708 = vrot.lane.b32.xlu0 %v7103, 56
  %v7709 = vpop.permute.xlu0 %7708
  %7710 = vrot.lane.b32.xlu0 %v7104, 56
  %v7711 = vpop.permute.xlu0 %7710
  %7712 = vrot.lane.b32.xlu0 %v7105, 56
  %v7713 = vpop.permute.xlu0 %7712
  %7714 = vrot.lane.b32.xlu0 %v7106, 56
  %v7715 = vpop.permute.xlu0 %7714
  %7716 = vrot.lane.b32.xlu0 %v7107, 56
  %v7717 = vpop.permute.xlu0 %7716
  %7718 = vrot.lane.b32.xlu0 %v7108, 56
  %v7719 = vpop.permute.xlu0 %7718
  %7720 = vrot.lane.b32.xlu0 %v7109, 56
  %v7721 = vpop.permute.xlu0 %7720
  %7722 = vrot.lane.b32.xlu0 %v7110, 56
  %v7723 = vpop.permute.xlu0 %7722
  %7724 = vrot.lane.b32.xlu0 %v7111, 56
  %v7725 = vpop.permute.xlu0 %7724
  %7726 = vrot.lane.b32.xlu0 %v7112, 56
  %v7727 = vpop.permute.xlu0 %7726
  %7728 = vrot.lane.b32.xlu0 %v7113, 56
  %v7729 = vpop.permute.xlu0 %7728
  %7730 = vrot.lane.b32.xlu0 %v7114, 56
  %v7731 = vpop.permute.xlu0 %7730
  %7732 = vrot.lane.b32.xlu0 %v7115, 56
  %v7733 = vpop.permute.xlu0 %7732
  %7734 = vrot.lane.b32.xlu0 %v7116, 56
  %v7735 = vpop.permute.xlu0 %7734
  %7736 = vrot.lane.b32.xlu0 %v7117, 56
  %v7737 = vpop.permute.xlu0 %7736
  %7738 = vrot.lane.b32.xlu0 %v7118, 56
  %v7739 = vpop.permute.xlu0 %7738
  %7740 = vrot.lane.b32.xlu0 %v7119, 56
  %v7741 = vpop.permute.xlu0 %7740
  %7742 = vrot.lane.b32.xlu0 %v7120, 56
  %v7743 = vpop.permute.xlu0 %7742
  %7744 = vrot.lane.b32.xlu0 %v7121, 56
  %v7745 = vpop.permute.xlu0 %7744
  %vm7746 = vcmask 457728
  %v7747 = vsel %vm7746, %v7347, %v7349
  %v7748 = vsel %vm7746, %v7349, %v7351
  %v7749 = vsel %vm7746, %v7351, %v7353
  %v7750 = vsel %vm7746, %v7353, %v7355
  %v7751 = vsel %vm7746, %v7355, %v7357
  %v7752 = vsel %vm7746, %v7357, %v7359
  %v7753 = vsel %vm7746, %v7359, %v7361
  %v7754 = vsel %vm7746, %v7361, %v7363
  %v7755 = vsel %vm7746, %v7363, %v7365
  %v7756 = vsel %vm7746, %v7365, %v7367
  %v7757 = vsel %vm7746, %v7367, %v7369
  %v7758 = vsel %vm7746, %v7369, %v7371
  %v7759 = vsel %vm7746, %v7371, %v7373
  %v7760 = vsel %vm7746, %v7373, %v7375
  %v7761 = vsel %vm7746, %v7375, %v7377
  %v7762 = vsel %vm7746, %v7377, %v7379
  %v7763 = vsel %vm7746, %v7379, %v7381
  %v7764 = vsel %vm7746, %v7381, %v7383
  %v7765 = vsel %vm7746, %v7383, %v7385
  %v7766 = vsel %vm7746, %v7385, %v7387
  %v7767 = vsel %vm7746, %v7387, %v7389
  %v7768 = vsel %vm7746, %v7389, %v7391
  %v7769 = vsel %vm7746, %v7391, %v7393
  %v7770 = vsel %vm7746, %v7393, %v7395
  %v7771 = vsel %vm7746, %v7397, %v7399
  %v7772 = vsel %vm7746, %v7399, %v7401
  %v7773 = vsel %vm7746, %v7401, %v7403
  %v7774 = vsel %vm7746, %v7403, %v7405
  %v7775 = vsel %vm7746, %v7405, %v7407
  %v7776 = vsel %vm7746, %v7407, %v7409
  %v7777 = vsel %vm7746, %v7409, %v7411
  %v7778 = vsel %vm7746, %v7411, %v7413
  %v7779 = vsel %vm7746, %v7413, %v7415
  %v7780 = vsel %vm7746, %v7415, %v7417
  %v7781 = vsel %vm7746, %v7417, %v7419
  %v7782 = vsel %vm7746, %v7419, %v7421
  %v7783 = vsel %vm7746, %v7421, %v7423
  %v7784 = vsel %vm7746, %v7423, %v7425
  %v7785 = vsel %vm7746, %v7425, %v7427
  %v7786 = vsel %vm7746, %v7427, %v7429
  %v7787 = vsel %vm7746, %v7429, %v7431
  %v7788 = vsel %vm7746, %v7431, %v7433
  %v7789 = vsel %vm7746, %v7433, %v7435
  %v7790 = vsel %vm7746, %v7435, %v7437
  %v7791 = vsel %vm7746, %v7437, %v7439
  %v7792 = vsel %vm7746, %v7439, %v7441
  %v7793 = vsel %vm7746, %v7441, %v7443
  %v7794 = vsel %vm7746, %v7443, %v7445
  %v7795 = vsel %vm7746, %v7447, %v7449
  %v7796 = vsel %vm7746, %v7449, %v7451
  %v7797 = vsel %vm7746, %v7451, %v7453
  %v7798 = vsel %vm7746, %v7453, %v7455
  %v7799 = vsel %vm7746, %v7455, %v7457
  %v7800 = vsel %vm7746, %v7457, %v7459
  %v7801 = vsel %vm7746, %v7459, %v7461
  %v7802 = vsel %vm7746, %v7461, %v7463
  %v7803 = vsel %vm7746, %v7463, %v7465
  %v7804 = vsel %vm7746, %v7465, %v7467
  %v7805 = vsel %vm7746, %v7467, %v7469
  %v7806 = vsel %vm7746, %v7469, %v7471
  %v7807 = vsel %vm7746, %v7471, %v7473
  %v7808 = vsel %vm7746, %v7473, %v7475
  %v7809 = vsel %vm7746, %v7475, %v7477
  %v7810 = vsel %vm7746, %v7477, %v7479
  %v7811 = vsel %vm7746, %v7479, %v7481
  %v7812 = vsel %vm7746, %v7481, %v7483
  %v7813 = vsel %vm7746, %v7483, %v7485
  %v7814 = vsel %vm7746, %v7485, %v7487
  %v7815 = vsel %vm7746, %v7487, %v7489
  %v7816 = vsel %vm7746, %v7489, %v7491
  %v7817 = vsel %vm7746, %v7491, %v7493
  %v7818 = vsel %vm7746, %v7493, %v7495
  %v7819 = vsel %vm7746, %v7497, %v7499
  %v7820 = vsel %vm7746, %v7499, %v7501
  %v7821 = vsel %vm7746, %v7501, %v7503
  %v7822 = vsel %vm7746, %v7503, %v7505
  %v7823 = vsel %vm7746, %v7505, %v7507
  %v7824 = vsel %vm7746, %v7507, %v7509
  %v7825 = vsel %vm7746, %v7509, %v7511
  %v7826 = vsel %vm7746, %v7511, %v7513
  %v7827 = vsel %vm7746, %v7513, %v7515
  %v7828 = vsel %vm7746, %v7515, %v7517
  %v7829 = vsel %vm7746, %v7517, %v7519
  %v7830 = vsel %vm7746, %v7519, %v7521
  %v7831 = vsel %vm7746, %v7521, %v7523
  %v7832 = vsel %vm7746, %v7523, %v7525
  %v7833 = vsel %vm7746, %v7525, %v7527
  %v7834 = vsel %vm7746, %v7527, %v7529
  %v7835 = vsel %vm7746, %v7529, %v7531
  %v7836 = vsel %vm7746, %v7531, %v7533
  %v7837 = vsel %vm7746, %v7533, %v7535
  %v7838 = vsel %vm7746, %v7535, %v7537
  %v7839 = vsel %vm7746, %v7537, %v7539
  %v7840 = vsel %vm7746, %v7539, %v7541
  %v7841 = vsel %vm7746, %v7541, %v7543
  %v7842 = vsel %vm7746, %v7543, %v7545
  %v7843 = vsel %vm7746, %v7547, %v7549
  %v7844 = vsel %vm7746, %v7549, %v7551
  %v7845 = vsel %vm7746, %v7551, %v7553
  %v7846 = vsel %vm7746, %v7553, %v7555
  %v7847 = vsel %vm7746, %v7555, %v7557
  %v7848 = vsel %vm7746, %v7557, %v7559
  %v7849 = vsel %vm7746, %v7559, %v7561
  %v7850 = vsel %vm7746, %v7561, %v7563
  %v7851 = vsel %vm7746, %v7563, %v7565
  %v7852 = vsel %vm7746, %v7565, %v7567
  %v7853 = vsel %vm7746, %v7567, %v7569
  %v7854 = vsel %vm7746, %v7569, %v7571
  %v7855 = vsel %vm7746, %v7571, %v7573
  %v7856 = vsel %vm7746, %v7573, %v7575
  %v7857 = vsel %vm7746, %v7575, %v7577
  %v7858 = vsel %vm7746, %v7577, %v7579
  %v7859 = vsel %vm7746, %v7579, %v7581
  %v7860 = vsel %vm7746, %v7581, %v7583
  %v7861 = vsel %vm7746, %v7583, %v7585
  %v7862 = vsel %vm7746, %v7585, %v7587
  %v7863 = vsel %vm7746, %v7587, %v7589
  %v7864 = vsel %vm7746, %v7589, %v7591
  %v7865 = vsel %vm7746, %v7591, %v7593
  %v7866 = vsel %vm7746, %v7593, %v7595
  %v7867 = vsel %vm7746, %v7597, %v7599
  %v7868 = vsel %vm7746, %v7599, %v7601
  %v7869 = vsel %vm7746, %v7601, %v7603
  %v7870 = vsel %vm7746, %v7603, %v7605
  %v7871 = vsel %vm7746, %v7605, %v7607
  %v7872 = vsel %vm7746, %v7607, %v7609
  %v7873 = vsel %vm7746, %v7609, %v7611
  %v7874 = vsel %vm7746, %v7611, %v7613
  %v7875 = vsel %vm7746, %v7613, %v7615
  %v7876 = vsel %vm7746, %v7615, %v7617
  %v7877 = vsel %vm7746, %v7617, %v7619
  %v7878 = vsel %vm7746, %v7619, %v7621
  %v7879 = vsel %vm7746, %v7621, %v7623
  %v7880 = vsel %vm7746, %v7623, %v7625
  %v7881 = vsel %vm7746, %v7625, %v7627
  %v7882 = vsel %vm7746, %v7627, %v7629
  %v7883 = vsel %vm7746, %v7629, %v7631
  %v7884 = vsel %vm7746, %v7631, %v7633
  %v7885 = vsel %vm7746, %v7633, %v7635
  %v7886 = vsel %vm7746, %v7635, %v7637
  %v7887 = vsel %vm7746, %v7637, %v7639
  %v7888 = vsel %vm7746, %v7639, %v7641
  %v7889 = vsel %vm7746, %v7641, %v7643
  %v7890 = vsel %vm7746, %v7643, %v7645
  %v7891 = vsel %vm7746, %v7647, %v7649
  %v7892 = vsel %vm7746, %v7649, %v7651
  %v7893 = vsel %vm7746, %v7651, %v7653
  %v7894 = vsel %vm7746, %v7653, %v7655
  %v7895 = vsel %vm7746, %v7655, %v7657
  %v7896 = vsel %vm7746, %v7657, %v7659
  %v7897 = vsel %vm7746, %v7659, %v7661
  %v7898 = vsel %vm7746, %v7661, %v7663
  %v7899 = vsel %vm7746, %v7663, %v7665
  %v7900 = vsel %vm7746, %v7665, %v7667
  %v7901 = vsel %vm7746, %v7667, %v7669
  %v7902 = vsel %vm7746, %v7669, %v7671
  %v7903 = vsel %vm7746, %v7671, %v7673
  %v7904 = vsel %vm7746, %v7673, %v7675
  %v7905 = vsel %vm7746, %v7675, %v7677
  %v7906 = vsel %vm7746, %v7677, %v7679
  %v7907 = vsel %vm7746, %v7679, %v7681
  %v7908 = vsel %vm7746, %v7681, %v7683
  %v7909 = vsel %vm7746, %v7683, %v7685
  %v7910 = vsel %vm7746, %v7685, %v7687
  %v7911 = vsel %vm7746, %v7687, %v7689
  %v7912 = vsel %vm7746, %v7689, %v7691
  %v7913 = vsel %vm7746, %v7691, %v7693
  %v7914 = vsel %vm7746, %v7693, %v7695
  %v7915 = vsel %vm7746, %v7697, %v7699
  %v7916 = vsel %vm7746, %v7699, %v7701
  %v7917 = vsel %vm7746, %v7701, %v7703
  %v7918 = vsel %vm7746, %v7703, %v7705
  %v7919 = vsel %vm7746, %v7705, %v7707
  %v7920 = vsel %vm7746, %v7707, %v7709
  %v7921 = vsel %vm7746, %v7709, %v7711
  %v7922 = vsel %vm7746, %v7711, %v7713
  %v7923 = vsel %vm7746, %v7713, %v7715
  %v7924 = vsel %vm7746, %v7715, %v7717
  %v7925 = vsel %vm7746, %v7717, %v7719
  %v7926 = vsel %vm7746, %v7719, %v7721
  %v7927 = vsel %vm7746, %v7721, %v7723
  %v7928 = vsel %vm7746, %v7723, %v7725
  %v7929 = vsel %vm7746, %v7725, %v7727
  %v7930 = vsel %vm7746, %v7727, %v7729
  %v7931 = vsel %vm7746, %v7729, %v7731
  %v7932 = vsel %vm7746, %v7731, %v7733
  %v7933 = vsel %vm7746, %v7733, %v7735
  %v7934 = vsel %vm7746, %v7735, %v7737
  %v7935 = vsel %vm7746, %v7737, %v7739
  %v7936 = vsel %vm7746, %v7739, %v7741
  %v7937 = vsel %vm7746, %v7741, %v7743
  %v7938 = vsel %vm7746, %v7743, %v7745
  %v8139 = vsel %vm7746, %v7131, %v7347
  %v8140 = vsel %vm7746, %v7133, %v7397
  %v8141 = vsel %vm7746, %v7135, %v7447
  %v8142 = vsel %vm7746, %v7137, %v7497
  %v8143 = vsel %vm7746, %v7139, %v7547
  %v8144 = vsel %vm7746, %v7141, %v7597
  %v8145 = vsel %vm7746, %v7143, %v7647
  %v8146 = vsel %vm7746, %v7145, %v7697
  %v8147 = vld [vmem:[%s2] sm:$0xff]
  %v8148 = vld [vmem:[%s2 + $0x8] sm:$0xff]
  %v8149 = vld [vmem:[%s2 + $0x10] sm:$0xff]
  %v8150 = vld [vmem:[%s2 + $0x18] sm:$0xff]
  %v8151 = vld [vmem:[%s2 + $0x20] sm:$0xff]
  %v8152 = vld [vmem:[%s2 + $0x28] sm:$0xff]
  %v8153 = vld [vmem:[%s2 + $0x30] sm:$0xff]
  %v8154 = vld [vmem:[%s2 + $0x38] sm:$0xff]
  %8156 = vset.pattern.permute.xlu0 0
  %8157 = vperm.xlu0 %8156, %v8147
  %v8158 = vpop.permute.xlu0 %8157
  %8161 = vset.pattern.permute.xlu0 0
  %8162 = vperm.xlu0 %8161, %v8148
  %v8163 = vpop.permute.xlu0 %8162
  %8166 = vset.pattern.permute.xlu0 0
  %8167 = vperm.xlu0 %8166, %v8149
  %v8168 = vpop.permute.xlu0 %8167
  %8171 = vset.pattern.permute.xlu0 0
  %8172 = vperm.xlu0 %8171, %v8150
  %v8173 = vpop.permute.xlu0 %8172
  %8176 = vset.pattern.permute.xlu0 0
  %8177 = vperm.xlu0 %8176, %v8151
  %v8178 = vpop.permute.xlu0 %8177
  %8181 = vset.pattern.permute.xlu0 0
  %8182 = vperm.xlu0 %8181, %v8152
  %v8183 = vpop.permute.xlu0 %8182
  %8186 = vset.pattern.permute.xlu0 0
  %8187 = vperm.xlu0 %8186, %v8153
  %v8188 = vpop.permute.xlu0 %8187
  %8191 = vset.pattern.permute.xlu0 0
  %8192 = vperm.xlu0 %8191, %v8154
  %v8193 = vpop.permute.xlu0 %8192
  %v8195 = vmul.f32 %v8158, %v6922
  %v8196 = vmul.f32 %v8158, %v6923
  %v8197 = vmul.f32 %v8158, %v6924
  %v8198 = vmul.f32 %v8158, %v6925
  %v8199 = vmul.f32 %v8158, %v6926
  %v8200 = vmul.f32 %v8158, %v6927
  %v8201 = vmul.f32 %v8158, %v6928
  %v8202 = vmul.f32 %v8158, %v6929
  %v8203 = vmul.f32 %v8158, %v6930
  %v8204 = vmul.f32 %v8158, %v6931
  %v8205 = vmul.f32 %v8158, %v6932
  %v8206 = vmul.f32 %v8158, %v6933
  %v8207 = vmul.f32 %v8158, %v6934
  %v8208 = vmul.f32 %v8158, %v6935
  %v8209 = vmul.f32 %v8158, %v6936
  %v8210 = vmul.f32 %v8158, %v6937
  %v8211 = vmul.f32 %v8158, %v6938
  %v8212 = vmul.f32 %v8158, %v6939
  %v8213 = vmul.f32 %v8158, %v6940
  %v8214 = vmul.f32 %v8158, %v6941
  %v8215 = vmul.f32 %v8158, %v6942
  %v8216 = vmul.f32 %v8158, %v6943
  %v8217 = vmul.f32 %v8158, %v6944
  %v8218 = vmul.f32 %v8158, %v6945
  %v8219 = vmul.f32 %v8158, %v6946
  %v8220 = vmul.f32 %v8163, %v6947
  %v8221 = vmul.f32 %v8163, %v6948
  %v8222 = vmul.f32 %v8163, %v6949
  %v8223 = vmul.f32 %v8163, %v6950
  %v8224 = vmul.f32 %v8163, %v6951
  %v8225 = vmul.f32 %v8163, %v6952
  %v8226 = vmul.f32 %v8163, %v6953
  %v8227 = vmul.f32 %v8163, %v6954
  %v8228 = vmul.f32 %v8163, %v6955
  %v8229 = vmul.f32 %v8163, %v6956
  %v8230 = vmul.f32 %v8163, %v6957
  %v8231 = vmul.f32 %v8163, %v6958
  %v8232 = vmul.f32 %v8163, %v6959
  %v8233 = vmul.f32 %v8163, %v6960
  %v8234 = vmul.f32 %v8163, %v6961
  %v8235 = vmul.f32 %v8163, %v6962
  %v8236 = vmul.f32 %v8163, %v6963
  %v8237 = vmul.f32 %v8163, %v6964
  %v8238 = vmul.f32 %v8163, %v6965
  %v8239 = vmul.f32 %v8163, %v6966
  %v8240 = vmul.f32 %v8163, %v6967
  %v8241 = vmul.f32 %v8163, %v6968
  %v8242 = vmul.f32 %v8163, %v6969
  %v8243 = vmul.f32 %v8163, %v6970
  %v8244 = vmul.f32 %v8163, %v6971
  %v8245 = vmul.f32 %v8168, %v6972
  %v8246 = vmul.f32 %v8168, %v6973
  %v8247 = vmul.f32 %v8168, %v6974
  %v8248 = vmul.f32 %v8168, %v6975
  %v8249 = vmul.f32 %v8168, %v6976
  %v8250 = vmul.f32 %v8168, %v6977
  %v8251 = vmul.f32 %v8168, %v6978
  %v8252 = vmul.f32 %v8168, %v6979
  %v8253 = vmul.f32 %v8168, %v6980
  %v8254 = vmul.f32 %v8168, %v6981
  %v8255 = vmul.f32 %v8168, %v6982
  %v8256 = vmul.f32 %v8168, %v6983
  %v8257 = vmul.f32 %v8168, %v6984
  %v8258 = vmul.f32 %v8168, %v6985
  %v8259 = vmul.f32 %v8168, %v6986
  %v8260 = vmul.f32 %v8168, %v6987
  %v8261 = vmul.f32 %v8168, %v6988
  %v8262 = vmul.f32 %v8168, %v6989
  %v8263 = vmul.f32 %v8168, %v6990
  %v8264 = vmul.f32 %v8168, %v6991
  %v8265 = vmul.f32 %v8168, %v6992
  %v8266 = vmul.f32 %v8168, %v6993
  %v8267 = vmul.f32 %v8168, %v6994
  %v8268 = vmul.f32 %v8168, %v6995
  %v8269 = vmul.f32 %v8168, %v6996
  %v8270 = vmul.f32 %v8173, %v6997
  %v8271 = vmul.f32 %v8173, %v6998
  %v8272 = vmul.f32 %v8173, %v6999
  %v8273 = vmul.f32 %v8173, %v7000
  %v8274 = vmul.f32 %v8173, %v7001
  %v8275 = vmul.f32 %v8173, %v7002
  %v8276 = vmul.f32 %v8173, %v7003
  %v8277 = vmul.f32 %v8173, %v7004
  %v8278 = vmul.f32 %v8173, %v7005
  %v8279 = vmul.f32 %v8173, %v7006
  %v8280 = vmul.f32 %v8173, %v7007
  %v8281 = vmul.f32 %v8173, %v7008
  %v8282 = vmul.f32 %v8173, %v7009
  %v8283 = vmul.f32 %v8173, %v7010
  %v8284 = vmul.f32 %v8173, %v7011
  %v8285 = vmul.f32 %v8173, %v7012
  %v8286 = vmul.f32 %v8173, %v7013
  %v8287 = vmul.f32 %v8173, %v7014
  %v8288 = vmul.f32 %v8173, %v7015
  %v8289 = vmul.f32 %v8173, %v7016
  %v8290 = vmul.f32 %v8173, %v7017
  %v8291 = vmul.f32 %v8173, %v7018
  %v8292 = vmul.f32 %v8173, %v7019
  %v8293 = vmul.f32 %v8173, %v7020
  %v8294 = vmul.f32 %v8173, %v7021
  %v8295 = vmul.f32 %v8178, %v7022
  %v8296 = vmul.f32 %v8178, %v7023
  %v8297 = vmul.f32 %v8178, %v7024
  %v8298 = vmul.f32 %v8178, %v7025
  %v8299 = vmul.f32 %v8178, %v7026
  %v8300 = vmul.f32 %v8178, %v7027
  %v8301 = vmul.f32 %v8178, %v7028
  %v8302 = vmul.f32 %v8178, %v7029
  %v8303 = vmul.f32 %v8178, %v7030
  %v8304 = vmul.f32 %v8178, %v7031
  %v8305 = vmul.f32 %v8178, %v7032
  %v8306 = vmul.f32 %v8178, %v7033
  %v8307 = vmul.f32 %v8178, %v7034
  %v8308 = vmul.f32 %v8178, %v7035
  %v8309 = vmul.f32 %v8178, %v7036
  %v8310 = vmul.f32 %v8178, %v7037
  %v8311 = vmul.f32 %v8178, %v7038
  %v8312 = vmul.f32 %v8178, %v7039
  %v8313 = vmul.f32 %v8178, %v7040
  %v8314 = vmul.f32 %v8178, %v7041
  %v8315 = vmul.f32 %v8178, %v7042
  %v8316 = vmul.f32 %v8178, %v7043
  %v8317 = vmul.f32 %v8178, %v7044
  %v8318 = vmul.f32 %v8178, %v7045
  %v8319 = vmul.f32 %v8178, %v7046
  %v8320 = vmul.f32 %v8183, %v7047
  %v8321 = vmul.f32 %v8183, %v7048
  %v8322 = vmul.f32 %v8183, %v7049
  %v8323 = vmul.f32 %v8183, %v7050
  %v8324 = vmul.f32 %v8183, %v7051
  %v8325 = vmul.f32 %v8183, %v7052
  %v8326 = vmul.f32 %v8183, %v7053
  %v8327 = vmul.f32 %v8183, %v7054
  %v8328 = vmul.f32 %v8183, %v7055
  %v8329 = vmul.f32 %v8183, %v7056
  %v8330 = vmul.f32 %v8183, %v7057
  %v8331 = vmul.f32 %v8183, %v7058
  %v8332 = vmul.f32 %v8183, %v7059
  %v8333 = vmul.f32 %v8183, %v7060
  %v8334 = vmul.f32 %v8183, %v7061
  %v8335 = vmul.f32 %v8183, %v7062
  %v8336 = vmul.f32 %v8183, %v7063
  %v8337 = vmul.f32 %v8183, %v7064
  %v8338 = vmul.f32 %v8183, %v7065
  %v8339 = vmul.f32 %v8183, %v7066
  %v8340 = vmul.f32 %v8183, %v7067
  %v8341 = vmul.f32 %v8183, %v7068
  %v8342 = vmul.f32 %v8183, %v7069
  %v8343 = vmul.f32 %v8183, %v7070
  %v8344 = vmul.f32 %v8183, %v7071
  %v8345 = vmul.f32 %v8188, %v7072
  %v8346 = vmul.f32 %v8188, %v7073
  %v8347 = vmul.f32 %v8188, %v7074
  %v8348 = vmul.f32 %v8188, %v7075
  %v8349 = vmul.f32 %v8188, %v7076
  %v8350 = vmul.f32 %v8188, %v7077
  %v8351 = vmul.f32 %v8188, %v7078
  %v8352 = vmul.f32 %v8188, %v7079
  %v8353 = vmul.f32 %v8188, %v7080
  %v8354 = vmul.f32 %v8188, %v7081
  %v8355 = vmul.f32 %v8188, %v7082
  %v8356 = vmul.f32 %v8188, %v7083
  %v8357 = vmul.f32 %v8188, %v7084
  %v8358 = vmul.f32 %v8188, %v7085
  %v8359 = vmul.f32 %v8188, %v7086
  %v8360 = vmul.f32 %v8188, %v7087
  %v8361 = vmul.f32 %v8188, %v7088
  %v8362 = vmul.f32 %v8188, %v7089
  %v8363 = vmul.f32 %v8188, %v7090
  %v8364 = vmul.f32 %v8188, %v7091
  %v8365 = vmul.f32 %v8188, %v7092
  %v8366 = vmul.f32 %v8188, %v7093
  %v8367 = vmul.f32 %v8188, %v7094
  %v8368 = vmul.f32 %v8188, %v7095
  %v8369 = vmul.f32 %v8188, %v7096
  %v8370 = vmul.f32 %v8193, %v7097
  %v8371 = vmul.f32 %v8193, %v7098
  %v8372 = vmul.f32 %v8193, %v7099
  %v8373 = vmul.f32 %v8193, %v7100
  %v8374 = vmul.f32 %v8193, %v7101
  %v8375 = vmul.f32 %v8193, %v7102
  %v8376 = vmul.f32 %v8193, %v7103
  %v8377 = vmul.f32 %v8193, %v7104
  %v8378 = vmul.f32 %v8193, %v7105
  %v8379 = vmul.f32 %v8193, %v7106
  %v8380 = vmul.f32 %v8193, %v7107
  %v8381 = vmul.f32 %v8193, %v7108
  %v8382 = vmul.f32 %v8193, %v7109
  %v8383 = vmul.f32 %v8193, %v7110
  %v8384 = vmul.f32 %v8193, %v7111
  %v8385 = vmul.f32 %v8193, %v7112
  %v8386 = vmul.f32 %v8193, %v7113
  %v8387 = vmul.f32 %v8193, %v7114
  %v8388 = vmul.f32 %v8193, %v7115
  %v8389 = vmul.f32 %v8193, %v7116
  %v8390 = vmul.f32 %v8193, %v7117
  %v8391 = vmul.f32 %v8193, %v7118
  %v8392 = vmul.f32 %v8193, %v7119
  %v8393 = vmul.f32 %v8193, %v7120
  %v8394 = vmul.f32 %v8193, %v7121
  %8395 = vset.pattern.permute.xlu0 1
  %8396 = vperm.xlu0 %8395, %v8147
  %v8397 = vpop.permute.xlu0 %8396
  %8399 = vset.pattern.permute.xlu0 1
  %8400 = vperm.xlu0 %8399, %v8148
  %v8401 = vpop.permute.xlu0 %8400
  %8403 = vset.pattern.permute.xlu0 1
  %8404 = vperm.xlu0 %8403, %v8149
  %v8405 = vpop.permute.xlu0 %8404
  %8407 = vset.pattern.permute.xlu0 1
  %8408 = vperm.xlu0 %8407, %v8150
  %v8409 = vpop.permute.xlu0 %8408
  %8411 = vset.pattern.permute.xlu0 1
  %8412 = vperm.xlu0 %8411, %v8151
  %v8413 = vpop.permute.xlu0 %8412
  %8415 = vset.pattern.permute.xlu0 1
  %8416 = vperm.xlu0 %8415, %v8152
  %v8417 = vpop.permute.xlu0 %8416
  %8419 = vset.pattern.permute.xlu0 1
  %8420 = vperm.xlu0 %8419, %v8153
  %v8421 = vpop.permute.xlu0 %8420
  %8423 = vset.pattern.permute.xlu0 1
  %8424 = vperm.xlu0 %8423, %v8154
  %v8425 = vpop.permute.xlu0 %8424
  %v8427 = vmul.f32 %v8397, %v8139
  %v8428 = vmul.f32 %v8397, %v7747
  %v8429 = vmul.f32 %v8397, %v7748
  %v8430 = vmul.f32 %v8397, %v7749
  %v8431 = vmul.f32 %v8397, %v7750
  %v8432 = vmul.f32 %v8397, %v7751
  %v8433 = vmul.f32 %v8397, %v7752
  %v8434 = vmul.f32 %v8397, %v7753
  %v8435 = vmul.f32 %v8397, %v7754
  %v8436 = vmul.f32 %v8397, %v7755
  %v8437 = vmul.f32 %v8397, %v7756
  %v8438 = vmul.f32 %v8397, %v7757
  %v8439 = vmul.f32 %v8397, %v7758
  %v8440 = vmul.f32 %v8397, %v7759
  %v8441 = vmul.f32 %v8397, %v7760
  %v8442 = vmul.f32 %v8397, %v7761
  %v8443 = vmul.f32 %v8397, %v7762
  %v8444 = vmul.f32 %v8397, %v7763
  %v8445 = vmul.f32 %v8397, %v7764
  %v8446 = vmul.f32 %v8397, %v7765
  %v8447 = vmul.f32 %v8397, %v7766
  %v8448 = vmul.f32 %v8397, %v7767
  %v8449 = vmul.f32 %v8397, %v7768
  %v8450 = vmul.f32 %v8397, %v7769
  %v8451 = vmul.f32 %v8397, %v7770
  %v8452 = vmul.f32 %v8401, %v8140
  %v8453 = vmul.f32 %v8401, %v7771
  %v8454 = vmul.f32 %v8401, %v7772
  %v8455 = vmul.f32 %v8401, %v7773
  %v8456 = vmul.f32 %v8401, %v7774
  %v8457 = vmul.f32 %v8401, %v7775
  %v8458 = vmul.f32 %v8401, %v7776
  %v8459 = vmul.f32 %v8401, %v7777
  %v8460 = vmul.f32 %v8401, %v7778
  %v8461 = vmul.f32 %v8401, %v7779
  %v8462 = vmul.f32 %v8401, %v7780
  %v8463 = vmul.f32 %v8401, %v7781
  %v8464 = vmul.f32 %v8401, %v7782
  %v8465 = vmul.f32 %v8401, %v7783
  %v8466 = vmul.f32 %v8401, %v7784
  %v8467 = vmul.f32 %v8401, %v7785
  %v8468 = vmul.f32 %v8401, %v7786
  %v8469 = vmul.f32 %v8401, %v7787
  %v8470 = vmul.f32 %v8401, %v7788
  %v8471 = vmul.f32 %v8401, %v7789
  %v8472 = vmul.f32 %v8401, %v7790
  %v8473 = vmul.f32 %v8401, %v7791
  %v8474 = vmul.f32 %v8401, %v7792
  %v8475 = vmul.f32 %v8401, %v7793
  %v8476 = vmul.f32 %v8401, %v7794
  %v8477 = vmul.f32 %v8405, %v8141
  %v8478 = vmul.f32 %v8405, %v7795
  %v8479 = vmul.f32 %v8405, %v7796
  %v8480 = vmul.f32 %v8405, %v7797
  %v8481 = vmul.f32 %v8405, %v7798
  %v8482 = vmul.f32 %v8405, %v7799
  %v8483 = vmul.f32 %v8405, %v7800
  %v8484 = vmul.f32 %v8405, %v7801
  %v8485 = vmul.f32 %v8405, %v7802
  %v8486 = vmul.f32 %v8405, %v7803
  %v8487 = vmul.f32 %v8405, %v7804
  %v8488 = vmul.f32 %v8405, %v7805
  %v8489 = vmul.f32 %v8405, %v7806
  %v8490 = vmul.f32 %v8405, %v7807
  %v8491 = vmul.f32 %v8405, %v7808
  %v8492 = vmul.f32 %v8405, %v7809
  %v8493 = vmul.f32 %v8405, %v7810
  %v8494 = vmul.f32 %v8405, %v7811
  %v8495 = vmul.f32 %v8405, %v7812
  %v8496 = vmul.f32 %v8405, %v7813
  %v8497 = vmul.f32 %v8405, %v7814
  %v8498 = vmul.f32 %v8405, %v7815
  %v8499 = vmul.f32 %v8405, %v7816
  %v8500 = vmul.f32 %v8405, %v7817
  %v8501 = vmul.f32 %v8405, %v7818
  %v8502 = vmul.f32 %v8409, %v8142
  %v8503 = vmul.f32 %v8409, %v7819
  %v8504 = vmul.f32 %v8409, %v7820
  %v8505 = vmul.f32 %v8409, %v7821
  %v8506 = vmul.f32 %v8409, %v7822
  %v8507 = vmul.f32 %v8409, %v7823
  %v8508 = vmul.f32 %v8409, %v7824
  %v8509 = vmul.f32 %v8409, %v7825
  %v8510 = vmul.f32 %v8409, %v7826
  %v8511 = vmul.f32 %v8409, %v7827
  %v8512 = vmul.f32 %v8409, %v7828
  %v8513 = vmul.f32 %v8409, %v7829
  %v8514 = vmul.f32 %v8409, %v7830
  %v8515 = vmul.f32 %v8409, %v7831
  %v8516 = vmul.f32 %v8409, %v7832
  %v8517 = vmul.f32 %v8409, %v7833
  %v8518 = vmul.f32 %v8409, %v7834
  %v8519 = vmul.f32 %v8409, %v7835
  %v8520 = vmul.f32 %v8409, %v7836
  %v8521 = vmul.f32 %v8409, %v7837
  %v8522 = vmul.f32 %v8409, %v7838
  %v8523 = vmul.f32 %v8409, %v7839
  %v8524 = vmul.f32 %v8409, %v7840
  %v8525 = vmul.f32 %v8409, %v7841
  %v8526 = vmul.f32 %v8409, %v7842
  %v8527 = vmul.f32 %v8413, %v8143
  %v8528 = vmul.f32 %v8413, %v7843
  %v8529 = vmul.f32 %v8413, %v7844
  %v8530 = vmul.f32 %v8413, %v7845
  %v8531 = vmul.f32 %v8413, %v7846
  %v8532 = vmul.f32 %v8413, %v7847
  %v8533 = vmul.f32 %v8413, %v7848
  %v8534 = vmul.f32 %v8413, %v7849
  %v8535 = vmul.f32 %v8413, %v7850
  %v8536 = vmul.f32 %v8413, %v7851
  %v8537 = vmul.f32 %v8413, %v7852
  %v8538 = vmul.f32 %v8413, %v7853
  %v8539 = vmul.f32 %v8413, %v7854
  %v8540 = vmul.f32 %v8413, %v7855
  %v8541 = vmul.f32 %v8413, %v7856
  %v8542 = vmul.f32 %v8413, %v7857
  %v8543 = vmul.f32 %v8413, %v7858
  %v8544 = vmul.f32 %v8413, %v7859
  %v8545 = vmul.f32 %v8413, %v7860
  %v8546 = vmul.f32 %v8413, %v7861
  %v8547 = vmul.f32 %v8413, %v7862
  %v8548 = vmul.f32 %v8413, %v7863
  %v8549 = vmul.f32 %v8413, %v7864
  %v8550 = vmul.f32 %v8413, %v7865
  %v8551 = vmul.f32 %v8413, %v7866
  %v8552 = vmul.f32 %v8417, %v8144
  %v8553 = vmul.f32 %v8417, %v7867
  %v8554 = vmul.f32 %v8417, %v7868
  %v8555 = vmul.f32 %v8417, %v7869
  %v8556 = vmul.f32 %v8417, %v7870
  %v8557 = vmul.f32 %v8417, %v7871
  %v8558 = vmul.f32 %v8417, %v7872
  %v8559 = vmul.f32 %v8417, %v7873
  %v8560 = vmul.f32 %v8417, %v7874
  %v8561 = vmul.f32 %v8417, %v7875
  %v8562 = vmul.f32 %v8417, %v7876
  %v8563 = vmul.f32 %v8417, %v7877
  %v8564 = vmul.f32 %v8417, %v7878
  %v8565 = vmul.f32 %v8417, %v7879
  %v8566 = vmul.f32 %v8417, %v7880
  %v8567 = vmul.f32 %v8417, %v7881
  %v8568 = vmul.f32 %v8417, %v7882
  %v8569 = vmul.f32 %v8417, %v7883
  %v8570 = vmul.f32 %v8417, %v7884
  %v8571 = vmul.f32 %v8417, %v7885
  %v8572 = vmul.f32 %v8417, %v7886
  %v8573 = vmul.f32 %v8417, %v7887
  %v8574 = vmul.f32 %v8417, %v7888
  %v8575 = vmul.f32 %v8417, %v7889
  %v8576 = vmul.f32 %v8417, %v7890
  %v8577 = vmul.f32 %v8421, %v8145
  %v8578 = vmul.f32 %v8421, %v7891
  %v8579 = vmul.f32 %v8421, %v7892
  %v8580 = vmul.f32 %v8421, %v7893
  %v8581 = vmul.f32 %v8421, %v7894
  %v8582 = vmul.f32 %v8421, %v7895
  %v8583 = vmul.f32 %v8421, %v7896
  %v8584 = vmul.f32 %v8421, %v7897
  %v8585 = vmul.f32 %v8421, %v7898
  %v8586 = vmul.f32 %v8421, %v7899
  %v8587 = vmul.f32 %v8421, %v7900
  %v8588 = vmul.f32 %v8421, %v7901
  %v8589 = vmul.f32 %v8421, %v7902
  %v8590 = vmul.f32 %v8421, %v7903
  %v8591 = vmul.f32 %v8421, %v7904
  %v8592 = vmul.f32 %v8421, %v7905
  %v8593 = vmul.f32 %v8421, %v7906
  %v8594 = vmul.f32 %v8421, %v7907
  %v8595 = vmul.f32 %v8421, %v7908
  %v8596 = vmul.f32 %v8421, %v7909
  %v8597 = vmul.f32 %v8421, %v7910
  %v8598 = vmul.f32 %v8421, %v7911
  %v8599 = vmul.f32 %v8421, %v7912
  %v8600 = vmul.f32 %v8421, %v7913
  %v8601 = vmul.f32 %v8421, %v7914
  %v8602 = vmul.f32 %v8425, %v8146
  %v8603 = vmul.f32 %v8425, %v7915
  %v8604 = vmul.f32 %v8425, %v7916
  %v8605 = vmul.f32 %v8425, %v7917
  %v8606 = vmul.f32 %v8425, %v7918
  %v8607 = vmul.f32 %v8425, %v7919
  %v8608 = vmul.f32 %v8425, %v7920
  %v8609 = vmul.f32 %v8425, %v7921
  %v8610 = vmul.f32 %v8425, %v7922
  %v8611 = vmul.f32 %v8425, %v7923
  %v8612 = vmul.f32 %v8425, %v7924
  %v8613 = vmul.f32 %v8425, %v7925
  %v8614 = vmul.f32 %v8425, %v7926
  %v8615 = vmul.f32 %v8425, %v7927
  %v8616 = vmul.f32 %v8425, %v7928
  %v8617 = vmul.f32 %v8425, %v7929
  %v8618 = vmul.f32 %v8425, %v7930
  %v8619 = vmul.f32 %v8425, %v7931
  %v8620 = vmul.f32 %v8425, %v7932
  %v8621 = vmul.f32 %v8425, %v7933
  %v8622 = vmul.f32 %v8425, %v7934
  %v8623 = vmul.f32 %v8425, %v7935
  %v8624 = vmul.f32 %v8425, %v7936
  %v8625 = vmul.f32 %v8425, %v7937
  %v8626 = vmul.f32 %v8425, %v7938
  %v8627 = vadd.f32 %v8195, %v8427
  %v8628 = vadd.f32 %v8196, %v8428
  %v8629 = vadd.f32 %v8197, %v8429
  %v8630 = vadd.f32 %v8198, %v8430
  %v8631 = vadd.f32 %v8199, %v8431
  %v8632 = vadd.f32 %v8200, %v8432
  %v8633 = vadd.f32 %v8201, %v8433
  %v8634 = vadd.f32 %v8202, %v8434
  %v8635 = vadd.f32 %v8203, %v8435
  %v8636 = vadd.f32 %v8204, %v8436
  %v8637 = vadd.f32 %v8205, %v8437
  %v8638 = vadd.f32 %v8206, %v8438
  %v8639 = vadd.f32 %v8207, %v8439
  %v8640 = vadd.f32 %v8208, %v8440
  %v8641 = vadd.f32 %v8209, %v8441
  %v8642 = vadd.f32 %v8210, %v8442
  %v8643 = vadd.f32 %v8211, %v8443
  %v8644 = vadd.f32 %v8212, %v8444
  %v8645 = vadd.f32 %v8213, %v8445
  %v8646 = vadd.f32 %v8214, %v8446
  %v8647 = vadd.f32 %v8215, %v8447
  %v8648 = vadd.f32 %v8216, %v8448
  %v8649 = vadd.f32 %v8217, %v8449
  %v8650 = vadd.f32 %v8218, %v8450
  %v8651 = vadd.f32 %v8219, %v8451
  %v8652 = vadd.f32 %v8220, %v8452
  %v8653 = vadd.f32 %v8221, %v8453
  %v8654 = vadd.f32 %v8222, %v8454
  %v8655 = vadd.f32 %v8223, %v8455
  %v8656 = vadd.f32 %v8224, %v8456
  %v8657 = vadd.f32 %v8225, %v8457
  %v8658 = vadd.f32 %v8226, %v8458
  %v8659 = vadd.f32 %v8227, %v8459
  %v8660 = vadd.f32 %v8228, %v8460
  %v8661 = vadd.f32 %v8229, %v8461
  %v8662 = vadd.f32 %v8230, %v8462
  %v8663 = vadd.f32 %v8231, %v8463
  %v8664 = vadd.f32 %v8232, %v8464
  %v8665 = vadd.f32 %v8233, %v8465
  %v8666 = vadd.f32 %v8234, %v8466
  %v8667 = vadd.f32 %v8235, %v8467
  %v8668 = vadd.f32 %v8236, %v8468
  %v8669 = vadd.f32 %v8237, %v8469
  %v8670 = vadd.f32 %v8238, %v8470
  %v8671 = vadd.f32 %v8239, %v8471
  %v8672 = vadd.f32 %v8240, %v8472
  %v8673 = vadd.f32 %v8241, %v8473
  %v8674 = vadd.f32 %v8242, %v8474
  %v8675 = vadd.f32 %v8243, %v8475
  %v8676 = vadd.f32 %v8244, %v8476
  %v8677 = vadd.f32 %v8245, %v8477
  %v8678 = vadd.f32 %v8246, %v8478
  %v8679 = vadd.f32 %v8247, %v8479
  %v8680 = vadd.f32 %v8248, %v8480
  %v8681 = vadd.f32 %v8249, %v8481
  %v8682 = vadd.f32 %v8250, %v8482
  %v8683 = vadd.f32 %v8251, %v8483
  %v8684 = vadd.f32 %v8252, %v8484
  %v8685 = vadd.f32 %v8253, %v8485
  %v8686 = vadd.f32 %v8254, %v8486
  %v8687 = vadd.f32 %v8255, %v8487
  %v8688 = vadd.f32 %v8256, %v8488
  %v8689 = vadd.f32 %v8257, %v8489
  %v8690 = vadd.f32 %v8258, %v8490
  %v8691 = vadd.f32 %v8259, %v8491
  %v8692 = vadd.f32 %v8260, %v8492
  %v8693 = vadd.f32 %v8261, %v8493
  %v8694 = vadd.f32 %v8262, %v8494
  %v8695 = vadd.f32 %v8263, %v8495
  %v8696 = vadd.f32 %v8264, %v8496
  %v8697 = vadd.f32 %v8265, %v8497
  %v8698 = vadd.f32 %v8266, %v8498
  %v8699 = vadd.f32 %v8267, %v8499
  %v8700 = vadd.f32 %v8268, %v8500
  %v8701 = vadd.f32 %v8269, %v8501
  %v8702 = vadd.f32 %v8270, %v8502
  %v8703 = vadd.f32 %v8271, %v8503
  %v8704 = vadd.f32 %v8272, %v8504
  %v8705 = vadd.f32 %v8273, %v8505
  %v8706 = vadd.f32 %v8274, %v8506
  %v8707 = vadd.f32 %v8275, %v8507
  %v8708 = vadd.f32 %v8276, %v8508
  %v8709 = vadd.f32 %v8277, %v8509
  %v8710 = vadd.f32 %v8278, %v8510
  %v8711 = vadd.f32 %v8279, %v8511
  %v8712 = vadd.f32 %v8280, %v8512
  %v8713 = vadd.f32 %v8281, %v8513
  %v8714 = vadd.f32 %v8282, %v8514
  %v8715 = vadd.f32 %v8283, %v8515
  %v8716 = vadd.f32 %v8284, %v8516
  %v8717 = vadd.f32 %v8285, %v8517
  %v8718 = vadd.f32 %v8286, %v8518
  %v8719 = vadd.f32 %v8287, %v8519
  %v8720 = vadd.f32 %v8288, %v8520
  %v8721 = vadd.f32 %v8289, %v8521
  %v8722 = vadd.f32 %v8290, %v8522
  %v8723 = vadd.f32 %v8291, %v8523
  %v8724 = vadd.f32 %v8292, %v8524
  %v8725 = vadd.f32 %v8293, %v8525
  %v8726 = vadd.f32 %v8294, %v8526
  %v8727 = vadd.f32 %v8295, %v8527
  %v8728 = vadd.f32 %v8296, %v8528
  %v8729 = vadd.f32 %v8297, %v8529
  %v8730 = vadd.f32 %v8298, %v8530
  %v8731 = vadd.f32 %v8299, %v8531
  %v8732 = vadd.f32 %v8300, %v8532
  %v8733 = vadd.f32 %v8301, %v8533
  %v8734 = vadd.f32 %v8302, %v8534
  %v8735 = vadd.f32 %v8303, %v8535
  %v8736 = vadd.f32 %v8304, %v8536
  %v8737 = vadd.f32 %v8305, %v8537
  %v8738 = vadd.f32 %v8306, %v8538
  %v8739 = vadd.f32 %v8307, %v8539
  %v8740 = vadd.f32 %v8308, %v8540
  %v8741 = vadd.f32 %v8309, %v8541
  %v8742 = vadd.f32 %v8310, %v8542
  %v8743 = vadd.f32 %v8311, %v8543
  %v8744 = vadd.f32 %v8312, %v8544
  %v8745 = vadd.f32 %v8313, %v8545
  %v8746 = vadd.f32 %v8314, %v8546
  %v8747 = vadd.f32 %v8315, %v8547
  %v8748 = vadd.f32 %v8316, %v8548
  %v8749 = vadd.f32 %v8317, %v8549
  %v8750 = vadd.f32 %v8318, %v8550
  %v8751 = vadd.f32 %v8319, %v8551
  %v8752 = vadd.f32 %v8320, %v8552
  %v8753 = vadd.f32 %v8321, %v8553
  %v8754 = vadd.f32 %v8322, %v8554
  %v8755 = vadd.f32 %v8323, %v8555
  %v8756 = vadd.f32 %v8324, %v8556
  %v8757 = vadd.f32 %v8325, %v8557
  %v8758 = vadd.f32 %v8326, %v8558
  %v8759 = vadd.f32 %v8327, %v8559
  %v8760 = vadd.f32 %v8328, %v8560
  %v8761 = vadd.f32 %v8329, %v8561
  %v8762 = vadd.f32 %v8330, %v8562
  %v8763 = vadd.f32 %v8331, %v8563
  %v8764 = vadd.f32 %v8332, %v8564
  %v8765 = vadd.f32 %v8333, %v8565
  %v8766 = vadd.f32 %v8334, %v8566
  %v8767 = vadd.f32 %v8335, %v8567
  %v8768 = vadd.f32 %v8336, %v8568
  %v8769 = vadd.f32 %v8337, %v8569
  %v8770 = vadd.f32 %v8338, %v8570
  %v8771 = vadd.f32 %v8339, %v8571
  %v8772 = vadd.f32 %v8340, %v8572
  %v8773 = vadd.f32 %v8341, %v8573
  %v8774 = vadd.f32 %v8342, %v8574
  %v8775 = vadd.f32 %v8343, %v8575
  %v8776 = vadd.f32 %v8344, %v8576
  %v8777 = vadd.f32 %v8345, %v8577
  %v8778 = vadd.f32 %v8346, %v8578
  %v8779 = vadd.f32 %v8347, %v8579
  %v8780 = vadd.f32 %v8348, %v8580
  %v8781 = vadd.f32 %v8349, %v8581
  %v8782 = vadd.f32 %v8350, %v8582
  %v8783 = vadd.f32 %v8351, %v8583
  %v8784 = vadd.f32 %v8352, %v8584
  %v8785 = vadd.f32 %v8353, %v8585
  %v8786 = vadd.f32 %v8354, %v8586
  %v8787 = vadd.f32 %v8355, %v8587
  %v8788 = vadd.f32 %v8356, %v8588
  %v8789 = vadd.f32 %v8357, %v8589
  %v8790 = vadd.f32 %v8358, %v8590
  %v8791 = vadd.f32 %v8359, %v8591
  %v8792 = vadd.f32 %v8360, %v8592
  %v8793 = vadd.f32 %v8361, %v8593
  %v8794 = vadd.f32 %v8362, %v8594
  %v8795 = vadd.f32 %v8363, %v8595
  %v8796 = vadd.f32 %v8364, %v8596
  %v8797 = vadd.f32 %v8365, %v8597
  %v8798 = vadd.f32 %v8366, %v8598
  %v8799 = vadd.f32 %v8367, %v8599
  %v8800 = vadd.f32 %v8368, %v8600
  %v8801 = vadd.f32 %v8369, %v8601
  %v8802 = vadd.f32 %v8370, %v8602
  %v8803 = vadd.f32 %v8371, %v8603
  %v8804 = vadd.f32 %v8372, %v8604
  %v8805 = vadd.f32 %v8373, %v8605
  %v8806 = vadd.f32 %v8374, %v8606
  %v8807 = vadd.f32 %v8375, %v8607
  %v8808 = vadd.f32 %v8376, %v8608
  %v8809 = vadd.f32 %v8377, %v8609
  %v8810 = vadd.f32 %v8378, %v8610
  %v8811 = vadd.f32 %v8379, %v8611
  %v8812 = vadd.f32 %v8380, %v8612
  %v8813 = vadd.f32 %v8381, %v8613
  %v8814 = vadd.f32 %v8382, %v8614
  %v8815 = vadd.f32 %v8383, %v8615
  %v8816 = vadd.f32 %v8384, %v8616
  %v8817 = vadd.f32 %v8385, %v8617
  %v8818 = vadd.f32 %v8386, %v8618
  %v8819 = vadd.f32 %v8387, %v8619
  %v8820 = vadd.f32 %v8388, %v8620
  %v8821 = vadd.f32 %v8389, %v8621
  %v8822 = vadd.f32 %v8390, %v8622
  %v8823 = vadd.f32 %v8391, %v8623
  %v8824 = vadd.f32 %v8392, %v8624
  %v8825 = vadd.f32 %v8393, %v8625
  %v8826 = vadd.f32 %v8394, %v8626
  %8827 = vst [vmem:[%s3] sm:$0xff] %v8627
  %8828 = vst [vmem:[%s3 + $0x8] sm:$0xff] %v8628
  %8829 = vst [vmem:[%s3 + $0x10] sm:$0xff] %v8629
  %8830 = vst [vmem:[%s3 + $0x18] sm:$0xff] %v8630
  %8831 = vst [vmem:[%s3 + $0x20] sm:$0xff] %v8631
  %8832 = vst [vmem:[%s3 + $0x28] sm:$0xff] %v8632
  %8833 = vst [vmem:[%s3 + $0x30] sm:$0xff] %v8633
  %8834 = vst [vmem:[%s3 + $0x38] sm:$0xff] %v8634
  %8835 = vst [vmem:[%s3 + $0x40] sm:$0xff] %v8635
  %8836 = vst [vmem:[%s3 + $0x48] sm:$0xff] %v8636
  %8837 = vst [vmem:[%s3 + $0x50] sm:$0xff] %v8637
  %8838 = vst [vmem:[%s3 + $0x58] sm:$0xff] %v8638
  %8839 = vst [vmem:[%s3 + $0x60] sm:$0xff] %v8639
  %8840 = vst [vmem:[%s3 + $0x68] sm:$0xff] %v8640
  %8841 = vst [vmem:[%s3 + $0x70] sm:$0xff] %v8641
  %8842 = vst [vmem:[%s3 + $0x78] sm:$0xff] %v8642
  %8843 = vst [vmem:[%s3 + $0x80] sm:$0xff] %v8643
  %8844 = vst [vmem:[%s3 + $0x88] sm:$0xff] %v8644
  %8845 = vst [vmem:[%s3 + $0x90] sm:$0xff] %v8645
  %8846 = vst [vmem:[%s3 + $0x98] sm:$0xff] %v8646
  %8847 = vst [vmem:[%s3 + $0xa0] sm:$0xff] %v8647
  %8848 = vst [vmem:[%s3 + $0xa8] sm:$0xff] %v8648
  %8849 = vst [vmem:[%s3 + $0xb0] sm:$0xff] %v8649
  %8850 = vst [vmem:[%s3 + $0xb8] sm:$0xff] %v8650
  %8851 = vst.msk [vmem:[%s3 + $0xc0] sm:$0xff] %vm1224, %v8651
  %8852 = vst [vmem:[%s3 + $0xc8] sm:$0xff] %v8652
  %8853 = vst [vmem:[%s3 + $0xd0] sm:$0xff] %v8653
  %8854 = vst [vmem:[%s3 + $0xd8] sm:$0xff] %v8654
  %8855 = vst [vmem:[%s3 + $0xe0] sm:$0xff] %v8655
  %8856 = vst [vmem:[%s3 + $0xe8] sm:$0xff] %v8656
  %8857 = vst [vmem:[%s3 + $0xf0] sm:$0xff] %v8657
  %8858 = vst [vmem:[%s3 + $0xf8] sm:$0xff] %v8658
  %8859 = vst [vmem:[%s3 + $0x100] sm:$0xff] %v8659
  %8860 = vst [vmem:[%s3 + $0x108] sm:$0xff] %v8660
  %8861 = vst [vmem:[%s3 + $0x110] sm:$0xff] %v8661
  %8862 = vst [vmem:[%s3 + $0x118] sm:$0xff] %v8662
  %8863 = vst [vmem:[%s3 + $0x120] sm:$0xff] %v8663
  %8864 = vst [vmem:[%s3 + $0x128] sm:$0xff] %v8664
  %8865 = vst [vmem:[%s3 + $0x130] sm:$0xff] %v8665
  %8866 = vst [vmem:[%s3 + $0x138] sm:$0xff] %v8666
  %8867 = vst [vmem:[%s3 + $0x140] sm:$0xff] %v8667
  %8868 = vst [vmem:[%s3 + $0x148] sm:$0xff] %v8668
  %8869 = vst [vmem:[%s3 + $0x150] sm:$0xff] %v8669
  %8870 = vst [vmem:[%s3 + $0x158] sm:$0xff] %v8670
  %8871 = vst [vmem:[%s3 + $0x160] sm:$0xff] %v8671
  %8872 = vst [vmem:[%s3 + $0x168] sm:$0xff] %v8672
  %8873 = vst [vmem:[%s3 + $0x170] sm:$0xff] %v8673
  %8874 = vst [vmem:[%s3 + $0x178] sm:$0xff] %v8674
  %8875 = vst [vmem:[%s3 + $0x180] sm:$0xff] %v8675
  %8876 = vst.msk [vmem:[%s3 + $0x188] sm:$0xff] %vm1224, %v8676
  %8877 = vst [vmem:[%s3 + $0x190] sm:$0xff] %v8677
  %8878 = vst [vmem:[%s3 + $0x198] sm:$0xff] %v8678
  %8879 = vst [vmem:[%s3 + $0x1a0] sm:$0xff] %v8679
  %8880 = vst [vmem:[%s3 + $0x1a8] sm:$0xff] %v8680
  %8881 = vst [vmem:[%s3 + $0x1b0] sm:$0xff] %v8681
  %8882 = vst [vmem:[%s3 + $0x1b8] sm:$0xff] %v8682
  %8883 = vst [vmem:[%s3 + $0x1c0] sm:$0xff] %v8683
  %8884 = vst [vmem:[%s3 + $0x1c8] sm:$0xff] %v8684
  %8885 = vst [vmem:[%s3 + $0x1d0] sm:$0xff] %v8685
  %8886 = vst [vmem:[%s3 + $0x1d8] sm:$0xff] %v8686
  %8887 = vst [vmem:[%s3 + $0x1e0] sm:$0xff] %v8687
  %8888 = vst [vmem:[%s3 + $0x1e8] sm:$0xff] %v8688
  %8889 = vst [vmem:[%s3 + $0x1f0] sm:$0xff] %v8689
  %8890 = vst [vmem:[%s3 + $0x1f8] sm:$0xff] %v8690
  %8891 = vst [vmem:[%s3 + $0x200] sm:$0xff] %v8691
  %8892 = vst [vmem:[%s3 + $0x208] sm:$0xff] %v8692
  %8893 = vst [vmem:[%s3 + $0x210] sm:$0xff] %v8693
  %8894 = vst [vmem:[%s3 + $0x218] sm:$0xff] %v8694
  %8895 = vst [vmem:[%s3 + $0x220] sm:$0xff] %v8695
  %8896 = vst [vmem:[%s3 + $0x228] sm:$0xff] %v8696
  %8897 = vst [vmem:[%s3 + $0x230] sm:$0xff] %v8697
  %8898 = vst [vmem:[%s3 + $0x238] sm:$0xff] %v8698
  %8899 = vst [vmem:[%s3 + $0x240] sm:$0xff] %v8699
  %8900 = vst [vmem:[%s3 + $0x248] sm:$0xff] %v8700
  %8901 = vst.msk [vmem:[%s3 + $0x250] sm:$0xff] %vm1224, %v8701
  %8902 = vst [vmem:[%s3 + $0x258] sm:$0xff] %v8702
  %8903 = vst [vmem:[%s3 + $0x260] sm:$0xff] %v8703
  %8904 = vst [vmem:[%s3 + $0x268] sm:$0xff] %v8704
  %8905 = vst [vmem:[%s3 + $0x270] sm:$0xff] %v8705
  %8906 = vst [vmem:[%s3 + $0x278] sm:$0xff] %v8706
  %8907 = vst [vmem:[%s3 + $0x280] sm:$0xff] %v8707
  %8908 = vst [vmem:[%s3 + $0x288] sm:$0xff] %v8708
  %8909 = vst [vmem:[%s3 + $0x290] sm:$0xff] %v8709
  %8910 = vst [vmem:[%s3 + $0x298] sm:$0xff] %v8710
  %8911 = vst [vmem:[%s3 + $0x2a0] sm:$0xff] %v8711
  %8912 = vst [vmem:[%s3 + $0x2a8] sm:$0xff] %v8712
  %8913 = vst [vmem:[%s3 + $0x2b0] sm:$0xff] %v8713
  %8914 = vst [vmem:[%s3 + $0x2b8] sm:$0xff] %v8714
  %8915 = vst [vmem:[%s3 + $0x2c0] sm:$0xff] %v8715
  %8916 = vst [vmem:[%s3 + $0x2c8] sm:$0xff] %v8716
  %8917 = vst [vmem:[%s3 + $0x2d0] sm:$0xff] %v8717
  %8918 = vst [vmem:[%s3 + $0x2d8] sm:$0xff] %v8718
  %8919 = vst [vmem:[%s3 + $0x2e0] sm:$0xff] %v8719
  %8920 = vst [vmem:[%s3 + $0x2e8] sm:$0xff] %v8720
  %8921 = vst [vmem:[%s3 + $0x2f0] sm:$0xff] %v8721
  %8922 = vst [vmem:[%s3 + $0x2f8] sm:$0xff] %v8722
  %8923 = vst [vmem:[%s3 + $0x300] sm:$0xff] %v8723
  %8924 = vst [vmem:[%s3 + $0x308] sm:$0xff] %v8724
  %8925 = vst [vmem:[%s3 + $0x310] sm:$0xff] %v8725
  %8926 = vst.msk [vmem:[%s3 + $0x318] sm:$0xff] %vm1224, %v8726
  %8927 = vst [vmem:[%s3 + $0x320] sm:$0xff] %v8727
  %8928 = vst [vmem:[%s3 + $0x328] sm:$0xff] %v8728
  %8929 = vst [vmem:[%s3 + $0x330] sm:$0xff] %v8729
  %8930 = vst [vmem:[%s3 + $0x338] sm:$0xff] %v8730
  %8931 = vst [vmem:[%s3 + $0x340] sm:$0xff] %v8731
  %8932 = vst [vmem:[%s3 + $0x348] sm:$0xff] %v8732
  %8933 = vst [vmem:[%s3 + $0x350] sm:$0xff] %v8733
  %8934 = vst [vmem:[%s3 + $0x358] sm:$0xff] %v8734
  %8935 = vst [vmem:[%s3 + $0x360] sm:$0xff] %v8735
  %8936 = vst [vmem:[%s3 + $0x368] sm:$0xff] %v8736
  %8937 = vst [vmem:[%s3 + $0x370] sm:$0xff] %v8737
  %8938 = vst [vmem:[%s3 + $0x378] sm:$0xff] %v8738
  %8939 = vst [vmem:[%s3 + $0x380] sm:$0xff] %v8739
  %8940 = vst [vmem:[%s3 + $0x388] sm:$0xff] %v8740
  %8941 = vst [vmem:[%s3 + $0x390] sm:$0xff] %v8741
  %8942 = vst [vmem:[%s3 + $0x398] sm:$0xff] %v8742
  %8943 = vst [vmem:[%s3 + $0x3a0] sm:$0xff] %v8743
  %8944 = vst [vmem:[%s3 + $0x3a8] sm:$0xff] %v8744
  %8945 = vst [vmem:[%s3 + $0x3b0] sm:$0xff] %v8745
  %8946 = vst [vmem:[%s3 + $0x3b8] sm:$0xff] %v8746
  %8947 = vst [vmem:[%s3 + $0x3c0] sm:$0xff] %v8747
  %8948 = vst [vmem:[%s3 + $0x3c8] sm:$0xff] %v8748
  %8949 = vst [vmem:[%s3 + $0x3d0] sm:$0xff] %v8749
  %8950 = vst [vmem:[%s3 + $0x3d8] sm:$0xff] %v8750
  %8951 = vst.msk [vmem:[%s3 + $0x3e0] sm:$0xff] %vm1224, %v8751
  %8952 = vst [vmem:[%s3 + $0x3e8] sm:$0xff] %v8752
  %8953 = vst [vmem:[%s3 + $0x3f0] sm:$0xff] %v8753
  %8954 = vst [vmem:[%s3 + $0x3f8] sm:$0xff] %v8754
  %8955 = vst [vmem:[%s3 + $0x400] sm:$0xff] %v8755
  %8956 = vst [vmem:[%s3 + $0x408] sm:$0xff] %v8756
  %8957 = vst [vmem:[%s3 + $0x410] sm:$0xff] %v8757
  %8958 = vst [vmem:[%s3 + $0x418] sm:$0xff] %v8758
  %8959 = vst [vmem:[%s3 + $0x420] sm:$0xff] %v8759
  %8960 = vst [vmem:[%s3 + $0x428] sm:$0xff] %v8760
  %8961 = vst [vmem:[%s3 + $0x430] sm:$0xff] %v8761
  %8962 = vst [vmem:[%s3 + $0x438] sm:$0xff] %v8762
  %8963 = vst [vmem:[%s3 + $0x440] sm:$0xff] %v8763
  %8964 = vst [vmem:[%s3 + $0x448] sm:$0xff] %v8764
  %8965 = vst [vmem:[%s3 + $0x450] sm:$0xff] %v8765
  %8966 = vst [vmem:[%s3 + $0x458] sm:$0xff] %v8766
  %8967 = vst [vmem:[%s3 + $0x460] sm:$0xff] %v8767
  %8968 = vst [vmem:[%s3 + $0x468] sm:$0xff] %v8768
  %8969 = vst [vmem:[%s3 + $0x470] sm:$0xff] %v8769
  %8970 = vst [vmem:[%s3 + $0x478] sm:$0xff] %v8770
  %8971 = vst [vmem:[%s3 + $0x480] sm:$0xff] %v8771
  %8972 = vst [vmem:[%s3 + $0x488] sm:$0xff] %v8772
  %8973 = vst [vmem:[%s3 + $0x490] sm:$0xff] %v8773
  %8974 = vst [vmem:[%s3 + $0x498] sm:$0xff] %v8774
  %8975 = vst [vmem:[%s3 + $0x4a0] sm:$0xff] %v8775
  %8976 = vst.msk [vmem:[%s3 + $0x4a8] sm:$0xff] %vm1224, %v8776
  %8977 = vst [vmem:[%s3 + $0x4b0] sm:$0xff] %v8777
  %8978 = vst [vmem:[%s3 + $0x4b8] sm:$0xff] %v8778
  %8979 = vst [vmem:[%s3 + $0x4c0] sm:$0xff] %v8779
  %8980 = vst [vmem:[%s3 + $0x4c8] sm:$0xff] %v8780
  %8981 = vst [vmem:[%s3 + $0x4d0] sm:$0xff] %v8781
  %8982 = vst [vmem:[%s3 + $0x4d8] sm:$0xff] %v8782
  %8983 = vst [vmem:[%s3 + $0x4e0] sm:$0xff] %v8783
  %8984 = vst [vmem:[%s3 + $0x4e8] sm:$0xff] %v8784
  %8985 = vst [vmem:[%s3 + $0x4f0] sm:$0xff] %v8785
  %8986 = vst [vmem:[%s3 + $0x4f8] sm:$0xff] %v8786
  %8987 = vst [vmem:[%s3 + $0x500] sm:$0xff] %v8787
  %8988 = vst [vmem:[%s3 + $0x508] sm:$0xff] %v8788
  %8989 = vst [vmem:[%s3 + $0x510] sm:$0xff] %v8789
  %8990 = vst [vmem:[%s3 + $0x518] sm:$0xff] %v8790
  %8991 = vst [vmem:[%s3 + $0x520] sm:$0xff] %v8791
  %8992 = vst [vmem:[%s3 + $0x528] sm:$0xff] %v8792
  %8993 = vst [vmem:[%s3 + $0x530] sm:$0xff] %v8793
  %8994 = vst [vmem:[%s3 + $0x538] sm:$0xff] %v8794
  %8995 = vst [vmem:[%s3 + $0x540] sm:$0xff] %v8795
  %8996 = vst [vmem:[%s3 + $0x548] sm:$0xff] %v8796
  %8997 = vst [vmem:[%s3 + $0x550] sm:$0xff] %v8797
  %8998 = vst [vmem:[%s3 + $0x558] sm:$0xff] %v8798
  %8999 = vst [vmem:[%s3 + $0x560] sm:$0xff] %v8799
  %9000 = vst [vmem:[%s3 + $0x568] sm:$0xff] %v8800
  %9001 = vst.msk [vmem:[%s3 + $0x570] sm:$0xff] %vm1224, %v8801
  %9002 = vst [vmem:[%s3 + $0x578] sm:$0xff] %v8802
  %9003 = vst [vmem:[%s3 + $0x580] sm:$0xff] %v8803
  %9004 = vst [vmem:[%s3 + $0x588] sm:$0xff] %v8804
  %9005 = vst [vmem:[%s3 + $0x590] sm:$0xff] %v8805
  %9006 = vst [vmem:[%s3 + $0x598] sm:$0xff] %v8806
  %9007 = vst [vmem:[%s3 + $0x5a0] sm:$0xff] %v8807
  %9008 = vst [vmem:[%s3 + $0x5a8] sm:$0xff] %v8808
  %9009 = vst [vmem:[%s3 + $0x5b0] sm:$0xff] %v8809
  %9010 = vst [vmem:[%s3 + $0x5b8] sm:$0xff] %v8810
  %9011 = vst [vmem:[%s3 + $0x5c0] sm:$0xff] %v8811
  %9012 = vst [vmem:[%s3 + $0x5c8] sm:$0xff] %v8812
  %9013 = vst [vmem:[%s3 + $0x5d0] sm:$0xff] %v8813
  %9014 = vst [vmem:[%s3 + $0x5d8] sm:$0xff] %v8814
  %9015 = vst [vmem:[%s3 + $0x5e0] sm:$0xff] %v8815
  %9016 = vst [vmem:[%s3 + $0x5e8] sm:$0xff] %v8816
  %9017 = vst [vmem:[%s3 + $0x5f0] sm:$0xff] %v8817
  %9018 = vst [vmem:[%s3 + $0x5f8] sm:$0xff] %v8818
  %9019 = vst [vmem:[%s3 + $0x600] sm:$0xff] %v8819
  %9020 = vst [vmem:[%s3 + $0x608] sm:$0xff] %v8820
  %9021 = vst [vmem:[%s3 + $0x610] sm:$0xff] %v8821
  %9022 = vst [vmem:[%s3 + $0x618] sm:$0xff] %v8822
  %9023 = vst [vmem:[%s3 + $0x620] sm:$0xff] %v8823
  %9024 = vst [vmem:[%s3 + $0x628] sm:$0xff] %v8824
  %9025 = vst [vmem:[%s3 + $0x630] sm:$0xff] %v8825
  %9026 = vst.msk [vmem:[%s3 + $0x638] sm:$0xff] %vm1224, %v8826
  // Predicated region
  $region14: #{kernel_generated_0_forward.1} parent=0 // pred_check
    _
  $region15: #{kernel_generated_0_forward.1} parent=0 // pred_check_branch
    %9028 = sbr.rel (0) target = $region17
  $region16: #{kernel_generated_0_forward.1} parent=0 // pred_region
    _
  $region17: #{kernel_generated_0_forward.1} parent=0 // pred_fallthru
    _
  // Predicated region
  $region18: #{kernel_generated_0_forward.1} parent=0 // pred_check
    _
  $region19: #{kernel_generated_0_forward.1} parent=0 // pred_check_branch
    %9030 = sbr.rel (0) target = $region21
  $region20: #{kernel_generated_0_forward.1} parent=0 // pred_region
    _
  $region21: #{kernel_generated_0_forward.1} parent=0 // pred_fallthru
    _

</llo_original>
